<compile_context>
chip_gen: v7x
topology: tpu7x:2x2x1
jax: 0.10.0
libtpu: 0.0.40
codegen_flags: <defaults>
</compile_context>

<pallas_src>
import functools

import numpy as np
import jax
import jax.numpy as jnp
from jax.experimental import pallas as pl
from jax.experimental.pallas import tpu as pltpu

EPS = 1e-5
DEPTH = 5
MATMUL_DTYPE = jnp.bfloat16   # MXU operand dtype; accumulation stays float32.


# ----------------------------------------------------------------------------
# Deterministic raw parameters (PyTorch layouts, synthetic values)
# ----------------------------------------------------------------------------
def _init_conv(key, cout, cin, K):
    k1, k2 = jax.random.split(key)
    bound = 1.0 / (cin * K) ** 0.5
    w = jax.random.uniform(k1, (cout, cin, K), jnp.float32, -bound, bound)
    b = jax.random.uniform(k2, (cout,), jnp.float32, -bound, bound)
    return w, b


def _init_bn(key, c):
    k1, k2, k3, k4 = jax.random.split(key, 4)
    gamma = jax.random.uniform(k1, (c,), jnp.float32, 0.5, 1.5)
    beta = 0.1 * jax.random.normal(k2, (c,), jnp.float32)
    mean = 0.1 * jax.random.normal(k3, (c,), jnp.float32)
    var = jax.random.uniform(k4, (c,), jnp.float32, 0.5, 1.5)
    return (gamma, beta, mean, var)


def init_params(key, internals):
    cin = internals["general"]["channels_in"]
    cout = internals["general"]["channels_out"]
    f0 = internals["general"]["init_features"]
    K = internals["convolution"]["kernel_size"]
    feats = [f0 * (2 ** i) for i in range(DEPTH)]
    up = feats[0] * DEPTH
    cnt = [0]

    def nk():
        cnt[0] += 1
        return jax.random.fold_in(key, cnt[0])

    def blk(ci, f):  # Block: conv -> BN -> relu -> conv -> BN -> relu
        w1, b1 = _init_conv(nk(), f, ci, K)
        bn1 = _init_bn(nk(), f)
        w2, b2 = _init_conv(nk(), f, f, K)
        bn2 = _init_bn(nk(), f)
        return dict(w1=w1, b1=b1, bn1=bn1, w2=w2, b2=b2, bn2=bn2)

    def sgl(ci, f):  # BlockSingle: conv -> BN -> relu
        w, b = _init_conv(nk(), f, ci, K)
        bn = _init_bn(nk(), f)
        return dict(w=w, b=b, bn=bn)

    p = {}
    p["enc_i_0"] = blk(cin, feats[0])
    p["enc_0_1"] = blk(feats[0], feats[1])
    p["enc_1_2"] = blk(feats[1], feats[2])
    p["enc_2_3"] = blk(feats[2], feats[3])
    p["enc_3_4"] = blk(feats[3], feats[4])

    p["enc0_to_dec1"] = sgl(feats[0], feats[0])
    p["enc1_to_dec_1"] = sgl(feats[1], feats[0])
    p["enc2_to_dec1"] = sgl(feats[2], feats[0])
    p["enc3_to_dec1"] = sgl(feats[3], feats[0])
    p["enc4_to_dec1"] = sgl(feats[4], feats[0])
    p["dec1"] = sgl(up, up)

    p["enc0_to_dec2"] = sgl(feats[0], feats[0])
    p["enc1_to_dec2"] = sgl(feats[1], feats[0])
    p["enc2_to_dec2"] = sgl(feats[2], feats[0])
    p["enc3_to_dec2"] = sgl(up, feats[0])
    p["enc4_to_dec2"] = sgl(feats[4], feats[0])
    p["dec2"] = sgl(up, up)

    p["enc0_to_dec3"] = sgl(feats[0], feats[0])
    p["enc1_to_dec3"] = sgl(feats[1], feats[0])
    p["enc2_to_dec3"] = sgl(up, feats[0])
    p["enc3_to_dec3"] = sgl(up, feats[0])
    p["enc4_to_dec3"] = sgl(feats[4], feats[0])
    p["dec3"] = sgl(up, up)

    p["enc0_to_dec4"] = sgl(feats[0], feats[0])
    p["enc1_to_dec4"] = sgl(up, feats[0])
    p["enc2_to_dec4"] = sgl(up, feats[0])
    p["enc3_to_dec4"] = sgl(up, feats[0])
    p["enc4_to_dec4"] = sgl(feats[4], feats[0])
    p["dec4"] = sgl(up, up)

    w, b = _init_conv(nk(), cout, up, 1)
    p["conv_out_w"], p["conv_out_b"] = w, b
    return p


# ----------------------------------------------------------------------------
# Pure-JAX reference (mirrors the PyTorch forward exactly) -- correctness check.
# ----------------------------------------------------------------------------
def reference_forward(params, x_bcp, internals):
    pad = internals["convolution"]["padding"]

    def conv(x, w, b):                              # x: [B, P, Cin], w: [Cout, Cin, K]
        P_ = x.shape[1]
        xp = jnp.pad(x, ((0, 0), (pad, pad), (0, 0)))
        y = None
        for k in range(w.shape[2]):
            t = xp[:, k:k + P_, :] @ w[:, :, k].T
            y = t if y is None else y + t
        return y + b

    def bn_eval(x, bnp):
        gamma, beta, mean, var = bnp
        return (x - mean) * (gamma / jnp.sqrt(var + EPS)) + beta

    def blk(x, p):
        x = jax.nn.relu(bn_eval(conv(x, p["w1"], p["b1"]), p["bn1"]))
        x = jax.nn.relu(bn_eval(conv(x, p["w2"], p["b2"]), p["bn2"]))
        return x

    def sgl(x, p):
        return jax.nn.relu(bn_eval(conv(x, p["w"], p["b"]), p["bn"]))

    def pool(x, k):
        B_, P_, C_ = x.shape
        return x.reshape(B_, P_ // k, k, C_).max(axis=2)

    def up(x, s):                                   # PyTorch linear, align_corners=False
        B_, P_, C_ = x.shape
        j = jnp.arange(P_ * s, dtype=jnp.float32)
        src = jnp.maximum((j + 0.5) / s - 0.5, 0.0)
        i0 = jnp.minimum(jnp.floor(src).astype(jnp.int32), P_ - 1)
        i1 = jnp.minimum(i0 + 1, P_ - 1)
        lam = src - i0.astype(jnp.float32)
        return (jnp.take(x, i0, axis=1) * (1.0 - lam)[None, :, None]
                + jnp.take(x, i1, axis=1) * lam[None, :, None])

    x = jnp.transpose(x_bcp, (0, 2, 1))
    x_e0 = blk(x, params["enc_i_0"])
    x_e1 = blk(pool(x_e0, 2), params["enc_0_1"])
    x_e2 = blk(pool(x_e1, 2), params["enc_1_2"])
    x_e3 = blk(pool(x_e2, 2), params["enc_2_3"])
    x_d4 = blk(pool(x_e3, 2), params["enc_3_4"])

    c = jnp.concatenate((sgl(pool(x_e0, 8), params["enc0_to_dec1"]),
                         sgl(pool(x_e1, 4), params["enc1_to_dec_1"]),
                         sgl(pool(x_e2, 2), params["enc2_to_dec1"]),
                         sgl(x_e3, params["enc3_to_dec1"]),
                         sgl(up(x_d4, 2), params["enc4_to_dec1"])), axis=-1)
    x_d3 = sgl(c, params["dec1"])
    c = jnp.concatenate((sgl(pool(x_e0, 4), params["enc0_to_dec2"]),
                         sgl(pool(x_e1, 2), params["enc1_to_dec2"]),
                         sgl(x_e2, params["enc2_to_dec2"]),
                         sgl(up(x_d3, 2), params["enc3_to_dec2"]),
                         sgl(up(x_d4, 4), params["enc4_to_dec2"])), axis=-1)
    x_d2 = sgl(c, params["dec2"])
    c = jnp.concatenate((sgl(pool(x_e0, 2), params["enc0_to_dec3"]),
                         sgl(x_e1, params["enc1_to_dec3"]),
                         sgl(up(x_d2, 2), params["enc2_to_dec3"]),
                         sgl(up(x_d3, 4), params["enc3_to_dec3"]),
                         sgl(up(x_d4, 8), params["enc4_to_dec3"])), axis=-1)
    x_d1 = sgl(c, params["dec3"])
    c = jnp.concatenate((sgl(x_e0, params["enc0_to_dec4"]),
                         sgl(up(x_d1, 2), params["enc1_to_dec4"]),
                         sgl(up(x_d2, 4), params["enc2_to_dec4"]),
                         sgl(up(x_d3, 8), params["enc3_to_dec4"]),
                         sgl(up(x_d4, 16), params["enc4_to_dec4"])), axis=-1)
    x_d0 = sgl(c, params["dec4"])

    logits = x_d0 @ params["conv_out_w"][:, :, 0].T + params["conv_out_b"]
    act = internals["activation"]
    if act == "Softmax":
        y = jax.nn.softmax(logits, axis=-1)
    elif act == "Sigmoid":
        y = jax.nn.sigmoid(logits)
    else:
        y = logits
    return jnp.transpose(y, (0, 2, 1))


# ----------------------------------------------------------------------------
# Parameter preprocessing (done ONCE, outside the jitted forward)
# ----------------------------------------------------------------------------
def _upsample_matrix(pin, pout):
    """Per-batch [Pout, Pin] linear-interpolation matrix (align_corners=False)."""
    s = pout // pin
    u = np.zeros((pout, pin), np.float64)
    for j in range(pout):
        src = max((j + 0.5) / s - 0.5, 0.0)
        i0 = min(int(np.floor(src)), pin - 1)
        i1 = min(i0 + 1, pin - 1)
        lam = src - i0
        u[j, i0] += 1.0 - lam
        u[j, i1] += lam
    return u


def prepare_params(raw, internals, B, P):
    assert P % 16 == 0, "P must be divisible by 16 (UNet3+ pooling depth)"
    K = internals["convolution"]["kernel_size"]
    pad = internals["convolution"]["padding"]
    assert K % 2 == 1 and pad == K // 2, "only 'same' odd-kernel convs supported"
    cin = internals["general"]["channels_in"]
    cout = internals["general"]["channels_out"]
    f0 = internals["general"]["init_features"]
    act = internals["activation"]
    if act not in ("Softmax", "Sigmoid", None):
        raise ValueError(f"{act} isn't a valid activation layer!")
    feats = [f0 * (2 ** i) for i in range(DEPTH)]
    up_ch = f0 * DEPTH

    def fold(b, bn):
        # Fold conv bias + eval-mode BatchNorm (running stats) into scale/shift.
        gamma, beta, mean, var = (np.asarray(t, np.float64) for t in bn)
        b = np.asarray(b, np.float64)
        s = gamma / np.sqrt(var + EPS)
        return s, beta + (b - mean) * s

    def conv_rows(w, s):
        # torch [Cout, Cin, K] -> per-tap [Cin, Cout] with BN scale folded in.
        w = np.asarray(w, np.float64)
        return [w[:, :, k].T * s[None, :] for k in range(w.shape[2])]

    mats = {}   # name -> np [rows, cols]

    def add(name, m):
        mats[name] = np.asarray(m, np.float64)

    # ---- encoder blocks: im2col weights [K*Cin + 1, Cout] (last row = shift) ----
    enc_keys = ["enc_i_0", "enc_0_1", "enc_1_2", "enc_2_3", "enc_3_4"]
    for i, key in enumerate(enc_keys):
        bp = raw[key]
        s1, h1 = fold(bp["b1"], bp["bn1"])
        add(f"enc{i}_w1", np.concatenate(conv_rows(bp["w1"], s1) + [h1[None, :]], axis=0))
        s2, h2 = fold(bp["b2"], bp["bn2"])
        add(f"enc{i}_w2", np.concatenate(conv_rows(bp["w2"], s2) + [h2[None, :]], axis=0))

    # ---- decoder: the 5 branch convs fused into ONE block-diagonal weight per tap ----
    dec_branch_keys = [
        ["enc0_to_dec1", "enc1_to_dec_1", "enc2_to_dec1", "enc3_to_dec1", "enc4_to_dec1"],
        ["enc0_to_dec2", "enc1_to_dec2", "enc2_to_dec2", "enc3_to_dec2", "enc4_to_dec2"],
        ["enc0_to_dec3", "enc1_to_dec3", "enc2_to_dec3", "enc3_to_dec3", "enc4_to_dec3"],
        ["enc0_to_dec4", "enc1_to_dec4", "enc2_to_dec4", "enc3_to_dec4", "enc4_to_dec4"],
    ]
    dec_keys = ["dec1", "dec2", "dec3", "dec4"]
    branch_cin = [
        [feats[0], feats[1], feats[2], feats[3], feats[4]],
        [feats[0], feats[1], feats[2], up_ch,    feats[4]],
        [feats[0], feats[1], up_ch,    up_ch,    feats[4]],
        [feats[0], up_ch,    up_ch,    up_ch,    feats[4]],
    ]
    branch_srcs = [
        [("e0p8", False), ("e1p4", False), ("e2p2", False), ("e3", False), ("d4", True)],
        [("e0p4", False), ("e1p2", False), ("e2", False), ("d3", True), ("d4", True)],
        [("e0p2", False), ("e1", False), ("d2", True), ("d3", True), ("d4", True)],
        [("e0", False), ("d1", True), ("d2", True), ("d3", True), ("d4", True)],
    ]
    for lv in range(4):
        cins = branch_cin[lv]
        sum_ci = sum(cins)
        offs = [int(v) for v in np.concatenate([[0], np.cumsum(cins)[:-1]])]
        taps = [np.zeros((sum_ci, up_ch)) for _ in range(K)]
        hrow = np.zeros((1, up_ch))
        for bi, key in enumerate(dec_branch_keys[lv]):
            sp = raw[key]
            s, h = fold(sp["b"], sp["bn"])
            rows = conv_rows(sp["w"], s)
            for k in range(K):
                taps[k][offs[bi]:offs[bi] + cins[bi], bi * f0:(bi + 1) * f0] = rows[k]
            hrow[0, bi * f0:(bi + 1) * f0] = h
        for k in range(K):
            wk = taps[k] if k != K // 2 else np.concatenate([taps[k], hrow], axis=0)
            add(f"dec{lv}_bw{k}", wk)
        dp = raw[dec_keys[lv]]
        ds_, dh = fold(dp["b"], dp["bn"])
        add(f"dec{lv}_dw", np.concatenate(conv_rows(dp["w"], ds_) + [dh[None, :]], axis=0))

    # ---- output 1x1 conv (+bias row) ----
    add("out_w", np.concatenate(
        [np.asarray(raw["conv_out_w"], np.float64)[:, :, 0].T,
         np.asarray(raw["conv_out_b"], np.float64)[None, :]], axis=0))

    # ---- per-batch linear-upsample matrices (no B^2 P^2 block-diagonal) ----
    dec_plen = [P // 8, P // 4, P // 2, P]
    src_plen = {"e0": P, "e0p2": P // 2, "e0p4": P // 4, "e0p8": P // 8,
                "e1": P // 2, "e1p2": P // 4, "e1p4": P // 8,
                "e2": P // 4, "e2p2": P // 8,
                "e3": P // 8,
                "d4": P // 16, "d3": P // 8, "d2": P // 4, "d1": P // 2}
    up_pairs = set()
    for lv in range(4):
        for (src, is_up) in branch_srcs[lv]:
            if is_up:
                up_pairs.add((src_plen[src], dec_plen[lv]))
    for (pin, pout) in sorted(up_pairs):
        add(f"up_{pin}_{pout}", _upsample_matrix(pin, pout))

    # ---- pack everything into ONE bf16 blob (single prologue DMA) ----
    ALIGN = 16
    max_cols = max(m.shape[1] for m in mats.values())
    lane = ((max(max_cols, 128) + 127) // 128) * 128
    windex, off = {}, 0
    for name, m in mats.items():
        windex[name] = (off, m.shape[0], m.shape[1])
        off += ((m.shape[0] + ALIGN - 1) // ALIGN) * ALIGN
    blob_np = np.zeros((max(off, ALIGN), lane), np.float32)
    for name, m in mats.items():
        o, r, c = windex[name]
        blob_np[o:o + r, :c] = m
    blob = jnp.asarray(blob_np, dtype=MATMUL_DTYPE)

    scratch_info = [
        ("e0", P, feats[0]), ("e0p2", P // 2, feats[0]),
        ("e0p4", P // 4, feats[0]), ("e0p8", P // 8, feats[0]),
        ("e1", P // 2, feats[1]), ("e1p2", P // 4, feats[1]), ("e1p4", P // 8, feats[1]),
        ("e2", P // 4, feats[2]), ("e2p2", P // 8, feats[2]),
        ("e3", P // 8, feats[3]),
        ("d4", P // 16, feats[4]), ("d3", P // 8, up_ch),
        ("d2", P // 4, up_ch), ("d1", P // 2, up_ch),
    ]
    cpad = max(8, ((cout + 7) // 8) * 8)
    cfg = dict(B=B, P=P, K=K, cin=cin, cout=cout, cpad=cpad, f0=f0, feats=feats,
               up_ch=up_ch, act=act, windex=windex, dec_plen=dec_plen,
               src_plen=src_plen, branch_srcs=branch_srcs, scratch_info=scratch_info)
    return blob, cfg


# ----------------------------------------------------------------------------
# The fused whole-network kernel
# ----------------------------------------------------------------------------
def _make_kernel(cfg):
    B, P, K = cfg["B"], cfg["P"], cfg["K"]
    cout, cpad, act = cfg["cout"], cfg["cpad"], cfg["act"]
    windex = cfg["windex"]
    src_plen, dec_plen = cfg["src_plen"], cfg["dec_plen"]
    branch_srcs = cfg["branch_srcs"]
    scratch_info = cfg["scratch_info"]
    half = K // 2

    def kernel(x_ref, w_ref, out_ref, *scr):
        S = {info[0]: ref for info, ref in zip(scratch_info, scr)}
        masks, ones_cache = {}, {}

        def get_w(name):
            off, rows, cols = windex[name]
            return w_ref[off:off + rows, :cols]          # bf16 [rows, cols]

        def ones_col(m):
            if m not in ones_cache:
                ones_cache[m] = jnp.ones((m, 1), jnp.float32)
            return ones_cache[m]

        def keep_mask(m, p_len, delta):
            key = (m, p_len, delta)
            if key not in masks:
                pos = jax.lax.broadcasted_iota(jnp.int32, (m, 1), 0) % p_len
                masks[key] = (pos < p_len - delta) if delta > 0 else (pos >= -delta)
            return masks[key]

        def shift_rows(x, delta, p_len):
            # y[r] = x[r + delta] within each length-p_len batch segment, 0 outside.
            if delta == 0:
                return x
            m, c = x.shape
            z = jnp.zeros((abs(delta), c), x.dtype)
            if delta > 0:
                y = jnp.concatenate([x[delta:, :], z], axis=0)
            else:
                y = jnp.concatenate([z, x[:m + delta, :]], axis=0)
            if B > 1:
                y = jnp.where(keep_mask(m, p_len, delta), y, 0.0)
            return y

        def mm(lhs_f32, wname):
            return jnp.dot(lhs_f32.astype(MATMUL_DTYPE), get_w(wname),
                           preferred_element_type=jnp.float32)

        def conv_im2col(x, wname, p_len):
            # 'same' Conv1d + folded bias/BN as ONE matmul (im2col + ones column).
            m = x.shape[0]
            parts = [shift_rows(x, k - half, p_len) for k in range(K)] + [ones_col(m)]
            return mm(jnp.concatenate(parts, axis=-1), wname)

        def conv_taps(x, prefix, p_len):
            # Decoder branch stage: one matmul per tap (K ~= 224-256 fills the MXU);
            # bias/shift folded into the center tap via the ones column.
            m = x.shape[0]
            acc = mm(jnp.concatenate([x, ones_col(m)], axis=-1), f"{prefix}{half}")
            for k in range(K):
                if k == half:
                    continue
                acc = acc + mm(shift_rows(x, k - half, p_len), f"{prefix}{k}")
            return acc

        def relu(x):
            return jnp.maximum(x, 0.0)

        def pool2(src_name):
            # per-batch MaxPool1d(2) as two stride-2 VMEM reads from scratch.
            ref = S[src_name]
            m_out = ref.shape[0] // 2
            a = ref[pl.ds(0, m_out, stride=2), :]
            b = ref[pl.ds(1, m_out, stride=2), :]
            return jnp.maximum(a, b)

        def enc_block(x, idx, p_len):
            h = relu(conv_im2col(x, f"enc{idx}_w1", p_len))
            return relu(conv_im2col(h, f"enc{idx}_w2", p_len))

        # ---------------- encoder + incremental max-pool pyramid ----------------
        S["e0"][...] = enc_block(x_ref[...], 0, P)
        S["e0p2"][...] = pool2("e0")
        S["e0p4"][...] = pool2("e0p2")
        S["e0p8"][...] = pool2("e0p4")

        S["e1"][...] = enc_block(S["e0p2"][...], 1, P // 2)
        S["e1p2"][...] = pool2("e1")
        S["e1p4"][...] = pool2("e1p2")

        S["e2"][...] = enc_block(S["e1p2"][...], 2, P // 4)
        S["e2p2"][...] = pool2("e2")

        S["e3"][...] = enc_block(S["e2p2"][...], 3, P // 8)

        S["d4"][...] = enc_block(pool2("e3"), 4, P // 16)

        # ---------------- decoder ----------------
        def upsample(src, p_out):
            # PyTorch Upsample(linear, align_corners=False) as a per-batch matmul.
            pin = src_plen[src]
            U = get_w(f"up_{pin}_{p_out}")               # bf16 [p_out, pin]
            ref = S[src]
            segs = [jnp.dot(U, ref[b * pin:(b + 1) * pin, :].astype(MATMUL_DTYPE),
                            preferred_element_type=jnp.float32)
                    for b in range(B)]
            return segs[0] if B == 1 else jnp.concatenate(segs, axis=0)

        dec_store = ["d3", "d2", "d1", None]
        d0 = None
        for lv in range(4):
            p_out = dec_plen[lv]
            parts = [upsample(src, p_out) if is_up else S[src][...]
                     for (src, is_up) in branch_srcs[lv]]
            xb = jnp.concatenate(parts, axis=-1)          # [B*p_out, sum_ci] f32
            cat = relu(conv_taps(xb, f"dec{lv}_bw", p_out))
            h = relu(conv_im2col(cat, f"dec{lv}_dw", p_out))
            if dec_store[lv] is None:
                d0 = h
            else:
                S[dec_store[lv]][...] = h

        # ---------------- output head (+ softmax over static column slices) ----
        m = B * P
        logits = mm(jnp.concatenate([d0, ones_col(m)], axis=-1), "out_w")   # [M, cout] f32
        cols = [logits[:, i:i + 1] for i in range(cout)]
        if act == "Softmax":
            mx = cols[0]
            for c in cols[1:]:
                mx = jnp.maximum(mx, c)
            exps = [jnp.exp(c - mx) for c in cols]
            tot = exps[0]
            for e in exps[1:]:
                tot = tot + e
            inv = 1.0 / tot
            cols = [e * inv for e in exps]
        elif act == "Sigmoid":
            cols = [1.0 / (1.0 + jnp.exp(-c)) for c in cols]
        if cpad > cout:
            cols.append(jnp.zeros((m, cpad - cout), jnp.float32))
        out_ref[...] = jnp.concatenate(cols, axis=-1)

    return kernel


def build_forward(raw_params, internals, B, P):
    blob, cfg = prepare_params(raw_params, internals, B, P)
    kernel = _make_kernel(cfg)
    M = B * P
    scratch_shapes = [pltpu.VMEM((B * plen, ch), jnp.float32)
                      for (_, plen, ch) in cfg["scratch_info"]]
    vmem = pl.BlockSpec(memory_space=pltpu.MemorySpace.VMEM)
    call = pl.pallas_call(
        kernel,
        out_shape=jax.ShapeDtypeStruct((M, cfg["cpad"]), jnp.float32),
        in_specs=[vmem, vmem],
        out_specs=vmem,
        scratch_shapes=scratch_shapes,
    )
    cin, cout = cfg["cin"], cfg["cout"]

    def forward(x_bcp):
        # [B, Cin, P] -> stacked channels-last [B*P, Cin]
        xr = jnp.transpose(x_bcp, (0, 2, 1)).reshape(M, cin)
        y = call(xr, blob)[:, :cout]
        return jnp.transpose(y.reshape(B, P, cout), (0, 2, 1))

    return jax.jit(forward)


# ----------------------------------------------------------------------------
if __name__ == "__main__":
    internals = {
        "general": {"channels_in": 4, "channels_out": 3, "init_features": 8, "drop_rate": 0.1},
        "convolution": {"kernel_size": 3, "padding": 1},
        "trans_conv": {"kernel_size": 2, "stride": 2},  # unused in forward (Upsample is used)
        "activation": "Softmax",
    }
    B, P = 2, 64  # P divisible by 16 (UNet3+ pooling depth)

    key = jax.random.PRNGKey(0)
    params = init_params(key, internals)
    x = jax.random.normal(jax.random.fold_in(key, 999),
                          (B, internals["general"]["channels_in"], P), jnp.float32)

    fwd = build_forward(params, internals, B, P)
    out = jax.block_until_ready(fwd(x))

    assert out.shape == (B, internals["general"]["channels_out"], P), out.shape
    assert bool(jnp.all(jnp.isfinite(out)))
    # Softmax over channels sums to 1 per point.
    assert bool(jnp.allclose(out.sum(axis=1), 1.0, atol=1e-4))

    # Cross-check the fused kernel against a pure-JAX re-implementation of the
    # PyTorch forward (bf16 MXU operands -> allow a small tolerance).
    ref = jax.block_until_ready(
        jax.jit(functools.partial(reference_forward, internals=internals))(params, x))
    err = float(jnp.max(jnp.abs(out - ref)))
    assert err < 5e-2, f"kernel deviates from reference, max abs err = {err}"
    print("KERNEL_OK")
</pallas_src>

<mosaic_0001>
module attributes {stable_mosaic.version = 11 : i64} {
  func.func @kernel(%arg0: memref<128x4xf32, #tpu.memory_space<vmem>>, %arg1: memref<5168x128xbf16, #tpu.memory_space<vmem>>, %arg2: memref<128x8xf32, #tpu.memory_space<vmem>>, %arg3: memref<128x8xf32, #tpu.memory_space<vmem>>, %arg4: memref<64x8xf32, #tpu.memory_space<vmem>>, %arg5: memref<32x8xf32, #tpu.memory_space<vmem>>, %arg6: memref<16x8xf32, #tpu.memory_space<vmem>>, %arg7: memref<64x16xf32, #tpu.memory_space<vmem>>, %arg8: memref<32x16xf32, #tpu.memory_space<vmem>>, %arg9: memref<16x16xf32, #tpu.memory_space<vmem>>, %arg10: memref<32x32xf32, #tpu.memory_space<vmem>>, %arg11: memref<16x32xf32, #tpu.memory_space<vmem>>, %arg12: memref<16x64xf32, #tpu.memory_space<vmem>>, %arg13: memref<8x128xf32, #tpu.memory_space<vmem>>, %arg14: memref<16x40xf32, #tpu.memory_space<vmem>>, %arg15: memref<32x40xf32, #tpu.memory_space<vmem>>, %arg16: memref<64x40xf32, #tpu.memory_space<vmem>>) attributes {dimension_semantics = [], scalar_prefetch = 0 : i64, scratch_operands = 14 : i64, tpu.core_type = #tpu.core_type<tc>} {
    %c0 = arith.constant 0 : index
    %c0_0 = arith.constant 0 : index
    %0 = vector.load %arg0[%c0, %c0_0] : memref<128x4xf32, #tpu.memory_space<vmem>>, vector<128x4xf32>
    %cst = arith.constant 0.000000e+00 : f32
    %1 = vector.broadcast %cst : f32 to vector<1x4xf32>
    %2 = vector.extract_strided_slice %0 {offsets = [0, 0], sizes = [127, 4], strides = [1, 1]} : vector<128x4xf32> to vector<127x4xf32>
    %3 = tpu.concatenate %1, %2 in 0 : vector<1x4xf32>, vector<127x4xf32> -> vector<128x4xf32>
    %4 = tpu.iota {dimensions = array<i32: 0>} : vector<128x1xi32>
    %c64_i32 = arith.constant 64 : i32
    %c0_i32 = arith.constant 0 : i32
    %5 = arith.cmpi eq, %c64_i32, %c0_i32 : i32
    %c1_i32 = arith.constant 1 : i32
    %6 = arith.select %5, %c1_i32, %c64_i32 : i32
    %7 = vector.broadcast %6 : i32 to vector<128x1xi32>
    %8 = arith.remsi %4, %7 : vector<128x1xi32>
    %c0_i32_1 = arith.constant 0 : i32
    %9 = vector.broadcast %c0_i32_1 : i32 to vector<128x1xi32>
    %10 = arith.cmpi ne, %8, %9 : vector<128x1xi32>
    %c0_i32_2 = arith.constant 0 : i32
    %11 = vector.broadcast %c0_i32_2 : i32 to vector<128x1xi32>
    %12 = arith.cmpi slt, %8, %11 : vector<128x1xi32>
    %c0_i32_3 = arith.constant 0 : i32
    %13 = arith.cmpi slt, %6, %c0_i32_3 : i32
    %14 = vector.broadcast %13 : i1 to vector<128x1xi1>
    %15 = vector.broadcast %14 : vector<128x1xi1> to vector<128x1xi1>
    %16 = arith.xori %12, %15 : vector<128x1xi1>
    %17 = arith.andi %16, %10 : vector<128x1xi1>
    %18 = vector.broadcast %6 : i32 to vector<128x1xi32>
    %19 = arith.addi %8, %18 : vector<128x1xi32>
    %20 = arith.select %17, %19, %8 : vector<128x1xi1>, vector<128x1xi32>
    %c1_i32_4 = arith.constant 1 : i32
    %21 = vector.broadcast %c1_i32_4 : i32 to vector<128x1xi32>
    %22 = arith.cmpi sge, %20, %21 : vector<128x1xi32>
    %cst_5 = arith.constant 0.000000e+00 : f32
    %23 = vector.shape_cast %22 : vector<128x1xi1> to vector<128x1xi1>
    %24 = vector.broadcast %23 : vector<128x1xi1> to vector<128x4xi1>
    %25 = vector.broadcast %cst_5 : f32 to vector<128x4xf32>
    %26 = arith.select %24, %3, %25 : vector<128x4xi1>, vector<128x4xf32>
    %cst_6 = arith.constant 0.000000e+00 : f32
    %27 = vector.broadcast %cst_6 : f32 to vector<1x4xf32>
    %28 = vector.extract_strided_slice %0 {offsets = [1, 0], sizes = [127, 4], strides = [1, 1]} : vector<128x4xf32> to vector<127x4xf32>
    %29 = tpu.concatenate %28, %27 in 0 : vector<127x4xf32>, vector<1x4xf32> -> vector<128x4xf32>
    %30 = tpu.iota {dimensions = array<i32: 0>} : vector<128x1xi32>
    %c64_i32_7 = arith.constant 64 : i32
    %c0_i32_8 = arith.constant 0 : i32
    %31 = arith.cmpi eq, %c64_i32_7, %c0_i32_8 : i32
    %c1_i32_9 = arith.constant 1 : i32
    %32 = arith.select %31, %c1_i32_9, %c64_i32_7 : i32
    %33 = vector.broadcast %32 : i32 to vector<128x1xi32>
    %34 = arith.remsi %30, %33 : vector<128x1xi32>
    %c0_i32_10 = arith.constant 0 : i32
    %35 = vector.broadcast %c0_i32_10 : i32 to vector<128x1xi32>
    %36 = arith.cmpi ne, %34, %35 : vector<128x1xi32>
    %c0_i32_11 = arith.constant 0 : i32
    %37 = vector.broadcast %c0_i32_11 : i32 to vector<128x1xi32>
    %38 = arith.cmpi slt, %34, %37 : vector<128x1xi32>
    %c0_i32_12 = arith.constant 0 : i32
    %39 = arith.cmpi slt, %32, %c0_i32_12 : i32
    %40 = vector.broadcast %39 : i1 to vector<128x1xi1>
    %41 = vector.broadcast %40 : vector<128x1xi1> to vector<128x1xi1>
    %42 = arith.xori %38, %41 : vector<128x1xi1>
    %43 = arith.andi %42, %36 : vector<128x1xi1>
    %44 = vector.broadcast %32 : i32 to vector<128x1xi32>
    %45 = arith.addi %34, %44 : vector<128x1xi32>
    %46 = arith.select %43, %45, %34 : vector<128x1xi1>, vector<128x1xi32>
    %c63_i32 = arith.constant 63 : i32
    %47 = vector.broadcast %c63_i32 : i32 to vector<128x1xi32>
    %48 = arith.cmpi slt, %46, %47 : vector<128x1xi32>
    %cst_13 = arith.constant 0.000000e+00 : f32
    %49 = vector.shape_cast %48 : vector<128x1xi1> to vector<128x1xi1>
    %50 = vector.broadcast %49 : vector<128x1xi1> to vector<128x4xi1>
    %51 = vector.broadcast %cst_13 : f32 to vector<128x4xf32>
    %52 = arith.select %50, %29, %51 : vector<128x4xi1>, vector<128x4xf32>
    %cst_14 = arith.constant 1.000000e+00 : f32
    %53 = vector.broadcast %cst_14 : f32 to vector<128x1xf32>
    %54 = tpu.concatenate %26, %0, %52, %53 in 1 : vector<128x4xf32>, vector<128x4xf32>, vector<128x4xf32>, vector<128x1xf32> -> vector<128x13xf32>
    %55 = arith.truncf %54 : vector<128x13xf32> to vector<128x13xbf16>
    %c0_15 = arith.constant 0 : index
    %c0_16 = arith.constant 0 : index
    %56 = vector.load %arg1[%c0_15, %c0_16] : memref<5168x128xbf16, #tpu.memory_space<vmem>>, vector<13x8xbf16>
    %cst_17 = arith.constant dense<0.000000e+00> : vector<128x8xf32>
    %57 = tpu.matmul %55, %56, %cst_17 {dimension_numbers = #tpu.dot_dimension_numbers<[1], [0], [0], [1], [0, 0, 1, 1], [], []>} : vector<128x13xbf16>, vector<13x8xbf16>, vector<128x8xf32> -> vector<128x8xf32>
    %cst_18 = arith.constant 0.000000e+00 : f32
    %58 = vector.broadcast %cst_18 : f32 to vector<128x8xf32>
    %59 = arith.maximumf %57, %58 : vector<128x8xf32>
    %cst_19 = arith.constant 0.000000e+00 : f32
    %60 = vector.broadcast %cst_19 : f32 to vector<1x8xf32>
    %61 = vector.extract_strided_slice %59 {offsets = [0, 0], sizes = [127, 8], strides = [1, 1]} : vector<128x8xf32> to vector<127x8xf32>
    %62 = tpu.concatenate %60, %61 in 0 : vector<1x8xf32>, vector<127x8xf32> -> vector<128x8xf32>
    %cst_20 = arith.constant 0.000000e+00 : f32
    %63 = vector.shape_cast %22 : vector<128x1xi1> to vector<128x1xi1>
    %64 = vector.broadcast %63 : vector<128x1xi1> to vector<128x8xi1>
    %65 = vector.broadcast %cst_20 : f32 to vector<128x8xf32>
    %66 = arith.select %64, %62, %65 : vector<128x8xi1>, vector<128x8xf32>
    %cst_21 = arith.constant 0.000000e+00 : f32
    %67 = vector.broadcast %cst_21 : f32 to vector<1x8xf32>
    %68 = vector.extract_strided_slice %59 {offsets = [1, 0], sizes = [127, 8], strides = [1, 1]} : vector<128x8xf32> to vector<127x8xf32>
    %69 = tpu.concatenate %68, %67 in 0 : vector<127x8xf32>, vector<1x8xf32> -> vector<128x8xf32>
    %cst_22 = arith.constant 0.000000e+00 : f32
    %70 = vector.shape_cast %48 : vector<128x1xi1> to vector<128x1xi1>
    %71 = vector.broadcast %70 : vector<128x1xi1> to vector<128x8xi1>
    %72 = vector.broadcast %cst_22 : f32 to vector<128x8xf32>
    %73 = arith.select %71, %69, %72 : vector<128x8xi1>, vector<128x8xf32>
    %74 = tpu.concatenate %66, %59, %73, %53 in 1 : vector<128x8xf32>, vector<128x8xf32>, vector<128x8xf32>, vector<128x1xf32> -> vector<128x25xf32>
    %75 = arith.truncf %74 : vector<128x25xf32> to vector<128x25xbf16>
    %c16 = arith.constant 16 : index
    %c0_23 = arith.constant 0 : index
    %76 = vector.load %arg1[%c16, %c0_23] : memref<5168x128xbf16, #tpu.memory_space<vmem>>, vector<25x8xbf16>
    %cst_24 = arith.constant dense<0.000000e+00> : vector<128x8xf32>
    %77 = tpu.matmul %75, %76, %cst_24 {dimension_numbers = #tpu.dot_dimension_numbers<[1], [0], [0], [1], [0, 0, 1, 1], [], []>} : vector<128x25xbf16>, vector<25x8xbf16>, vector<128x8xf32> -> vector<128x8xf32>
    %cst_25 = arith.constant 0.000000e+00 : f32
    %78 = vector.broadcast %cst_25 : f32 to vector<128x8xf32>
    %79 = arith.maximumf %77, %78 : vector<128x8xf32>
    %c0_26 = arith.constant 0 : index
    %c0_27 = arith.constant 0 : index
    %80 = vector.load %arg3[%c0_26, %c0_27] : memref<128x8xf32, #tpu.memory_space<vmem>>, vector<128x8xf32>
    tpu.vector_store %arg3[%c0_26, %c0_27], %79 {strides = array<i32>} : memref<128x8xf32, #tpu.memory_space<vmem>>, vector<128x8xf32>,
    %c0_28 = arith.constant 0 : index
    %c0_29 = arith.constant 0 : index
    %81 = tpu.strided_load %arg3[%c0_28, %c0_29] {strides = array<i32: 2, 1>} : memref<128x8xf32, #tpu.memory_space<vmem>>, vector<64x8xf32>
    %c1 = arith.constant 1 : index
    %c0_30 = arith.constant 0 : index
    %82 = tpu.strided_load %arg3[%c1, %c0_30] {strides = array<i32: 2, 1>} : memref<128x8xf32, #tpu.memory_space<vmem>>, vector<64x8xf32>
    %83 = arith.maximumf %81, %82 : vector<64x8xf32>
    %c0_31 = arith.constant 0 : index
    %c0_32 = arith.constant 0 : index
    %84 = vector.load %arg4[%c0_31, %c0_32] : memref<64x8xf32, #tpu.memory_space<vmem>>, vector<64x8xf32>
    tpu.vector_store %arg4[%c0_31, %c0_32], %83 {strides = array<i32>} : memref<64x8xf32, #tpu.memory_space<vmem>>, vector<64x8xf32>,
    %c0_33 = arith.constant 0 : index
    %c0_34 = arith.constant 0 : index
    %85 = tpu.strided_load %arg4[%c0_33, %c0_34] {strides = array<i32: 2, 1>} : memref<64x8xf32, #tpu.memory_space<vmem>>, vector<32x8xf32>
    %c1_35 = arith.constant 1 : index
    %c0_36 = arith.constant 0 : index
    %86 = tpu.strided_load %arg4[%c1_35, %c0_36] {strides = array<i32: 2, 1>} : memref<64x8xf32, #tpu.memory_space<vmem>>, vector<32x8xf32>
    %87 = arith.maximumf %85, %86 : vector<32x8xf32>
    %c0_37 = arith.constant 0 : index
    %c0_38 = arith.constant 0 : index
    %88 = vector.load %arg5[%c0_37, %c0_38] : memref<32x8xf32, #tpu.memory_space<vmem>>, vector<32x8xf32>
    tpu.vector_store %arg5[%c0_37, %c0_38], %87 {strides = array<i32>} : memref<32x8xf32, #tpu.memory_space<vmem>>, vector<32x8xf32>,
    %c0_39 = arith.constant 0 : index
    %c0_40 = arith.constant 0 : index
    %89 = tpu.strided_load %arg5[%c0_39, %c0_40] {strides = array<i32: 2, 1>} : memref<32x8xf32, #tpu.memory_space<vmem>>, vector<16x8xf32>
    %c1_41 = arith.constant 1 : index
    %c0_42 = arith.constant 0 : index
    %90 = tpu.strided_load %arg5[%c1_41, %c0_42] {strides = array<i32: 2, 1>} : memref<32x8xf32, #tpu.memory_space<vmem>>, vector<16x8xf32>
    %91 = arith.maximumf %89, %90 : vector<16x8xf32>
    %c0_43 = arith.constant 0 : index
    %c0_44 = arith.constant 0 : index
    %92 = vector.load %arg6[%c0_43, %c0_44] : memref<16x8xf32, #tpu.memory_space<vmem>>, vector<16x8xf32>
    tpu.vector_store %arg6[%c0_43, %c0_44], %91 {strides = array<i32>} : memref<16x8xf32, #tpu.memory_space<vmem>>, vector<16x8xf32>,
    %c0_45 = arith.constant 0 : index
    %c0_46 = arith.constant 0 : index
    %93 = vector.load %arg4[%c0_45, %c0_46] : memref<64x8xf32, #tpu.memory_space<vmem>>, vector<64x8xf32>
    %cst_47 = arith.constant 0.000000e+00 : f32
    %94 = vector.broadcast %cst_47 : f32 to vector<1x8xf32>
    %95 = vector.extract_strided_slice %93 {offsets = [0, 0], sizes = [63, 8], strides = [1, 1]} : vector<64x8xf32> to vector<63x8xf32>
    %96 = tpu.concatenate %94, %95 in 0 : vector<1x8xf32>, vector<63x8xf32> -> vector<64x8xf32>
    %97 = tpu.iota {dimensions = array<i32: 0>} : vector<64x1xi32>
    %c32_i32 = arith.constant 32 : i32
    %c0_i32_48 = arith.constant 0 : i32
    %98 = arith.cmpi eq, %c32_i32, %c0_i32_48 : i32
    %c1_i32_49 = arith.constant 1 : i32
    %99 = arith.select %98, %c1_i32_49, %c32_i32 : i32
    %100 = vector.broadcast %99 : i32 to vector<64x1xi32>
    %101 = arith.remsi %97, %100 : vector<64x1xi32>
    %c0_i32_50 = arith.constant 0 : i32
    %102 = vector.broadcast %c0_i32_50 : i32 to vector<64x1xi32>
    %103 = arith.cmpi ne, %101, %102 : vector<64x1xi32>
    %c0_i32_51 = arith.constant 0 : i32
    %104 = vector.broadcast %c0_i32_51 : i32 to vector<64x1xi32>
    %105 = arith.cmpi slt, %101, %104 : vector<64x1xi32>
    %c0_i32_52 = arith.constant 0 : i32
    %106 = arith.cmpi slt, %99, %c0_i32_52 : i32
    %107 = vector.broadcast %106 : i1 to vector<64x1xi1>
    %108 = vector.broadcast %107 : vector<64x1xi1> to vector<64x1xi1>
    %109 = arith.xori %105, %108 : vector<64x1xi1>
    %110 = arith.andi %109, %103 : vector<64x1xi1>
    %111 = vector.broadcast %99 : i32 to vector<64x1xi32>
    %112 = arith.addi %101, %111 : vector<64x1xi32>
    %113 = arith.select %110, %112, %101 : vector<64x1xi1>, vector<64x1xi32>
    %c1_i32_53 = arith.constant 1 : i32
    %114 = vector.broadcast %c1_i32_53 : i32 to vector<64x1xi32>
    %115 = arith.cmpi sge, %113, %114 : vector<64x1xi32>
    %cst_54 = arith.constant 0.000000e+00 : f32
    %116 = vector.shape_cast %115 : vector<64x1xi1> to vector<64x1xi1>
    %117 = vector.broadcast %116 : vector<64x1xi1> to vector<64x8xi1>
    %118 = vector.broadcast %cst_54 : f32 to vector<64x8xf32>
    %119 = arith.select %117, %96, %118 : vector<64x8xi1>, vector<64x8xf32>
    %cst_55 = arith.constant 0.000000e+00 : f32
    %120 = vector.broadcast %cst_55 : f32 to vector<1x8xf32>
    %121 = vector.extract_strided_slice %93 {offsets = [1, 0], sizes = [63, 8], strides = [1, 1]} : vector<64x8xf32> to vector<63x8xf32>
    %122 = tpu.concatenate %121, %120 in 0 : vector<63x8xf32>, vector<1x8xf32> -> vector<64x8xf32>
    %123 = tpu.iota {dimensions = array<i32: 0>} : vector<64x1xi32>
    %c32_i32_56 = arith.constant 32 : i32
    %c0_i32_57 = arith.constant 0 : i32
    %124 = arith.cmpi eq, %c32_i32_56, %c0_i32_57 : i32
    %c1_i32_58 = arith.constant 1 : i32
    %125 = arith.select %124, %c1_i32_58, %c32_i32_56 : i32
    %126 = vector.broadcast %125 : i32 to vector<64x1xi32>
    %127 = arith.remsi %123, %126 : vector<64x1xi32>
    %c0_i32_59 = arith.constant 0 : i32
    %128 = vector.broadcast %c0_i32_59 : i32 to vector<64x1xi32>
    %129 = arith.cmpi ne, %127, %128 : vector<64x1xi32>
    %c0_i32_60 = arith.constant 0 : i32
    %130 = vector.broadcast %c0_i32_60 : i32 to vector<64x1xi32>
    %131 = arith.cmpi slt, %127, %130 : vector<64x1xi32>
    %c0_i32_61 = arith.constant 0 : i32
    %132 = arith.cmpi slt, %125, %c0_i32_61 : i32
    %133 = vector.broadcast %132 : i1 to vector<64x1xi1>
    %134 = vector.broadcast %133 : vector<64x1xi1> to vector<64x1xi1>
    %135 = arith.xori %131, %134 : vector<64x1xi1>
    %136 = arith.andi %135, %129 : vector<64x1xi1>
    %137 = vector.broadcast %125 : i32 to vector<64x1xi32>
    %138 = arith.addi %127, %137 : vector<64x1xi32>
    %139 = arith.select %136, %138, %127 : vector<64x1xi1>, vector<64x1xi32>
    %c31_i32 = arith.constant 31 : i32
    %140 = vector.broadcast %c31_i32 : i32 to vector<64x1xi32>
    %141 = arith.cmpi slt, %139, %140 : vector<64x1xi32>
    %cst_62 = arith.constant 0.000000e+00 : f32
    %142 = vector.shape_cast %141 : vector<64x1xi1> to vector<64x1xi1>
    %143 = vector.broadcast %142 : vector<64x1xi1> to vector<64x8xi1>
    %144 = vector.broadcast %cst_62 : f32 to vector<64x8xf32>
    %145 = arith.select %143, %122, %144 : vector<64x8xi1>, vector<64x8xf32>
    %cst_63 = arith.constant 1.000000e+00 : f32
    %146 = vector.broadcast %cst_63 : f32 to vector<64x1xf32>
    %147 = tpu.concatenate %119, %93, %145, %146 in 1 : vector<64x8xf32>, vector<64x8xf32>, vector<64x8xf32>, vector<64x1xf32> -> vector<64x25xf32>
    %148 = arith.truncf %147 : vector<64x25xf32> to vector<64x25xbf16>
    %c48 = arith.constant 48 : index
    %c0_64 = arith.constant 0 : index
    %149 = vector.load %arg1[%c48, %c0_64] : memref<5168x128xbf16, #tpu.memory_space<vmem>>, vector<25x16xbf16>
    %cst_65 = arith.constant dense<0.000000e+00> : vector<64x16xf32>
    %150 = tpu.matmul %148, %149, %cst_65 {dimension_numbers = #tpu.dot_dimension_numbers<[1], [0], [0], [1], [0, 0, 1, 1], [], []>} : vector<64x25xbf16>, vector<25x16xbf16>, vector<64x16xf32> -> vector<64x16xf32>
    %cst_66 = arith.constant 0.000000e+00 : f32
    %151 = vector.broadcast %cst_66 : f32 to vector<64x16xf32>
    %152 = arith.maximumf %150, %151 : vector<64x16xf32>
    %cst_67 = arith.constant 0.000000e+00 : f32
    %153 = vector.broadcast %cst_67 : f32 to vector<1x16xf32>
    %154 = vector.extract_strided_slice %152 {offsets = [0, 0], sizes = [63, 16], strides = [1, 1]} : vector<64x16xf32> to vector<63x16xf32>
    %155 = tpu.concatenate %153, %154 in 0 : vector<1x16xf32>, vector<63x16xf32> -> vector<64x16xf32>
    %cst_68 = arith.constant 0.000000e+00 : f32
    %156 = vector.shape_cast %115 : vector<64x1xi1> to vector<64x1xi1>
    %157 = vector.broadcast %156 : vector<64x1xi1> to vector<64x16xi1>
    %158 = vector.broadcast %cst_68 : f32 to vector<64x16xf32>
    %159 = arith.select %157, %155, %158 : vector<64x16xi1>, vector<64x16xf32>
    %cst_69 = arith.constant 0.000000e+00 : f32
    %160 = vector.broadcast %cst_69 : f32 to vector<1x16xf32>
    %161 = vector.extract_strided_slice %152 {offsets = [1, 0], sizes = [63, 16], strides = [1, 1]} : vector<64x16xf32> to vector<63x16xf32>
    %162 = tpu.concatenate %161, %160 in 0 : vector<63x16xf32>, vector<1x16xf32> -> vector<64x16xf32>
    %cst_70 = arith.constant 0.000000e+00 : f32
    %163 = vector.shape_cast %141 : vector<64x1xi1> to vector<64x1xi1>
    %164 = vector.broadcast %163 : vector<64x1xi1> to vector<64x16xi1>
    %165 = vector.broadcast %cst_70 : f32 to vector<64x16xf32>
    %166 = arith.select %164, %162, %165 : vector<64x16xi1>, vector<64x16xf32>
    %167 = tpu.concatenate %159, %152, %166, %146 in 1 : vector<64x16xf32>, vector<64x16xf32>, vector<64x16xf32>, vector<64x1xf32> -> vector<64x49xf32>
    %168 = arith.truncf %167 : vector<64x49xf32> to vector<64x49xbf16>
    %c80 = arith.constant 80 : index
    %c0_71 = arith.constant 0 : index
    %169 = vector.load %arg1[%c80, %c0_71] : memref<5168x128xbf16, #tpu.memory_space<vmem>>, vector<49x16xbf16>
    %cst_72 = arith.constant dense<0.000000e+00> : vector<64x16xf32>
    %170 = tpu.matmul %168, %169, %cst_72 {dimension_numbers = #tpu.dot_dimension_numbers<[1], [0], [0], [1], [0, 0, 1, 1], [], []>} : vector<64x49xbf16>, vector<49x16xbf16>, vector<64x16xf32> -> vector<64x16xf32>
    %cst_73 = arith.constant 0.000000e+00 : f32
    %171 = vector.broadcast %cst_73 : f32 to vector<64x16xf32>
    %172 = arith.maximumf %170, %171 : vector<64x16xf32>
    %c0_74 = arith.constant 0 : index
    %c0_75 = arith.constant 0 : index
    %173 = vector.load %arg7[%c0_74, %c0_75] : memref<64x16xf32, #tpu.memory_space<vmem>>, vector<64x16xf32>
    tpu.vector_store %arg7[%c0_74, %c0_75], %172 {strides = array<i32>} : memref<64x16xf32, #tpu.memory_space<vmem>>, vector<64x16xf32>,
    %c0_76 = arith.constant 0 : index
    %c0_77 = arith.constant 0 : index
    %174 = tpu.strided_load %arg7[%c0_76, %c0_77] {strides = array<i32: 2, 1>} : memref<64x16xf32, #tpu.memory_space<vmem>>, vector<32x16xf32>
    %c1_78 = arith.constant 1 : index
    %c0_79 = arith.constant 0 : index
    %175 = tpu.strided_load %arg7[%c1_78, %c0_79] {strides = array<i32: 2, 1>} : memref<64x16xf32, #tpu.memory_space<vmem>>, vector<32x16xf32>
    %176 = arith.maximumf %174, %175 : vector<32x16xf32>
    %c0_80 = arith.constant 0 : index
    %c0_81 = arith.constant 0 : index
    %177 = vector.load %arg8[%c0_80, %c0_81] : memref<32x16xf32, #tpu.memory_space<vmem>>, vector<32x16xf32>
    tpu.vector_store %arg8[%c0_80, %c0_81], %176 {strides = array<i32>} : memref<32x16xf32, #tpu.memory_space<vmem>>, vector<32x16xf32>,
    %c0_82 = arith.constant 0 : index
    %c0_83 = arith.constant 0 : index
    %178 = tpu.strided_load %arg8[%c0_82, %c0_83] {strides = array<i32: 2, 1>} : memref<32x16xf32, #tpu.memory_space<vmem>>, vector<16x16xf32>
    %c1_84 = arith.constant 1 : index
    %c0_85 = arith.constant 0 : index
    %179 = tpu.strided_load %arg8[%c1_84, %c0_85] {strides = array<i32: 2, 1>} : memref<32x16xf32, #tpu.memory_space<vmem>>, vector<16x16xf32>
    %180 = arith.maximumf %178, %179 : vector<16x16xf32>
    %c0_86 = arith.constant 0 : index
    %c0_87 = arith.constant 0 : index
    %181 = vector.load %arg9[%c0_86, %c0_87] : memref<16x16xf32, #tpu.memory_space<vmem>>, vector<16x16xf32>
    tpu.vector_store %arg9[%c0_86, %c0_87], %180 {strides = array<i32>} : memref<16x16xf32, #tpu.memory_space<vmem>>, vector<16x16xf32>,
    %c0_88 = arith.constant 0 : index
    %c0_89 = arith.constant 0 : index
    %182 = vector.load %arg8[%c0_88, %c0_89] : memref<32x16xf32, #tpu.memory_space<vmem>>, vector<32x16xf32>
    %cst_90 = arith.constant 0.000000e+00 : f32
    %183 = vector.broadcast %cst_90 : f32 to vector<1x16xf32>
    %184 = vector.extract_strided_slice %182 {offsets = [0, 0], sizes = [31, 16], strides = [1, 1]} : vector<32x16xf32> to vector<31x16xf32>
    %185 = tpu.concatenate %183, %184 in 0 : vector<1x16xf32>, vector<31x16xf32> -> vector<32x16xf32>
    %186 = tpu.iota {dimensions = array<i32: 0>} : vector<32x1xi32>
    %c16_i32 = arith.constant 16 : i32
    %c0_i32_91 = arith.constant 0 : i32
    %187 = arith.cmpi eq, %c16_i32, %c0_i32_91 : i32
    %c1_i32_92 = arith.constant 1 : i32
    %188 = arith.select %187, %c1_i32_92, %c16_i32 : i32
    %189 = vector.broadcast %188 : i32 to vector<32x1xi32>
    %190 = arith.remsi %186, %189 : vector<32x1xi32>
    %c0_i32_93 = arith.constant 0 : i32
    %191 = vector.broadcast %c0_i32_93 : i32 to vector<32x1xi32>
    %192 = arith.cmpi ne, %190, %191 : vector<32x1xi32>
    %c0_i32_94 = arith.constant 0 : i32
    %193 = vector.broadcast %c0_i32_94 : i32 to vector<32x1xi32>
    %194 = arith.cmpi slt, %190, %193 : vector<32x1xi32>
    %c0_i32_95 = arith.constant 0 : i32
    %195 = arith.cmpi slt, %188, %c0_i32_95 : i32
    %196 = vector.broadcast %195 : i1 to vector<32x1xi1>
    %197 = vector.broadcast %196 : vector<32x1xi1> to vector<32x1xi1>
    %198 = arith.xori %194, %197 : vector<32x1xi1>
    %199 = arith.andi %198, %192 : vector<32x1xi1>
    %200 = vector.broadcast %188 : i32 to vector<32x1xi32>
    %201 = arith.addi %190, %200 : vector<32x1xi32>
    %202 = arith.select %199, %201, %190 : vector<32x1xi1>, vector<32x1xi32>
    %c1_i32_96 = arith.constant 1 : i32
    %203 = vector.broadcast %c1_i32_96 : i32 to vector<32x1xi32>
    %204 = arith.cmpi sge, %202, %203 : vector<32x1xi32>
    %cst_97 = arith.constant 0.000000e+00 : f32
    %205 = vector.shape_cast %204 : vector<32x1xi1> to vector<32x1xi1>
    %206 = vector.broadcast %205 : vector<32x1xi1> to vector<32x16xi1>
    %207 = vector.broadcast %cst_97 : f32 to vector<32x16xf32>
    %208 = arith.select %206, %185, %207 : vector<32x16xi1>, vector<32x16xf32>
    %cst_98 = arith.constant 0.000000e+00 : f32
    %209 = vector.broadcast %cst_98 : f32 to vector<1x16xf32>
    %210 = vector.extract_strided_slice %182 {offsets = [1, 0], sizes = [31, 16], strides = [1, 1]} : vector<32x16xf32> to vector<31x16xf32>
    %211 = tpu.concatenate %210, %209 in 0 : vector<31x16xf32>, vector<1x16xf32> -> vector<32x16xf32>
    %212 = tpu.iota {dimensions = array<i32: 0>} : vector<32x1xi32>
    %c16_i32_99 = arith.constant 16 : i32
    %c0_i32_100 = arith.constant 0 : i32
    %213 = arith.cmpi eq, %c16_i32_99, %c0_i32_100 : i32
    %c1_i32_101 = arith.constant 1 : i32
    %214 = arith.select %213, %c1_i32_101, %c16_i32_99 : i32
    %215 = vector.broadcast %214 : i32 to vector<32x1xi32>
    %216 = arith.remsi %212, %215 : vector<32x1xi32>
    %c0_i32_102 = arith.constant 0 : i32
    %217 = vector.broadcast %c0_i32_102 : i32 to vector<32x1xi32>
    %218 = arith.cmpi ne, %216, %217 : vector<32x1xi32>
    %c0_i32_103 = arith.constant 0 : i32
    %219 = vector.broadcast %c0_i32_103 : i32 to vector<32x1xi32>
    %220 = arith.cmpi slt, %216, %219 : vector<32x1xi32>
    %c0_i32_104 = arith.constant 0 : i32
    %221 = arith.cmpi slt, %214, %c0_i32_104 : i32
    %222 = vector.broadcast %221 : i1 to vector<32x1xi1>
    %223 = vector.broadcast %222 : vector<32x1xi1> to vector<32x1xi1>
    %224 = arith.xori %220, %223 : vector<32x1xi1>
    %225 = arith.andi %224, %218 : vector<32x1xi1>
    %226 = vector.broadcast %214 : i32 to vector<32x1xi32>
    %227 = arith.addi %216, %226 : vector<32x1xi32>
    %228 = arith.select %225, %227, %216 : vector<32x1xi1>, vector<32x1xi32>
    %c15_i32 = arith.constant 15 : i32
    %229 = vector.broadcast %c15_i32 : i32 to vector<32x1xi32>
    %230 = arith.cmpi slt, %228, %229 : vector<32x1xi32>
    %cst_105 = arith.constant 0.000000e+00 : f32
    %231 = vector.shape_cast %230 : vector<32x1xi1> to vector<32x1xi1>
    %232 = vector.broadcast %231 : vector<32x1xi1> to vector<32x16xi1>
    %233 = vector.broadcast %cst_105 : f32 to vector<32x16xf32>
    %234 = arith.select %232, %211, %233 : vector<32x16xi1>, vector<32x16xf32>
    %cst_106 = arith.constant 1.000000e+00 : f32
    %235 = vector.broadcast %cst_106 : f32 to vector<32x1xf32>
    %236 = tpu.concatenate %208, %182, %234, %235 in 1 : vector<32x16xf32>, vector<32x16xf32>, vector<32x16xf32>, vector<32x1xf32> -> vector<32x49xf32>
    %237 = arith.truncf %236 : vector<32x49xf32> to vector<32x49xbf16>
    %c144 = arith.constant 144 : index
    %c0_107 = arith.constant 0 : index
    %238 = vector.load %arg1[%c144, %c0_107] : memref<5168x128xbf16, #tpu.memory_space<vmem>>, vector<49x32xbf16>
    %cst_108 = arith.constant dense<0.000000e+00> : vector<32x32xf32>
    %239 = tpu.matmul %237, %238, %cst_108 {dimension_numbers = #tpu.dot_dimension_numbers<[1], [0], [0], [1], [0, 0, 1, 1], [], []>} : vector<32x49xbf16>, vector<49x32xbf16>, vector<32x32xf32> -> vector<32x32xf32>
    %cst_109 = arith.constant 0.000000e+00 : f32
    %240 = vector.broadcast %cst_109 : f32 to vector<32x32xf32>
    %241 = arith.maximumf %239, %240 : vector<32x32xf32>
    %cst_110 = arith.constant 0.000000e+00 : f32
    %242 = vector.broadcast %cst_110 : f32 to vector<1x32xf32>
    %243 = vector.extract_strided_slice %241 {offsets = [0, 0], sizes = [31, 32], strides = [1, 1]} : vector<32x32xf32> to vector<31x32xf32>
    %244 = tpu.concatenate %242, %243 in 0 : vector<1x32xf32>, vector<31x32xf32> -> vector<32x32xf32>
    %cst_111 = arith.constant 0.000000e+00 : f32
    %245 = vector.shape_cast %204 : vector<32x1xi1> to vector<32x1xi1>
    %246 = vector.broadcast %245 : vector<32x1xi1> to vector<32x32xi1>
    %247 = vector.broadcast %cst_111 : f32 to vector<32x32xf32>
    %248 = arith.select %246, %244, %247 : vector<32x32xi1>, vector<32x32xf32>
    %cst_112 = arith.constant 0.000000e+00 : f32
    %249 = vector.broadcast %cst_112 : f32 to vector<1x32xf32>
    %250 = vector.extract_strided_slice %241 {offsets = [1, 0], sizes = [31, 32], strides = [1, 1]} : vector<32x32xf32> to vector<31x32xf32>
    %251 = tpu.concatenate %250, %249 in 0 : vector<31x32xf32>, vector<1x32xf32> -> vector<32x32xf32>
    %cst_113 = arith.constant 0.000000e+00 : f32
    %252 = vector.shape_cast %230 : vector<32x1xi1> to vector<32x1xi1>
    %253 = vector.broadcast %252 : vector<32x1xi1> to vector<32x32xi1>
    %254 = vector.broadcast %cst_113 : f32 to vector<32x32xf32>
    %255 = arith.select %253, %251, %254 : vector<32x32xi1>, vector<32x32xf32>
    %256 = tpu.concatenate %248, %241, %255, %235 in 1 : vector<32x32xf32>, vector<32x32xf32>, vector<32x32xf32>, vector<32x1xf32> -> vector<32x97xf32>
    %257 = arith.truncf %256 : vector<32x97xf32> to vector<32x97xbf16>
    %c208 = arith.constant 208 : index
    %c0_114 = arith.constant 0 : index
    %258 = vector.load %arg1[%c208, %c0_114] : memref<5168x128xbf16, #tpu.memory_space<vmem>>, vector<97x32xbf16>
    %cst_115 = arith.constant dense<0.000000e+00> : vector<32x32xf32>
    %259 = tpu.matmul %257, %258, %cst_115 {dimension_numbers = #tpu.dot_dimension_numbers<[1], [0], [0], [1], [0, 0, 1, 1], [], []>} : vector<32x97xbf16>, vector<97x32xbf16>, vector<32x32xf32> -> vector<32x32xf32>
    %cst_116 = arith.constant 0.000000e+00 : f32
    %260 = vector.broadcast %cst_116 : f32 to vector<32x32xf32>
    %261 = arith.maximumf %259, %260 : vector<32x32xf32>
    %c0_117 = arith.constant 0 : index
    %c0_118 = arith.constant 0 : index
    %262 = vector.load %arg10[%c0_117, %c0_118] : memref<32x32xf32, #tpu.memory_space<vmem>>, vector<32x32xf32>
    tpu.vector_store %arg10[%c0_117, %c0_118], %261 {strides = array<i32>} : memref<32x32xf32, #tpu.memory_space<vmem>>, vector<32x32xf32>,
    %c0_119 = arith.constant 0 : index
    %c0_120 = arith.constant 0 : index
    %263 = tpu.strided_load %arg10[%c0_119, %c0_120] {strides = array<i32: 2, 1>} : memref<32x32xf32, #tpu.memory_space<vmem>>, vector<16x32xf32>
    %c1_121 = arith.constant 1 : index
    %c0_122 = arith.constant 0 : index
    %264 = tpu.strided_load %arg10[%c1_121, %c0_122] {strides = array<i32: 2, 1>} : memref<32x32xf32, #tpu.memory_space<vmem>>, vector<16x32xf32>
    %265 = arith.maximumf %263, %264 : vector<16x32xf32>
    %c0_123 = arith.constant 0 : index
    %c0_124 = arith.constant 0 : index
    %266 = vector.load %arg11[%c0_123, %c0_124] : memref<16x32xf32, #tpu.memory_space<vmem>>, vector<16x32xf32>
    tpu.vector_store %arg11[%c0_123, %c0_124], %265 {strides = array<i32>} : memref<16x32xf32, #tpu.memory_space<vmem>>, vector<16x32xf32>,
    %c0_125 = arith.constant 0 : index
    %c0_126 = arith.constant 0 : index
    %267 = vector.load %arg11[%c0_125, %c0_126] : memref<16x32xf32, #tpu.memory_space<vmem>>, vector<16x32xf32>
    %cst_127 = arith.constant 0.000000e+00 : f32
    %268 = vector.broadcast %cst_127 : f32 to vector<1x32xf32>
    %269 = vector.extract_strided_slice %267 {offsets = [0, 0], sizes = [15, 32], strides = [1, 1]} : vector<16x32xf32> to vector<15x32xf32>
    %270 = tpu.concatenate %268, %269 in 0 : vector<1x32xf32>, vector<15x32xf32> -> vector<16x32xf32>
    %271 = tpu.iota {dimensions = array<i32: 0>} : vector<16x1xi32>
    %c8_i32 = arith.constant 8 : i32
    %c0_i32_128 = arith.constant 0 : i32
    %272 = arith.cmpi eq, %c8_i32, %c0_i32_128 : i32
    %c1_i32_129 = arith.constant 1 : i32
    %273 = arith.select %272, %c1_i32_129, %c8_i32 : i32
    %274 = vector.broadcast %273 : i32 to vector<16x1xi32>
    %275 = arith.remsi %271, %274 : vector<16x1xi32>
    %c0_i32_130 = arith.constant 0 : i32
    %276 = vector.broadcast %c0_i32_130 : i32 to vector<16x1xi32>
    %277 = arith.cmpi ne, %275, %276 : vector<16x1xi32>
    %c0_i32_131 = arith.constant 0 : i32
    %278 = vector.broadcast %c0_i32_131 : i32 to vector<16x1xi32>
    %279 = arith.cmpi slt, %275, %278 : vector<16x1xi32>
    %c0_i32_132 = arith.constant 0 : i32
    %280 = arith.cmpi slt, %273, %c0_i32_132 : i32
    %281 = vector.broadcast %280 : i1 to vector<16x1xi1>
    %282 = vector.broadcast %281 : vector<16x1xi1> to vector<16x1xi1>
    %283 = arith.xori %279, %282 : vector<16x1xi1>
    %284 = arith.andi %283, %277 : vector<16x1xi1>
    %285 = vector.broadcast %273 : i32 to vector<16x1xi32>
    %286 = arith.addi %275, %285 : vector<16x1xi32>
    %287 = arith.select %284, %286, %275 : vector<16x1xi1>, vector<16x1xi32>
    %c1_i32_133 = arith.constant 1 : i32
    %288 = vector.broadcast %c1_i32_133 : i32 to vector<16x1xi32>
    %289 = arith.cmpi sge, %287, %288 : vector<16x1xi32>
    %cst_134 = arith.constant 0.000000e+00 : f32
    %290 = vector.shape_cast %289 : vector<16x1xi1> to vector<16x1xi1>
    %291 = vector.broadcast %290 : vector<16x1xi1> to vector<16x32xi1>
    %292 = vector.broadcast %cst_134 : f32 to vector<16x32xf32>
    %293 = arith.select %291, %270, %292 : vector<16x32xi1>, vector<16x32xf32>
    %cst_135 = arith.constant 0.000000e+00 : f32
    %294 = vector.broadcast %cst_135 : f32 to vector<1x32xf32>
    %295 = vector.extract_strided_slice %267 {offsets = [1, 0], sizes = [15, 32], strides = [1, 1]} : vector<16x32xf32> to vector<15x32xf32>
    %296 = tpu.concatenate %295, %294 in 0 : vector<15x32xf32>, vector<1x32xf32> -> vector<16x32xf32>
    %297 = tpu.iota {dimensions = array<i32: 0>} : vector<16x1xi32>
    %c8_i32_136 = arith.constant 8 : i32
    %c0_i32_137 = arith.constant 0 : i32
    %298 = arith.cmpi eq, %c8_i32_136, %c0_i32_137 : i32
    %c1_i32_138 = arith.constant 1 : i32
    %299 = arith.select %298, %c1_i32_138, %c8_i32_136 : i32
    %300 = vector.broadcast %299 : i32 to vector<16x1xi32>
    %301 = arith.remsi %297, %300 : vector<16x1xi32>
    %c0_i32_139 = arith.constant 0 : i32
    %302 = vector.broadcast %c0_i32_139 : i32 to vector<16x1xi32>
    %303 = arith.cmpi ne, %301, %302 : vector<16x1xi32>
    %c0_i32_140 = arith.constant 0 : i32
    %304 = vector.broadcast %c0_i32_140 : i32 to vector<16x1xi32>
    %305 = arith.cmpi slt, %301, %304 : vector<16x1xi32>
    %c0_i32_141 = arith.constant 0 : i32
    %306 = arith.cmpi slt, %299, %c0_i32_141 : i32
    %307 = vector.broadcast %306 : i1 to vector<16x1xi1>
    %308 = vector.broadcast %307 : vector<16x1xi1> to vector<16x1xi1>
    %309 = arith.xori %305, %308 : vector<16x1xi1>
    %310 = arith.andi %309, %303 : vector<16x1xi1>
    %311 = vector.broadcast %299 : i32 to vector<16x1xi32>
    %312 = arith.addi %301, %311 : vector<16x1xi32>
    %313 = arith.select %310, %312, %301 : vector<16x1xi1>, vector<16x1xi32>
    %c7_i32 = arith.constant 7 : i32
    %314 = vector.broadcast %c7_i32 : i32 to vector<16x1xi32>
    %315 = arith.cmpi slt, %313, %314 : vector<16x1xi32>
    %cst_142 = arith.constant 0.000000e+00 : f32
    %316 = vector.shape_cast %315 : vector<16x1xi1> to vector<16x1xi1>
    %317 = vector.broadcast %316 : vector<16x1xi1> to vector<16x32xi1>
    %318 = vector.broadcast %cst_142 : f32 to vector<16x32xf32>
    %319 = arith.select %317, %296, %318 : vector<16x32xi1>, vector<16x32xf32>
    %cst_143 = arith.constant 1.000000e+00 : f32
    %320 = vector.broadcast %cst_143 : f32 to vector<16x1xf32>
    %321 = tpu.concatenate %293, %267, %319, %320 in 1 : vector<16x32xf32>, vector<16x32xf32>, vector<16x32xf32>, vector<16x1xf32> -> vector<16x97xf32>
    %322 = arith.truncf %321 : vector<16x97xf32> to vector<16x97xbf16>
    %c320 = arith.constant 320 : index
    %c0_144 = arith.constant 0 : index
    %323 = vector.load %arg1[%c320, %c0_144] : memref<5168x128xbf16, #tpu.memory_space<vmem>>, vector<97x64xbf16>
    %cst_145 = arith.constant dense<0.000000e+00> : vector<16x64xf32>
    %324 = tpu.matmul %322, %323, %cst_145 {dimension_numbers = #tpu.dot_dimension_numbers<[1], [0], [0], [1], [0, 0, 1, 1], [], []>} : vector<16x97xbf16>, vector<97x64xbf16>, vector<16x64xf32> -> vector<16x64xf32>
    %cst_146 = arith.constant 0.000000e+00 : f32
    %325 = vector.broadcast %cst_146 : f32 to vector<16x64xf32>
    %326 = arith.maximumf %324, %325 : vector<16x64xf32>
    %cst_147 = arith.constant 0.000000e+00 : f32
    %327 = vector.broadcast %cst_147 : f32 to vector<1x64xf32>
    %328 = vector.extract_strided_slice %326 {offsets = [0, 0], sizes = [15, 64], strides = [1, 1]} : vector<16x64xf32> to vector<15x64xf32>
    %329 = tpu.concatenate %327, %328 in 0 : vector<1x64xf32>, vector<15x64xf32> -> vector<16x64xf32>
    %cst_148 = arith.constant 0.000000e+00 : f32
    %330 = vector.shape_cast %289 : vector<16x1xi1> to vector<16x1xi1>
    %331 = vector.broadcast %330 : vector<16x1xi1> to vector<16x64xi1>
    %332 = vector.broadcast %cst_148 : f32 to vector<16x64xf32>
    %333 = arith.select %331, %329, %332 : vector<16x64xi1>, vector<16x64xf32>
    %cst_149 = arith.constant 0.000000e+00 : f32
    %334 = vector.broadcast %cst_149 : f32 to vector<1x64xf32>
    %335 = vector.extract_strided_slice %326 {offsets = [1, 0], sizes = [15, 64], strides = [1, 1]} : vector<16x64xf32> to vector<15x64xf32>
    %336 = tpu.concatenate %335, %334 in 0 : vector<15x64xf32>, vector<1x64xf32> -> vector<16x64xf32>
    %cst_150 = arith.constant 0.000000e+00 : f32
    %337 = vector.shape_cast %315 : vector<16x1xi1> to vector<16x1xi1>
    %338 = vector.broadcast %337 : vector<16x1xi1> to vector<16x64xi1>
    %339 = vector.broadcast %cst_150 : f32 to vector<16x64xf32>
    %340 = arith.select %338, %336, %339 : vector<16x64xi1>, vector<16x64xf32>
    %341 = tpu.concatenate %333, %326, %340, %320 in 1 : vector<16x64xf32>, vector<16x64xf32>, vector<16x64xf32>, vector<16x1xf32> -> vector<16x193xf32>
    %342 = arith.truncf %341 : vector<16x193xf32> to vector<16x193xbf16>
    %c432 = arith.constant 432 : index
    %c0_151 = arith.constant 0 : index
    %343 = vector.load %arg1[%c432, %c0_151] : memref<5168x128xbf16, #tpu.memory_space<vmem>>, vector<193x64xbf16>
    %cst_152 = arith.constant dense<0.000000e+00> : vector<16x64xf32>
    %344 = tpu.matmul %342, %343, %cst_152 {dimension_numbers = #tpu.dot_dimension_numbers<[1], [0], [0], [1], [0, 0, 1, 1], [], []>} : vector<16x193xbf16>, vector<193x64xbf16>, vector<16x64xf32> -> vector<16x64xf32>
    %cst_153 = arith.constant 0.000000e+00 : f32
    %345 = vector.broadcast %cst_153 : f32 to vector<16x64xf32>
    %346 = arith.maximumf %344, %345 : vector<16x64xf32>
    %c0_154 = arith.constant 0 : index
    %c0_155 = arith.constant 0 : index
    %347 = vector.load %arg12[%c0_154, %c0_155] : memref<16x64xf32, #tpu.memory_space<vmem>>, vector<16x64xf32>
    tpu.vector_store %arg12[%c0_154, %c0_155], %346 {strides = array<i32>} : memref<16x64xf32, #tpu.memory_space<vmem>>, vector<16x64xf32>,
    %c0_156 = arith.constant 0 : index
    %c0_157 = arith.constant 0 : index
    %348 = tpu.strided_load %arg12[%c0_156, %c0_157] {strides = array<i32: 2, 1>} : memref<16x64xf32, #tpu.memory_space<vmem>>, vector<8x64xf32>
    %c1_158 = arith.constant 1 : index
    %c0_159 = arith.constant 0 : index
    %349 = tpu.strided_load %arg12[%c1_158, %c0_159] {strides = array<i32: 2, 1>} : memref<16x64xf32, #tpu.memory_space<vmem>>, vector<8x64xf32>
    %350 = arith.maximumf %348, %349 : vector<8x64xf32>
    %cst_160 = arith.constant 0.000000e+00 : f32
    %351 = vector.broadcast %cst_160 : f32 to vector<1x64xf32>
    %352 = vector.extract_strided_slice %350 {offsets = [0, 0], sizes = [7, 64], strides = [1, 1]} : vector<8x64xf32> to vector<7x64xf32>
    %353 = tpu.concatenate %351, %352 in 0 : vector<1x64xf32>, vector<7x64xf32> -> vector<8x64xf32>
    %354 = tpu.iota {dimensions = array<i32: 0>} : vector<8x1xi32>
    %c4_i32 = arith.constant 4 : i32
    %c0_i32_161 = arith.constant 0 : i32
    %355 = arith.cmpi eq, %c4_i32, %c0_i32_161 : i32
    %c1_i32_162 = arith.constant 1 : i32
    %356 = arith.select %355, %c1_i32_162, %c4_i32 : i32
    %357 = vector.broadcast %356 : i32 to vector<8x1xi32>
    %358 = arith.remsi %354, %357 : vector<8x1xi32>
    %c0_i32_163 = arith.constant 0 : i32
    %359 = vector.broadcast %c0_i32_163 : i32 to vector<8x1xi32>
    %360 = arith.cmpi ne, %358, %359 : vector<8x1xi32>
    %c0_i32_164 = arith.constant 0 : i32
    %361 = vector.broadcast %c0_i32_164 : i32 to vector<8x1xi32>
    %362 = arith.cmpi slt, %358, %361 : vector<8x1xi32>
    %c0_i32_165 = arith.constant 0 : i32
    %363 = arith.cmpi slt, %356, %c0_i32_165 : i32
    %364 = vector.broadcast %363 : i1 to vector<8x1xi1>
    %365 = vector.broadcast %364 : vector<8x1xi1> to vector<8x1xi1>
    %366 = arith.xori %362, %365 : vector<8x1xi1>
    %367 = arith.andi %366, %360 : vector<8x1xi1>
    %368 = vector.broadcast %356 : i32 to vector<8x1xi32>
    %369 = arith.addi %358, %368 : vector<8x1xi32>
    %370 = arith.select %367, %369, %358 : vector<8x1xi1>, vector<8x1xi32>
    %c1_i32_166 = arith.constant 1 : i32
    %371 = vector.broadcast %c1_i32_166 : i32 to vector<8x1xi32>
    %372 = arith.cmpi sge, %370, %371 : vector<8x1xi32>
    %cst_167 = arith.constant 0.000000e+00 : f32
    %373 = vector.shape_cast %372 : vector<8x1xi1> to vector<8x1xi1>
    %374 = vector.broadcast %373 : vector<8x1xi1> to vector<8x64xi1>
    %375 = vector.broadcast %cst_167 : f32 to vector<8x64xf32>
    %376 = arith.select %374, %353, %375 : vector<8x64xi1>, vector<8x64xf32>
    %cst_168 = arith.constant 0.000000e+00 : f32
    %377 = vector.broadcast %cst_168 : f32 to vector<1x64xf32>
    %378 = vector.extract_strided_slice %350 {offsets = [1, 0], sizes = [7, 64], strides = [1, 1]} : vector<8x64xf32> to vector<7x64xf32>
    %379 = tpu.concatenate %378, %377 in 0 : vector<7x64xf32>, vector<1x64xf32> -> vector<8x64xf32>
    %380 = tpu.iota {dimensions = array<i32: 0>} : vector<8x1xi32>
    %c4_i32_169 = arith.constant 4 : i32
    %c0_i32_170 = arith.constant 0 : i32
    %381 = arith.cmpi eq, %c4_i32_169, %c0_i32_170 : i32
    %c1_i32_171 = arith.constant 1 : i32
    %382 = arith.select %381, %c1_i32_171, %c4_i32_169 : i32
    %383 = vector.broadcast %382 : i32 to vector<8x1xi32>
    %384 = arith.remsi %380, %383 : vector<8x1xi32>
    %c0_i32_172 = arith.constant 0 : i32
    %385 = vector.broadcast %c0_i32_172 : i32 to vector<8x1xi32>
    %386 = arith.cmpi ne, %384, %385 : vector<8x1xi32>
    %c0_i32_173 = arith.constant 0 : i32
    %387 = vector.broadcast %c0_i32_173 : i32 to vector<8x1xi32>
    %388 = arith.cmpi slt, %384, %387 : vector<8x1xi32>
    %c0_i32_174 = arith.constant 0 : i32
    %389 = arith.cmpi slt, %382, %c0_i32_174 : i32
    %390 = vector.broadcast %389 : i1 to vector<8x1xi1>
    %391 = vector.broadcast %390 : vector<8x1xi1> to vector<8x1xi1>
    %392 = arith.xori %388, %391 : vector<8x1xi1>
    %393 = arith.andi %392, %386 : vector<8x1xi1>
    %394 = vector.broadcast %382 : i32 to vector<8x1xi32>
    %395 = arith.addi %384, %394 : vector<8x1xi32>
    %396 = arith.select %393, %395, %384 : vector<8x1xi1>, vector<8x1xi32>
    %c3_i32 = arith.constant 3 : i32
    %397 = vector.broadcast %c3_i32 : i32 to vector<8x1xi32>
    %398 = arith.cmpi slt, %396, %397 : vector<8x1xi32>
    %cst_175 = arith.constant 0.000000e+00 : f32
    %399 = vector.shape_cast %398 : vector<8x1xi1> to vector<8x1xi1>
    %400 = vector.broadcast %399 : vector<8x1xi1> to vector<8x64xi1>
    %401 = vector.broadcast %cst_175 : f32 to vector<8x64xf32>
    %402 = arith.select %400, %379, %401 : vector<8x64xi1>, vector<8x64xf32>
    %cst_176 = arith.constant 1.000000e+00 : f32
    %403 = vector.broadcast %cst_176 : f32 to vector<8x1xf32>
    %404 = tpu.concatenate %376, %350, %402, %403 in 1 : vector<8x64xf32>, vector<8x64xf32>, vector<8x64xf32>, vector<8x1xf32> -> vector<8x193xf32>
    %405 = arith.truncf %404 : vector<8x193xf32> to vector<8x193xbf16>
    %c640 = arith.constant 640 : index
    %c0_177 = arith.constant 0 : index
    %406 = vector.load %arg1[%c640, %c0_177] : memref<5168x128xbf16, #tpu.memory_space<vmem>>, vector<193x128xbf16>
    %cst_178 = arith.constant dense<0.000000e+00> : vector<8x128xf32>
    %407 = tpu.matmul %405, %406, %cst_178 {dimension_numbers = #tpu.dot_dimension_numbers<[1], [0], [0], [1], [0, 0, 1, 1], [], []>} : vector<8x193xbf16>, vector<193x128xbf16>, vector<8x128xf32> -> vector<8x128xf32>
    %cst_179 = arith.constant 0.000000e+00 : f32
    %408 = vector.broadcast %cst_179 : f32 to vector<8x128xf32>
    %409 = arith.maximumf %407, %408 : vector<8x128xf32>
    %cst_180 = arith.constant 0.000000e+00 : f32
    %410 = vector.broadcast %cst_180 : f32 to vector<1x128xf32>
    %411 = vector.extract_strided_slice %409 {offsets = [0, 0], sizes = [7, 128], strides = [1, 1]} : vector<8x128xf32> to vector<7x128xf32>
    %412 = tpu.concatenate %410, %411 in 0 : vector<1x128xf32>, vector<7x128xf32> -> vector<8x128xf32>
    %cst_181 = arith.constant 0.000000e+00 : f32
    %413 = vector.shape_cast %372 : vector<8x1xi1> to vector<8x1xi1>
    %414 = vector.broadcast %413 : vector<8x1xi1> to vector<8x128xi1>
    %415 = vector.broadcast %cst_181 : f32 to vector<8x128xf32>
    %416 = arith.select %414, %412, %415 : vector<8x128xi1>, vector<8x128xf32>
    %cst_182 = arith.constant 0.000000e+00 : f32
    %417 = vector.broadcast %cst_182 : f32 to vector<1x128xf32>
    %418 = vector.extract_strided_slice %409 {offsets = [1, 0], sizes = [7, 128], strides = [1, 1]} : vector<8x128xf32> to vector<7x128xf32>
    %419 = tpu.concatenate %418, %417 in 0 : vector<7x128xf32>, vector<1x128xf32> -> vector<8x128xf32>
    %cst_183 = arith.constant 0.000000e+00 : f32
    %420 = vector.shape_cast %398 : vector<8x1xi1> to vector<8x1xi1>
    %421 = vector.broadcast %420 : vector<8x1xi1> to vector<8x128xi1>
    %422 = vector.broadcast %cst_183 : f32 to vector<8x128xf32>
    %423 = arith.select %421, %419, %422 : vector<8x128xi1>, vector<8x128xf32>
    %424 = tpu.concatenate %416, %409, %423, %403 in 1 : vector<8x128xf32>, vector<8x128xf32>, vector<8x128xf32>, vector<8x1xf32> -> vector<8x385xf32>
    %425 = arith.truncf %424 : vector<8x385xf32> to vector<8x385xbf16>
    %c848 = arith.constant 848 : index
    %c0_184 = arith.constant 0 : index
    %426 = vector.load %arg1[%c848, %c0_184] : memref<5168x128xbf16, #tpu.memory_space<vmem>>, vector<385x128xbf16>
    %cst_185 = arith.constant dense<0.000000e+00> : vector<8x128xf32>
    %427 = tpu.matmul %425, %426, %cst_185 {dimension_numbers = #tpu.dot_dimension_numbers<[1], [0], [0], [1], [0, 0, 1, 1], [], []>} : vector<8x385xbf16>, vector<385x128xbf16>, vector<8x128xf32> -> vector<8x128xf32>
    %cst_186 = arith.constant 0.000000e+00 : f32
    %428 = vector.broadcast %cst_186 : f32 to vector<8x128xf32>
    %429 = arith.maximumf %427, %428 : vector<8x128xf32>
    %c0_187 = arith.constant 0 : index
    %c0_188 = arith.constant 0 : index
    %430 = vector.load %arg13[%c0_187, %c0_188] : memref<8x128xf32, #tpu.memory_space<vmem>>, vector<8x128xf32>
    tpu.vector_store %arg13[%c0_187, %c0_188], %429 {strides = array<i32>} : memref<8x128xf32, #tpu.memory_space<vmem>>, vector<8x128xf32>,
    %c0_189 = arith.constant 0 : index
    %c0_190 = arith.constant 0 : index
    %431 = vector.load %arg6[%c0_189, %c0_190] : memref<16x8xf32, #tpu.memory_space<vmem>>, vector<16x8xf32>
    %c0_191 = arith.constant 0 : index
    %c0_192 = arith.constant 0 : index
    %432 = vector.load %arg9[%c0_191, %c0_192] : memref<16x16xf32, #tpu.memory_space<vmem>>, vector<16x16xf32>
    %c0_193 = arith.constant 0 : index
    %c0_194 = arith.constant 0 : index
    %433 = vector.load %arg11[%c0_193, %c0_194] : memref<16x32xf32, #tpu.memory_space<vmem>>, vector<16x32xf32>
    %c0_195 = arith.constant 0 : index
    %c0_196 = arith.constant 0 : index
    %434 = vector.load %arg12[%c0_195, %c0_196] : memref<16x64xf32, #tpu.memory_space<vmem>>, vector<16x64xf32>
    %c4768 = arith.constant 4768 : index
    %c0_197 = arith.constant 0 : index
    %435 = vector.load %arg1[%c4768, %c0_197] : memref<5168x128xbf16, #tpu.memory_space<vmem>>, vector<8x4xbf16>
    %c0_198 = arith.constant 0 : index
    %c0_199 = arith.constant 0 : index
    %436 = vector.load %arg13[%c0_198, %c0_199] : memref<8x128xf32, #tpu.memory_space<vmem>>, vector<4x128xf32>
    %437 = arith.truncf %436 : vector<4x128xf32> to vector<4x128xbf16>
    %cst_200 = arith.constant dense<0.000000e+00> : vector<8x128xf32>
    %438 = tpu.matmul %435, %437, %cst_200 {dimension_numbers = #tpu.dot_dimension_numbers<[1], [0], [0], [1], [0, 0, 1, 1], [], []>} : vector<8x4xbf16>, vector<4x128xbf16>, vector<8x128xf32> -> vector<8x128xf32>
    %c4 = arith.constant 4 : index
    %c0_201 = arith.constant 0 : index
    %439 = vector.load %arg13[%c4, %c0_201] : memref<8x128xf32, #tpu.memory_space<vmem>>, vector<4x128xf32>
    %440 = arith.truncf %439 : vector<4x128xf32> to vector<4x128xbf16>
    %cst_202 = arith.constant dense<0.000000e+00> : vector<8x128xf32>
    %441 = tpu.matmul %435, %440, %cst_202 {dimension_numbers = #tpu.dot_dimension_numbers<[1], [0], [0], [1], [0, 0, 1, 1], [], []>} : vector<8x4xbf16>, vector<4x128xbf16>, vector<8x128xf32> -> vector<8x128xf32>
    %442 = tpu.concatenate %438, %441 in 0 : vector<8x128xf32>, vector<8x128xf32> -> vector<16x128xf32>
    %443 = tpu.concatenate %431, %432, %433, %434, %442 in 1 : vector<16x8xf32>, vector<16x16xf32>, vector<16x32xf32>, vector<16x64xf32>, vector<16x128xf32> -> vector<16x248xf32>
    %444 = tpu.concatenate %443, %320 in 1 : vector<16x248xf32>, vector<16x1xf32> -> vector<16x249xf32>
    %445 = arith.truncf %444 : vector<16x249xf32> to vector<16x249xbf16>
    %c1504 = arith.constant 1504 : index
    %c0_203 = arith.constant 0 : index
    %446 = vector.load %arg1[%c1504, %c0_203] : memref<5168x128xbf16, #tpu.memory_space<vmem>>, vector<249x40xbf16>
    %cst_204 = arith.constant dense<0.000000e+00> : vector<16x40xf32>
    %447 = tpu.matmul %445, %446, %cst_204 {dimension_numbers = #tpu.dot_dimension_numbers<[1], [0], [0], [1], [0, 0, 1, 1], [], []>} : vector<16x249xbf16>, vector<249x40xbf16>, vector<16x40xf32> -> vector<16x40xf32>
    %cst_205 = arith.constant 0.000000e+00 : f32
    %448 = vector.broadcast %cst_205 : f32 to vector<1x248xf32>
    %449 = vector.extract_strided_slice %443 {offsets = [0, 0], sizes = [15, 248], strides = [1, 1]} : vector<16x248xf32> to vector<15x248xf32>
    %450 = tpu.concatenate %448, %449 in 0 : vector<1x248xf32>, vector<15x248xf32> -> vector<16x248xf32>
    %cst_206 = arith.constant 0.000000e+00 : f32
    %451 = vector.shape_cast %289 : vector<16x1xi1> to vector<16x1xi1>
    %452 = vector.broadcast %451 : vector<16x1xi1> to vector<16x248xi1>
    %453 = vector.broadcast %cst_206 : f32 to vector<16x248xf32>
    %454 = arith.select %452, %450, %453 : vector<16x248xi1>, vector<16x248xf32>
    %455 = arith.truncf %454 : vector<16x248xf32> to vector<16x248xbf16>
    %c1248 = arith.constant 1248 : index
    %c0_207 = arith.constant 0 : index
    %456 = vector.load %arg1[%c1248, %c0_207] : memref<5168x128xbf16, #tpu.memory_space<vmem>>, vector<248x40xbf16>
    %cst_208 = arith.constant dense<0.000000e+00> : vector<16x40xf32>
    %457 = tpu.matmul %455, %456, %cst_208 {dimension_numbers = #tpu.dot_dimension_numbers<[1], [0], [0], [1], [0, 0, 1, 1], [], []>} : vector<16x248xbf16>, vector<248x40xbf16>, vector<16x40xf32> -> vector<16x40xf32>
    %458 = arith.addf %447, %457 : vector<16x40xf32>
    %cst_209 = arith.constant 0.000000e+00 : f32
    %459 = vector.broadcast %cst_209 : f32 to vector<1x248xf32>
    %460 = vector.extract_strided_slice %443 {offsets = [1, 0], sizes = [15, 248], strides = [1, 1]} : vector<16x248xf32> to vector<15x248xf32>
    %461 = tpu.concatenate %460, %459 in 0 : vector<15x248xf32>, vector<1x248xf32> -> vector<16x248xf32>
    %cst_210 = arith.constant 0.000000e+00 : f32
    %462 = vector.shape_cast %315 : vector<16x1xi1> to vector<16x1xi1>
    %463 = vector.broadcast %462 : vector<16x1xi1> to vector<16x248xi1>
    %464 = vector.broadcast %cst_210 : f32 to vector<16x248xf32>
    %465 = arith.select %463, %461, %464 : vector<16x248xi1>, vector<16x248xf32>
    %466 = arith.truncf %465 : vector<16x248xf32> to vector<16x248xbf16>
    %c1760 = arith.constant 1760 : index
    %c0_211 = arith.constant 0 : index
    %467 = vector.load %arg1[%c1760, %c0_211] : memref<5168x128xbf16, #tpu.memory_space<vmem>>, vector<248x40xbf16>
    %cst_212 = arith.constant dense<0.000000e+00> : vector<16x40xf32>
    %468 = tpu.matmul %466, %467, %cst_212 {dimension_numbers = #tpu.dot_dimension_numbers<[1], [0], [0], [1], [0, 0, 1, 1], [], []>} : vector<16x248xbf16>, vector<248x40xbf16>, vector<16x40xf32> -> vector<16x40xf32>
    %469 = arith.addf %458, %468 : vector<16x40xf32>
    %cst_213 = arith.constant 0.000000e+00 : f32
    %470 = vector.broadcast %cst_213 : f32 to vector<16x40xf32>
    %471 = arith.maximumf %469, %470 : vector<16x40xf32>
    %cst_214 = arith.constant 0.000000e+00 : f32
    %472 = vector.broadcast %cst_214 : f32 to vector<1x40xf32>
    %473 = vector.extract_strided_slice %471 {offsets = [0, 0], sizes = [15, 40], strides = [1, 1]} : vector<16x40xf32> to vector<15x40xf32>
    %474 = tpu.concatenate %472, %473 in 0 : vector<1x40xf32>, vector<15x40xf32> -> vector<16x40xf32>
    %cst_215 = arith.constant 0.000000e+00 : f32
    %475 = vector.shape_cast %289 : vector<16x1xi1> to vector<16x1xi1>
    %476 = vector.broadcast %475 : vector<16x1xi1> to vector<16x40xi1>
    %477 = vector.broadcast %cst_215 : f32 to vector<16x40xf32>
    %478 = arith.select %476, %474, %477 : vector<16x40xi1>, vector<16x40xf32>
    %cst_216 = arith.constant 0.000000e+00 : f32
    %479 = vector.broadcast %cst_216 : f32 to vector<1x40xf32>
    %480 = vector.extract_strided_slice %471 {offsets = [1, 0], sizes = [15, 40], strides = [1, 1]} : vector<16x40xf32> to vector<15x40xf32>
    %481 = tpu.concatenate %480, %479 in 0 : vector<15x40xf32>, vector<1x40xf32> -> vector<16x40xf32>
    %cst_217 = arith.constant 0.000000e+00 : f32
    %482 = vector.shape_cast %315 : vector<16x1xi1> to vector<16x1xi1>
    %483 = vector.broadcast %482 : vector<16x1xi1> to vector<16x40xi1>
    %484 = vector.broadcast %cst_217 : f32 to vector<16x40xf32>
    %485 = arith.select %483, %481, %484 : vector<16x40xi1>, vector<16x40xf32>
    %486 = tpu.concatenate %478, %471, %485, %320 in 1 : vector<16x40xf32>, vector<16x40xf32>, vector<16x40xf32>, vector<16x1xf32> -> vector<16x121xf32>
    %487 = arith.truncf %486 : vector<16x121xf32> to vector<16x121xbf16>
    %c2016 = arith.constant 2016 : index
    %c0_218 = arith.constant 0 : index
    %488 = vector.load %arg1[%c2016, %c0_218] : memref<5168x128xbf16, #tpu.memory_space<vmem>>, vector<121x40xbf16>
    %cst_219 = arith.constant dense<0.000000e+00> : vector<16x40xf32>
    %489 = tpu.matmul %487, %488, %cst_219 {dimension_numbers = #tpu.dot_dimension_numbers<[1], [0], [0], [1], [0, 0, 1, 1], [], []>} : vector<16x121xbf16>, vector<121x40xbf16>, vector<16x40xf32> -> vector<16x40xf32>
    %cst_220 = arith.constant 0.000000e+00 : f32
    %490 = vector.broadcast %cst_220 : f32 to vector<16x40xf32>
    %491 = arith.maximumf %489, %490 : vector<16x40xf32>
    %c0_221 = arith.constant 0 : index
    %c0_222 = arith.constant 0 : index
    %492 = vector.load %arg14[%c0_221, %c0_222] : memref<16x40xf32, #tpu.memory_space<vmem>>, vector<16x40xf32>
    tpu.vector_store %arg14[%c0_221, %c0_222], %491 {strides = array<i32>} : memref<16x40xf32, #tpu.memory_space<vmem>>, vector<16x40xf32>,
    %c0_223 = arith.constant 0 : index
    %c0_224 = arith.constant 0 : index
    %493 = vector.load %arg5[%c0_223, %c0_224] : memref<32x8xf32, #tpu.memory_space<vmem>>, vector<32x8xf32>
    %c0_225 = arith.constant 0 : index
    %c0_226 = arith.constant 0 : index
    %494 = vector.load %arg8[%c0_225, %c0_226] : memref<32x16xf32, #tpu.memory_space<vmem>>, vector<32x16xf32>
    %c0_227 = arith.constant 0 : index
    %c0_228 = arith.constant 0 : index
    %495 = vector.load %arg10[%c0_227, %c0_228] : memref<32x32xf32, #tpu.memory_space<vmem>>, vector<32x32xf32>
    %c4896 = arith.constant 4896 : index
    %c0_229 = arith.constant 0 : index
    %496 = vector.load %arg1[%c4896, %c0_229] : memref<5168x128xbf16, #tpu.memory_space<vmem>>, vector<16x8xbf16>
    %c0_230 = arith.constant 0 : index
    %c0_231 = arith.constant 0 : index
    %497 = vector.load %arg14[%c0_230, %c0_231] : memref<16x40xf32, #tpu.memory_space<vmem>>, vector<8x40xf32>
    %498 = arith.truncf %497 : vector<8x40xf32> to vector<8x40xbf16>
    %cst_232 = arith.constant dense<0.000000e+00> : vector<16x40xf32>
    %499 = tpu.matmul %496, %498, %cst_232 {dimension_numbers = #tpu.dot_dimension_numbers<[1], [0], [0], [1], [0, 0, 1, 1], [], []>} : vector<16x8xbf16>, vector<8x40xbf16>, vector<16x40xf32> -> vector<16x40xf32>
    %c8 = arith.constant 8 : index
    %c0_233 = arith.constant 0 : index
    %500 = vector.load %arg14[%c8, %c0_233] : memref<16x40xf32, #tpu.memory_space<vmem>>, vector<8x40xf32>
    %501 = arith.truncf %500 : vector<8x40xf32> to vector<8x40xbf16>
    %cst_234 = arith.constant dense<0.000000e+00> : vector<16x40xf32>
    %502 = tpu.matmul %496, %501, %cst_234 {dimension_numbers = #tpu.dot_dimension_numbers<[1], [0], [0], [1], [0, 0, 1, 1], [], []>} : vector<16x8xbf16>, vector<8x40xbf16>, vector<16x40xf32> -> vector<16x40xf32>
    %503 = tpu.concatenate %499, %502 in 0 : vector<16x40xf32>, vector<16x40xf32> -> vector<32x40xf32>
    %c4784 = arith.constant 4784 : index
    %c0_235 = arith.constant 0 : index
    %504 = vector.load %arg1[%c4784, %c0_235] : memref<5168x128xbf16, #tpu.memory_space<vmem>>, vector<16x4xbf16>
    %c0_236 = arith.constant 0 : index
    %c0_237 = arith.constant 0 : index
    %505 = vector.load %arg13[%c0_236, %c0_237] : memref<8x128xf32, #tpu.memory_space<vmem>>, vector<4x128xf32>
    %506 = arith.truncf %505 : vector<4x128xf32> to vector<4x128xbf16>
    %cst_238 = arith.constant dense<0.000000e+00> : vector<16x128xf32>
    %507 = tpu.matmul %504, %506, %cst_238 {dimension_numbers = #tpu.dot_dimension_numbers<[1], [0], [0], [1], [0, 0, 1, 1], [], []>} : vector<16x4xbf16>, vector<4x128xbf16>, vector<16x128xf32> -> vector<16x128xf32>
    %c4_239 = arith.constant 4 : index
    %c0_240 = arith.constant 0 : index
    %508 = vector.load %arg13[%c4_239, %c0_240] : memref<8x128xf32, #tpu.memory_space<vmem>>, vector<4x128xf32>
    %509 = arith.truncf %508 : vector<4x128xf32> to vector<4x128xbf16>
    %cst_241 = arith.constant dense<0.000000e+00> : vector<16x128xf32>
    %510 = tpu.matmul %504, %509, %cst_241 {dimension_numbers = #tpu.dot_dimension_numbers<[1], [0], [0], [1], [0, 0, 1, 1], [], []>} : vector<16x4xbf16>, vector<4x128xbf16>, vector<16x128xf32> -> vector<16x128xf32>
    %511 = tpu.concatenate %507, %510 in 0 : vector<16x128xf32>, vector<16x128xf32> -> vector<32x128xf32>
    %512 = tpu.concatenate %493, %494, %495, %503, %511 in 1 : vector<32x8xf32>, vector<32x16xf32>, vector<32x32xf32>, vector<32x40xf32>, vector<32x128xf32> -> vector<32x224xf32>
    %513 = tpu.concatenate %512, %235 in 1 : vector<32x224xf32>, vector<32x1xf32> -> vector<32x225xf32>
    %514 = arith.truncf %513 : vector<32x225xf32> to vector<32x225xbf16>
    %c2368 = arith.constant 2368 : index
    %c0_242 = arith.constant 0 : index
    %515 = vector.load %arg1[%c2368, %c0_242] : memref<5168x128xbf16, #tpu.memory_space<vmem>>, vector<225x40xbf16>
    %cst_243 = arith.constant dense<0.000000e+00> : vector<32x40xf32>
    %516 = tpu.matmul %514, %515, %cst_243 {dimension_numbers = #tpu.dot_dimension_numbers<[1], [0], [0], [1], [0, 0, 1, 1], [], []>} : vector<32x225xbf16>, vector<225x40xbf16>, vector<32x40xf32> -> vector<32x40xf32>
    %cst_244 = arith.constant 0.000000e+00 : f32
    %517 = vector.broadcast %cst_244 : f32 to vector<1x224xf32>
    %518 = vector.extract_strided_slice %512 {offsets = [0, 0], sizes = [31, 224], strides = [1, 1]} : vector<32x224xf32> to vector<31x224xf32>
    %519 = tpu.concatenate %517, %518 in 0 : vector<1x224xf32>, vector<31x224xf32> -> vector<32x224xf32>
    %cst_245 = arith.constant 0.000000e+00 : f32
    %520 = vector.shape_cast %204 : vector<32x1xi1> to vector<32x1xi1>
    %521 = vector.broadcast %520 : vector<32x1xi1> to vector<32x224xi1>
    %522 = vector.broadcast %cst_245 : f32 to vector<32x224xf32>
    %523 = arith.select %521, %519, %522 : vector<32x224xi1>, vector<32x224xf32>
    %524 = arith.truncf %523 : vector<32x224xf32> to vector<32x224xbf16>
    %c2144 = arith.constant 2144 : index
    %c0_246 = arith.constant 0 : index
    %525 = vector.load %arg1[%c2144, %c0_246] : memref<5168x128xbf16, #tpu.memory_space<vmem>>, vector<224x40xbf16>
    %cst_247 = arith.constant dense<0.000000e+00> : vector<32x40xf32>
    %526 = tpu.matmul %524, %525, %cst_247 {dimension_numbers = #tpu.dot_dimension_numbers<[1], [0], [0], [1], [0, 0, 1, 1], [], []>} : vector<32x224xbf16>, vector<224x40xbf16>, vector<32x40xf32> -> vector<32x40xf32>
    %527 = arith.addf %516, %526 : vector<32x40xf32>
    %cst_248 = arith.constant 0.000000e+00 : f32
    %528 = vector.broadcast %cst_248 : f32 to vector<1x224xf32>
    %529 = vector.extract_strided_slice %512 {offsets = [1, 0], sizes = [31, 224], strides = [1, 1]} : vector<32x224xf32> to vector<31x224xf32>
    %530 = tpu.concatenate %529, %528 in 0 : vector<31x224xf32>, vector<1x224xf32> -> vector<32x224xf32>
    %cst_249 = arith.constant 0.000000e+00 : f32
    %531 = vector.shape_cast %230 : vector<32x1xi1> to vector<32x1xi1>
    %532 = vector.broadcast %531 : vector<32x1xi1> to vector<32x224xi1>
    %533 = vector.broadcast %cst_249 : f32 to vector<32x224xf32>
    %534 = arith.select %532, %530, %533 : vector<32x224xi1>, vector<32x224xf32>
    %535 = arith.truncf %534 : vector<32x224xf32> to vector<32x224xbf16>
    %c2608 = arith.constant 2608 : index
    %c0_250 = arith.constant 0 : index
    %536 = vector.load %arg1[%c2608, %c0_250] : memref<5168x128xbf16, #tpu.memory_space<vmem>>, vector<224x40xbf16>
    %cst_251 = arith.constant dense<0.000000e+00> : vector<32x40xf32>
    %537 = tpu.matmul %535, %536, %cst_251 {dimension_numbers = #tpu.dot_dimension_numbers<[1], [0], [0], [1], [0, 0, 1, 1], [], []>} : vector<32x224xbf16>, vector<224x40xbf16>, vector<32x40xf32> -> vector<32x40xf32>
    %538 = arith.addf %527, %537 : vector<32x40xf32>
    %cst_252 = arith.constant 0.000000e+00 : f32
    %539 = vector.broadcast %cst_252 : f32 to vector<32x40xf32>
    %540 = arith.maximumf %538, %539 : vector<32x40xf32>
    %cst_253 = arith.constant 0.000000e+00 : f32
    %541 = vector.broadcast %cst_253 : f32 to vector<1x40xf32>
    %542 = vector.extract_strided_slice %540 {offsets = [0, 0], sizes = [31, 40], strides = [1, 1]} : vector<32x40xf32> to vector<31x40xf32>
    %543 = tpu.concatenate %541, %542 in 0 : vector<1x40xf32>, vector<31x40xf32> -> vector<32x40xf32>
    %cst_254 = arith.constant 0.000000e+00 : f32
    %544 = vector.shape_cast %204 : vector<32x1xi1> to vector<32x1xi1>
    %545 = vector.broadcast %544 : vector<32x1xi1> to vector<32x40xi1>
    %546 = vector.broadcast %cst_254 : f32 to vector<32x40xf32>
    %547 = arith.select %545, %543, %546 : vector<32x40xi1>, vector<32x40xf32>
    %cst_255 = arith.constant 0.000000e+00 : f32
    %548 = vector.broadcast %cst_255 : f32 to vector<1x40xf32>
    %549 = vector.extract_strided_slice %540 {offsets = [1, 0], sizes = [31, 40], strides = [1, 1]} : vector<32x40xf32> to vector<31x40xf32>
    %550 = tpu.concatenate %549, %548 in 0 : vector<31x40xf32>, vector<1x40xf32> -> vector<32x40xf32>
    %cst_256 = arith.constant 0.000000e+00 : f32
    %551 = vector.shape_cast %230 : vector<32x1xi1> to vector<32x1xi1>
    %552 = vector.broadcast %551 : vector<32x1xi1> to vector<32x40xi1>
    %553 = vector.broadcast %cst_256 : f32 to vector<32x40xf32>
    %554 = arith.select %552, %550, %553 : vector<32x40xi1>, vector<32x40xf32>
    %555 = tpu.concatenate %547, %540, %554, %235 in 1 : vector<32x40xf32>, vector<32x40xf32>, vector<32x40xf32>, vector<32x1xf32> -> vector<32x121xf32>
    %556 = arith.truncf %555 : vector<32x121xf32> to vector<32x121xbf16>
    %c2832 = arith.constant 2832 : index
    %c0_257 = arith.constant 0 : index
    %557 = vector.load %arg1[%c2832, %c0_257] : memref<5168x128xbf16, #tpu.memory_space<vmem>>, vector<121x40xbf16>
    %cst_258 = arith.constant dense<0.000000e+00> : vector<32x40xf32>
    %558 = tpu.matmul %556, %557, %cst_258 {dimension_numbers = #tpu.dot_dimension_numbers<[1], [0], [0], [1], [0, 0, 1, 1], [], []>} : vector<32x121xbf16>, vector<121x40xbf16>, vector<32x40xf32> -> vector<32x40xf32>
    %cst_259 = arith.constant 0.000000e+00 : f32
    %559 = vector.broadcast %cst_259 : f32 to vector<32x40xf32>
    %560 = arith.maximumf %558, %559 : vector<32x40xf32>
    %c0_260 = arith.constant 0 : index
    %c0_261 = arith.constant 0 : index
    %561 = vector.load %arg15[%c0_260, %c0_261] : memref<32x40xf32, #tpu.memory_space<vmem>>, vector<32x40xf32>
    tpu.vector_store %arg15[%c0_260, %c0_261], %560 {strides = array<i32>} : memref<32x40xf32, #tpu.memory_space<vmem>>, vector<32x40xf32>,
    %c0_262 = arith.constant 0 : index
    %c0_263 = arith.constant 0 : index
    %562 = vector.load %arg4[%c0_262, %c0_263] : memref<64x8xf32, #tpu.memory_space<vmem>>, vector<64x8xf32>
    %c0_264 = arith.constant 0 : index
    %c0_265 = arith.constant 0 : index
    %563 = vector.load %arg7[%c0_264, %c0_265] : memref<64x16xf32, #tpu.memory_space<vmem>>, vector<64x16xf32>
    %c5008 = arith.constant 5008 : index
    %c0_266 = arith.constant 0 : index
    %564 = vector.load %arg1[%c5008, %c0_266] : memref<5168x128xbf16, #tpu.memory_space<vmem>>, vector<32x16xbf16>
    %c0_267 = arith.constant 0 : index
    %c0_268 = arith.constant 0 : index
    %565 = vector.load %arg15[%c0_267, %c0_268] : memref<32x40xf32, #tpu.memory_space<vmem>>, vector<16x40xf32>
    %566 = arith.truncf %565 : vector<16x40xf32> to vector<16x40xbf16>
    %cst_269 = arith.constant dense<0.000000e+00> : vector<32x40xf32>
    %567 = tpu.matmul %564, %566, %cst_269 {dimension_numbers = #tpu.dot_dimension_numbers<[1], [0], [0], [1], [0, 0, 1, 1], [], []>} : vector<32x16xbf16>, vector<16x40xbf16>, vector<32x40xf32> -> vector<32x40xf32>
    %c16_270 = arith.constant 16 : index
    %c0_271 = arith.constant 0 : index
    %568 = vector.load %arg15[%c16_270, %c0_271] : memref<32x40xf32, #tpu.memory_space<vmem>>, vector<16x40xf32>
    %569 = arith.truncf %568 : vector<16x40xf32> to vector<16x40xbf16>
    %cst_272 = arith.constant dense<0.000000e+00> : vector<32x40xf32>
    %570 = tpu.matmul %564, %569, %cst_272 {dimension_numbers = #tpu.dot_dimension_numbers<[1], [0], [0], [1], [0, 0, 1, 1], [], []>} : vector<32x16xbf16>, vector<16x40xbf16>, vector<32x40xf32> -> vector<32x40xf32>
    %571 = tpu.concatenate %567, %570 in 0 : vector<32x40xf32>, vector<32x40xf32> -> vector<64x40xf32>
    %c4912 = arith.constant 4912 : index
    %c0_273 = arith.constant 0 : index
    %572 = vector.load %arg1[%c4912, %c0_273] : memref<5168x128xbf16, #tpu.memory_space<vmem>>, vector<32x8xbf16>
    %c0_274 = arith.constant 0 : index
    %c0_275 = arith.constant 0 : index
    %573 = vector.load %arg14[%c0_274, %c0_275] : memref<16x40xf32, #tpu.memory_space<vmem>>, vector<8x40xf32>
    %574 = arith.truncf %573 : vector<8x40xf32> to vector<8x40xbf16>
    %cst_276 = arith.constant dense<0.000000e+00> : vector<32x40xf32>
    %575 = tpu.matmul %572, %574, %cst_276 {dimension_numbers = #tpu.dot_dimension_numbers<[1], [0], [0], [1], [0, 0, 1, 1], [], []>} : vector<32x8xbf16>, vector<8x40xbf16>, vector<32x40xf32> -> vector<32x40xf32>
    %c8_277 = arith.constant 8 : index
    %c0_278 = arith.constant 0 : index
    %576 = vector.load %arg14[%c8_277, %c0_278] : memref<16x40xf32, #tpu.memory_space<vmem>>, vector<8x40xf32>
    %577 = arith.truncf %576 : vector<8x40xf32> to vector<8x40xbf16>
    %cst_279 = arith.constant dense<0.000000e+00> : vector<32x40xf32>
    %578 = tpu.matmul %572, %577, %cst_279 {dimension_numbers = #tpu.dot_dimension_numbers<[1], [0], [0], [1], [0, 0, 1, 1], [], []>} : vector<32x8xbf16>, vector<8x40xbf16>, vector<32x40xf32> -> vector<32x40xf32>
    %579 = tpu.concatenate %575, %578 in 0 : vector<32x40xf32>, vector<32x40xf32> -> vector<64x40xf32>
    %c4800 = arith.constant 4800 : index
    %c0_280 = arith.constant 0 : index
    %580 = vector.load %arg1[%c4800, %c0_280] : memref<5168x128xbf16, #tpu.memory_space<vmem>>, vector<32x4xbf16>
    %c0_281 = arith.constant 0 : index
    %c0_282 = arith.constant 0 : index
    %581 = vector.load %arg13[%c0_281, %c0_282] : memref<8x128xf32, #tpu.memory_space<vmem>>, vector<4x128xf32>
    %582 = arith.truncf %581 : vector<4x128xf32> to vector<4x128xbf16>
    %cst_283 = arith.constant dense<0.000000e+00> : vector<32x128xf32>
    %583 = tpu.matmul %580, %582, %cst_283 {dimension_numbers = #tpu.dot_dimension_numbers<[1], [0], [0], [1], [0, 0, 1, 1], [], []>} : vector<32x4xbf16>, vector<4x128xbf16>, vector<32x128xf32> -> vector<32x128xf32>
    %c4_284 = arith.constant 4 : index
    %c0_285 = arith.constant 0 : index
    %584 = vector.load %arg13[%c4_284, %c0_285] : memref<8x128xf32, #tpu.memory_space<vmem>>, vector<4x128xf32>
    %585 = arith.truncf %584 : vector<4x128xf32> to vector<4x128xbf16>
    %cst_286 = arith.constant dense<0.000000e+00> : vector<32x128xf32>
    %586 = tpu.matmul %580, %585, %cst_286 {dimension_numbers = #tpu.dot_dimension_numbers<[1], [0], [0], [1], [0, 0, 1, 1], [], []>} : vector<32x4xbf16>, vector<4x128xbf16>, vector<32x128xf32> -> vector<32x128xf32>
    %587 = tpu.concatenate %583, %586 in 0 : vector<32x128xf32>, vector<32x128xf32> -> vector<64x128xf32>
    %588 = tpu.concatenate %562, %563, %571, %579, %587 in 1 : vector<64x8xf32>, vector<64x16xf32>, vector<64x40xf32>, vector<64x40xf32>, vector<64x128xf32> -> vector<64x232xf32>
    %589 = tpu.concatenate %588, %146 in 1 : vector<64x232xf32>, vector<64x1xf32> -> vector<64x233xf32>
    %590 = arith.truncf %589 : vector<64x233xf32> to vector<64x233xbf16>
    %c3200 = arith.constant 3200 : index
    %c0_287 = arith.constant 0 : index
    %591 = vector.load %arg1[%c3200, %c0_287] : memref<5168x128xbf16, #tpu.memory_space<vmem>>, vector<233x40xbf16>
    %cst_288 = arith.constant dense<0.000000e+00> : vector<64x40xf32>
    %592 = tpu.matmul %590, %591, %cst_288 {dimension_numbers = #tpu.dot_dimension_numbers<[1], [0], [0], [1], [0, 0, 1, 1], [], []>} : vector<64x233xbf16>, vector<233x40xbf16>, vector<64x40xf32> -> vector<64x40xf32>
    %cst_289 = arith.constant 0.000000e+00 : f32
    %593 = vector.broadcast %cst_289 : f32 to vector<1x232xf32>
    %594 = vector.extract_strided_slice %588 {offsets = [0, 0], sizes = [63, 232], strides = [1, 1]} : vector<64x232xf32> to vector<63x232xf32>
    %595 = tpu.concatenate %593, %594 in 0 : vector<1x232xf32>, vector<63x232xf32> -> vector<64x232xf32>
    %cst_290 = arith.constant 0.000000e+00 : f32
    %596 = vector.shape_cast %115 : vector<64x1xi1> to vector<64x1xi1>
    %597 = vector.broadcast %596 : vector<64x1xi1> to vector<64x232xi1>
    %598 = vector.broadcast %cst_290 : f32 to vector<64x232xf32>
    %599 = arith.select %597, %595, %598 : vector<64x232xi1>, vector<64x232xf32>
    %600 = arith.truncf %599 : vector<64x232xf32> to vector<64x232xbf16>
    %c2960 = arith.constant 2960 : index
    %c0_291 = arith.constant 0 : index
    %601 = vector.load %arg1[%c2960, %c0_291] : memref<5168x128xbf16, #tpu.memory_space<vmem>>, vector<232x40xbf16>
    %cst_292 = arith.constant dense<0.000000e+00> : vector<64x40xf32>
    %602 = tpu.matmul %600, %601, %cst_292 {dimension_numbers = #tpu.dot_dimension_numbers<[1], [0], [0], [1], [0, 0, 1, 1], [], []>} : vector<64x232xbf16>, vector<232x40xbf16>, vector<64x40xf32> -> vector<64x40xf32>
    %603 = arith.addf %592, %602 : vector<64x40xf32>
    %cst_293 = arith.constant 0.000000e+00 : f32
    %604 = vector.broadcast %cst_293 : f32 to vector<1x232xf32>
    %605 = vector.extract_strided_slice %588 {offsets = [1, 0], sizes = [63, 232], strides = [1, 1]} : vector<64x232xf32> to vector<63x232xf32>
    %606 = tpu.concatenate %605, %604 in 0 : vector<63x232xf32>, vector<1x232xf32> -> vector<64x232xf32>
    %cst_294 = arith.constant 0.000000e+00 : f32
    %607 = vector.shape_cast %141 : vector<64x1xi1> to vector<64x1xi1>
    %608 = vector.broadcast %607 : vector<64x1xi1> to vector<64x232xi1>
    %609 = vector.broadcast %cst_294 : f32 to vector<64x232xf32>
    %610 = arith.select %608, %606, %609 : vector<64x232xi1>, vector<64x232xf32>
    %611 = arith.truncf %610 : vector<64x232xf32> to vector<64x232xbf16>
    %c3440 = arith.constant 3440 : index
    %c0_295 = arith.constant 0 : index
    %612 = vector.load %arg1[%c3440, %c0_295] : memref<5168x128xbf16, #tpu.memory_space<vmem>>, vector<232x40xbf16>
    %cst_296 = arith.constant dense<0.000000e+00> : vector<64x40xf32>
    %613 = tpu.matmul %611, %612, %cst_296 {dimension_numbers = #tpu.dot_dimension_numbers<[1], [0], [0], [1], [0, 0, 1, 1], [], []>} : vector<64x232xbf16>, vector<232x40xbf16>, vector<64x40xf32> -> vector<64x40xf32>
    %614 = arith.addf %603, %613 : vector<64x40xf32>
    %cst_297 = arith.constant 0.000000e+00 : f32
    %615 = vector.broadcast %cst_297 : f32 to vector<64x40xf32>
    %616 = arith.maximumf %614, %615 : vector<64x40xf32>
    %cst_298 = arith.constant 0.000000e+00 : f32
    %617 = vector.broadcast %cst_298 : f32 to vector<1x40xf32>
    %618 = vector.extract_strided_slice %616 {offsets = [0, 0], sizes = [63, 40], strides = [1, 1]} : vector<64x40xf32> to vector<63x40xf32>
    %619 = tpu.concatenate %617, %618 in 0 : vector<1x40xf32>, vector<63x40xf32> -> vector<64x40xf32>
    %cst_299 = arith.constant 0.000000e+00 : f32
    %620 = vector.shape_cast %115 : vector<64x1xi1> to vector<64x1xi1>
    %621 = vector.broadcast %620 : vector<64x1xi1> to vector<64x40xi1>
    %622 = vector.broadcast %cst_299 : f32 to vector<64x40xf32>
    %623 = arith.select %621, %619, %622 : vector<64x40xi1>, vector<64x40xf32>
    %cst_300 = arith.constant 0.000000e+00 : f32
    %624 = vector.broadcast %cst_300 : f32 to vector<1x40xf32>
    %625 = vector.extract_strided_slice %616 {offsets = [1, 0], sizes = [63, 40], strides = [1, 1]} : vector<64x40xf32> to vector<63x40xf32>
    %626 = tpu.concatenate %625, %624 in 0 : vector<63x40xf32>, vector<1x40xf32> -> vector<64x40xf32>
    %cst_301 = arith.constant 0.000000e+00 : f32
    %627 = vector.shape_cast %141 : vector<64x1xi1> to vector<64x1xi1>
    %628 = vector.broadcast %627 : vector<64x1xi1> to vector<64x40xi1>
    %629 = vector.broadcast %cst_301 : f32 to vector<64x40xf32>
    %630 = arith.select %628, %626, %629 : vector<64x40xi1>, vector<64x40xf32>
    %631 = tpu.concatenate %623, %616, %630, %146 in 1 : vector<64x40xf32>, vector<64x40xf32>, vector<64x40xf32>, vector<64x1xf32> -> vector<64x121xf32>
    %632 = arith.truncf %631 : vector<64x121xf32> to vector<64x121xbf16>
    %c3680 = arith.constant 3680 : index
    %c0_302 = arith.constant 0 : index
    %633 = vector.load %arg1[%c3680, %c0_302] : memref<5168x128xbf16, #tpu.memory_space<vmem>>, vector<121x40xbf16>
    %cst_303 = arith.constant dense<0.000000e+00> : vector<64x40xf32>
    %634 = tpu.matmul %632, %633, %cst_303 {dimension_numbers = #tpu.dot_dimension_numbers<[1], [0], [0], [1], [0, 0, 1, 1], [], []>} : vector<64x121xbf16>, vector<121x40xbf16>, vector<64x40xf32> -> vector<64x40xf32>
    %cst_304 = arith.constant 0.000000e+00 : f32
    %635 = vector.broadcast %cst_304 : f32 to vector<64x40xf32>
    %636 = arith.maximumf %634, %635 : vector<64x40xf32>
    %c0_305 = arith.constant 0 : index
    %c0_306 = arith.constant 0 : index
    %637 = vector.load %arg16[%c0_305, %c0_306] : memref<64x40xf32, #tpu.memory_space<vmem>>, vector<64x40xf32>
    tpu.vector_store %arg16[%c0_305, %c0_306], %636 {strides = array<i32>} : memref<64x40xf32, #tpu.memory_space<vmem>>, vector<64x40xf32>,
    %c0_307 = arith.constant 0 : index
    %c0_308 = arith.constant 0 : index
    %638 = vector.load %arg3[%c0_307, %c0_308] : memref<128x8xf32, #tpu.memory_space<vmem>>, vector<128x8xf32>
    %c5104 = arith.constant 5104 : index
    %c0_309 = arith.constant 0 : index
    %639 = vector.load %arg1[%c5104, %c0_309] : memref<5168x128xbf16, #tpu.memory_space<vmem>>, vector<64x32xbf16>
    %c0_310 = arith.constant 0 : index
    %c0_311 = arith.constant 0 : index
    %640 = vector.load %arg16[%c0_310, %c0_311] : memref<64x40xf32, #tpu.memory_space<vmem>>, vector<32x40xf32>
    %641 = arith.truncf %640 : vector<32x40xf32> to vector<32x40xbf16>
    %cst_312 = arith.constant dense<0.000000e+00> : vector<64x40xf32>
    %642 = tpu.matmul %639, %641, %cst_312 {dimension_numbers = #tpu.dot_dimension_numbers<[1], [0], [0], [1], [0, 0, 1, 1], [], []>} : vector<64x32xbf16>, vector<32x40xbf16>, vector<64x40xf32> -> vector<64x40xf32>
    %c32 = arith.constant 32 : index
    %c0_313 = arith.constant 0 : index
    %643 = vector.load %arg16[%c32, %c0_313] : memref<64x40xf32, #tpu.memory_space<vmem>>, vector<32x40xf32>
    %644 = arith.truncf %643 : vector<32x40xf32> to vector<32x40xbf16>
    %cst_314 = arith.constant dense<0.000000e+00> : vector<64x40xf32>
    %645 = tpu.matmul %639, %644, %cst_314 {dimension_numbers = #tpu.dot_dimension_numbers<[1], [0], [0], [1], [0, 0, 1, 1], [], []>} : vector<64x32xbf16>, vector<32x40xbf16>, vector<64x40xf32> -> vector<64x40xf32>
    %646 = tpu.concatenate %642, %645 in 0 : vector<64x40xf32>, vector<64x40xf32> -> vector<128x40xf32>
    %c5040 = arith.constant 5040 : index
    %c0_315 = arith.constant 0 : index
    %647 = vector.load %arg1[%c5040, %c0_315] : memref<5168x128xbf16, #tpu.memory_space<vmem>>, vector<64x16xbf16>
    %c0_316 = arith.constant 0 : index
    %c0_317 = arith.constant 0 : index
    %648 = vector.load %arg15[%c0_316, %c0_317] : memref<32x40xf32, #tpu.memory_space<vmem>>, vector<16x40xf32>
    %649 = arith.truncf %648 : vector<16x40xf32> to vector<16x40xbf16>
    %cst_318 = arith.constant dense<0.000000e+00> : vector<64x40xf32>
    %650 = tpu.matmul %647, %649, %cst_318 {dimension_numbers = #tpu.dot_dimension_numbers<[1], [0], [0], [1], [0, 0, 1, 1], [], []>} : vector<64x16xbf16>, vector<16x40xbf16>, vector<64x40xf32> -> vector<64x40xf32>
    %c16_319 = arith.constant 16 : index
    %c0_320 = arith.constant 0 : index
    %651 = vector.load %arg15[%c16_319, %c0_320] : memref<32x40xf32, #tpu.memory_space<vmem>>, vector<16x40xf32>
    %652 = arith.truncf %651 : vector<16x40xf32> to vector<16x40xbf16>
    %cst_321 = arith.constant dense<0.000000e+00> : vector<64x40xf32>
    %653 = tpu.matmul %647, %652, %cst_321 {dimension_numbers = #tpu.dot_dimension_numbers<[1], [0], [0], [1], [0, 0, 1, 1], [], []>} : vector<64x16xbf16>, vector<16x40xbf16>, vector<64x40xf32> -> vector<64x40xf32>
    %654 = tpu.concatenate %650, %653 in 0 : vector<64x40xf32>, vector<64x40xf32> -> vector<128x40xf32>
    %c4944 = arith.constant 4944 : index
    %c0_322 = arith.constant 0 : index
    %655 = vector.load %arg1[%c4944, %c0_322] : memref<5168x128xbf16, #tpu.memory_space<vmem>>, vector<64x8xbf16>
    %c0_323 = arith.constant 0 : index
    %c0_324 = arith.constant 0 : index
    %656 = vector.load %arg14[%c0_323, %c0_324] : memref<16x40xf32, #tpu.memory_space<vmem>>, vector<8x40xf32>
    %657 = arith.truncf %656 : vector<8x40xf32> to vector<8x40xbf16>
    %cst_325 = arith.constant dense<0.000000e+00> : vector<64x40xf32>
    %658 = tpu.matmul %655, %657, %cst_325 {dimension_numbers = #tpu.dot_dimension_numbers<[1], [0], [0], [1], [0, 0, 1, 1], [], []>} : vector<64x8xbf16>, vector<8x40xbf16>, vector<64x40xf32> -> vector<64x40xf32>
    %c8_326 = arith.constant 8 : index
    %c0_327 = arith.constant 0 : index
    %659 = vector.load %arg14[%c8_326, %c0_327] : memref<16x40xf32, #tpu.memory_space<vmem>>, vector<8x40xf32>
    %660 = arith.truncf %659 : vector<8x40xf32> to vector<8x40xbf16>
    %cst_328 = arith.constant dense<0.000000e+00> : vector<64x40xf32>
    %661 = tpu.matmul %655, %660, %cst_328 {dimension_numbers = #tpu.dot_dimension_numbers<[1], [0], [0], [1], [0, 0, 1, 1], [], []>} : vector<64x8xbf16>, vector<8x40xbf16>, vector<64x40xf32> -> vector<64x40xf32>
    %662 = tpu.concatenate %658, %661 in 0 : vector<64x40xf32>, vector<64x40xf32> -> vector<128x40xf32>
    %c4832 = arith.constant 4832 : index
    %c0_329 = arith.constant 0 : index
    %663 = vector.load %arg1[%c4832, %c0_329] : memref<5168x128xbf16, #tpu.memory_space<vmem>>, vector<64x4xbf16>
    %c0_330 = arith.constant 0 : index
    %c0_331 = arith.constant 0 : index
    %664 = vector.load %arg13[%c0_330, %c0_331] : memref<8x128xf32, #tpu.memory_space<vmem>>, vector<4x128xf32>
    %665 = arith.truncf %664 : vector<4x128xf32> to vector<4x128xbf16>
    %cst_332 = arith.constant dense<0.000000e+00> : vector<64x128xf32>
    %666 = tpu.matmul %663, %665, %cst_332 {dimension_numbers = #tpu.dot_dimension_numbers<[1], [0], [0], [1], [0, 0, 1, 1], [], []>} : vector<64x4xbf16>, vector<4x128xbf16>, vector<64x128xf32> -> vector<64x128xf32>
    %c4_333 = arith.constant 4 : index
    %c0_334 = arith.constant 0 : index
    %667 = vector.load %arg13[%c4_333, %c0_334] : memref<8x128xf32, #tpu.memory_space<vmem>>, vector<4x128xf32>
    %668 = arith.truncf %667 : vector<4x128xf32> to vector<4x128xbf16>
    %cst_335 = arith.constant dense<0.000000e+00> : vector<64x128xf32>
    %669 = tpu.matmul %663, %668, %cst_335 {dimension_numbers = #tpu.dot_dimension_numbers<[1], [0], [0], [1], [0, 0, 1, 1], [], []>} : vector<64x4xbf16>, vector<4x128xbf16>, vector<64x128xf32> -> vector<64x128xf32>
    %670 = tpu.concatenate %666, %669 in 0 : vector<64x128xf32>, vector<64x128xf32> -> vector<128x128xf32>
    %671 = tpu.concatenate %638, %646, %654, %662, %670 in 1 : vector<128x8xf32>, vector<128x40xf32>, vector<128x40xf32>, vector<128x40xf32>, vector<128x128xf32> -> vector<128x256xf32>
    %672 = tpu.concatenate %671, %53 in 1 : vector<128x256xf32>, vector<128x1xf32> -> vector<128x257xf32>
    %673 = arith.truncf %672 : vector<128x257xf32> to vector<128x257xbf16>
    %c4064 = arith.constant 4064 : index
    %c0_336 = arith.constant 0 : index
    %674 = vector.load %arg1[%c4064, %c0_336] : memref<5168x128xbf16, #tpu.memory_space<vmem>>, vector<257x40xbf16>
    %cst_337 = arith.constant dense<0.000000e+00> : vector<128x40xf32>
    %675 = tpu.matmul %673, %674, %cst_337 {dimension_numbers = #tpu.dot_dimension_numbers<[1], [0], [0], [1], [0, 0, 1, 1], [], []>} : vector<128x257xbf16>, vector<257x40xbf16>, vector<128x40xf32> -> vector<128x40xf32>
    %cst_338 = arith.constant 0.000000e+00 : f32
    %676 = vector.broadcast %cst_338 : f32 to vector<1x256xf32>
    %677 = vector.extract_strided_slice %671 {offsets = [0, 0], sizes = [127, 256], strides = [1, 1]} : vector<128x256xf32> to vector<127x256xf32>
    %678 = tpu.concatenate %676, %677 in 0 : vector<1x256xf32>, vector<127x256xf32> -> vector<128x256xf32>
    %cst_339 = arith.constant 0.000000e+00 : f32
    %679 = vector.shape_cast %22 : vector<128x1xi1> to vector<128x1xi1>
    %680 = vector.broadcast %679 : vector<128x1xi1> to vector<128x256xi1>
    %681 = vector.broadcast %cst_339 : f32 to vector<128x256xf32>
    %682 = arith.select %680, %678, %681 : vector<128x256xi1>, vector<128x256xf32>
    %683 = arith.truncf %682 : vector<128x256xf32> to vector<128x256xbf16>
    %c3808 = arith.constant 3808 : index
    %c0_340 = arith.constant 0 : index
    %684 = vector.load %arg1[%c3808, %c0_340] : memref<5168x128xbf16, #tpu.memory_space<vmem>>, vector<256x40xbf16>
    %cst_341 = arith.constant dense<0.000000e+00> : vector<128x40xf32>
    %685 = tpu.matmul %683, %684, %cst_341 {dimension_numbers = #tpu.dot_dimension_numbers<[1], [0], [0], [1], [0, 0, 1, 1], [], []>} : vector<128x256xbf16>, vector<256x40xbf16>, vector<128x40xf32> -> vector<128x40xf32>
    %686 = arith.addf %675, %685 : vector<128x40xf32>
    %cst_342 = arith.constant 0.000000e+00 : f32
    %687 = vector.broadcast %cst_342 : f32 to vector<1x256xf32>
    %688 = vector.extract_strided_slice %671 {offsets = [1, 0], sizes = [127, 256], strides = [1, 1]} : vector<128x256xf32> to vector<127x256xf32>
    %689 = tpu.concatenate %688, %687 in 0 : vector<127x256xf32>, vector<1x256xf32> -> vector<128x256xf32>
    %cst_343 = arith.constant 0.000000e+00 : f32
    %690 = vector.shape_cast %48 : vector<128x1xi1> to vector<128x1xi1>
    %691 = vector.broadcast %690 : vector<128x1xi1> to vector<128x256xi1>
    %692 = vector.broadcast %cst_343 : f32 to vector<128x256xf32>
    %693 = arith.select %691, %689, %692 : vector<128x256xi1>, vector<128x256xf32>
    %694 = arith.truncf %693 : vector<128x256xf32> to vector<128x256xbf16>
    %c4336 = arith.constant 4336 : index
    %c0_344 = arith.constant 0 : index
    %695 = vector.load %arg1[%c4336, %c0_344] : memref<5168x128xbf16, #tpu.memory_space<vmem>>, vector<256x40xbf16>
    %cst_345 = arith.constant dense<0.000000e+00> : vector<128x40xf32>
    %696 = tpu.matmul %694, %695, %cst_345 {dimension_numbers = #tpu.dot_dimension_numbers<[1], [0], [0], [1], [0, 0, 1, 1], [], []>} : vector<128x256xbf16>, vector<256x40xbf16>, vector<128x40xf32> -> vector<128x40xf32>
    %697 = arith.addf %686, %696 : vector<128x40xf32>
    %cst_346 = arith.constant 0.000000e+00 : f32
    %698 = vector.broadcast %cst_346 : f32 to vector<128x40xf32>
    %699 = arith.maximumf %697, %698 : vector<128x40xf32>
    %cst_347 = arith.constant 0.000000e+00 : f32
    %700 = vector.broadcast %cst_347 : f32 to vector<1x40xf32>
    %701 = vector.extract_strided_slice %699 {offsets = [0, 0], sizes = [127, 40], strides = [1, 1]} : vector<128x40xf32> to vector<127x40xf32>
    %702 = tpu.concatenate %700, %701 in 0 : vector<1x40xf32>, vector<127x40xf32> -> vector<128x40xf32>
    %cst_348 = arith.constant 0.000000e+00 : f32
    %703 = vector.shape_cast %22 : vector<128x1xi1> to vector<128x1xi1>
    %704 = vector.broadcast %703 : vector<128x1xi1> to vector<128x40xi1>
    %705 = vector.broadcast %cst_348 : f32 to vector<128x40xf32>
    %706 = arith.select %704, %702, %705 : vector<128x40xi1>, vector<128x40xf32>
    %cst_349 = arith.constant 0.000000e+00 : f32
    %707 = vector.broadcast %cst_349 : f32 to vector<1x40xf32>
    %708 = vector.extract_strided_slice %699 {offsets = [1, 0], sizes = [127, 40], strides = [1, 1]} : vector<128x40xf32> to vector<127x40xf32>
    %709 = tpu.concatenate %708, %707 in 0 : vector<127x40xf32>, vector<1x40xf32> -> vector<128x40xf32>
    %cst_350 = arith.constant 0.000000e+00 : f32
    %710 = vector.shape_cast %48 : vector<128x1xi1> to vector<128x1xi1>
    %711 = vector.broadcast %710 : vector<128x1xi1> to vector<128x40xi1>
    %712 = vector.broadcast %cst_350 : f32 to vector<128x40xf32>
    %713 = arith.select %711, %709, %712 : vector<128x40xi1>, vector<128x40xf32>
    %714 = tpu.concatenate %706, %699, %713, %53 in 1 : vector<128x40xf32>, vector<128x40xf32>, vector<128x40xf32>, vector<128x1xf32> -> vector<128x121xf32>
    %715 = arith.truncf %714 : vector<128x121xf32> to vector<128x121xbf16>
    %c4592 = arith.constant 4592 : index
    %c0_351 = arith.constant 0 : index
    %716 = vector.load %arg1[%c4592, %c0_351] : memref<5168x128xbf16, #tpu.memory_space<vmem>>, vector<121x40xbf16>
    %cst_352 = arith.constant dense<0.000000e+00> : vector<128x40xf32>
    %717 = tpu.matmul %715, %716, %cst_352 {dimension_numbers = #tpu.dot_dimension_numbers<[1], [0], [0], [1], [0, 0, 1, 1], [], []>} : vector<128x121xbf16>, vector<121x40xbf16>, vector<128x40xf32> -> vector<128x40xf32>
    %cst_353 = arith.constant 0.000000e+00 : f32
    %718 = vector.broadcast %cst_353 : f32 to vector<128x40xf32>
    %719 = arith.maximumf %717, %718 : vector<128x40xf32>
    %720 = tpu.concatenate %719, %53 in 1 : vector<128x40xf32>, vector<128x1xf32> -> vector<128x41xf32>
    %721 = arith.truncf %720 : vector<128x41xf32> to vector<128x41xbf16>
    %c4720 = arith.constant 4720 : index
    %c0_354 = arith.constant 0 : index
    %722 = vector.load %arg1[%c4720, %c0_354] : memref<5168x128xbf16, #tpu.memory_space<vmem>>, vector<41x3xbf16>
    %cst_355 = arith.constant dense<0.000000e+00> : vector<128x3xf32>
    %723 = tpu.matmul %721, %722, %cst_355 {dimension_numbers = #tpu.dot_dimension_numbers<[1], [0], [0], [1], [0, 0, 1, 1], [], []>} : vector<128x41xbf16>, vector<41x3xbf16>, vector<128x3xf32> -> vector<128x3xf32>
    %724 = vector.extract_strided_slice %723 {offsets = [0, 0], sizes = [128, 1], strides = [1, 1]} : vector<128x3xf32> to vector<128x1xf32>
    %725 = vector.extract_strided_slice %723 {offsets = [0, 1], sizes = [128, 1], strides = [1, 1]} : vector<128x3xf32> to vector<128x1xf32>
    %726 = vector.extract_strided_slice %723 {offsets = [0, 2], sizes = [128, 1], strides = [1, 1]} : vector<128x3xf32> to vector<128x1xf32>
    %727 = arith.maximumf %724, %725 : vector<128x1xf32>
    %728 = arith.maximumf %727, %726 : vector<128x1xf32>
    %729 = arith.subf %724, %728 : vector<128x1xf32>
    %730 = math.exp %729 : vector<128x1xf32>
    %731 = arith.subf %725, %728 : vector<128x1xf32>
    %732 = math.exp %731 : vector<128x1xf32>
    %733 = arith.subf %726, %728 : vector<128x1xf32>
    %734 = math.exp %733 : vector<128x1xf32>
    %735 = arith.addf %730, %732 : vector<128x1xf32>
    %736 = arith.addf %735, %734 : vector<128x1xf32>
    %cst_356 = arith.constant 1.000000e+00 : f32
    %737 = vector.broadcast %cst_356 : f32 to vector<128x1xf32>
    %738 = arith.divf %737, %736 : vector<128x1xf32>
    %739 = arith.mulf %730, %738 : vector<128x1xf32>
    %740 = arith.mulf %732, %738 : vector<128x1xf32>
    %741 = arith.mulf %734, %738 : vector<128x1xf32>
    %cst_357 = arith.constant 0.000000e+00 : f32
    %742 = vector.broadcast %cst_357 : f32 to vector<128x5xf32>
    %743 = tpu.concatenate %739, %740, %741, %742 in 1 : vector<128x1xf32>, vector<128x1xf32>, vector<128x1xf32>, vector<128x5xf32> -> vector<128x8xf32>
    %c0_358 = arith.constant 0 : index
    %c0_359 = arith.constant 0 : index
    %744 = vector.load %arg2[%c0_358, %c0_359] : memref<128x8xf32, #tpu.memory_space<vmem>>, vector<128x8xf32>
    tpu.vector_store %arg2[%c0_358, %c0_359], %743 {strides = array<i32>} : memref<128x8xf32, #tpu.memory_space<vmem>>, vector<128x8xf32>,
    return
  }
}

</mosaic_0001>

<llo_original>
// kernel: forward.1
$region0: #{forward.1}
  #allocation0 [shape = 'u32[]', space=smem, size = 0x4, offset = 0x4, fixed_abs, tag = 'smem constant byte address 0x4 - core index']
  #allocation1 [shape = 'u32[144,128]{1,0:T(1,128)}', space=vmem, size = 0x12000, scoped, tag = 'internal scratch']
  #allocation2 [shape = 'f32[128,8]{1,0:T(8,128)}', space=vmem, size = 0x10000, scoped, tag = 'scratch operand']
  #allocation3 [shape = 'f32[64,8]{1,0:T(8,128)}', space=vmem, size = 0x8000, scoped, tag = 'scratch operand']
  #allocation4 [shape = 'f32[32,8]{1,0:T(8,128)}', space=vmem, size = 0x4000, scoped, tag = 'scratch operand']
  #allocation5 [shape = 'f32[16,8]{1,0:T(8,128)}', space=vmem, size = 0x2000, scoped, tag = 'scratch operand']
  #allocation6 [shape = 'f32[64,16]{1,0:T(8,128)}', space=vmem, size = 0x8000, scoped, tag = 'scratch operand']
  #allocation7 [shape = 'f32[32,16]{1,0:T(8,128)}', space=vmem, size = 0x4000, scoped, tag = 'scratch operand']
  #allocation8 [shape = 'f32[16,16]{1,0:T(8,128)}', space=vmem, size = 0x2000, scoped, tag = 'scratch operand']
  #allocation9 [shape = 'f32[32,32]{1,0:T(8,128)}', space=vmem, size = 0x4000, scoped, tag = 'scratch operand']
  #allocation10 [shape = 'f32[16,32]{1,0:T(8,128)}', space=vmem, size = 0x2000, scoped, tag = 'scratch operand']
  #allocation11 [shape = 'f32[16,64]{1,0:T(8,128)}', space=vmem, size = 0x2000, scoped, tag = 'scratch operand']
  #allocation12 [shape = 'f32[8,128]{1,0:T(8,128)}', space=vmem, size = 0x1000, scoped, tag = 'scratch operand']
  #allocation13 [shape = 'f32[16,40]{1,0:T(8,128)}', space=vmem, size = 0x2000, scoped, tag = 'scratch operand']
  #allocation14 [shape = 'f32[32,40]{1,0:T(8,128)}', space=vmem, size = 0x4000, scoped, tag = 'scratch operand']
  #allocation15 [shape = 'f32[64,40]{1,0:T(8,128)}', space=vmem, size = 0x8000, scoped, tag = 'scratch operand']
  %s0 = inlined_call_operand.vmem [shape: f32[128,4], index: 0, kind: input, shape index: {}]
  %s1 = inlined_call_operand.hbm [shape: bf16[5168,128], index: 1, kind: input, shape index: {}]
  %s2 = inlined_call_operand.vmem [shape: f32[128,8], index: 2, kind: output, shape index: {}]
  %s3 = sld [smem:[#allocation0]]
  $region22: #{forward.1} parent=0
    _
  %s5 = ssub.s32 1, %s3
  %s6 = scalar_select 0, %s5, %s3
  $region1: #{forward.1} parent=0
    #allocation16 [shape = 'u8[1323008]{0}', space=vmem, size = 0x143000, scoped, tag = 'input window, operand 1, single buffered']
    #allocation17 [shape = 's32[1]{0}', space=sflag, size = 0x4, scoped, tag = 'scoped memory for forward.1']
    %7 = vsyncpa [#allocation17], 0
    // Predicated region
    $region2: #{forward.1} parent=1 // pred_check
      _
    $region3: #{forward.1} parent=1 // pred_check_branch
      %9 = sbr.rel (0) target = $region5
    $region4: #{forward.1} parent=1 // pred_region
      _
    $region5: #{forward.1} parent=1 // pred_fallthru
      _
    // Predicated region
    $region6: #{forward.1} parent=1 // pred_check
      _
    $region7: #{forward.1} parent=1 // pred_check_branch
      %11 = sbr.rel (0) target = $region9
    $region8: #{forward.1} parent=1 // pred_region
      %s13 = ssub.s32 41344, 41344
      %14 = vsyncadd [#allocation17], %s13
      %s15 = sshll.u32 [#allocation16], 4
      %s16 = int_to_ptr.vmem [resolvable:$true] %s15
      %21 = dma.hbm_to_vmem [thread:$0]  %s1, 41344, %s16, [#allocation17], 64, 64, 4
    $region9: #{forward.1} parent=1 // pred_fallthru
      _
    // Predicated region
    $region10: #{forward.1} parent=1 // pred_check
      _
    $region11: #{forward.1} parent=1 // pred_check_branch
      %23 = sbr.rel (0) target = $region13
    $region12: #{forward.1} parent=1 // pred_region
      %24 = dma.done [#allocation17], 41344
    $region13: #{forward.1} parent=1 // pred_fallthru
      _
    %v26 = vld [vmem:[%s0] sm:$0xff]
    %v27 = vld [vmem:[%s0 + $0x8] sm:$0xff]
    %v28 = vld [vmem:[%s0 + $0x10] sm:$0xff]
    %v29 = vld [vmem:[%s0 + $0x18] sm:$0xff]
    %v30 = vld [vmem:[%s0 + $0x20] sm:$0xff]
    %v31 = vld [vmem:[%s0 + $0x28] sm:$0xff]
    %v32 = vld [vmem:[%s0 + $0x30] sm:$0xff]
    %v33 = vld [vmem:[%s0 + $0x38] sm:$0xff]
    %v34 = vld [vmem:[%s0 + $0x40] sm:$0xff]
    %v35 = vld [vmem:[%s0 + $0x48] sm:$0xff]
    %v36 = vld [vmem:[%s0 + $0x50] sm:$0xff]
    %v37 = vld [vmem:[%s0 + $0x58] sm:$0xff]
    %v38 = vld [vmem:[%s0 + $0x60] sm:$0xff]
    %v39 = vld [vmem:[%s0 + $0x68] sm:$0xff]
    %v40 = vld [vmem:[%s0 + $0x70] sm:$0xff]
    %v41 = vld [vmem:[%s0 + $0x78] sm:$0xff]
    %vm58 = vcmask 1040384
    %v59 = vrot.slane %v26, 7
    %v60 = vrot.slane %v27, 7
    %v61 = vsel %vm58, %v59, %v60
    %v62 = vrot.slane %v28, 7
    %v63 = vsel %vm58, %v60, %v62
    %v64 = vrot.slane %v29, 7
    %v65 = vsel %vm58, %v62, %v64
    %v66 = vrot.slane %v30, 7
    %v67 = vsel %vm58, %v64, %v66
    %v68 = vrot.slane %v31, 7
    %v69 = vsel %vm58, %v66, %v68
    %v70 = vrot.slane %v32, 7
    %v71 = vsel %vm58, %v68, %v70
    %v72 = vrot.slane %v33, 7
    %v73 = vsel %vm58, %v70, %v72
    %v74 = vrot.slane %v34, 7
    %v75 = vsel %vm58, %v72, %v74
    %v76 = vrot.slane %v35, 7
    %v77 = vsel %vm58, %v74, %v76
    %v78 = vrot.slane %v36, 7
    %v79 = vsel %vm58, %v76, %v78
    %v80 = vrot.slane %v37, 7
    %v81 = vsel %vm58, %v78, %v80
    %v82 = vrot.slane %v38, 7
    %v83 = vsel %vm58, %v80, %v82
    %v84 = vrot.slane %v39, 7
    %v85 = vsel %vm58, %v82, %v84
    %v86 = vrot.slane %v40, 7
    %v87 = vsel %vm58, %v84, %v86
    %v88 = vrot.slane %v41, 7
    %v89 = vsel %vm58, %v86, %v88
    %v106 = vsel %vm58, 0.0, %v59
    %v107 = vlaneseq
    %v108 = vshrl.u32 %v107, 7
    %v109 = vadd.s32 %v108, 8
    %v110 = vadd.s32 %v108, 16
    %v111 = vadd.s32 %v108, 24
    %v112 = vadd.s32 %v108, 32
    %v113 = vadd.s32 %v108, 40
    %v114 = vadd.s32 %v108, 48
    %v115 = vadd.s32 %v108, 56
    %v116 = vadd.s32 %v108, 64
    %v117 = vadd.s32 %v108, 72
    %v118 = vadd.s32 %v108, 80
    %v119 = vadd.s32 %v108, 88
    %v120 = vadd.s32 %v108, 96
    %v121 = vadd.s32 %v108, 104
    %v122 = vadd.s32 %v108, 112
    %v123 = vadd.s32 %v108, 120
    %vm124 = vcmp.lt.s32.totalorder %v108, 0
    %v125 = vsub.s32 0, %v108
    %v126 = vsel %vm124, %v125, %v108
    %v127 = vshrl.u32 %v126, 6
    %v128 = vand.u32 %v126, 63
    %v129 = vsub.s32 0, %v128
    %v130 = vsel %vm124, %v129, %v128
    %vm131 = vcmp.lt.s32.totalorder %v109, 0
    %v132 = vsub.s32 0, %v109
    %v133 = vsel %vm131, %v132, %v109
    %v134 = vshrl.u32 %v133, 6
    %v135 = vand.u32 %v133, 63
    %v136 = vsub.s32 0, %v135
    %v137 = vsel %vm131, %v136, %v135
    %vm138 = vcmp.lt.s32.totalorder %v110, 0
    %v139 = vsub.s32 0, %v110
    %v140 = vsel %vm138, %v139, %v110
    %v141 = vshrl.u32 %v140, 6
    %v142 = vand.u32 %v140, 63
    %v143 = vsub.s32 0, %v142
    %v144 = vsel %vm138, %v143, %v142
    %vm145 = vcmp.lt.s32.totalorder %v111, 0
    %v146 = vsub.s32 0, %v111
    %v147 = vsel %vm145, %v146, %v111
    %v148 = vshrl.u32 %v147, 6
    %v149 = vand.u32 %v147, 63
    %v150 = vsub.s32 0, %v149
    %v151 = vsel %vm145, %v150, %v149
    %vm152 = vcmp.lt.s32.totalorder %v112, 0
    %v153 = vsub.s32 0, %v112
    %v154 = vsel %vm152, %v153, %v112
    %v155 = vshrl.u32 %v154, 6
    %v156 = vand.u32 %v154, 63
    %v157 = vsub.s32 0, %v156
    %v158 = vsel %vm152, %v157, %v156
    %vm159 = vcmp.lt.s32.totalorder %v113, 0
    %v160 = vsub.s32 0, %v113
    %v161 = vsel %vm159, %v160, %v113
    %v162 = vshrl.u32 %v161, 6
    %v163 = vand.u32 %v161, 63
    %v164 = vsub.s32 0, %v163
    %v165 = vsel %vm159, %v164, %v163
    %vm166 = vcmp.lt.s32.totalorder %v114, 0
    %v167 = vsub.s32 0, %v114
    %v168 = vsel %vm166, %v167, %v114
    %v169 = vshrl.u32 %v168, 6
    %v170 = vand.u32 %v168, 63
    %v171 = vsub.s32 0, %v170
    %v172 = vsel %vm166, %v171, %v170
    %vm173 = vcmp.lt.s32.totalorder %v115, 0
    %v174 = vsub.s32 0, %v115
    %v175 = vsel %vm173, %v174, %v115
    %v176 = vshrl.u32 %v175, 6
    %v177 = vand.u32 %v175, 63
    %v178 = vsub.s32 0, %v177
    %v179 = vsel %vm173, %v178, %v177
    %vm180 = vcmp.lt.s32.totalorder %v116, 0
    %v181 = vsub.s32 0, %v116
    %v182 = vsel %vm180, %v181, %v116
    %v183 = vshrl.u32 %v182, 6
    %v184 = vand.u32 %v182, 63
    %v185 = vsub.s32 0, %v184
    %v186 = vsel %vm180, %v185, %v184
    %vm187 = vcmp.lt.s32.totalorder %v117, 0
    %v188 = vsub.s32 0, %v117
    %v189 = vsel %vm187, %v188, %v117
    %v190 = vshrl.u32 %v189, 6
    %v191 = vand.u32 %v189, 63
    %v192 = vsub.s32 0, %v191
    %v193 = vsel %vm187, %v192, %v191
    %vm194 = vcmp.lt.s32.totalorder %v118, 0
    %v195 = vsub.s32 0, %v118
    %v196 = vsel %vm194, %v195, %v118
    %v197 = vshrl.u32 %v196, 6
    %v198 = vand.u32 %v196, 63
    %v199 = vsub.s32 0, %v198
    %v200 = vsel %vm194, %v199, %v198
    %vm201 = vcmp.lt.s32.totalorder %v119, 0
    %v202 = vsub.s32 0, %v119
    %v203 = vsel %vm201, %v202, %v119
    %v204 = vshrl.u32 %v203, 6
    %v205 = vand.u32 %v203, 63
    %v206 = vsub.s32 0, %v205
    %v207 = vsel %vm201, %v206, %v205
    %vm208 = vcmp.lt.s32.totalorder %v120, 0
    %v209 = vsub.s32 0, %v120
    %v210 = vsel %vm208, %v209, %v120
    %v211 = vshrl.u32 %v210, 6
    %v212 = vand.u32 %v210, 63
    %v213 = vsub.s32 0, %v212
    %v214 = vsel %vm208, %v213, %v212
    %vm215 = vcmp.lt.s32.totalorder %v121, 0
    %v216 = vsub.s32 0, %v121
    %v217 = vsel %vm215, %v216, %v121
    %v218 = vshrl.u32 %v217, 6
    %v219 = vand.u32 %v217, 63
    %v220 = vsub.s32 0, %v219
    %v221 = vsel %vm215, %v220, %v219
    %vm222 = vcmp.lt.s32.totalorder %v122, 0
    %v223 = vsub.s32 0, %v122
    %v224 = vsel %vm222, %v223, %v122
    %v225 = vshrl.u32 %v224, 6
    %v226 = vand.u32 %v224, 63
    %v227 = vsub.s32 0, %v226
    %v228 = vsel %vm222, %v227, %v226
    %vm229 = vcmp.lt.s32.totalorder %v123, 0
    %v230 = vsub.s32 0, %v123
    %v231 = vsel %vm229, %v230, %v123
    %v232 = vshrl.u32 %v231, 6
    %v233 = vand.u32 %v231, 63
    %v234 = vsub.s32 0, %v233
    %v235 = vsel %vm229, %v234, %v233
    %vm236 = vcmp.ne.s32.totalorder %v130, 0
    %vm237 = vcmp.ne.s32.totalorder %v137, 0
    %vm238 = vcmp.ne.s32.totalorder %v144, 0
    %vm239 = vcmp.ne.s32.totalorder %v151, 0
    %vm240 = vcmp.ne.s32.totalorder %v158, 0
    %vm241 = vcmp.ne.s32.totalorder %v165, 0
    %vm242 = vcmp.ne.s32.totalorder %v172, 0
    %vm243 = vcmp.ne.s32.totalorder %v179, 0
    %vm244 = vcmp.ne.s32.totalorder %v186, 0
    %vm245 = vcmp.ne.s32.totalorder %v193, 0
    %vm246 = vcmp.ne.s32.totalorder %v200, 0
    %vm247 = vcmp.ne.s32.totalorder %v207, 0
    %vm248 = vcmp.ne.s32.totalorder %v214, 0
    %vm249 = vcmp.ne.s32.totalorder %v221, 0
    %vm250 = vcmp.ne.s32.totalorder %v228, 0
    %vm251 = vcmp.ne.s32.totalorder %v235, 0
    %vm252 = vcmp.lt.s32.totalorder %v130, 0
    %vm253 = vcmp.lt.s32.totalorder %v137, 0
    %vm254 = vcmp.lt.s32.totalorder %v144, 0
    %vm255 = vcmp.lt.s32.totalorder %v151, 0
    %vm256 = vcmp.lt.s32.totalorder %v158, 0
    %vm257 = vcmp.lt.s32.totalorder %v165, 0
    %vm258 = vcmp.lt.s32.totalorder %v172, 0
    %vm259 = vcmp.lt.s32.totalorder %v179, 0
    %vm260 = vcmp.lt.s32.totalorder %v186, 0
    %vm261 = vcmp.lt.s32.totalorder %v193, 0
    %vm262 = vcmp.lt.s32.totalorder %v200, 0
    %vm263 = vcmp.lt.s32.totalorder %v207, 0
    %vm264 = vcmp.lt.s32.totalorder %v214, 0
    %vm265 = vcmp.lt.s32.totalorder %v221, 0
    %vm266 = vcmp.lt.s32.totalorder %v228, 0
    %vm267 = vcmp.lt.s32.totalorder %v235, 0
    %vm268 = vmand %vm252, %vm236
    %vm269 = vmand %vm253, %vm237
    %vm270 = vmand %vm254, %vm238
    %vm271 = vmand %vm255, %vm239
    %vm272 = vmand %vm256, %vm240
    %vm273 = vmand %vm257, %vm241
    %vm274 = vmand %vm258, %vm242
    %vm275 = vmand %vm259, %vm243
    %vm276 = vmand %vm260, %vm244
    %vm277 = vmand %vm261, %vm245
    %vm278 = vmand %vm262, %vm246
    %vm279 = vmand %vm263, %vm247
    %vm280 = vmand %vm264, %vm248
    %vm281 = vmand %vm265, %vm249
    %vm282 = vmand %vm266, %vm250
    %vm283 = vmand %vm267, %vm251
    %v284 = vadd.s32 %v130, 64
    %v285 = vadd.s32 %v137, 64
    %v286 = vadd.s32 %v144, 64
    %v287 = vadd.s32 %v151, 64
    %v288 = vadd.s32 %v158, 64
    %v289 = vadd.s32 %v165, 64
    %v290 = vadd.s32 %v172, 64
    %v291 = vadd.s32 %v179, 64
    %v292 = vadd.s32 %v186, 64
    %v293 = vadd.s32 %v193, 64
    %v294 = vadd.s32 %v200, 64
    %v295 = vadd.s32 %v207, 64
    %v296 = vadd.s32 %v214, 64
    %v297 = vadd.s32 %v221, 64
    %v298 = vadd.s32 %v228, 64
    %v299 = vadd.s32 %v235, 64
    %v300 = vsel %vm268, %v284, %v130
    %v301 = vsel %vm269, %v285, %v137
    %v302 = vsel %vm270, %v286, %v144
    %v303 = vsel %vm271, %v287, %v151
    %v304 = vsel %vm272, %v288, %v158
    %v305 = vsel %vm273, %v289, %v165
    %v306 = vsel %vm274, %v290, %v172
    %v307 = vsel %vm275, %v291, %v179
    %v308 = vsel %vm276, %v292, %v186
    %v309 = vsel %vm277, %v293, %v193
    %v310 = vsel %vm278, %v294, %v200
    %v311 = vsel %vm279, %v295, %v207
    %v312 = vsel %vm280, %v296, %v214
    %v313 = vsel %vm281, %v297, %v221
    %v314 = vsel %vm282, %v298, %v228
    %v315 = vsel %vm283, %v299, %v235
    %vm316 = vcmp.ge.s32.totalorder %v300, 1
    %vm317 = vcmp.ge.s32.totalorder %v301, 1
    %vm318 = vcmp.ge.s32.totalorder %v302, 1
    %vm319 = vcmp.ge.s32.totalorder %v303, 1
    %vm320 = vcmp.ge.s32.totalorder %v304, 1
    %vm321 = vcmp.ge.s32.totalorder %v305, 1
    %vm322 = vcmp.ge.s32.totalorder %v306, 1
    %vm323 = vcmp.ge.s32.totalorder %v307, 1
    %vm324 = vcmp.ge.s32.totalorder %v308, 1
    %vm325 = vcmp.ge.s32.totalorder %v309, 1
    %vm326 = vcmp.ge.s32.totalorder %v310, 1
    %vm327 = vcmp.ge.s32.totalorder %v311, 1
    %vm328 = vcmp.ge.s32.totalorder %v312, 1
    %vm329 = vcmp.ge.s32.totalorder %v313, 1
    %vm330 = vcmp.ge.s32.totalorder %v314, 1
    %vm331 = vcmp.ge.s32.totalorder %v315, 1
    %v332 = vsel %vm316, 1, 0
    %v333 = vsel %vm317, 1, 0
    %v334 = vsel %vm318, 1, 0
    %v335 = vsel %vm319, 1, 0
    %v336 = vsel %vm320, 1, 0
    %v337 = vsel %vm321, 1, 0
    %v338 = vsel %vm322, 1, 0
    %v339 = vsel %vm323, 1, 0
    %v340 = vsel %vm324, 1, 0
    %v341 = vsel %vm325, 1, 0
    %v342 = vsel %vm326, 1, 0
    %v343 = vsel %vm327, 1, 0
    %v344 = vsel %vm328, 1, 0
    %v345 = vsel %vm329, 1, 0
    %v346 = vsel %vm330, 1, 0
    %v347 = vsel %vm331, 1, 0
    %vm348 = vcmp.eq.s32.totalorder %v332, 1
    %vm349 = vcmp.eq.s32.totalorder %v333, 1
    %vm350 = vcmp.eq.s32.totalorder %v334, 1
    %vm351 = vcmp.eq.s32.totalorder %v335, 1
    %vm352 = vcmp.eq.s32.totalorder %v336, 1
    %vm353 = vcmp.eq.s32.totalorder %v337, 1
    %vm354 = vcmp.eq.s32.totalorder %v338, 1
    %vm355 = vcmp.eq.s32.totalorder %v339, 1
    %vm356 = vcmp.eq.s32.totalorder %v340, 1
    %vm357 = vcmp.eq.s32.totalorder %v341, 1
    %vm358 = vcmp.eq.s32.totalorder %v342, 1
    %vm359 = vcmp.eq.s32.totalorder %v343, 1
    %vm360 = vcmp.eq.s32.totalorder %v344, 1
    %vm361 = vcmp.eq.s32.totalorder %v345, 1
    %vm362 = vcmp.eq.s32.totalorder %v346, 1
    %vm363 = vcmp.eq.s32.totalorder %v347, 1
    %v364 = vsel %vm348, %v106, 0.0
    %v365 = vsel %vm349, %v61, 0.0
    %v366 = vsel %vm350, %v63, 0.0
    %v367 = vsel %vm351, %v65, 0.0
    %v368 = vsel %vm352, %v67, 0.0
    %v369 = vsel %vm353, %v69, 0.0
    %v370 = vsel %vm354, %v71, 0.0
    %v371 = vsel %vm355, %v73, 0.0
    %v372 = vsel %vm356, %v75, 0.0
    %v373 = vsel %vm357, %v77, 0.0
    %v374 = vsel %vm358, %v79, 0.0
    %v375 = vsel %vm359, %v81, 0.0
    %v376 = vsel %vm360, %v83, 0.0
    %v377 = vsel %vm361, %v85, 0.0
    %v378 = vsel %vm362, %v87, 0.0
    %v379 = vsel %vm363, %v89, 0.0
    %vm380 = vcmask 1046528
    %v381 = vrot.slane %v26, 1
    %v382 = vrot.slane %v27, 1
    %v383 = vsel %vm380, %v381, %v382
    %v384 = vrot.slane %v28, 1
    %v385 = vsel %vm380, %v382, %v384
    %v386 = vrot.slane %v29, 1
    %v387 = vsel %vm380, %v384, %v386
    %v388 = vrot.slane %v30, 1
    %v389 = vsel %vm380, %v386, %v388
    %v390 = vrot.slane %v31, 1
    %v391 = vsel %vm380, %v388, %v390
    %v392 = vrot.slane %v32, 1
    %v393 = vsel %vm380, %v390, %v392
    %v394 = vrot.slane %v33, 1
    %v395 = vsel %vm380, %v392, %v394
    %v396 = vrot.slane %v34, 1
    %v397 = vsel %vm380, %v394, %v396
    %v398 = vrot.slane %v35, 1
    %v399 = vsel %vm380, %v396, %v398
    %v400 = vrot.slane %v36, 1
    %v401 = vsel %vm380, %v398, %v400
    %v402 = vrot.slane %v37, 1
    %v403 = vsel %vm380, %v400, %v402
    %v404 = vrot.slane %v38, 1
    %v405 = vsel %vm380, %v402, %v404
    %v406 = vrot.slane %v39, 1
    %v407 = vsel %vm380, %v404, %v406
    %v408 = vrot.slane %v40, 1
    %v409 = vsel %vm380, %v406, %v408
    %v410 = vrot.slane %v41, 1
    %v411 = vsel %vm380, %v408, %v410
    %v428 = vsel %vm380, %v410, 0.0
    %vm429 = vcmp.lt.s32.totalorder %v300, 63
    %vm430 = vcmp.lt.s32.totalorder %v301, 63
    %vm431 = vcmp.lt.s32.totalorder %v302, 63
    %vm432 = vcmp.lt.s32.totalorder %v303, 63
    %vm433 = vcmp.lt.s32.totalorder %v304, 63
    %vm434 = vcmp.lt.s32.totalorder %v305, 63
    %vm435 = vcmp.lt.s32.totalorder %v306, 63
    %vm436 = vcmp.lt.s32.totalorder %v307, 63
    %vm437 = vcmp.lt.s32.totalorder %v308, 63
    %vm438 = vcmp.lt.s32.totalorder %v309, 63
    %vm439 = vcmp.lt.s32.totalorder %v310, 63
    %vm440 = vcmp.lt.s32.totalorder %v311, 63
    %vm441 = vcmp.lt.s32.totalorder %v312, 63
    %vm442 = vcmp.lt.s32.totalorder %v313, 63
    %vm443 = vcmp.lt.s32.totalorder %v314, 63
    %vm444 = vcmp.lt.s32.totalorder %v315, 63
    %v445 = vsel %vm429, 1, 0
    %v446 = vsel %vm430, 1, 0
    %v447 = vsel %vm431, 1, 0
    %v448 = vsel %vm432, 1, 0
    %v449 = vsel %vm433, 1, 0
    %v450 = vsel %vm434, 1, 0
    %v451 = vsel %vm435, 1, 0
    %v452 = vsel %vm436, 1, 0
    %v453 = vsel %vm437, 1, 0
    %v454 = vsel %vm438, 1, 0
    %v455 = vsel %vm439, 1, 0
    %v456 = vsel %vm440, 1, 0
    %v457 = vsel %vm441, 1, 0
    %v458 = vsel %vm442, 1, 0
    %v459 = vsel %vm443, 1, 0
    %v460 = vsel %vm444, 1, 0
    %vm461 = vcmp.eq.s32.totalorder %v445, 1
    %vm462 = vcmp.eq.s32.totalorder %v446, 1
    %vm463 = vcmp.eq.s32.totalorder %v447, 1
    %vm464 = vcmp.eq.s32.totalorder %v448, 1
    %vm465 = vcmp.eq.s32.totalorder %v449, 1
    %vm466 = vcmp.eq.s32.totalorder %v450, 1
    %vm467 = vcmp.eq.s32.totalorder %v451, 1
    %vm468 = vcmp.eq.s32.totalorder %v452, 1
    %vm469 = vcmp.eq.s32.totalorder %v453, 1
    %vm470 = vcmp.eq.s32.totalorder %v454, 1
    %vm471 = vcmp.eq.s32.totalorder %v455, 1
    %vm472 = vcmp.eq.s32.totalorder %v456, 1
    %vm473 = vcmp.eq.s32.totalorder %v457, 1
    %vm474 = vcmp.eq.s32.totalorder %v458, 1
    %vm475 = vcmp.eq.s32.totalorder %v459, 1
    %vm476 = vcmp.eq.s32.totalorder %v460, 1
    %v477 = vsel %vm461, %v383, 0.0
    %v478 = vsel %vm462, %v385, 0.0
    %v479 = vsel %vm463, %v387, 0.0
    %v480 = vsel %vm464, %v389, 0.0
    %v481 = vsel %vm465, %v391, 0.0
    %v482 = vsel %vm466, %v393, 0.0
    %v483 = vsel %vm467, %v395, 0.0
    %v484 = vsel %vm468, %v397, 0.0
    %v485 = vsel %vm469, %v399, 0.0
    %v486 = vsel %vm470, %v401, 0.0
    %v487 = vsel %vm471, %v403, 0.0
    %v488 = vsel %vm472, %v405, 0.0
    %v489 = vsel %vm473, %v407, 0.0
    %v490 = vsel %vm474, %v409, 0.0
    %v491 = vsel %vm475, %v411, 0.0
    %v492 = vsel %vm476, %v428, 0.0
    %493 = vrot.lane.b32.xlu0 %v26, 4
    %v494 = vpop.permute.xlu0 %493
    %495 = vrot.lane.b32.xlu0 %v27, 4
    %v496 = vpop.permute.xlu0 %495
    %497 = vrot.lane.b32.xlu0 %v28, 4
    %v498 = vpop.permute.xlu0 %497
    %499 = vrot.lane.b32.xlu0 %v29, 4
    %v500 = vpop.permute.xlu0 %499
    %501 = vrot.lane.b32.xlu0 %v30, 4
    %v502 = vpop.permute.xlu0 %501
    %503 = vrot.lane.b32.xlu0 %v31, 4
    %v504 = vpop.permute.xlu0 %503
    %505 = vrot.lane.b32.xlu0 %v32, 4
    %v506 = vpop.permute.xlu0 %505
    %507 = vrot.lane.b32.xlu0 %v33, 4
    %v508 = vpop.permute.xlu0 %507
    %509 = vrot.lane.b32.xlu0 %v34, 4
    %v510 = vpop.permute.xlu0 %509
    %511 = vrot.lane.b32.xlu0 %v35, 4
    %v512 = vpop.permute.xlu0 %511
    %513 = vrot.lane.b32.xlu0 %v36, 4
    %v514 = vpop.permute.xlu0 %513
    %515 = vrot.lane.b32.xlu0 %v37, 4
    %v516 = vpop.permute.xlu0 %515
    %517 = vrot.lane.b32.xlu0 %v38, 4
    %v518 = vpop.permute.xlu0 %517
    %519 = vrot.lane.b32.xlu0 %v39, 4
    %v520 = vpop.permute.xlu0 %519
    %521 = vrot.lane.b32.xlu0 %v40, 4
    %v522 = vpop.permute.xlu0 %521
    %523 = vrot.lane.b32.xlu0 %v41, 4
    %v524 = vpop.permute.xlu0 %523
    %557 = vrot.lane.b32.xlu0 %v477, 8
    %v558 = vpop.permute.xlu0 %557
    %559 = vrot.lane.b32.xlu0 %v478, 8
    %v560 = vpop.permute.xlu0 %559
    %561 = vrot.lane.b32.xlu0 %v479, 8
    %v562 = vpop.permute.xlu0 %561
    %563 = vrot.lane.b32.xlu0 %v480, 8
    %v564 = vpop.permute.xlu0 %563
    %565 = vrot.lane.b32.xlu0 %v481, 8
    %v566 = vpop.permute.xlu0 %565
    %567 = vrot.lane.b32.xlu0 %v482, 8
    %v568 = vpop.permute.xlu0 %567
    %569 = vrot.lane.b32.xlu0 %v483, 8
    %v570 = vpop.permute.xlu0 %569
    %571 = vrot.lane.b32.xlu0 %v484, 8
    %v572 = vpop.permute.xlu0 %571
    %573 = vrot.lane.b32.xlu0 %v485, 8
    %v574 = vpop.permute.xlu0 %573
    %575 = vrot.lane.b32.xlu0 %v486, 8
    %v576 = vpop.permute.xlu0 %575
    %577 = vrot.lane.b32.xlu0 %v487, 8
    %v578 = vpop.permute.xlu0 %577
    %579 = vrot.lane.b32.xlu0 %v488, 8
    %v580 = vpop.permute.xlu0 %579
    %581 = vrot.lane.b32.xlu0 %v489, 8
    %v582 = vpop.permute.xlu0 %581
    %583 = vrot.lane.b32.xlu0 %v490, 8
    %v584 = vpop.permute.xlu0 %583
    %585 = vrot.lane.b32.xlu0 %v491, 8
    %v586 = vpop.permute.xlu0 %585
    %587 = vrot.lane.b32.xlu0 %v492, 8
    %v588 = vpop.permute.xlu0 %587
    %vm605 = vcmask 31744
    %v606 = vsel %vm605, %v364, %v494
    %v607 = vsel %vm605, %v365, %v496
    %v608 = vsel %vm605, %v366, %v498
    %v609 = vsel %vm605, %v367, %v500
    %v610 = vsel %vm605, %v368, %v502
    %v611 = vsel %vm605, %v369, %v504
    %v612 = vsel %vm605, %v370, %v506
    %v613 = vsel %vm605, %v371, %v508
    %v614 = vsel %vm605, %v372, %v510
    %v615 = vsel %vm605, %v373, %v512
    %v616 = vsel %vm605, %v374, %v514
    %v617 = vsel %vm605, %v375, %v516
    %v618 = vsel %vm605, %v376, %v518
    %v619 = vsel %vm605, %v377, %v520
    %v620 = vsel %vm605, %v378, %v522
    %v621 = vsel %vm605, %v379, %v524
    %vm622 = vcmask 64512
    %v623 = vsel %vm622, %v606, %v558
    %v624 = vsel %vm622, %v607, %v560
    %v625 = vsel %vm622, %v608, %v562
    %v626 = vsel %vm622, %v609, %v564
    %v627 = vsel %vm622, %v610, %v566
    %v628 = vsel %vm622, %v611, %v568
    %v629 = vsel %vm622, %v612, %v570
    %v630 = vsel %vm622, %v613, %v572
    %v631 = vsel %vm622, %v614, %v574
    %v632 = vsel %vm622, %v615, %v576
    %v633 = vsel %vm622, %v616, %v578
    %v634 = vsel %vm622, %v617, %v580
    %v635 = vsel %vm622, %v618, %v582
    %v636 = vsel %vm622, %v619, %v584
    %v637 = vsel %vm622, %v620, %v586
    %v638 = vsel %vm622, %v621, %v588
    %vm639 = vcmask 97280
    %v640 = vsel %vm639, %v623, 1.0
    %v641 = vsel %vm639, %v624, 1.0
    %v642 = vsel %vm639, %v625, 1.0
    %v643 = vsel %vm639, %v626, 1.0
    %v644 = vsel %vm639, %v627, 1.0
    %v645 = vsel %vm639, %v628, 1.0
    %v646 = vsel %vm639, %v629, 1.0
    %v647 = vsel %vm639, %v630, 1.0
    %v648 = vsel %vm639, %v631, 1.0
    %v649 = vsel %vm639, %v632, 1.0
    %v650 = vsel %vm639, %v633, 1.0
    %v651 = vsel %vm639, %v634, 1.0
    %v652 = vsel %vm639, %v635, 1.0
    %v653 = vsel %vm639, %v636, 1.0
    %v654 = vsel %vm639, %v637, 1.0
    %v655 = vsel %vm639, %v638, 1.0
    %v656 = vpack.c.bf16 %v641, %v640
    %v657 = vpack.c.bf16 %v643, %v642
    %v658 = vpack.c.bf16 %v645, %v644
    %v659 = vpack.c.bf16 %v647, %v646
    %v660 = vpack.c.bf16 %v649, %v648
    %v661 = vpack.c.bf16 %v651, %v650
    %v662 = vpack.c.bf16 %v653, %v652
    %v663 = vpack.c.bf16 %v655, %v654
    %v664 = vld [vmem:[#allocation16] sm:$0xf]
    %v665 = vld [vmem:[#allocation16 + $0x4] sm:$0x7]
    %v668 = vunpack.c.l.b16 %v664
    %v669 = vunpack.c.l.b16 %v665
    %v670 = vpack.c.b16 %v669, %v668
    %vm671 = vcmask 105472
    %v673 = vsel %vm671, %v656, 0
    %v676 = vsel %vm671, %v657, 0
    %v679 = vsel %vm671, %v658, 0
    %v682 = vsel %vm671, %v659, 0
    %v685 = vsel %vm671, %v660, 0
    %v688 = vsel %vm671, %v661, 0
    %v691 = vsel %vm671, %v662, 0
    %v694 = vsel %vm671, %v663, 0
    %vm696 = vcmask 1045504
    %v697 = vsel %vm696, 4294967295, 65535
    %v698 = vsel %vm380, %v697, 0
    %v700 = vand.u32 %v670, %v698
    %702 = vmatprep.subr.bf16.mxu0 0
    %703 = vmatpush1.bf16.msra.mxu0 %v700
    %704 = vmatprep.subr.bf16.mxu0 0
    %705 = vmatpush1.bf16.msra.mxu0 0
    %706 = vmatprep.subr.bf16.mxu0 0
    %707 = vmatpush1.bf16.msra.mxu0 0
    %708 = vmatprep.subr.bf16.mxu0 0
    %709 = vmatpush1.bf16.msra.mxu0 0
    %710 = vmatprep.subr.bf16.mxu0 0
    %711 = vmatpush1.bf16.msra.mxu0 0
    %712 = vmatprep.subr.bf16.mxu0 0
    %713 = vmatpush1.bf16.msra.mxu0 0
    %714 = vmatprep.subr.bf16.mxu0 0
    %715 = vmatpush1.bf16.msra.mxu0 0
    %716 = vmatprep.subr.bf16.mxu0 0
    %717 = vmatpush1.bf16.msra.mxu0 0
    %718 = vmatprep.subr.bf16.mxu0 0
    %719 = vmatpush1.bf16.msra.mxu0 0
    %720 = vmatprep.subr.bf16.mxu0 0
    %721 = vmatpush1.bf16.msra.mxu0 0
    %722 = vmatprep.subr.bf16.mxu0 0
    %723 = vmatpush1.bf16.msra.mxu0 0
    %724 = vmatprep.subr.bf16.mxu0 0
    %725 = vmatpush1.bf16.msra.mxu0 0
    %726 = vmatprep.subr.bf16.mxu0 0
    %727 = vmatpush1.bf16.msra.mxu0 0
    %728 = vmatprep.subr.bf16.mxu0 0
    %729 = vmatpush1.bf16.msra.mxu0 0
    %730 = vmatprep.subr.bf16.mxu0 0
    %731 = vmatpush1.bf16.msra.mxu0 0
    %732 = vmatprep.subr.bf16.mxu0 0
    %733 = vmatpush1.bf16.msra.mxu0 0
    %734 = vmatprep.mubr.bf16.mxu0 0
    %735 = vmatmul.mubr.bf16.gmra.mrb[0].mxu0 %v673
    %v736 = vpop.f32.mrb[0].mxu0
    %v737 = vadd.f32 0.0, %v736
    %v738 = vpop.f32.mrb[0].mxu0
    %v739 = vpop.f32.mrb[0].mxu0
    %v740 = vadd.f32 0.0, %v739
    %v741 = vpop.f32.mrb[0].mxu0
    %742 = vmatprep.mubr.bf16.mxu0 0
    %743 = vmatmul.mubr.bf16.gmra.mrb[0].mxu0 %v676
    %v744 = vpop.f32.mrb[0].mxu0
    %v745 = vadd.f32 0.0, %v744
    %v746 = vpop.f32.mrb[0].mxu0
    %v747 = vpop.f32.mrb[0].mxu0
    %v748 = vadd.f32 0.0, %v747
    %v749 = vpop.f32.mrb[0].mxu0
    %750 = vmatprep.mubr.bf16.mxu0 0
    %751 = vmatmul.mubr.bf16.gmra.mrb[0].mxu0 %v679
    %v752 = vpop.f32.mrb[0].mxu0
    %v753 = vadd.f32 0.0, %v752
    %v754 = vpop.f32.mrb[0].mxu0
    %v755 = vpop.f32.mrb[0].mxu0
    %v756 = vadd.f32 0.0, %v755
    %v757 = vpop.f32.mrb[0].mxu0
    %758 = vmatprep.mubr.bf16.mxu0 0
    %759 = vmatmul.mubr.bf16.gmra.mrb[0].mxu0 %v682
    %v760 = vpop.f32.mrb[0].mxu0
    %v761 = vadd.f32 0.0, %v760
    %v762 = vpop.f32.mrb[0].mxu0
    %v763 = vpop.f32.mrb[0].mxu0
    %v764 = vadd.f32 0.0, %v763
    %v765 = vpop.f32.mrb[0].mxu0
    %766 = vmatprep.mubr.bf16.mxu0 0
    %767 = vmatmul.mubr.bf16.gmra.mrb[0].mxu0 %v685
    %v768 = vpop.f32.mrb[0].mxu0
    %v769 = vadd.f32 0.0, %v768
    %v770 = vpop.f32.mrb[0].mxu0
    %v771 = vpop.f32.mrb[0].mxu0
    %v772 = vadd.f32 0.0, %v771
    %v773 = vpop.f32.mrb[0].mxu0
    %774 = vmatprep.mubr.bf16.mxu0 0
    %775 = vmatmul.mubr.bf16.gmra.mrb[0].mxu0 %v688
    %v776 = vpop.f32.mrb[0].mxu0
    %v777 = vadd.f32 0.0, %v776
    %v778 = vpop.f32.mrb[0].mxu0
    %v779 = vpop.f32.mrb[0].mxu0
    %v780 = vadd.f32 0.0, %v779
    %v781 = vpop.f32.mrb[0].mxu0
    %782 = vmatprep.mubr.bf16.mxu0 0
    %783 = vmatmul.mubr.bf16.gmra.mrb[0].mxu0 %v691
    %v784 = vpop.f32.mrb[0].mxu0
    %v785 = vadd.f32 0.0, %v784
    %v786 = vpop.f32.mrb[0].mxu0
    %v787 = vpop.f32.mrb[0].mxu0
    %v788 = vadd.f32 0.0, %v787
    %v789 = vpop.f32.mrb[0].mxu0
    %790 = vmatprep.mubr.bf16.mxu0 0
    %791 = vmatmul.mubr.bf16.gmra.mrb[0].mxu0 %v694
    %v792 = vpop.f32.mrb[0].mxu0
    %v793 = vadd.f32 0.0, %v792
    %v794 = vpop.f32.mrb[0].mxu0
    %v795 = vpop.f32.mrb[0].mxu0
    %v796 = vadd.f32 0.0, %v795
    %v797 = vpop.f32.mrb[0].mxu0
    %798 = vdwg.mxu0
    %v799 = vmax.f32 %v737, 0.0
    %v800 = vmax.f32 %v740, 0.0
    %v801 = vmax.f32 %v745, 0.0
    %v802 = vmax.f32 %v748, 0.0
    %v803 = vmax.f32 %v753, 0.0
    %v804 = vmax.f32 %v756, 0.0
    %v805 = vmax.f32 %v761, 0.0
    %v806 = vmax.f32 %v764, 0.0
    %v807 = vmax.f32 %v769, 0.0
    %v808 = vmax.f32 %v772, 0.0
    %v809 = vmax.f32 %v777, 0.0
    %v810 = vmax.f32 %v780, 0.0
    %v811 = vmax.f32 %v785, 0.0
    %v812 = vmax.f32 %v788, 0.0
    %v813 = vmax.f32 %v793, 0.0
    %v814 = vmax.f32 %v796, 0.0
    %v831 = vrot.slane %v799, 7
    %v832 = vrot.slane %v800, 7
    %v833 = vsel %vm58, %v831, %v832
    %v834 = vrot.slane %v801, 7
    %v835 = vsel %vm58, %v832, %v834
    %v836 = vrot.slane %v802, 7
    %v837 = vsel %vm58, %v834, %v836
    %v838 = vrot.slane %v803, 7
    %v839 = vsel %vm58, %v836, %v838
    %v840 = vrot.slane %v804, 7
    %v841 = vsel %vm58, %v838, %v840
    %v842 = vrot.slane %v805, 7
    %v843 = vsel %vm58, %v840, %v842
    %v844 = vrot.slane %v806, 7
    %v845 = vsel %vm58, %v842, %v844
    %v846 = vrot.slane %v807, 7
    %v847 = vsel %vm58, %v844, %v846
    %v848 = vrot.slane %v808, 7
    %v849 = vsel %vm58, %v846, %v848
    %v850 = vrot.slane %v809, 7
    %v851 = vsel %vm58, %v848, %v850
    %v852 = vrot.slane %v810, 7
    %v853 = vsel %vm58, %v850, %v852
    %v854 = vrot.slane %v811, 7
    %v855 = vsel %vm58, %v852, %v854
    %v856 = vrot.slane %v812, 7
    %v857 = vsel %vm58, %v854, %v856
    %v858 = vrot.slane %v813, 7
    %v859 = vsel %vm58, %v856, %v858
    %v860 = vrot.slane %v814, 7
    %v861 = vsel %vm58, %v858, %v860
    %v878 = vsel %vm58, 0.0, %v831
    %v879 = vsel %vm348, %v878, 0.0
    %v880 = vsel %vm349, %v833, 0.0
    %v881 = vsel %vm350, %v835, 0.0
    %v882 = vsel %vm351, %v837, 0.0
    %v883 = vsel %vm352, %v839, 0.0
    %v884 = vsel %vm353, %v841, 0.0
    %v885 = vsel %vm354, %v843, 0.0
    %v886 = vsel %vm355, %v845, 0.0
    %v887 = vsel %vm356, %v847, 0.0
    %v888 = vsel %vm357, %v849, 0.0
    %v889 = vsel %vm358, %v851, 0.0
    %v890 = vsel %vm359, %v853, 0.0
    %v891 = vsel %vm360, %v855, 0.0
    %v892 = vsel %vm361, %v857, 0.0
    %v893 = vsel %vm362, %v859, 0.0
    %v894 = vsel %vm363, %v861, 0.0
    %v895 = vrot.slane %v799, 1
    %v896 = vrot.slane %v800, 1
    %v897 = vsel %vm380, %v895, %v896
    %v898 = vrot.slane %v801, 1
    %v899 = vsel %vm380, %v896, %v898
    %v900 = vrot.slane %v802, 1
    %v901 = vsel %vm380, %v898, %v900
    %v902 = vrot.slane %v803, 1
    %v903 = vsel %vm380, %v900, %v902
    %v904 = vrot.slane %v804, 1
    %v905 = vsel %vm380, %v902, %v904
    %v906 = vrot.slane %v805, 1
    %v907 = vsel %vm380, %v904, %v906
    %v908 = vrot.slane %v806, 1
    %v909 = vsel %vm380, %v906, %v908
    %v910 = vrot.slane %v807, 1
    %v911 = vsel %vm380, %v908, %v910
    %v912 = vrot.slane %v808, 1
    %v913 = vsel %vm380, %v910, %v912
    %v914 = vrot.slane %v809, 1
    %v915 = vsel %vm380, %v912, %v914
    %v916 = vrot.slane %v810, 1
    %v917 = vsel %vm380, %v914, %v916
    %v918 = vrot.slane %v811, 1
    %v919 = vsel %vm380, %v916, %v918
    %v920 = vrot.slane %v812, 1
    %v921 = vsel %vm380, %v918, %v920
    %v922 = vrot.slane %v813, 1
    %v923 = vsel %vm380, %v920, %v922
    %v924 = vrot.slane %v814, 1
    %v925 = vsel %vm380, %v922, %v924
    %v942 = vsel %vm380, %v924, 0.0
    %v943 = vsel %vm461, %v897, 0.0
    %v944 = vsel %vm462, %v899, 0.0
    %v945 = vsel %vm463, %v901, 0.0
    %v946 = vsel %vm464, %v903, 0.0
    %v947 = vsel %vm465, %v905, 0.0
    %v948 = vsel %vm466, %v907, 0.0
    %v949 = vsel %vm467, %v909, 0.0
    %v950 = vsel %vm468, %v911, 0.0
    %v951 = vsel %vm469, %v913, 0.0
    %v952 = vsel %vm470, %v915, 0.0
    %v953 = vsel %vm471, %v917, 0.0
    %v954 = vsel %vm472, %v919, 0.0
    %v955 = vsel %vm473, %v921, 0.0
    %v956 = vsel %vm474, %v923, 0.0
    %v957 = vsel %vm475, %v925, 0.0
    %v958 = vsel %vm476, %v942, 0.0
    %959 = vrot.lane.b32.xlu0 %v799, 8
    %v960 = vpop.permute.xlu0 %959
    %961 = vrot.lane.b32.xlu0 %v800, 8
    %v962 = vpop.permute.xlu0 %961
    %963 = vrot.lane.b32.xlu0 %v801, 8
    %v964 = vpop.permute.xlu0 %963
    %965 = vrot.lane.b32.xlu0 %v802, 8
    %v966 = vpop.permute.xlu0 %965
    %967 = vrot.lane.b32.xlu0 %v803, 8
    %v968 = vpop.permute.xlu0 %967
    %969 = vrot.lane.b32.xlu0 %v804, 8
    %v970 = vpop.permute.xlu0 %969
    %971 = vrot.lane.b32.xlu0 %v805, 8
    %v972 = vpop.permute.xlu0 %971
    %973 = vrot.lane.b32.xlu0 %v806, 8
    %v974 = vpop.permute.xlu0 %973
    %975 = vrot.lane.b32.xlu0 %v807, 8
    %v976 = vpop.permute.xlu0 %975
    %977 = vrot.lane.b32.xlu0 %v808, 8
    %v978 = vpop.permute.xlu0 %977
    %979 = vrot.lane.b32.xlu0 %v809, 8
    %v980 = vpop.permute.xlu0 %979
    %981 = vrot.lane.b32.xlu0 %v810, 8
    %v982 = vpop.permute.xlu0 %981
    %983 = vrot.lane.b32.xlu0 %v811, 8
    %v984 = vpop.permute.xlu0 %983
    %985 = vrot.lane.b32.xlu0 %v812, 8
    %v986 = vpop.permute.xlu0 %985
    %987 = vrot.lane.b32.xlu0 %v813, 8
    %v988 = vpop.permute.xlu0 %987
    %989 = vrot.lane.b32.xlu0 %v814, 8
    %v990 = vpop.permute.xlu0 %989
    %1023 = vrot.lane.b32.xlu0 %v943, 16
    %v1024 = vpop.permute.xlu0 %1023
    %1025 = vrot.lane.b32.xlu0 %v944, 16
    %v1026 = vpop.permute.xlu0 %1025
    %1027 = vrot.lane.b32.xlu0 %v945, 16
    %v1028 = vpop.permute.xlu0 %1027
    %1029 = vrot.lane.b32.xlu0 %v946, 16
    %v1030 = vpop.permute.xlu0 %1029
    %1031 = vrot.lane.b32.xlu0 %v947, 16
    %v1032 = vpop.permute.xlu0 %1031
    %1033 = vrot.lane.b32.xlu0 %v948, 16
    %v1034 = vpop.permute.xlu0 %1033
    %1035 = vrot.lane.b32.xlu0 %v949, 16
    %v1036 = vpop.permute.xlu0 %1035
    %1037 = vrot.lane.b32.xlu0 %v950, 16
    %v1038 = vpop.permute.xlu0 %1037
    %1039 = vrot.lane.b32.xlu0 %v951, 16
    %v1040 = vpop.permute.xlu0 %1039
    %1041 = vrot.lane.b32.xlu0 %v952, 16
    %v1042 = vpop.permute.xlu0 %1041
    %1043 = vrot.lane.b32.xlu0 %v953, 16
    %v1044 = vpop.permute.xlu0 %1043
    %1045 = vrot.lane.b32.xlu0 %v954, 16
    %v1046 = vpop.permute.xlu0 %1045
    %1047 = vrot.lane.b32.xlu0 %v955, 16
    %v1048 = vpop.permute.xlu0 %1047
    %1049 = vrot.lane.b32.xlu0 %v956, 16
    %v1050 = vpop.permute.xlu0 %1049
    %1051 = vrot.lane.b32.xlu0 %v957, 16
    %v1052 = vpop.permute.xlu0 %1051
    %1053 = vrot.lane.b32.xlu0 %v958, 16
    %v1054 = vpop.permute.xlu0 %1053
    %v1071 = vsel %vm622, %v879, %v960
    %v1072 = vsel %vm622, %v880, %v962
    %v1073 = vsel %vm622, %v881, %v964
    %v1074 = vsel %vm622, %v882, %v966
    %v1075 = vsel %vm622, %v883, %v968
    %v1076 = vsel %vm622, %v884, %v970
    %v1077 = vsel %vm622, %v885, %v972
    %v1078 = vsel %vm622, %v886, %v974
    %v1079 = vsel %vm622, %v887, %v976
    %v1080 = vsel %vm622, %v888, %v978
    %v1081 = vsel %vm622, %v889, %v980
    %v1082 = vsel %vm622, %v890, %v982
    %v1083 = vsel %vm622, %v891, %v984
    %v1084 = vsel %vm622, %v892, %v986
    %v1085 = vsel %vm622, %v893, %v988
    %v1086 = vsel %vm622, %v894, %v990
    %vm1087 = vcmask 130048
    %v1088 = vsel %vm1087, %v1071, %v1024
    %v1089 = vsel %vm1087, %v1072, %v1026
    %v1090 = vsel %vm1087, %v1073, %v1028
    %v1091 = vsel %vm1087, %v1074, %v1030
    %v1092 = vsel %vm1087, %v1075, %v1032
    %v1093 = vsel %vm1087, %v1076, %v1034
    %v1094 = vsel %vm1087, %v1077, %v1036
    %v1095 = vsel %vm1087, %v1078, %v1038
    %v1096 = vsel %vm1087, %v1079, %v1040
    %v1097 = vsel %vm1087, %v1080, %v1042
    %v1098 = vsel %vm1087, %v1081, %v1044
    %v1099 = vsel %vm1087, %v1082, %v1046
    %v1100 = vsel %vm1087, %v1083, %v1048
    %v1101 = vsel %vm1087, %v1084, %v1050
    %v1102 = vsel %vm1087, %v1085, %v1052
    %v1103 = vsel %vm1087, %v1086, %v1054
    %vm1104 = vcmask 195584
    %v1105 = vsel %vm1104, %v1088, 1.0
    %v1106 = vsel %vm1104, %v1089, 1.0
    %v1107 = vsel %vm1104, %v1090, 1.0
    %v1108 = vsel %vm1104, %v1091, 1.0
    %v1109 = vsel %vm1104, %v1092, 1.0
    %v1110 = vsel %vm1104, %v1093, 1.0
    %v1111 = vsel %vm1104, %v1094, 1.0
    %v1112 = vsel %vm1104, %v1095, 1.0
    %v1113 = vsel %vm1104, %v1096, 1.0
    %v1114 = vsel %vm1104, %v1097, 1.0
    %v1115 = vsel %vm1104, %v1098, 1.0
    %v1116 = vsel %vm1104, %v1099, 1.0
    %v1117 = vsel %vm1104, %v1100, 1.0
    %v1118 = vsel %vm1104, %v1101, 1.0
    %v1119 = vsel %vm1104, %v1102, 1.0
    %v1120 = vsel %vm1104, %v1103, 1.0
    %v1121 = vpack.c.bf16 %v1106, %v1105
    %v1122 = vpack.c.bf16 %v1108, %v1107
    %v1123 = vpack.c.bf16 %v1110, %v1109
    %v1124 = vpack.c.bf16 %v1112, %v1111
    %v1125 = vpack.c.bf16 %v1114, %v1113
    %v1126 = vpack.c.bf16 %v1116, %v1115
    %v1127 = vpack.c.bf16 %v1118, %v1117
    %v1128 = vpack.c.bf16 %v1120, %v1119
    %v1129 = vld [vmem:[#allocation16 + $0x8] sm:$0xf]
    %v1130 = vld [vmem:[#allocation16 + $0xc] sm:$0xf]
    %v1131 = vld [vmem:[#allocation16 + $0x10] sm:$0xf]
    %v1132 = vld [vmem:[#allocation16 + $0x14] sm:$0x1]
    %v1137 = vunpack.c.l.b16 %v1129
    %v1138 = vunpack.c.l.b16 %v1130
    %v1139 = vunpack.c.l.b16 %v1131
    %v1140 = vunpack.c.l.b16 %v1132
    %v1141 = vpack.c.b16 %v1138, %v1137
    %v1142 = vpack.c.b16 %v1140, %v1139
    %vm1144 = vcmask 203776
    %v1146 = vsel %vm1144, %v1121, 0
    %v1149 = vsel %vm1144, %v1122, 0
    %v1152 = vsel %vm1144, %v1123, 0
    %v1155 = vsel %vm1144, %v1124, 0
    %v1158 = vsel %vm1144, %v1125, 0
    %v1161 = vsel %vm1144, %v1126, 0
    %v1164 = vsel %vm1144, %v1127, 0
    %v1167 = vsel %vm1144, %v1128, 0
    %vm1169 = vcmask 1043456
    %vm1170 = vcmask 1044480
    %v1171 = vsel %vm1169, 4294967295, 65535
    %v1172 = vsel %vm1170, %v1171, 0
    %v1174 = vand.u32 %v1142, %v1172
    %1176 = vmatprep.subr.bf16.mxu0 0
    %1177 = vmatpush1.bf16.msra.mxu0 %v1141
    %1178 = vmatprep.subr.bf16.mxu0 0
    %1179 = vmatpush1.bf16.msra.mxu0 %v1174
    %1180 = vmatprep.subr.bf16.mxu0 0
    %1181 = vmatpush1.bf16.msra.mxu0 0
    %1182 = vmatprep.subr.bf16.mxu0 0
    %1183 = vmatpush1.bf16.msra.mxu0 0
    %1184 = vmatprep.subr.bf16.mxu0 0
    %1185 = vmatpush1.bf16.msra.mxu0 0
    %1186 = vmatprep.subr.bf16.mxu0 0
    %1187 = vmatpush1.bf16.msra.mxu0 0
    %1188 = vmatprep.subr.bf16.mxu0 0
    %1189 = vmatpush1.bf16.msra.mxu0 0
    %1190 = vmatprep.subr.bf16.mxu0 0
    %1191 = vmatpush1.bf16.msra.mxu0 0
    %1192 = vmatprep.subr.bf16.mxu0 0
    %1193 = vmatpush1.bf16.msra.mxu0 0
    %1194 = vmatprep.subr.bf16.mxu0 0
    %1195 = vmatpush1.bf16.msra.mxu0 0
    %1196 = vmatprep.subr.bf16.mxu0 0
    %1197 = vmatpush1.bf16.msra.mxu0 0
    %1198 = vmatprep.subr.bf16.mxu0 0
    %1199 = vmatpush1.bf16.msra.mxu0 0
    %1200 = vmatprep.subr.bf16.mxu0 0
    %1201 = vmatpush1.bf16.msra.mxu0 0
    %1202 = vmatprep.subr.bf16.mxu0 0
    %1203 = vmatpush1.bf16.msra.mxu0 0
    %1204 = vmatprep.subr.bf16.mxu0 0
    %1205 = vmatpush1.bf16.msra.mxu0 0
    %1206 = vmatprep.subr.bf16.mxu0 0
    %1207 = vmatpush1.bf16.msra.mxu0 0
    %1208 = vmatprep.mubr.bf16.mxu0 0
    %1209 = vmatmul.mubr.bf16.gmra.mrb[0].mxu0 %v1146
    %v1210 = vpop.f32.mrb[0].mxu0
    %v1211 = vadd.f32 0.0, %v1210
    %v1212 = vpop.f32.mrb[0].mxu0
    %v1213 = vpop.f32.mrb[0].mxu0
    %v1214 = vadd.f32 0.0, %v1213
    %v1215 = vpop.f32.mrb[0].mxu0
    %1216 = vmatprep.mubr.bf16.mxu0 0
    %1217 = vmatmul.mubr.bf16.gmra.mrb[0].mxu0 %v1149
    %v1218 = vpop.f32.mrb[0].mxu0
    %v1219 = vadd.f32 0.0, %v1218
    %v1220 = vpop.f32.mrb[0].mxu0
    %v1221 = vpop.f32.mrb[0].mxu0
    %v1222 = vadd.f32 0.0, %v1221
    %v1223 = vpop.f32.mrb[0].mxu0
    %1224 = vmatprep.mubr.bf16.mxu0 0
    %1225 = vmatmul.mubr.bf16.gmra.mrb[0].mxu0 %v1152
    %v1226 = vpop.f32.mrb[0].mxu0
    %v1227 = vadd.f32 0.0, %v1226
    %v1228 = vpop.f32.mrb[0].mxu0
    %v1229 = vpop.f32.mrb[0].mxu0
    %v1230 = vadd.f32 0.0, %v1229
    %v1231 = vpop.f32.mrb[0].mxu0
    %1232 = vmatprep.mubr.bf16.mxu0 0
    %1233 = vmatmul.mubr.bf16.gmra.mrb[0].mxu0 %v1155
    %v1234 = vpop.f32.mrb[0].mxu0
    %v1235 = vadd.f32 0.0, %v1234
    %v1236 = vpop.f32.mrb[0].mxu0
    %v1237 = vpop.f32.mrb[0].mxu0
    %v1238 = vadd.f32 0.0, %v1237
    %v1239 = vpop.f32.mrb[0].mxu0
    %1240 = vmatprep.mubr.bf16.mxu0 0
    %1241 = vmatmul.mubr.bf16.gmra.mrb[0].mxu0 %v1158
    %v1242 = vpop.f32.mrb[0].mxu0
    %v1243 = vadd.f32 0.0, %v1242
    %v1244 = vpop.f32.mrb[0].mxu0
    %v1245 = vpop.f32.mrb[0].mxu0
    %v1246 = vadd.f32 0.0, %v1245
    %v1247 = vpop.f32.mrb[0].mxu0
    %1248 = vmatprep.mubr.bf16.mxu0 0
    %1249 = vmatmul.mubr.bf16.gmra.mrb[0].mxu0 %v1161
    %v1250 = vpop.f32.mrb[0].mxu0
    %v1251 = vadd.f32 0.0, %v1250
    %v1252 = vpop.f32.mrb[0].mxu0
    %v1253 = vpop.f32.mrb[0].mxu0
    %v1254 = vadd.f32 0.0, %v1253
    %v1255 = vpop.f32.mrb[0].mxu0
    %1256 = vmatprep.mubr.bf16.mxu0 0
    %1257 = vmatmul.mubr.bf16.gmra.mrb[0].mxu0 %v1164
    %v1258 = vpop.f32.mrb[0].mxu0
    %v1259 = vadd.f32 0.0, %v1258
    %v1260 = vpop.f32.mrb[0].mxu0
    %v1261 = vpop.f32.mrb[0].mxu0
    %v1262 = vadd.f32 0.0, %v1261
    %v1263 = vpop.f32.mrb[0].mxu0
    %1264 = vmatprep.mubr.bf16.mxu0 0
    %1265 = vmatmul.mubr.bf16.gmra.mrb[0].mxu0 %v1167
    %v1266 = vpop.f32.mrb[0].mxu0
    %v1267 = vadd.f32 0.0, %v1266
    %v1268 = vpop.f32.mrb[0].mxu0
    %v1269 = vpop.f32.mrb[0].mxu0
    %v1270 = vadd.f32 0.0, %v1269
    %v1271 = vpop.f32.mrb[0].mxu0
    %1272 = vdwg.mxu0
    %v1273 = vmax.f32 %v1211, 0.0
    %v1274 = vmax.f32 %v1214, 0.0
    %v1275 = vmax.f32 %v1219, 0.0
    %v1276 = vmax.f32 %v1222, 0.0
    %v1277 = vmax.f32 %v1227, 0.0
    %v1278 = vmax.f32 %v1230, 0.0
    %v1279 = vmax.f32 %v1235, 0.0
    %v1280 = vmax.f32 %v1238, 0.0
    %v1281 = vmax.f32 %v1243, 0.0
    %v1282 = vmax.f32 %v1246, 0.0
    %v1283 = vmax.f32 %v1251, 0.0
    %v1284 = vmax.f32 %v1254, 0.0
    %v1285 = vmax.f32 %v1259, 0.0
    %v1286 = vmax.f32 %v1262, 0.0
    %v1287 = vmax.f32 %v1267, 0.0
    %v1288 = vmax.f32 %v1270, 0.0
    %1289 = vst.msk [vmem:[#allocation2] sm:$0xff] %vm622, %v1273
    %1290 = vst.msk [vmem:[#allocation2 + $0x8] sm:$0xff] %vm622, %v1274
    %1291 = vst.msk [vmem:[#allocation2 + $0x10] sm:$0xff] %vm622, %v1275
    %1292 = vst.msk [vmem:[#allocation2 + $0x18] sm:$0xff] %vm622, %v1276
    %1293 = vst.msk [vmem:[#allocation2 + $0x20] sm:$0xff] %vm622, %v1277
    %1294 = vst.msk [vmem:[#allocation2 + $0x28] sm:$0xff] %vm622, %v1278
    %1295 = vst.msk [vmem:[#allocation2 + $0x30] sm:$0xff] %vm622, %v1279
    %1296 = vst.msk [vmem:[#allocation2 + $0x38] sm:$0xff] %vm622, %v1280
    %1297 = vst.msk [vmem:[#allocation2 + $0x40] sm:$0xff] %vm622, %v1281
    %1298 = vst.msk [vmem:[#allocation2 + $0x48] sm:$0xff] %vm622, %v1282
    %1299 = vst.msk [vmem:[#allocation2 + $0x50] sm:$0xff] %vm622, %v1283
    %1300 = vst.msk [vmem:[#allocation2 + $0x58] sm:$0xff] %vm622, %v1284
    %1301 = vst.msk [vmem:[#allocation2 + $0x60] sm:$0xff] %vm622, %v1285
    %1302 = vst.msk [vmem:[#allocation2 + $0x68] sm:$0xff] %vm622, %v1286
    %1303 = vst.msk [vmem:[#allocation2 + $0x70] sm:$0xff] %vm622, %v1287
    %1304 = vst.msk [vmem:[#allocation2 + $0x78] sm:$0xff] %vm622, %v1288
    %v1305 = vld [vmem:[#allocation2] ss:$2 sm:$0xff]
    %s1306 = scalar_lea.vmem [#allocation2], 16
    %v1307 = vld [vmem:[%s1306] ss:$2 sm:$0xff]
    %s1308 = scalar_lea.vmem [#allocation2], 32
    %v1309 = vld [vmem:[%s1308] ss:$2 sm:$0xff]
    %s1310 = scalar_lea.vmem [#allocation2], 48
    %v1311 = vld [vmem:[%s1310] ss:$2 sm:$0xff]
    %s1312 = scalar_lea.vmem [#allocation2], 64
    %v1313 = vld [vmem:[%s1312] ss:$2 sm:$0xff]
    %s1314 = scalar_lea.vmem [#allocation2], 80
    %v1315 = vld [vmem:[%s1314] ss:$2 sm:$0xff]
    %s1316 = scalar_lea.vmem [#allocation2], 96
    %v1317 = vld [vmem:[%s1316] ss:$2 sm:$0xff]
    %s1318 = scalar_lea.vmem [#allocation2], 112
    %v1319 = vld [vmem:[%s1318] ss:$2 sm:$0xff]
    %s1320 = scalar_lea.vmem [#allocation2], 1
    %v1321 = vld [vmem:[%s1320] ss:$2 sm:$0xff]
    %s1322 = scalar_lea.vmem [#allocation2], 17
    %v1323 = vld [vmem:[%s1322] ss:$2 sm:$0xff]
    %s1324 = scalar_lea.vmem [#allocation2], 33
    %v1325 = vld [vmem:[%s1324] ss:$2 sm:$0xff]
    %s1326 = scalar_lea.vmem [#allocation2], 49
    %v1327 = vld [vmem:[%s1326] ss:$2 sm:$0xff]
    %s1328 = scalar_lea.vmem [#allocation2], 65
    %v1329 = vld [vmem:[%s1328] ss:$2 sm:$0xff]
    %s1330 = scalar_lea.vmem [#allocation2], 81
    %v1331 = vld [vmem:[%s1330] ss:$2 sm:$0xff]
    %s1332 = scalar_lea.vmem [#allocation2], 97
    %v1333 = vld [vmem:[%s1332] ss:$2 sm:$0xff]
    %s1334 = scalar_lea.vmem [#allocation2], 113
    %v1335 = vld [vmem:[%s1334] ss:$2 sm:$0xff]
    %v1336 = vmax.f32 %v1305, %v1321
    %v1337 = vmax.f32 %v1307, %v1323
    %v1338 = vmax.f32 %v1309, %v1325
    %v1339 = vmax.f32 %v1311, %v1327
    %v1340 = vmax.f32 %v1313, %v1329
    %v1341 = vmax.f32 %v1315, %v1331
    %v1342 = vmax.f32 %v1317, %v1333
    %v1343 = vmax.f32 %v1319, %v1335
    %1344 = vst.msk [vmem:[#allocation3] sm:$0xff] %vm622, %v1336
    %1345 = vst.msk [vmem:[#allocation3 + $0x8] sm:$0xff] %vm622, %v1337
    %1346 = vst.msk [vmem:[#allocation3 + $0x10] sm:$0xff] %vm622, %v1338
    %1347 = vst.msk [vmem:[#allocation3 + $0x18] sm:$0xff] %vm622, %v1339
    %1348 = vst.msk [vmem:[#allocation3 + $0x20] sm:$0xff] %vm622, %v1340
    %1349 = vst.msk [vmem:[#allocation3 + $0x28] sm:$0xff] %vm622, %v1341
    %1350 = vst.msk [vmem:[#allocation3 + $0x30] sm:$0xff] %vm622, %v1342
    %1351 = vst.msk [vmem:[#allocation3 + $0x38] sm:$0xff] %vm622, %v1343
    %v1352 = vld [vmem:[#allocation3] ss:$2 sm:$0xff]
    %s1353 = scalar_lea.vmem [#allocation3], 16
    %v1354 = vld [vmem:[%s1353] ss:$2 sm:$0xff]
    %s1355 = scalar_lea.vmem [#allocation3], 32
    %v1356 = vld [vmem:[%s1355] ss:$2 sm:$0xff]
    %s1357 = scalar_lea.vmem [#allocation3], 48
    %v1358 = vld [vmem:[%s1357] ss:$2 sm:$0xff]
    %s1359 = scalar_lea.vmem [#allocation3], 1
    %v1360 = vld [vmem:[%s1359] ss:$2 sm:$0xff]
    %s1361 = scalar_lea.vmem [#allocation3], 17
    %v1362 = vld [vmem:[%s1361] ss:$2 sm:$0xff]
    %s1363 = scalar_lea.vmem [#allocation3], 33
    %v1364 = vld [vmem:[%s1363] ss:$2 sm:$0xff]
    %s1365 = scalar_lea.vmem [#allocation3], 49
    %v1366 = vld [vmem:[%s1365] ss:$2 sm:$0xff]
    %v1367 = vmax.f32 %v1352, %v1360
    %v1368 = vmax.f32 %v1354, %v1362
    %v1369 = vmax.f32 %v1356, %v1364
    %v1370 = vmax.f32 %v1358, %v1366
    %1371 = vst.msk [vmem:[#allocation4] sm:$0xff] %vm622, %v1367
    %1372 = vst.msk [vmem:[#allocation4 + $0x8] sm:$0xff] %vm622, %v1368
    %1373 = vst.msk [vmem:[#allocation4 + $0x10] sm:$0xff] %vm622, %v1369
    %1374 = vst.msk [vmem:[#allocation4 + $0x18] sm:$0xff] %vm622, %v1370
    %v1375 = vld [vmem:[#allocation4] ss:$2 sm:$0xff]
    %s1376 = scalar_lea.vmem [#allocation4], 16
    %v1377 = vld [vmem:[%s1376] ss:$2 sm:$0xff]
    %s1378 = scalar_lea.vmem [#allocation4], 1
    %v1379 = vld [vmem:[%s1378] ss:$2 sm:$0xff]
    %s1380 = scalar_lea.vmem [#allocation4], 17
    %v1381 = vld [vmem:[%s1380] ss:$2 sm:$0xff]
    %v1382 = vmax.f32 %v1375, %v1379
    %v1383 = vmax.f32 %v1377, %v1381
    %1384 = vst.msk [vmem:[#allocation5] sm:$0xff] %vm622, %v1382
    %1385 = vst.msk [vmem:[#allocation5 + $0x8] sm:$0xff] %vm622, %v1383
    %v1386 = vld [vmem:[#allocation3] sm:$0xff]
    %v1387 = vld [vmem:[#allocation3 + $0x8] sm:$0xff]
    %v1388 = vld [vmem:[#allocation3 + $0x10] sm:$0xff]
    %v1389 = vld [vmem:[#allocation3 + $0x18] sm:$0xff]
    %v1390 = vld [vmem:[#allocation3 + $0x20] sm:$0xff]
    %v1391 = vld [vmem:[#allocation3 + $0x28] sm:$0xff]
    %v1392 = vld [vmem:[#allocation3 + $0x30] sm:$0xff]
    %v1393 = vld [vmem:[#allocation3 + $0x38] sm:$0xff]
    %v1402 = vrot.slane %v1386, 7
    %v1403 = vrot.slane %v1387, 7
    %v1404 = vsel %vm58, %v1402, %v1403
    %v1405 = vrot.slane %v1388, 7
    %v1406 = vsel %vm58, %v1403, %v1405
    %v1407 = vrot.slane %v1389, 7
    %v1408 = vsel %vm58, %v1405, %v1407
    %v1409 = vrot.slane %v1390, 7
    %v1410 = vsel %vm58, %v1407, %v1409
    %v1411 = vrot.slane %v1391, 7
    %v1412 = vsel %vm58, %v1409, %v1411
    %v1413 = vrot.slane %v1392, 7
    %v1414 = vsel %vm58, %v1411, %v1413
    %v1415 = vrot.slane %v1393, 7
    %v1416 = vsel %vm58, %v1413, %v1415
    %v1425 = vsel %vm58, 0.0, %v1402
    %vm1426 = vcmp.lt.s32.totalorder %v108, 0
    %v1427 = vsub.s32 0, %v108
    %v1428 = vsel %vm1426, %v1427, %v108
    %v1429 = vshrl.u32 %v1428, 5
    %v1430 = vand.u32 %v1428, 31
    %v1431 = vsub.s32 0, %v1430
    %v1432 = vsel %vm1426, %v1431, %v1430
    %vm1433 = vcmp.lt.s32.totalorder %v109, 0
    %v1434 = vsub.s32 0, %v109
    %v1435 = vsel %vm1433, %v1434, %v109
    %v1436 = vshrl.u32 %v1435, 5
    %v1437 = vand.u32 %v1435, 31
    %v1438 = vsub.s32 0, %v1437
    %v1439 = vsel %vm1433, %v1438, %v1437
    %vm1440 = vcmp.lt.s32.totalorder %v110, 0
    %v1441 = vsub.s32 0, %v110
    %v1442 = vsel %vm1440, %v1441, %v110
    %v1443 = vshrl.u32 %v1442, 5
    %v1444 = vand.u32 %v1442, 31
    %v1445 = vsub.s32 0, %v1444
    %v1446 = vsel %vm1440, %v1445, %v1444
    %vm1447 = vcmp.lt.s32.totalorder %v111, 0
    %v1448 = vsub.s32 0, %v111
    %v1449 = vsel %vm1447, %v1448, %v111
    %v1450 = vshrl.u32 %v1449, 5
    %v1451 = vand.u32 %v1449, 31
    %v1452 = vsub.s32 0, %v1451
    %v1453 = vsel %vm1447, %v1452, %v1451
    %vm1454 = vcmp.lt.s32.totalorder %v112, 0
    %v1455 = vsub.s32 0, %v112
    %v1456 = vsel %vm1454, %v1455, %v112
    %v1457 = vshrl.u32 %v1456, 5
    %v1458 = vand.u32 %v1456, 31
    %v1459 = vsub.s32 0, %v1458
    %v1460 = vsel %vm1454, %v1459, %v1458
    %vm1461 = vcmp.lt.s32.totalorder %v113, 0
    %v1462 = vsub.s32 0, %v113
    %v1463 = vsel %vm1461, %v1462, %v113
    %v1464 = vshrl.u32 %v1463, 5
    %v1465 = vand.u32 %v1463, 31
    %v1466 = vsub.s32 0, %v1465
    %v1467 = vsel %vm1461, %v1466, %v1465
    %vm1468 = vcmp.lt.s32.totalorder %v114, 0
    %v1469 = vsub.s32 0, %v114
    %v1470 = vsel %vm1468, %v1469, %v114
    %v1471 = vshrl.u32 %v1470, 5
    %v1472 = vand.u32 %v1470, 31
    %v1473 = vsub.s32 0, %v1472
    %v1474 = vsel %vm1468, %v1473, %v1472
    %vm1475 = vcmp.lt.s32.totalorder %v115, 0
    %v1476 = vsub.s32 0, %v115
    %v1477 = vsel %vm1475, %v1476, %v115
    %v1478 = vshrl.u32 %v1477, 5
    %v1479 = vand.u32 %v1477, 31
    %v1480 = vsub.s32 0, %v1479
    %v1481 = vsel %vm1475, %v1480, %v1479
    %vm1482 = vcmp.ne.s32.totalorder %v1432, 0
    %vm1483 = vcmp.ne.s32.totalorder %v1439, 0
    %vm1484 = vcmp.ne.s32.totalorder %v1446, 0
    %vm1485 = vcmp.ne.s32.totalorder %v1453, 0
    %vm1486 = vcmp.ne.s32.totalorder %v1460, 0
    %vm1487 = vcmp.ne.s32.totalorder %v1467, 0
    %vm1488 = vcmp.ne.s32.totalorder %v1474, 0
    %vm1489 = vcmp.ne.s32.totalorder %v1481, 0
    %vm1490 = vcmp.lt.s32.totalorder %v1432, 0
    %vm1491 = vcmp.lt.s32.totalorder %v1439, 0
    %vm1492 = vcmp.lt.s32.totalorder %v1446, 0
    %vm1493 = vcmp.lt.s32.totalorder %v1453, 0
    %vm1494 = vcmp.lt.s32.totalorder %v1460, 0
    %vm1495 = vcmp.lt.s32.totalorder %v1467, 0
    %vm1496 = vcmp.lt.s32.totalorder %v1474, 0
    %vm1497 = vcmp.lt.s32.totalorder %v1481, 0
    %vm1498 = vmand %vm1490, %vm1482
    %vm1499 = vmand %vm1491, %vm1483
    %vm1500 = vmand %vm1492, %vm1484
    %vm1501 = vmand %vm1493, %vm1485
    %vm1502 = vmand %vm1494, %vm1486
    %vm1503 = vmand %vm1495, %vm1487
    %vm1504 = vmand %vm1496, %vm1488
    %vm1505 = vmand %vm1497, %vm1489
    %v1506 = vadd.s32 %v1432, 32
    %v1507 = vadd.s32 %v1439, 32
    %v1508 = vadd.s32 %v1446, 32
    %v1509 = vadd.s32 %v1453, 32
    %v1510 = vadd.s32 %v1460, 32
    %v1511 = vadd.s32 %v1467, 32
    %v1512 = vadd.s32 %v1474, 32
    %v1513 = vadd.s32 %v1481, 32
    %v1514 = vsel %vm1498, %v1506, %v1432
    %v1515 = vsel %vm1499, %v1507, %v1439
    %v1516 = vsel %vm1500, %v1508, %v1446
    %v1517 = vsel %vm1501, %v1509, %v1453
    %v1518 = vsel %vm1502, %v1510, %v1460
    %v1519 = vsel %vm1503, %v1511, %v1467
    %v1520 = vsel %vm1504, %v1512, %v1474
    %v1521 = vsel %vm1505, %v1513, %v1481
    %vm1522 = vcmp.ge.s32.totalorder %v1514, 1
    %vm1523 = vcmp.ge.s32.totalorder %v1515, 1
    %vm1524 = vcmp.ge.s32.totalorder %v1516, 1
    %vm1525 = vcmp.ge.s32.totalorder %v1517, 1
    %vm1526 = vcmp.ge.s32.totalorder %v1518, 1
    %vm1527 = vcmp.ge.s32.totalorder %v1519, 1
    %vm1528 = vcmp.ge.s32.totalorder %v1520, 1
    %vm1529 = vcmp.ge.s32.totalorder %v1521, 1
    %v1530 = vsel %vm1522, 1, 0
    %v1531 = vsel %vm1523, 1, 0
    %v1532 = vsel %vm1524, 1, 0
    %v1533 = vsel %vm1525, 1, 0
    %v1534 = vsel %vm1526, 1, 0
    %v1535 = vsel %vm1527, 1, 0
    %v1536 = vsel %vm1528, 1, 0
    %v1537 = vsel %vm1529, 1, 0
    %vm1538 = vcmp.eq.s32.totalorder %v1530, 1
    %vm1539 = vcmp.eq.s32.totalorder %v1531, 1
    %vm1540 = vcmp.eq.s32.totalorder %v1532, 1
    %vm1541 = vcmp.eq.s32.totalorder %v1533, 1
    %vm1542 = vcmp.eq.s32.totalorder %v1534, 1
    %vm1543 = vcmp.eq.s32.totalorder %v1535, 1
    %vm1544 = vcmp.eq.s32.totalorder %v1536, 1
    %vm1545 = vcmp.eq.s32.totalorder %v1537, 1
    %v1546 = vsel %vm1538, %v1425, 0.0
    %v1547 = vsel %vm1539, %v1404, 0.0
    %v1548 = vsel %vm1540, %v1406, 0.0
    %v1549 = vsel %vm1541, %v1408, 0.0
    %v1550 = vsel %vm1542, %v1410, 0.0
    %v1551 = vsel %vm1543, %v1412, 0.0
    %v1552 = vsel %vm1544, %v1414, 0.0
    %v1553 = vsel %vm1545, %v1416, 0.0
    %v1554 = vrot.slane %v1386, 1
    %v1555 = vrot.slane %v1387, 1
    %v1556 = vsel %vm380, %v1554, %v1555
    %v1557 = vrot.slane %v1388, 1
    %v1558 = vsel %vm380, %v1555, %v1557
    %v1559 = vrot.slane %v1389, 1
    %v1560 = vsel %vm380, %v1557, %v1559
    %v1561 = vrot.slane %v1390, 1
    %v1562 = vsel %vm380, %v1559, %v1561
    %v1563 = vrot.slane %v1391, 1
    %v1564 = vsel %vm380, %v1561, %v1563
    %v1565 = vrot.slane %v1392, 1
    %v1566 = vsel %vm380, %v1563, %v1565
    %v1567 = vrot.slane %v1393, 1
    %v1568 = vsel %vm380, %v1565, %v1567
    %v1577 = vsel %vm380, %v1567, 0.0
    %vm1578 = vcmp.lt.s32.totalorder %v1514, 31
    %vm1579 = vcmp.lt.s32.totalorder %v1515, 31
    %vm1580 = vcmp.lt.s32.totalorder %v1516, 31
    %vm1581 = vcmp.lt.s32.totalorder %v1517, 31
    %vm1582 = vcmp.lt.s32.totalorder %v1518, 31
    %vm1583 = vcmp.lt.s32.totalorder %v1519, 31
    %vm1584 = vcmp.lt.s32.totalorder %v1520, 31
    %vm1585 = vcmp.lt.s32.totalorder %v1521, 31
    %v1586 = vsel %vm1578, 1, 0
    %v1587 = vsel %vm1579, 1, 0
    %v1588 = vsel %vm1580, 1, 0
    %v1589 = vsel %vm1581, 1, 0
    %v1590 = vsel %vm1582, 1, 0
    %v1591 = vsel %vm1583, 1, 0
    %v1592 = vsel %vm1584, 1, 0
    %v1593 = vsel %vm1585, 1, 0
    %vm1594 = vcmp.eq.s32.totalorder %v1586, 1
    %vm1595 = vcmp.eq.s32.totalorder %v1587, 1
    %vm1596 = vcmp.eq.s32.totalorder %v1588, 1
    %vm1597 = vcmp.eq.s32.totalorder %v1589, 1
    %vm1598 = vcmp.eq.s32.totalorder %v1590, 1
    %vm1599 = vcmp.eq.s32.totalorder %v1591, 1
    %vm1600 = vcmp.eq.s32.totalorder %v1592, 1
    %vm1601 = vcmp.eq.s32.totalorder %v1593, 1
    %v1602 = vsel %vm1594, %v1556, 0.0
    %v1603 = vsel %vm1595, %v1558, 0.0
    %v1604 = vsel %vm1596, %v1560, 0.0
    %v1605 = vsel %vm1597, %v1562, 0.0
    %v1606 = vsel %vm1598, %v1564, 0.0
    %v1607 = vsel %vm1599, %v1566, 0.0
    %v1608 = vsel %vm1600, %v1568, 0.0
    %v1609 = vsel %vm1601, %v1577, 0.0
    %1610 = vrot.lane.b32.xlu0 %v1386, 8
    %v1611 = vpop.permute.xlu0 %1610
    %1612 = vrot.lane.b32.xlu0 %v1387, 8
    %v1613 = vpop.permute.xlu0 %1612
    %1614 = vrot.lane.b32.xlu0 %v1388, 8
    %v1615 = vpop.permute.xlu0 %1614
    %1616 = vrot.lane.b32.xlu0 %v1389, 8
    %v1617 = vpop.permute.xlu0 %1616
    %1618 = vrot.lane.b32.xlu0 %v1390, 8
    %v1619 = vpop.permute.xlu0 %1618
    %1620 = vrot.lane.b32.xlu0 %v1391, 8
    %v1621 = vpop.permute.xlu0 %1620
    %1622 = vrot.lane.b32.xlu0 %v1392, 8
    %v1623 = vpop.permute.xlu0 %1622
    %1624 = vrot.lane.b32.xlu0 %v1393, 8
    %v1625 = vpop.permute.xlu0 %1624
    %1642 = vrot.lane.b32.xlu0 %v1602, 16
    %v1643 = vpop.permute.xlu0 %1642
    %1644 = vrot.lane.b32.xlu0 %v1603, 16
    %v1645 = vpop.permute.xlu0 %1644
    %1646 = vrot.lane.b32.xlu0 %v1604, 16
    %v1647 = vpop.permute.xlu0 %1646
    %1648 = vrot.lane.b32.xlu0 %v1605, 16
    %v1649 = vpop.permute.xlu0 %1648
    %1650 = vrot.lane.b32.xlu0 %v1606, 16
    %v1651 = vpop.permute.xlu0 %1650
    %1652 = vrot.lane.b32.xlu0 %v1607, 16
    %v1653 = vpop.permute.xlu0 %1652
    %1654 = vrot.lane.b32.xlu0 %v1608, 16
    %v1655 = vpop.permute.xlu0 %1654
    %1656 = vrot.lane.b32.xlu0 %v1609, 16
    %v1657 = vpop.permute.xlu0 %1656
    %v1666 = vsel %vm622, %v1546, %v1611
    %v1667 = vsel %vm622, %v1547, %v1613
    %v1668 = vsel %vm622, %v1548, %v1615
    %v1669 = vsel %vm622, %v1549, %v1617
    %v1670 = vsel %vm622, %v1550, %v1619
    %v1671 = vsel %vm622, %v1551, %v1621
    %v1672 = vsel %vm622, %v1552, %v1623
    %v1673 = vsel %vm622, %v1553, %v1625
    %v1674 = vsel %vm1087, %v1666, %v1643
    %v1675 = vsel %vm1087, %v1667, %v1645
    %v1676 = vsel %vm1087, %v1668, %v1647
    %v1677 = vsel %vm1087, %v1669, %v1649
    %v1678 = vsel %vm1087, %v1670, %v1651
    %v1679 = vsel %vm1087, %v1671, %v1653
    %v1680 = vsel %vm1087, %v1672, %v1655
    %v1681 = vsel %vm1087, %v1673, %v1657
    %v1682 = vsel %vm1104, %v1674, 1.0
    %v1683 = vsel %vm1104, %v1675, 1.0
    %v1684 = vsel %vm1104, %v1676, 1.0
    %v1685 = vsel %vm1104, %v1677, 1.0
    %v1686 = vsel %vm1104, %v1678, 1.0
    %v1687 = vsel %vm1104, %v1679, 1.0
    %v1688 = vsel %vm1104, %v1680, 1.0
    %v1689 = vsel %vm1104, %v1681, 1.0
    %v1690 = vpack.c.bf16 %v1683, %v1682
    %v1691 = vpack.c.bf16 %v1685, %v1684
    %v1692 = vpack.c.bf16 %v1687, %v1686
    %v1693 = vpack.c.bf16 %v1689, %v1688
    %v1694 = vld [vmem:[#allocation16 + $0x18] sm:$0xf]
    %v1695 = vld [vmem:[#allocation16 + $0x1c] sm:$0xf]
    %v1696 = vld [vmem:[#allocation16 + $0x20] sm:$0xf]
    %v1697 = vld [vmem:[#allocation16 + $0x24] sm:$0x1]
    %v1702 = vunpack.c.l.b16 %v1694
    %v1703 = vunpack.c.l.b16 %v1695
    %v1704 = vunpack.c.l.b16 %v1696
    %v1705 = vunpack.c.l.b16 %v1697
    %v1706 = vpack.c.b16 %v1703, %v1702
    %v1707 = vpack.c.b16 %v1705, %v1704
    %v1710 = vsel %vm1144, %v1690, 0
    %v1713 = vsel %vm1144, %v1691, 0
    %v1716 = vsel %vm1144, %v1692, 0
    %v1719 = vsel %vm1144, %v1693, 0
    %v1722 = vand.u32 %v1707, %v1172
    %1724 = vmatprep.subr.bf16.mxu0 0
    %1725 = vmatpush1.bf16.msra.mxu0 %v1706
    %1726 = vmatprep.subr.bf16.mxu0 0
    %1727 = vmatpush1.bf16.msra.mxu0 %v1722
    %1728 = vmatprep.subr.bf16.mxu0 0
    %1729 = vmatpush1.bf16.msra.mxu0 0
    %1730 = vmatprep.subr.bf16.mxu0 0
    %1731 = vmatpush1.bf16.msra.mxu0 0
    %1732 = vmatprep.subr.bf16.mxu0 0
    %1733 = vmatpush1.bf16.msra.mxu0 0
    %1734 = vmatprep.subr.bf16.mxu0 0
    %1735 = vmatpush1.bf16.msra.mxu0 0
    %1736 = vmatprep.subr.bf16.mxu0 0
    %1737 = vmatpush1.bf16.msra.mxu0 0
    %1738 = vmatprep.subr.bf16.mxu0 0
    %1739 = vmatpush1.bf16.msra.mxu0 0
    %1740 = vmatprep.subr.bf16.mxu0 0
    %1741 = vmatpush1.bf16.msra.mxu0 0
    %1742 = vmatprep.subr.bf16.mxu0 0
    %1743 = vmatpush1.bf16.msra.mxu0 0
    %1744 = vmatprep.subr.bf16.mxu0 0
    %1745 = vmatpush1.bf16.msra.mxu0 0
    %1746 = vmatprep.subr.bf16.mxu0 0
    %1747 = vmatpush1.bf16.msra.mxu0 0
    %1748 = vmatprep.subr.bf16.mxu0 0
    %1749 = vmatpush1.bf16.msra.mxu0 0
    %1750 = vmatprep.subr.bf16.mxu0 0
    %1751 = vmatpush1.bf16.msra.mxu0 0
    %1752 = vmatprep.subr.bf16.mxu0 0
    %1753 = vmatpush1.bf16.msra.mxu0 0
    %1754 = vmatprep.subr.bf16.mxu0 0
    %1755 = vmatpush1.bf16.msra.mxu0 0
    %1756 = vmatprep.mubr.bf16.mxu0 0
    %1757 = vmatmul.mubr.bf16.gmra.mrb[0].mxu0 %v1710
    %v1758 = vpop.f32.mrb[0].mxu0
    %v1759 = vadd.f32 0.0, %v1758
    %v1760 = vpop.f32.mrb[0].mxu0
    %v1761 = vpop.f32.mrb[0].mxu0
    %v1762 = vadd.f32 0.0, %v1761
    %v1763 = vpop.f32.mrb[0].mxu0
    %1764 = vmatprep.mubr.bf16.mxu0 0
    %1765 = vmatmul.mubr.bf16.gmra.mrb[0].mxu0 %v1713
    %v1766 = vpop.f32.mrb[0].mxu0
    %v1767 = vadd.f32 0.0, %v1766
    %v1768 = vpop.f32.mrb[0].mxu0
    %v1769 = vpop.f32.mrb[0].mxu0
    %v1770 = vadd.f32 0.0, %v1769
    %v1771 = vpop.f32.mrb[0].mxu0
    %1772 = vmatprep.mubr.bf16.mxu0 0
    %1773 = vmatmul.mubr.bf16.gmra.mrb[0].mxu0 %v1716
    %v1774 = vpop.f32.mrb[0].mxu0
    %v1775 = vadd.f32 0.0, %v1774
    %v1776 = vpop.f32.mrb[0].mxu0
    %v1777 = vpop.f32.mrb[0].mxu0
    %v1778 = vadd.f32 0.0, %v1777
    %v1779 = vpop.f32.mrb[0].mxu0
    %1780 = vmatprep.mubr.bf16.mxu0 0
    %1781 = vmatmul.mubr.bf16.gmra.mrb[0].mxu0 %v1719
    %v1782 = vpop.f32.mrb[0].mxu0
    %v1783 = vadd.f32 0.0, %v1782
    %v1784 = vpop.f32.mrb[0].mxu0
    %v1785 = vpop.f32.mrb[0].mxu0
    %v1786 = vadd.f32 0.0, %v1785
    %v1787 = vpop.f32.mrb[0].mxu0
    %1788 = vdwg.mxu0
    %v1789 = vmax.f32 %v1759, 0.0
    %v1790 = vmax.f32 %v1762, 0.0
    %v1791 = vmax.f32 %v1767, 0.0
    %v1792 = vmax.f32 %v1770, 0.0
    %v1793 = vmax.f32 %v1775, 0.0
    %v1794 = vmax.f32 %v1778, 0.0
    %v1795 = vmax.f32 %v1783, 0.0
    %v1796 = vmax.f32 %v1786, 0.0
    %v1805 = vrot.slane %v1789, 7
    %v1806 = vrot.slane %v1790, 7
    %v1807 = vsel %vm58, %v1805, %v1806
    %v1808 = vrot.slane %v1791, 7
    %v1809 = vsel %vm58, %v1806, %v1808
    %v1810 = vrot.slane %v1792, 7
    %v1811 = vsel %vm58, %v1808, %v1810
    %v1812 = vrot.slane %v1793, 7
    %v1813 = vsel %vm58, %v1810, %v1812
    %v1814 = vrot.slane %v1794, 7
    %v1815 = vsel %vm58, %v1812, %v1814
    %v1816 = vrot.slane %v1795, 7
    %v1817 = vsel %vm58, %v1814, %v1816
    %v1818 = vrot.slane %v1796, 7
    %v1819 = vsel %vm58, %v1816, %v1818
    %v1828 = vsel %vm58, 0.0, %v1805
    %v1829 = vsel %vm1538, %v1828, 0.0
    %v1830 = vsel %vm1539, %v1807, 0.0
    %v1831 = vsel %vm1540, %v1809, 0.0
    %v1832 = vsel %vm1541, %v1811, 0.0
    %v1833 = vsel %vm1542, %v1813, 0.0
    %v1834 = vsel %vm1543, %v1815, 0.0
    %v1835 = vsel %vm1544, %v1817, 0.0
    %v1836 = vsel %vm1545, %v1819, 0.0
    %v1837 = vrot.slane %v1789, 1
    %v1838 = vrot.slane %v1790, 1
    %v1839 = vsel %vm380, %v1837, %v1838
    %v1840 = vrot.slane %v1791, 1
    %v1841 = vsel %vm380, %v1838, %v1840
    %v1842 = vrot.slane %v1792, 1
    %v1843 = vsel %vm380, %v1840, %v1842
    %v1844 = vrot.slane %v1793, 1
    %v1845 = vsel %vm380, %v1842, %v1844
    %v1846 = vrot.slane %v1794, 1
    %v1847 = vsel %vm380, %v1844, %v1846
    %v1848 = vrot.slane %v1795, 1
    %v1849 = vsel %vm380, %v1846, %v1848
    %v1850 = vrot.slane %v1796, 1
    %v1851 = vsel %vm380, %v1848, %v1850
    %v1860 = vsel %vm380, %v1850, 0.0
    %v1861 = vsel %vm1594, %v1839, 0.0
    %v1862 = vsel %vm1595, %v1841, 0.0
    %v1863 = vsel %vm1596, %v1843, 0.0
    %v1864 = vsel %vm1597, %v1845, 0.0
    %v1865 = vsel %vm1598, %v1847, 0.0
    %v1866 = vsel %vm1599, %v1849, 0.0
    %v1867 = vsel %vm1600, %v1851, 0.0
    %v1868 = vsel %vm1601, %v1860, 0.0
    %1869 = vrot.lane.b32.xlu0 %v1789, 16
    %v1870 = vpop.permute.xlu0 %1869
    %1871 = vrot.lane.b32.xlu0 %v1790, 16
    %v1872 = vpop.permute.xlu0 %1871
    %1873 = vrot.lane.b32.xlu0 %v1791, 16
    %v1874 = vpop.permute.xlu0 %1873
    %1875 = vrot.lane.b32.xlu0 %v1792, 16
    %v1876 = vpop.permute.xlu0 %1875
    %1877 = vrot.lane.b32.xlu0 %v1793, 16
    %v1878 = vpop.permute.xlu0 %1877
    %1879 = vrot.lane.b32.xlu0 %v1794, 16
    %v1880 = vpop.permute.xlu0 %1879
    %1881 = vrot.lane.b32.xlu0 %v1795, 16
    %v1882 = vpop.permute.xlu0 %1881
    %1883 = vrot.lane.b32.xlu0 %v1796, 16
    %v1884 = vpop.permute.xlu0 %1883
    %1901 = vrot.lane.b32.xlu0 %v1861, 32
    %v1902 = vpop.permute.xlu0 %1901
    %1903 = vrot.lane.b32.xlu0 %v1862, 32
    %v1904 = vpop.permute.xlu0 %1903
    %1905 = vrot.lane.b32.xlu0 %v1863, 32
    %v1906 = vpop.permute.xlu0 %1905
    %1907 = vrot.lane.b32.xlu0 %v1864, 32
    %v1908 = vpop.permute.xlu0 %1907
    %1909 = vrot.lane.b32.xlu0 %v1865, 32
    %v1910 = vpop.permute.xlu0 %1909
    %1911 = vrot.lane.b32.xlu0 %v1866, 32
    %v1912 = vpop.permute.xlu0 %1911
    %1913 = vrot.lane.b32.xlu0 %v1867, 32
    %v1914 = vpop.permute.xlu0 %1913
    %1915 = vrot.lane.b32.xlu0 %v1868, 32
    %v1916 = vpop.permute.xlu0 %1915
    %v1925 = vsel %vm1087, %v1829, %v1870
    %v1926 = vsel %vm1087, %v1830, %v1872
    %v1927 = vsel %vm1087, %v1831, %v1874
    %v1928 = vsel %vm1087, %v1832, %v1876
    %v1929 = vsel %vm1087, %v1833, %v1878
    %v1930 = vsel %vm1087, %v1834, %v1880
    %v1931 = vsel %vm1087, %v1835, %v1882
    %v1932 = vsel %vm1087, %v1836, %v1884
    %vm1933 = vcmask 261120
    %v1934 = vsel %vm1933, %v1925, %v1902
    %v1935 = vsel %vm1933, %v1926, %v1904
    %v1936 = vsel %vm1933, %v1927, %v1906
    %v1937 = vsel %vm1933, %v1928, %v1908
    %v1938 = vsel %vm1933, %v1929, %v1910
    %v1939 = vsel %vm1933, %v1930, %v1912
    %v1940 = vsel %vm1933, %v1931, %v1914
    %v1941 = vsel %vm1933, %v1932, %v1916
    %vm1942 = vcmask 392192
    %v1943 = vsel %vm1942, %v1934, 1.0
    %v1944 = vsel %vm1942, %v1935, 1.0
    %v1945 = vsel %vm1942, %v1936, 1.0
    %v1946 = vsel %vm1942, %v1937, 1.0
    %v1947 = vsel %vm1942, %v1938, 1.0
    %v1948 = vsel %vm1942, %v1939, 1.0
    %v1949 = vsel %vm1942, %v1940, 1.0
    %v1950 = vsel %vm1942, %v1941, 1.0
    %v1951 = vpack.c.bf16 %v1944, %v1943
    %v1952 = vpack.c.bf16 %v1946, %v1945
    %v1953 = vpack.c.bf16 %v1948, %v1947
    %v1954 = vpack.c.bf16 %v1950, %v1949
    %v1955 = vld [vmem:[#allocation16 + $0x28] sm:$0xf]
    %v1956 = vld [vmem:[#allocation16 + $0x2c] sm:$0xf]
    %v1957 = vld [vmem:[#allocation16 + $0x30] sm:$0xf]
    %v1958 = vld [vmem:[#allocation16 + $0x34] sm:$0xf]
    %v1959 = vld [vmem:[#allocation16 + $0x38] sm:$0xf]
    %v1960 = vld [vmem:[#allocation16 + $0x3c] sm:$0xf]
    %v1961 = vld [vmem:[#allocation16 + $0x40] sm:$0x1]
    %v1969 = vunpack.c.l.b16 %v1955
    %v1970 = vunpack.c.l.b16 %v1956
    %v1971 = vunpack.c.l.b16 %v1957
    %v1972 = vunpack.c.l.b16 %v1958
    %v1973 = vunpack.c.l.b16 %v1959
    %v1974 = vunpack.c.l.b16 %v1960
    %v1975 = vunpack.c.l.b16 %v1961
    %v1976 = vpack.c.b16 %v1970, %v1969
    %v1977 = vpack.c.b16 %v1972, %v1971
    %v1978 = vpack.c.b16 %v1974, %v1973
    %v1979 = vpack.c.b16 %v1975, %v1975
    %vm1983 = vcmask 400384
    %v1985 = vsel %vm1983, %v1951, 0
    %v1988 = vsel %vm1983, %v1952, 0
    %v1991 = vsel %vm1983, %v1953, 0
    %v1994 = vsel %vm1983, %v1954, 0
    %v1996 = vsel 0, 4294967295, 65535
    %v1997 = vsel %vm58, %v1996, 0
    %v1999 = vand.u32 %v1979, %v1997
    %2001 = vmatprep.subr.bf16.mxu0 0
    %2002 = vmatpush1.bf16.msra.mxu0 %v1976
    %2003 = vmatprep.subr.bf16.mxu0 0
    %2004 = vmatpush1.bf16.msra.mxu0 %v1977
    %2005 = vmatprep.subr.bf16.mxu0 0
    %2006 = vmatpush1.bf16.msra.mxu0 %v1978
    %2007 = vmatprep.subr.bf16.mxu0 0
    %2008 = vmatpush1.bf16.msra.mxu0 %v1999
    %2009 = vmatprep.subr.bf16.mxu0 0
    %2010 = vmatpush1.bf16.msra.mxu0 0
    %2011 = vmatprep.subr.bf16.mxu0 0
    %2012 = vmatpush1.bf16.msra.mxu0 0
    %2013 = vmatprep.subr.bf16.mxu0 0
    %2014 = vmatpush1.bf16.msra.mxu0 0
    %2015 = vmatprep.subr.bf16.mxu0 0
    %2016 = vmatpush1.bf16.msra.mxu0 0
    %2017 = vmatprep.subr.bf16.mxu0 0
    %2018 = vmatpush1.bf16.msra.mxu0 0
    %2019 = vmatprep.subr.bf16.mxu0 0
    %2020 = vmatpush1.bf16.msra.mxu0 0
    %2021 = vmatprep.subr.bf16.mxu0 0
    %2022 = vmatpush1.bf16.msra.mxu0 0
    %2023 = vmatprep.subr.bf16.mxu0 0
    %2024 = vmatpush1.bf16.msra.mxu0 0
    %2025 = vmatprep.subr.bf16.mxu0 0
    %2026 = vmatpush1.bf16.msra.mxu0 0
    %2027 = vmatprep.subr.bf16.mxu0 0
    %2028 = vmatpush1.bf16.msra.mxu0 0
    %2029 = vmatprep.subr.bf16.mxu0 0
    %2030 = vmatpush1.bf16.msra.mxu0 0
    %2031 = vmatprep.subr.bf16.mxu0 0
    %2032 = vmatpush1.bf16.msra.mxu0 0
    %2033 = vmatprep.mubr.bf16.mxu0 0
    %2034 = vmatmul.mubr.bf16.gmra.mrb[0].mxu0 %v1985
    %v2035 = vpop.f32.mrb[0].mxu0
    %v2036 = vadd.f32 0.0, %v2035
    %v2037 = vpop.f32.mrb[0].mxu0
    %v2038 = vpop.f32.mrb[0].mxu0
    %v2039 = vadd.f32 0.0, %v2038
    %v2040 = vpop.f32.mrb[0].mxu0
    %2041 = vmatprep.mubr.bf16.mxu0 0
    %2042 = vmatmul.mubr.bf16.gmra.mrb[0].mxu0 %v1988
    %v2043 = vpop.f32.mrb[0].mxu0
    %v2044 = vadd.f32 0.0, %v2043
    %v2045 = vpop.f32.mrb[0].mxu0
    %v2046 = vpop.f32.mrb[0].mxu0
    %v2047 = vadd.f32 0.0, %v2046
    %v2048 = vpop.f32.mrb[0].mxu0
    %2049 = vmatprep.mubr.bf16.mxu0 0
    %2050 = vmatmul.mubr.bf16.gmra.mrb[0].mxu0 %v1991
    %v2051 = vpop.f32.mrb[0].mxu0
    %v2052 = vadd.f32 0.0, %v2051
    %v2053 = vpop.f32.mrb[0].mxu0
    %v2054 = vpop.f32.mrb[0].mxu0
    %v2055 = vadd.f32 0.0, %v2054
    %v2056 = vpop.f32.mrb[0].mxu0
    %2057 = vmatprep.mubr.bf16.mxu0 0
    %2058 = vmatmul.mubr.bf16.gmra.mrb[0].mxu0 %v1994
    %v2059 = vpop.f32.mrb[0].mxu0
    %v2060 = vadd.f32 0.0, %v2059
    %v2061 = vpop.f32.mrb[0].mxu0
    %v2062 = vpop.f32.mrb[0].mxu0
    %v2063 = vadd.f32 0.0, %v2062
    %v2064 = vpop.f32.mrb[0].mxu0
    %2065 = vdwg.mxu0
    %v2066 = vmax.f32 %v2036, 0.0
    %v2067 = vmax.f32 %v2039, 0.0
    %v2068 = vmax.f32 %v2044, 0.0
    %v2069 = vmax.f32 %v2047, 0.0
    %v2070 = vmax.f32 %v2052, 0.0
    %v2071 = vmax.f32 %v2055, 0.0
    %v2072 = vmax.f32 %v2060, 0.0
    %v2073 = vmax.f32 %v2063, 0.0
    %2074 = vst.msk [vmem:[#allocation6] sm:$0xff] %vm1087, %v2066
    %2075 = vst.msk [vmem:[#allocation6 + $0x8] sm:$0xff] %vm1087, %v2067
    %2076 = vst.msk [vmem:[#allocation6 + $0x10] sm:$0xff] %vm1087, %v2068
    %2077 = vst.msk [vmem:[#allocation6 + $0x18] sm:$0xff] %vm1087, %v2069
    %2078 = vst.msk [vmem:[#allocation6 + $0x20] sm:$0xff] %vm1087, %v2070
    %2079 = vst.msk [vmem:[#allocation6 + $0x28] sm:$0xff] %vm1087, %v2071
    %2080 = vst.msk [vmem:[#allocation6 + $0x30] sm:$0xff] %vm1087, %v2072
    %2081 = vst.msk [vmem:[#allocation6 + $0x38] sm:$0xff] %vm1087, %v2073
    %v2082 = vld [vmem:[#allocation6] ss:$2 sm:$0xff]
    %s2083 = scalar_lea.vmem [#allocation6], 16
    %v2084 = vld [vmem:[%s2083] ss:$2 sm:$0xff]
    %s2085 = scalar_lea.vmem [#allocation6], 32
    %v2086 = vld [vmem:[%s2085] ss:$2 sm:$0xff]
    %s2087 = scalar_lea.vmem [#allocation6], 48
    %v2088 = vld [vmem:[%s2087] ss:$2 sm:$0xff]
    %s2089 = scalar_lea.vmem [#allocation6], 1
    %v2090 = vld [vmem:[%s2089] ss:$2 sm:$0xff]
    %s2091 = scalar_lea.vmem [#allocation6], 17
    %v2092 = vld [vmem:[%s2091] ss:$2 sm:$0xff]
    %s2093 = scalar_lea.vmem [#allocation6], 33
    %v2094 = vld [vmem:[%s2093] ss:$2 sm:$0xff]
    %s2095 = scalar_lea.vmem [#allocation6], 49
    %v2096 = vld [vmem:[%s2095] ss:$2 sm:$0xff]
    %v2097 = vmax.f32 %v2082, %v2090
    %v2098 = vmax.f32 %v2084, %v2092
    %v2099 = vmax.f32 %v2086, %v2094
    %v2100 = vmax.f32 %v2088, %v2096
    %2101 = vst.msk [vmem:[#allocation7] sm:$0xff] %vm1087, %v2097
    %2102 = vst.msk [vmem:[#allocation7 + $0x8] sm:$0xff] %vm1087, %v2098
    %2103 = vst.msk [vmem:[#allocation7 + $0x10] sm:$0xff] %vm1087, %v2099
    %2104 = vst.msk [vmem:[#allocation7 + $0x18] sm:$0xff] %vm1087, %v2100
    %v2105 = vld [vmem:[#allocation7] ss:$2 sm:$0xff]
    %s2106 = scalar_lea.vmem [#allocation7], 16
    %v2107 = vld [vmem:[%s2106] ss:$2 sm:$0xff]
    %s2108 = scalar_lea.vmem [#allocation7], 1
    %v2109 = vld [vmem:[%s2108] ss:$2 sm:$0xff]
    %s2110 = scalar_lea.vmem [#allocation7], 17
    %v2111 = vld [vmem:[%s2110] ss:$2 sm:$0xff]
    %v2112 = vmax.f32 %v2105, %v2109
    %v2113 = vmax.f32 %v2107, %v2111
    %2114 = vst.msk [vmem:[#allocation8] sm:$0xff] %vm1087, %v2112
    %2115 = vst.msk [vmem:[#allocation8 + $0x8] sm:$0xff] %vm1087, %v2113
    %v2116 = vld [vmem:[#allocation7] sm:$0xff]
    %v2117 = vld [vmem:[#allocation7 + $0x8] sm:$0xff]
    %v2118 = vld [vmem:[#allocation7 + $0x10] sm:$0xff]
    %v2119 = vld [vmem:[#allocation7 + $0x18] sm:$0xff]
    %v2124 = vrot.slane %v2116, 7
    %v2125 = vrot.slane %v2117, 7
    %v2126 = vsel %vm58, %v2124, %v2125
    %v2127 = vrot.slane %v2118, 7
    %v2128 = vsel %vm58, %v2125, %v2127
    %v2129 = vrot.slane %v2119, 7
    %v2130 = vsel %vm58, %v2127, %v2129
    %v2135 = vsel %vm58, 0.0, %v2124
    %vm2136 = vcmp.lt.s32.totalorder %v108, 0
    %v2137 = vsub.s32 0, %v108
    %v2138 = vsel %vm2136, %v2137, %v108
    %v2139 = vshrl.u32 %v2138, 4
    %v2140 = vand.u32 %v2138, 15
    %v2141 = vsub.s32 0, %v2140
    %v2142 = vsel %vm2136, %v2141, %v2140
    %vm2143 = vcmp.lt.s32.totalorder %v109, 0
    %v2144 = vsub.s32 0, %v109
    %v2145 = vsel %vm2143, %v2144, %v109
    %v2146 = vshrl.u32 %v2145, 4
    %v2147 = vand.u32 %v2145, 15
    %v2148 = vsub.s32 0, %v2147
    %v2149 = vsel %vm2143, %v2148, %v2147
    %vm2150 = vcmp.lt.s32.totalorder %v110, 0
    %v2151 = vsub.s32 0, %v110
    %v2152 = vsel %vm2150, %v2151, %v110
    %v2153 = vshrl.u32 %v2152, 4
    %v2154 = vand.u32 %v2152, 15
    %v2155 = vsub.s32 0, %v2154
    %v2156 = vsel %vm2150, %v2155, %v2154
    %vm2157 = vcmp.lt.s32.totalorder %v111, 0
    %v2158 = vsub.s32 0, %v111
    %v2159 = vsel %vm2157, %v2158, %v111
    %v2160 = vshrl.u32 %v2159, 4
    %v2161 = vand.u32 %v2159, 15
    %v2162 = vsub.s32 0, %v2161
    %v2163 = vsel %vm2157, %v2162, %v2161
    %vm2164 = vcmp.ne.s32.totalorder %v2142, 0
    %vm2165 = vcmp.ne.s32.totalorder %v2149, 0
    %vm2166 = vcmp.ne.s32.totalorder %v2156, 0
    %vm2167 = vcmp.ne.s32.totalorder %v2163, 0
    %vm2168 = vcmp.lt.s32.totalorder %v2142, 0
    %vm2169 = vcmp.lt.s32.totalorder %v2149, 0
    %vm2170 = vcmp.lt.s32.totalorder %v2156, 0
    %vm2171 = vcmp.lt.s32.totalorder %v2163, 0
    %vm2172 = vmand %vm2168, %vm2164
    %vm2173 = vmand %vm2169, %vm2165
    %vm2174 = vmand %vm2170, %vm2166
    %vm2175 = vmand %vm2171, %vm2167
    %v2176 = vadd.s32 %v2142, 16
    %v2177 = vadd.s32 %v2149, 16
    %v2178 = vadd.s32 %v2156, 16
    %v2179 = vadd.s32 %v2163, 16
    %v2180 = vsel %vm2172, %v2176, %v2142
    %v2181 = vsel %vm2173, %v2177, %v2149
    %v2182 = vsel %vm2174, %v2178, %v2156
    %v2183 = vsel %vm2175, %v2179, %v2163
    %vm2184 = vcmp.ge.s32.totalorder %v2180, 1
    %vm2185 = vcmp.ge.s32.totalorder %v2181, 1
    %vm2186 = vcmp.ge.s32.totalorder %v2182, 1
    %vm2187 = vcmp.ge.s32.totalorder %v2183, 1
    %v2188 = vsel %vm2184, 1, 0
    %v2189 = vsel %vm2185, 1, 0
    %v2190 = vsel %vm2186, 1, 0
    %v2191 = vsel %vm2187, 1, 0
    %vm2192 = vcmp.eq.s32.totalorder %v2188, 1
    %vm2193 = vcmp.eq.s32.totalorder %v2189, 1
    %vm2194 = vcmp.eq.s32.totalorder %v2190, 1
    %vm2195 = vcmp.eq.s32.totalorder %v2191, 1
    %v2196 = vsel %vm2192, %v2135, 0.0
    %v2197 = vsel %vm2193, %v2126, 0.0
    %v2198 = vsel %vm2194, %v2128, 0.0
    %v2199 = vsel %vm2195, %v2130, 0.0
    %v2200 = vrot.slane %v2116, 1
    %v2201 = vrot.slane %v2117, 1
    %v2202 = vsel %vm380, %v2200, %v2201
    %v2203 = vrot.slane %v2118, 1
    %v2204 = vsel %vm380, %v2201, %v2203
    %v2205 = vrot.slane %v2119, 1
    %v2206 = vsel %vm380, %v2203, %v2205
    %v2211 = vsel %vm380, %v2205, 0.0
    %vm2212 = vcmp.lt.s32.totalorder %v2180, 15
    %vm2213 = vcmp.lt.s32.totalorder %v2181, 15
    %vm2214 = vcmp.lt.s32.totalorder %v2182, 15
    %vm2215 = vcmp.lt.s32.totalorder %v2183, 15
    %v2216 = vsel %vm2212, 1, 0
    %v2217 = vsel %vm2213, 1, 0
    %v2218 = vsel %vm2214, 1, 0
    %v2219 = vsel %vm2215, 1, 0
    %vm2220 = vcmp.eq.s32.totalorder %v2216, 1
    %vm2221 = vcmp.eq.s32.totalorder %v2217, 1
    %vm2222 = vcmp.eq.s32.totalorder %v2218, 1
    %vm2223 = vcmp.eq.s32.totalorder %v2219, 1
    %v2224 = vsel %vm2220, %v2202, 0.0
    %v2225 = vsel %vm2221, %v2204, 0.0
    %v2226 = vsel %vm2222, %v2206, 0.0
    %v2227 = vsel %vm2223, %v2211, 0.0
    %2228 = vrot.lane.b32.xlu0 %v2116, 16
    %v2229 = vpop.permute.xlu0 %2228
    %2230 = vrot.lane.b32.xlu0 %v2117, 16
    %v2231 = vpop.permute.xlu0 %2230
    %2232 = vrot.lane.b32.xlu0 %v2118, 16
    %v2233 = vpop.permute.xlu0 %2232
    %2234 = vrot.lane.b32.xlu0 %v2119, 16
    %v2235 = vpop.permute.xlu0 %2234
    %2244 = vrot.lane.b32.xlu0 %v2224, 32
    %v2245 = vpop.permute.xlu0 %2244
    %2246 = vrot.lane.b32.xlu0 %v2225, 32
    %v2247 = vpop.permute.xlu0 %2246
    %2248 = vrot.lane.b32.xlu0 %v2226, 32
    %v2249 = vpop.permute.xlu0 %2248
    %2250 = vrot.lane.b32.xlu0 %v2227, 32
    %v2251 = vpop.permute.xlu0 %2250
    %v2256 = vsel %vm1087, %v2196, %v2229
    %v2257 = vsel %vm1087, %v2197, %v2231
    %v2258 = vsel %vm1087, %v2198, %v2233
    %v2259 = vsel %vm1087, %v2199, %v2235
    %v2260 = vsel %vm1933, %v2256, %v2245
    %v2261 = vsel %vm1933, %v2257, %v2247
    %v2262 = vsel %vm1933, %v2258, %v2249
    %v2263 = vsel %vm1933, %v2259, %v2251
    %v2264 = vsel %vm1942, %v2260, 1.0
    %v2265 = vsel %vm1942, %v2261, 1.0
    %v2266 = vsel %vm1942, %v2262, 1.0
    %v2267 = vsel %vm1942, %v2263, 1.0
    %v2268 = vpack.c.bf16 %v2265, %v2264
    %v2269 = vpack.c.bf16 %v2267, %v2266
    %v2270 = vld [vmem:[#allocation16 + $0x48] sm:$0xf]
    %v2271 = vld [vmem:[#allocation16 + $0x4c] sm:$0xf]
    %v2272 = vld [vmem:[#allocation16 + $0x50] sm:$0xf]
    %v2273 = vld [vmem:[#allocation16 + $0x54] sm:$0xf]
    %v2274 = vld [vmem:[#allocation16 + $0x58] sm:$0xf]
    %v2275 = vld [vmem:[#allocation16 + $0x5c] sm:$0xf]
    %v2276 = vld [vmem:[#allocation16 + $0x60] sm:$0x1]
    %v2284 = vunpack.c.l.b16 %v2270
    %v2285 = vunpack.c.l.b16 %v2271
    %v2286 = vunpack.c.l.b16 %v2272
    %v2287 = vunpack.c.l.b16 %v2273
    %v2288 = vunpack.c.l.b16 %v2274
    %v2289 = vunpack.c.l.b16 %v2275
    %v2290 = vunpack.c.l.b16 %v2276
    %v2291 = vpack.c.b16 %v2285, %v2284
    %v2292 = vpack.c.b16 %v2287, %v2286
    %v2293 = vpack.c.b16 %v2289, %v2288
    %v2294 = vpack.c.b16 %v2290, %v2290
    %v2299 = vsel %vm1983, %v2268, 0
    %v2302 = vsel %vm1983, %v2269, 0
    %v2305 = vand.u32 %v2294, %v1997
    %2307 = vmatprep.subr.bf16.mxu0 0
    %2308 = vmatpush1.bf16.msra.mxu0 %v2291
    %2309 = vmatprep.subr.bf16.mxu0 0
    %2310 = vmatpush1.bf16.msra.mxu0 %v2292
    %2311 = vmatprep.subr.bf16.mxu0 0
    %2312 = vmatpush1.bf16.msra.mxu0 %v2293
    %2313 = vmatprep.subr.bf16.mxu0 0
    %2314 = vmatpush1.bf16.msra.mxu0 %v2305
    %2315 = vmatprep.subr.bf16.mxu0 0
    %2316 = vmatpush1.bf16.msra.mxu0 0
    %2317 = vmatprep.subr.bf16.mxu0 0
    %2318 = vmatpush1.bf16.msra.mxu0 0
    %2319 = vmatprep.subr.bf16.mxu0 0
    %2320 = vmatpush1.bf16.msra.mxu0 0
    %2321 = vmatprep.subr.bf16.mxu0 0
    %2322 = vmatpush1.bf16.msra.mxu0 0
    %2323 = vmatprep.subr.bf16.mxu0 0
    %2324 = vmatpush1.bf16.msra.mxu0 0
    %2325 = vmatprep.subr.bf16.mxu0 0
    %2326 = vmatpush1.bf16.msra.mxu0 0
    %2327 = vmatprep.subr.bf16.mxu0 0
    %2328 = vmatpush1.bf16.msra.mxu0 0
    %2329 = vmatprep.subr.bf16.mxu0 0
    %2330 = vmatpush1.bf16.msra.mxu0 0
    %2331 = vmatprep.subr.bf16.mxu0 0
    %2332 = vmatpush1.bf16.msra.mxu0 0
    %2333 = vmatprep.subr.bf16.mxu0 0
    %2334 = vmatpush1.bf16.msra.mxu0 0
    %2335 = vmatprep.subr.bf16.mxu0 0
    %2336 = vmatpush1.bf16.msra.mxu0 0
    %2337 = vmatprep.subr.bf16.mxu0 0
    %2338 = vmatpush1.bf16.msra.mxu0 0
    %2339 = vmatprep.mubr.bf16.mxu0 0
    %2340 = vmatmul.mubr.bf16.gmra.mrb[0].mxu0 %v2299
    %v2341 = vpop.f32.mrb[0].mxu0
    %v2342 = vadd.f32 0.0, %v2341
    %v2343 = vpop.f32.mrb[0].mxu0
    %v2344 = vpop.f32.mrb[0].mxu0
    %v2345 = vadd.f32 0.0, %v2344
    %v2346 = vpop.f32.mrb[0].mxu0
    %2347 = vmatprep.mubr.bf16.mxu0 0
    %2348 = vmatmul.mubr.bf16.gmra.mrb[0].mxu0 %v2302
    %v2349 = vpop.f32.mrb[0].mxu0
    %v2350 = vadd.f32 0.0, %v2349
    %v2351 = vpop.f32.mrb[0].mxu0
    %v2352 = vpop.f32.mrb[0].mxu0
    %v2353 = vadd.f32 0.0, %v2352
    %v2354 = vpop.f32.mrb[0].mxu0
    %2355 = vdwg.mxu0
    %v2356 = vmax.f32 %v2342, 0.0
    %v2357 = vmax.f32 %v2345, 0.0
    %v2358 = vmax.f32 %v2350, 0.0
    %v2359 = vmax.f32 %v2353, 0.0
    %v2364 = vrot.slane %v2356, 7
    %v2365 = vrot.slane %v2357, 7
    %v2366 = vsel %vm58, %v2364, %v2365
    %v2367 = vrot.slane %v2358, 7
    %v2368 = vsel %vm58, %v2365, %v2367
    %v2369 = vrot.slane %v2359, 7
    %v2370 = vsel %vm58, %v2367, %v2369
    %v2375 = vsel %vm58, 0.0, %v2364
    %v2376 = vsel %vm2192, %v2375, 0.0
    %v2377 = vsel %vm2193, %v2366, 0.0
    %v2378 = vsel %vm2194, %v2368, 0.0
    %v2379 = vsel %vm2195, %v2370, 0.0
    %v2380 = vrot.slane %v2356, 1
    %v2381 = vrot.slane %v2357, 1
    %v2382 = vsel %vm380, %v2380, %v2381
    %v2383 = vrot.slane %v2358, 1
    %v2384 = vsel %vm380, %v2381, %v2383
    %v2385 = vrot.slane %v2359, 1
    %v2386 = vsel %vm380, %v2383, %v2385
    %v2391 = vsel %vm380, %v2385, 0.0
    %v2392 = vsel %vm2220, %v2382, 0.0
    %v2393 = vsel %vm2221, %v2384, 0.0
    %v2394 = vsel %vm2222, %v2386, 0.0
    %v2395 = vsel %vm2223, %v2391, 0.0
    %2396 = vrot.lane.b32.xlu0 %v2356, 32
    %v2397 = vpop.permute.xlu0 %2396
    %2398 = vrot.lane.b32.xlu0 %v2357, 32
    %v2399 = vpop.permute.xlu0 %2398
    %2400 = vrot.lane.b32.xlu0 %v2358, 32
    %v2401 = vpop.permute.xlu0 %2400
    %2402 = vrot.lane.b32.xlu0 %v2359, 32
    %v2403 = vpop.permute.xlu0 %2402
    %2412 = vrot.lane.b32.xlu0 %v2392, 64
    %v2413 = vpop.permute.xlu0 %2412
    %2414 = vrot.lane.b32.xlu0 %v2393, 64
    %v2415 = vpop.permute.xlu0 %2414
    %2416 = vrot.lane.b32.xlu0 %v2394, 64
    %v2417 = vpop.permute.xlu0 %2416
    %2418 = vrot.lane.b32.xlu0 %v2395, 64
    %v2419 = vpop.permute.xlu0 %2418
    %v2424 = vsel %vm1933, %v2376, %v2397
    %v2425 = vsel %vm1933, %v2377, %v2399
    %v2426 = vsel %vm1933, %v2378, %v2401
    %v2427 = vsel %vm1933, %v2379, %v2403
    %vm2428 = vcmask 523264
    %v2429 = vsel %vm2428, %v2424, %v2413
    %v2430 = vsel %vm2428, %v2425, %v2415
    %v2431 = vsel %vm2428, %v2426, %v2417
    %v2432 = vsel %vm2428, %v2427, %v2419
    %vm2433 = vcmask 785408
    %v2434 = vsel %vm2433, %v2429, 1.0
    %v2435 = vsel %vm2433, %v2430, 1.0
    %v2436 = vsel %vm2433, %v2431, 1.0
    %v2437 = vsel %vm2433, %v2432, 1.0
    %v2438 = vpack.c.bf16 %v2435, %v2434
    %v2439 = vpack.c.bf16 %v2437, %v2436
    %v2440 = vld [vmem:[#allocation16 + $0x68] sm:$0xf]
    %v2441 = vld [vmem:[#allocation16 + $0x6c] sm:$0xf]
    %v2442 = vld [vmem:[#allocation16 + $0x70] sm:$0xf]
    %v2443 = vld [vmem:[#allocation16 + $0x74] sm:$0xf]
    %v2444 = vld [vmem:[#allocation16 + $0x78] sm:$0xf]
    %v2445 = vld [vmem:[#allocation16 + $0x7c] sm:$0xf]
    %v2446 = vld [vmem:[#allocation16 + $0x80] sm:$0xf]
    %v2447 = vld [vmem:[#allocation16 + $0x84] sm:$0xf]
    %v2448 = vld [vmem:[#allocation16 + $0x88] sm:$0xf]
    %v2449 = vld [vmem:[#allocation16 + $0x8c] sm:$0xf]
    %v2450 = vld [vmem:[#allocation16 + $0x90] sm:$0xf]
    %v2451 = vld [vmem:[#allocation16 + $0x94] sm:$0xf]
    %v2452 = vld [vmem:[#allocation16 + $0x98] sm:$0x1]
    %v2466 = vunpack.c.l.b16 %v2440
    %v2467 = vunpack.c.l.b16 %v2441
    %v2468 = vunpack.c.l.b16 %v2442
    %v2469 = vunpack.c.l.b16 %v2443
    %v2470 = vunpack.c.l.b16 %v2444
    %v2471 = vunpack.c.l.b16 %v2445
    %v2472 = vunpack.c.l.b16 %v2446
    %v2473 = vunpack.c.l.b16 %v2447
    %v2474 = vunpack.c.l.b16 %v2448
    %v2475 = vunpack.c.l.b16 %v2449
    %v2476 = vunpack.c.l.b16 %v2450
    %v2477 = vunpack.c.l.b16 %v2451
    %v2478 = vunpack.c.l.b16 %v2452
    %v2479 = vpack.c.b16 %v2467, %v2466
    %v2480 = vpack.c.b16 %v2469, %v2468
    %v2481 = vpack.c.b16 %v2471, %v2470
    %v2482 = vpack.c.b16 %v2473, %v2472
    %v2483 = vpack.c.b16 %v2475, %v2474
    %v2484 = vpack.c.b16 %v2477, %v2476
    %v2485 = vpack.c.b16 %v2478, %v2478
    %vm2492 = vcmask 793600
    %v2494 = vsel %vm2492, %v2438, 0
    %v2497 = vsel %vm2492, %v2439, 0
    %v2500 = vand.u32 %v2485, %v1997
    %2502 = vmatprep.subr.bf16.mxu0 0
    %2503 = vmatpush1.bf16.msra.mxu0 %v2479
    %2504 = vmatprep.subr.bf16.mxu0 0
    %2505 = vmatpush1.bf16.msra.mxu0 %v2480
    %2506 = vmatprep.subr.bf16.mxu0 0
    %2507 = vmatpush1.bf16.msra.mxu0 %v2481
    %2508 = vmatprep.subr.bf16.mxu0 0
    %2509 = vmatpush1.bf16.msra.mxu0 %v2482
    %2510 = vmatprep.subr.bf16.mxu0 0
    %2511 = vmatpush1.bf16.msra.mxu0 %v2483
    %2512 = vmatprep.subr.bf16.mxu0 0
    %2513 = vmatpush1.bf16.msra.mxu0 %v2484
    %2514 = vmatprep.subr.bf16.mxu0 0
    %2515 = vmatpush1.bf16.msra.mxu0 %v2500
    %2516 = vmatprep.subr.bf16.mxu0 0
    %2517 = vmatpush1.bf16.msra.mxu0 0
    %2518 = vmatprep.subr.bf16.mxu0 0
    %2519 = vmatpush1.bf16.msra.mxu0 0
    %2520 = vmatprep.subr.bf16.mxu0 0
    %2521 = vmatpush1.bf16.msra.mxu0 0
    %2522 = vmatprep.subr.bf16.mxu0 0
    %2523 = vmatpush1.bf16.msra.mxu0 0
    %2524 = vmatprep.subr.bf16.mxu0 0
    %2525 = vmatpush1.bf16.msra.mxu0 0
    %2526 = vmatprep.subr.bf16.mxu0 0
    %2527 = vmatpush1.bf16.msra.mxu0 0
    %2528 = vmatprep.subr.bf16.mxu0 0
    %2529 = vmatpush1.bf16.msra.mxu0 0
    %2530 = vmatprep.subr.bf16.mxu0 0
    %2531 = vmatpush1.bf16.msra.mxu0 0
    %2532 = vmatprep.subr.bf16.mxu0 0
    %2533 = vmatpush1.bf16.msra.mxu0 0
    %2534 = vmatprep.mubr.bf16.mxu0 0
    %2535 = vmatmul.mubr.bf16.gmra.mrb[0].mxu0 %v2494
    %v2536 = vpop.f32.mrb[0].mxu0
    %v2537 = vadd.f32 0.0, %v2536
    %v2538 = vpop.f32.mrb[0].mxu0
    %v2539 = vpop.f32.mrb[0].mxu0
    %v2540 = vadd.f32 0.0, %v2539
    %v2541 = vpop.f32.mrb[0].mxu0
    %2542 = vmatprep.mubr.bf16.mxu0 0
    %2543 = vmatmul.mubr.bf16.gmra.mrb[0].mxu0 %v2497
    %v2544 = vpop.f32.mrb[0].mxu0
    %v2545 = vadd.f32 0.0, %v2544
    %v2546 = vpop.f32.mrb[0].mxu0
    %v2547 = vpop.f32.mrb[0].mxu0
    %v2548 = vadd.f32 0.0, %v2547
    %v2549 = vpop.f32.mrb[0].mxu0
    %2550 = vdwg.mxu0
    %v2551 = vmax.f32 %v2537, 0.0
    %v2552 = vmax.f32 %v2540, 0.0
    %v2553 = vmax.f32 %v2545, 0.0
    %v2554 = vmax.f32 %v2548, 0.0
    %2555 = vst.msk [vmem:[#allocation9] sm:$0xff] %vm1933, %v2551
    %2556 = vst.msk [vmem:[#allocation9 + $0x8] sm:$0xff] %vm1933, %v2552
    %2557 = vst.msk [vmem:[#allocation9 + $0x10] sm:$0xff] %vm1933, %v2553
    %2558 = vst.msk [vmem:[#allocation9 + $0x18] sm:$0xff] %vm1933, %v2554
    %v2559 = vld [vmem:[#allocation9] ss:$2 sm:$0xff]
    %s2560 = scalar_lea.vmem [#allocation9], 16
    %v2561 = vld [vmem:[%s2560] ss:$2 sm:$0xff]
    %s2562 = scalar_lea.vmem [#allocation9], 1
    %v2563 = vld [vmem:[%s2562] ss:$2 sm:$0xff]
    %s2564 = scalar_lea.vmem [#allocation9], 17
    %v2565 = vld [vmem:[%s2564] ss:$2 sm:$0xff]
    %v2566 = vmax.f32 %v2559, %v2563
    %v2567 = vmax.f32 %v2561, %v2565
    %2568 = vst.msk [vmem:[#allocation10] sm:$0xff] %vm1933, %v2566
    %2569 = vst.msk [vmem:[#allocation10 + $0x8] sm:$0xff] %vm1933, %v2567
    %v2570 = vld [vmem:[#allocation10] sm:$0xff]
    %v2571 = vld [vmem:[#allocation10 + $0x8] sm:$0xff]
    %v2574 = vrot.slane %v2570, 7
    %v2575 = vrot.slane %v2571, 7
    %v2576 = vsel %vm58, %v2574, %v2575
    %v2579 = vsel %vm58, 0.0, %v2574
    %vm2580 = vcmp.lt.s32.totalorder %v108, 0
    %v2581 = vsub.s32 0, %v108
    %v2582 = vsel %vm2580, %v2581, %v108
    %v2583 = vshrl.u32 %v2582, 3
    %v2584 = vand.u32 %v2582, 7
    %v2585 = vsub.s32 0, %v2584
    %v2586 = vsel %vm2580, %v2585, %v2584
    %vm2587 = vcmp.lt.s32.totalorder %v109, 0
    %v2588 = vsub.s32 0, %v109
    %v2589 = vsel %vm2587, %v2588, %v109
    %v2590 = vshrl.u32 %v2589, 3
    %v2591 = vand.u32 %v2589, 7
    %v2592 = vsub.s32 0, %v2591
    %v2593 = vsel %vm2587, %v2592, %v2591
    %vm2594 = vcmp.ne.s32.totalorder %v2586, 0
    %vm2595 = vcmp.ne.s32.totalorder %v2593, 0
    %vm2596 = vcmp.lt.s32.totalorder %v2586, 0
    %vm2597 = vcmp.lt.s32.totalorder %v2593, 0
    %vm2598 = vmand %vm2596, %vm2594
    %vm2599 = vmand %vm2597, %vm2595
    %v2600 = vadd.s32 %v2586, 8
    %v2601 = vadd.s32 %v2593, 8
    %v2602 = vsel %vm2598, %v2600, %v2586
    %v2603 = vsel %vm2599, %v2601, %v2593
    %vm2604 = vcmp.ge.s32.totalorder %v2602, 1
    %vm2605 = vcmp.ge.s32.totalorder %v2603, 1
    %v2606 = vsel %vm2604, 1, 0
    %v2607 = vsel %vm2605, 1, 0
    %vm2608 = vcmp.eq.s32.totalorder %v2606, 1
    %vm2609 = vcmp.eq.s32.totalorder %v2607, 1
    %v2610 = vsel %vm2608, %v2579, 0.0
    %v2611 = vsel %vm2609, %v2576, 0.0
    %v2612 = vrot.slane %v2570, 1
    %v2613 = vrot.slane %v2571, 1
    %v2614 = vsel %vm380, %v2612, %v2613
    %v2617 = vsel %vm380, %v2613, 0.0
    %vm2618 = vcmp.lt.s32.totalorder %v2602, 7
    %vm2619 = vcmp.lt.s32.totalorder %v2603, 7
    %v2620 = vsel %vm2618, 1, 0
    %v2621 = vsel %vm2619, 1, 0
    %vm2622 = vcmp.eq.s32.totalorder %v2620, 1
    %vm2623 = vcmp.eq.s32.totalorder %v2621, 1
    %v2624 = vsel %vm2622, %v2614, 0.0
    %v2625 = vsel %vm2623, %v2617, 0.0
    %2626 = vrot.lane.b32.xlu0 %v2570, 32
    %v2627 = vpop.permute.xlu0 %2626
    %2628 = vrot.lane.b32.xlu0 %v2571, 32
    %v2629 = vpop.permute.xlu0 %2628
    %2634 = vrot.lane.b32.xlu0 %v2624, 64
    %v2635 = vpop.permute.xlu0 %2634
    %2636 = vrot.lane.b32.xlu0 %v2625, 64
    %v2637 = vpop.permute.xlu0 %2636
    %v2640 = vsel %vm1933, %v2610, %v2627
    %v2641 = vsel %vm1933, %v2611, %v2629
    %v2642 = vsel %vm2428, %v2640, %v2635
    %v2643 = vsel %vm2428, %v2641, %v2637
    %v2644 = vsel %vm2433, %v2642, 1.0
    %v2645 = vsel %vm2433, %v2643, 1.0
    %v2646 = vpack.c.bf16 %v2645, %v2644
    %v2647 = vld [vmem:[#allocation16 + $0xa0] sm:$0xf]
    %v2648 = vld [vmem:[#allocation16 + $0xa4] sm:$0xf]
    %v2649 = vld [vmem:[#allocation16 + $0xa8] sm:$0xf]
    %v2650 = vld [vmem:[#allocation16 + $0xac] sm:$0xf]
    %v2651 = vld [vmem:[#allocation16 + $0xb0] sm:$0xf]
    %v2652 = vld [vmem:[#allocation16 + $0xb4] sm:$0xf]
    %v2653 = vld [vmem:[#allocation16 + $0xb8] sm:$0xf]
    %v2654 = vld [vmem:[#allocation16 + $0xbc] sm:$0xf]
    %v2655 = vld [vmem:[#allocation16 + $0xc0] sm:$0xf]
    %v2656 = vld [vmem:[#allocation16 + $0xc4] sm:$0xf]
    %v2657 = vld [vmem:[#allocation16 + $0xc8] sm:$0xf]
    %v2658 = vld [vmem:[#allocation16 + $0xcc] sm:$0xf]
    %v2659 = vld [vmem:[#allocation16 + $0xd0] sm:$0x1]
    %v2673 = vunpack.c.l.b16 %v2647
    %v2674 = vunpack.c.l.b16 %v2648
    %v2675 = vunpack.c.l.b16 %v2649
    %v2676 = vunpack.c.l.b16 %v2650
    %v2677 = vunpack.c.l.b16 %v2651
    %v2678 = vunpack.c.l.b16 %v2652
    %v2679 = vunpack.c.l.b16 %v2653
    %v2680 = vunpack.c.l.b16 %v2654
    %v2681 = vunpack.c.l.b16 %v2655
    %v2682 = vunpack.c.l.b16 %v2656
    %v2683 = vunpack.c.l.b16 %v2657
    %v2684 = vunpack.c.l.b16 %v2658
    %v2685 = vunpack.c.l.b16 %v2659
    %v2686 = vpack.c.b16 %v2674, %v2673
    %v2687 = vpack.c.b16 %v2676, %v2675
    %v2688 = vpack.c.b16 %v2678, %v2677
    %v2689 = vpack.c.b16 %v2680, %v2679
    %v2690 = vpack.c.b16 %v2682, %v2681
    %v2691 = vpack.c.b16 %v2684, %v2683
    %v2692 = vpack.c.b16 %v2685, %v2685
    %v2700 = vsel %vm2492, %v2646, 0
    %v2703 = vand.u32 %v2692, %v1997
    %2705 = vmatprep.subr.bf16.mxu0 0
    %2706 = vmatpush1.bf16.msra.mxu0 %v2686
    %2707 = vmatprep.subr.bf16.mxu0 0
    %2708 = vmatpush1.bf16.msra.mxu0 %v2687
    %2709 = vmatprep.subr.bf16.mxu0 0
    %2710 = vmatpush1.bf16.msra.mxu0 %v2688
    %2711 = vmatprep.subr.bf16.mxu0 0
    %2712 = vmatpush1.bf16.msra.mxu0 %v2689
    %2713 = vmatprep.subr.bf16.mxu0 0
    %2714 = vmatpush1.bf16.msra.mxu0 %v2690
    %2715 = vmatprep.subr.bf16.mxu0 0
    %2716 = vmatpush1.bf16.msra.mxu0 %v2691
    %2717 = vmatprep.subr.bf16.mxu0 0
    %2718 = vmatpush1.bf16.msra.mxu0 %v2703
    %2719 = vmatprep.subr.bf16.mxu0 0
    %2720 = vmatpush1.bf16.msra.mxu0 0
    %2721 = vmatprep.subr.bf16.mxu0 0
    %2722 = vmatpush1.bf16.msra.mxu0 0
    %2723 = vmatprep.subr.bf16.mxu0 0
    %2724 = vmatpush1.bf16.msra.mxu0 0
    %2725 = vmatprep.subr.bf16.mxu0 0
    %2726 = vmatpush1.bf16.msra.mxu0 0
    %2727 = vmatprep.subr.bf16.mxu0 0
    %2728 = vmatpush1.bf16.msra.mxu0 0
    %2729 = vmatprep.subr.bf16.mxu0 0
    %2730 = vmatpush1.bf16.msra.mxu0 0
    %2731 = vmatprep.subr.bf16.mxu0 0
    %2732 = vmatpush1.bf16.msra.mxu0 0
    %2733 = vmatprep.subr.bf16.mxu0 0
    %2734 = vmatpush1.bf16.msra.mxu0 0
    %2735 = vmatprep.subr.bf16.mxu0 0
    %2736 = vmatpush1.bf16.msra.mxu0 0
    %2737 = vmatprep.mubr.bf16.mxu0 0
    %2738 = vmatmul.mubr.bf16.gmra.mrb[0].mxu0 %v2700
    %v2739 = vpop.f32.mrb[0].mxu0
    %v2740 = vadd.f32 0.0, %v2739
    %v2741 = vpop.f32.mrb[0].mxu0
    %v2742 = vpop.f32.mrb[0].mxu0
    %v2743 = vadd.f32 0.0, %v2742
    %v2744 = vpop.f32.mrb[0].mxu0
    %2745 = vdwg.mxu0
    %v2746 = vmax.f32 %v2740, 0.0
    %v2747 = vmax.f32 %v2743, 0.0
    %v2750 = vrot.slane %v2746, 7
    %v2751 = vrot.slane %v2747, 7
    %v2752 = vsel %vm58, %v2750, %v2751
    %v2755 = vsel %vm58, 0.0, %v2750
    %v2756 = vsel %vm2608, %v2755, 0.0
    %v2757 = vsel %vm2609, %v2752, 0.0
    %v2758 = vrot.slane %v2746, 1
    %v2759 = vrot.slane %v2747, 1
    %v2760 = vsel %vm380, %v2758, %v2759
    %v2763 = vsel %vm380, %v2759, 0.0
    %v2764 = vsel %vm2622, %v2760, 0.0
    %v2765 = vsel %vm2623, %v2763, 0.0
    %2766 = vrot.lane.b32.xlu0 %v2746, 64
    %v2767 = vpop.permute.xlu0 %2766
    %2768 = vrot.lane.b32.xlu0 %v2747, 64
    %v2769 = vpop.permute.xlu0 %2768
    %v2772 = vsel %vm2428, %v2756, %v2767
    %v2773 = vsel %vm2428, %v2757, %v2769
    %v2774 = vsel %vm2428, %v2764, 1.0
    %v2775 = vsel %vm2428, %v2765, 1.0
    %v2776 = vpack.c.bf16 %v2773, %v2772
    %v2777 = vpack.c.bf16 %v2775, %v2774
    %v2778 = vld [vmem:[#allocation16 + $0xd8] sm:$0xf]
    %v2779 = vld [vmem:[#allocation16 + $0xdc] sm:$0xf]
    %v2780 = vld [vmem:[#allocation16 + $0xe0] sm:$0xf]
    %v2781 = vld [vmem:[#allocation16 + $0xe4] sm:$0xf]
    %v2782 = vld [vmem:[#allocation16 + $0xe8] sm:$0xf]
    %v2783 = vld [vmem:[#allocation16 + $0xec] sm:$0xf]
    %v2784 = vld [vmem:[#allocation16 + $0xf0] sm:$0xf]
    %v2785 = vld [vmem:[#allocation16 + $0xf4] sm:$0xf]
    %v2786 = vld [vmem:[#allocation16 + $0xf8] sm:$0xf]
    %v2787 = vld [vmem:[#allocation16 + $0xfc] sm:$0xf]
    %v2788 = vld [vmem:[#allocation16 + $0x100] sm:$0xf]
    %v2789 = vld [vmem:[#allocation16 + $0x104] sm:$0xf]
    %v2790 = vld [vmem:[#allocation16 + $0x108] sm:$0xf]
    %v2791 = vld [vmem:[#allocation16 + $0x10c] sm:$0xf]
    %v2792 = vld [vmem:[#allocation16 + $0x110] sm:$0xf]
    %v2793 = vld [vmem:[#allocation16 + $0x114] sm:$0xf]
    %v2794 = vld [vmem:[#allocation16 + $0x118] sm:$0xf]
    %v2795 = vld [vmem:[#allocation16 + $0x11c] sm:$0xf]
    %v2796 = vld [vmem:[#allocation16 + $0x120] sm:$0xf]
    %v2797 = vld [vmem:[#allocation16 + $0x124] sm:$0xf]
    %v2798 = vld [vmem:[#allocation16 + $0x128] sm:$0xf]
    %v2799 = vld [vmem:[#allocation16 + $0x12c] sm:$0xf]
    %v2800 = vld [vmem:[#allocation16 + $0x130] sm:$0xf]
    %v2801 = vld [vmem:[#allocation16 + $0x134] sm:$0xf]
    %v2802 = vld [vmem:[#allocation16 + $0x138] sm:$0x1]
    %v2828 = vunpack.c.l.b16 %v2778
    %v2829 = vunpack.c.l.b16 %v2779
    %v2830 = vunpack.c.l.b16 %v2780
    %v2831 = vunpack.c.l.b16 %v2781
    %v2832 = vunpack.c.l.b16 %v2782
    %v2833 = vunpack.c.l.b16 %v2783
    %v2834 = vunpack.c.l.b16 %v2784
    %v2835 = vunpack.c.l.b16 %v2785
    %v2836 = vunpack.c.l.b16 %v2786
    %v2837 = vunpack.c.l.b16 %v2787
    %v2838 = vunpack.c.l.b16 %v2788
    %v2839 = vunpack.c.l.b16 %v2789
    %v2840 = vunpack.c.l.b16 %v2790
    %v2841 = vunpack.c.l.b16 %v2791
    %v2842 = vunpack.c.l.b16 %v2792
    %v2843 = vunpack.c.l.b16 %v2793
    %v2844 = vunpack.c.l.b16 %v2794
    %v2845 = vunpack.c.l.b16 %v2795
    %v2846 = vunpack.c.l.b16 %v2796
    %v2847 = vunpack.c.l.b16 %v2797
    %v2848 = vunpack.c.l.b16 %v2798
    %v2849 = vunpack.c.l.b16 %v2799
    %v2850 = vunpack.c.l.b16 %v2800
    %v2851 = vunpack.c.l.b16 %v2801
    %v2852 = vunpack.c.l.b16 %v2802
    %v2853 = vpack.c.b16 %v2829, %v2828
    %v2854 = vpack.c.b16 %v2831, %v2830
    %v2855 = vpack.c.b16 %v2833, %v2832
    %v2856 = vpack.c.b16 %v2835, %v2834
    %v2857 = vpack.c.b16 %v2837, %v2836
    %v2858 = vpack.c.b16 %v2839, %v2838
    %v2859 = vpack.c.b16 %v2841, %v2840
    %v2860 = vpack.c.b16 %v2843, %v2842
    %v2861 = vpack.c.b16 %v2845, %v2844
    %v2862 = vpack.c.b16 %v2847, %v2846
    %v2863 = vpack.c.b16 %v2849, %v2848
    %v2864 = vpack.c.b16 %v2851, %v2850
    %v2865 = vpack.c.b16 %v2852, %v2852
    %vm2878 = vcmask 531456
    %v2880 = vsel %vm2878, %v2777, 0
    %v2883 = vand.u32 %v2865, %v1997
    %2885 = vmatprep.subr.bf16.mxu0 0
    %2886 = vmatpush1.bf16.msra.mxu0 %v2853
    %2887 = vmatprep.subr.bf16.mxu0 0
    %2888 = vmatpush1.bf16.msra.mxu0 %v2854
    %2889 = vmatprep.subr.bf16.mxu0 0
    %2890 = vmatpush1.bf16.msra.mxu0 %v2855
    %2891 = vmatprep.subr.bf16.mxu0 0
    %2892 = vmatpush1.bf16.msra.mxu0 %v2856
    %2893 = vmatprep.subr.bf16.mxu0 0
    %2894 = vmatpush1.bf16.msra.mxu0 %v2857
    %2895 = vmatprep.subr.bf16.mxu0 0
    %2896 = vmatpush1.bf16.msra.mxu0 %v2858
    %2897 = vmatprep.subr.bf16.mxu0 0
    %2898 = vmatpush1.bf16.msra.mxu0 %v2859
    %2899 = vmatprep.subr.bf16.mxu0 0
    %2900 = vmatpush1.bf16.msra.mxu0 %v2860
    %2901 = vmatprep.subr.bf16.mxu0 0
    %2902 = vmatpush1.bf16.msra.mxu0 %v2861
    %2903 = vmatprep.subr.bf16.mxu0 0
    %2904 = vmatpush1.bf16.msra.mxu0 %v2862
    %2905 = vmatprep.subr.bf16.mxu0 0
    %2906 = vmatpush1.bf16.msra.mxu0 %v2863
    %2907 = vmatprep.subr.bf16.mxu0 0
    %2908 = vmatpush1.bf16.msra.mxu0 %v2864
    %2909 = vmatprep.subr.bf16.mxu0 0
    %2910 = vmatpush1.bf16.msra.mxu0 %v2883
    %2911 = vmatprep.subr.bf16.mxu0 0
    %2912 = vmatpush1.bf16.msra.mxu0 0
    %2913 = vmatprep.subr.bf16.mxu0 0
    %2914 = vmatpush1.bf16.msra.mxu0 0
    %2915 = vmatprep.subr.bf16.mxu0 0
    %2916 = vmatpush1.bf16.msra.mxu0 0
    %2917 = vmatprep.mubr.bf16.mxu0 %v2880
    %2918 = vmatmul.mubr.bf16.gmra.mrb[0].mxu0 %v2776
    %v2919 = vpop.f32.mrb[0].mxu0
    %v2920 = vadd.f32 0.0, %v2919
    %v2921 = vpop.f32.mrb[0].mxu0
    %v2922 = vpop.f32.mrb[0].mxu0
    %v2923 = vadd.f32 0.0, %v2922
    %v2924 = vpop.f32.mrb[0].mxu0
    %2925 = vdwg.mxu0
    %v2926 = vmax.f32 %v2920, 0.0
    %v2927 = vmax.f32 %v2923, 0.0
    %2928 = vst.msk [vmem:[#allocation11] sm:$0xff] %vm2428, %v2926
    %2929 = vst.msk [vmem:[#allocation11 + $0x8] sm:$0xff] %vm2428, %v2927
    %v2930 = vld [vmem:[#allocation11] ss:$2 sm:$0xff]
    %s2931 = scalar_lea.vmem [#allocation11], 1
    %v2932 = vld [vmem:[%s2931] ss:$2 sm:$0xff]
    %v2933 = vmax.f32 %v2930, %v2932
    %v2935 = vrot.slane %v2933, 7
    %v2937 = vsel %vm58, 0.0, %v2935
    %vm2938 = vcmp.lt.s32.totalorder %v108, 0
    %v2939 = vsub.s32 0, %v108
    %v2940 = vsel %vm2938, %v2939, %v108
    %v2941 = vshrl.u32 %v2940, 2
    %v2942 = vand.u32 %v2940, 3
    %v2943 = vsub.s32 0, %v2942
    %v2944 = vsel %vm2938, %v2943, %v2942
    %vm2945 = vcmp.ne.s32.totalorder %v2944, 0
    %vm2946 = vcmp.lt.s32.totalorder %v2944, 0
    %vm2947 = vmand %vm2946, %vm2945
    %v2948 = vadd.s32 %v2944, 4
    %v2949 = vsel %vm2947, %v2948, %v2944
    %vm2950 = vcmp.ge.s32.totalorder %v2949, 1
    %v2951 = vsel %vm2950, 1, 0
    %vm2952 = vcmp.eq.s32.totalorder %v2951, 1
    %v2953 = vsel %vm2952, %v2937, 0.0
    %v2954 = vrot.slane %v2933, 1
    %v2956 = vsel %vm380, %v2954, 0.0
    %vm2957 = vcmp.lt.s32.totalorder %v2949, 3
    %v2958 = vsel %vm2957, 1, 0
    %vm2959 = vcmp.eq.s32.totalorder %v2958, 1
    %v2960 = vsel %vm2959, %v2956, 0.0
    %2961 = vrot.lane.b32.xlu0 %v2933, 64
    %v2962 = vpop.permute.xlu0 %2961
    %v2964 = vsel %vm2428, %v2953, %v2962
    %v2965 = vsel %vm2428, %v2960, 1.0
    %v2966 = vpack.c.bf16 %v2964, %v2964
    %v2967 = vpack.c.bf16 %v2965, %v2965
    %v2968 = vld [vmem:[#allocation16 + $0x140] sm:$0xf]
    %v2969 = vld [vmem:[#allocation16 + $0x144] sm:$0xf]
    %v2970 = vld [vmem:[#allocation16 + $0x148] sm:$0xf]
    %v2971 = vld [vmem:[#allocation16 + $0x14c] sm:$0xf]
    %v2972 = vld [vmem:[#allocation16 + $0x150] sm:$0xf]
    %v2973 = vld [vmem:[#allocation16 + $0x154] sm:$0xf]
    %v2974 = vld [vmem:[#allocation16 + $0x158] sm:$0xf]
    %v2975 = vld [vmem:[#allocation16 + $0x15c] sm:$0xf]
    %v2976 = vld [vmem:[#allocation16 + $0x160] sm:$0xf]
    %v2977 = vld [vmem:[#allocation16 + $0x164] sm:$0xf]
    %v2978 = vld [vmem:[#allocation16 + $0x168] sm:$0xf]
    %v2979 = vld [vmem:[#allocation16 + $0x16c] sm:$0xf]
    %v2980 = vld [vmem:[#allocation16 + $0x170] sm:$0xf]
    %v2981 = vld [vmem:[#allocation16 + $0x174] sm:$0xf]
    %v2982 = vld [vmem:[#allocation16 + $0x178] sm:$0xf]
    %v2983 = vld [vmem:[#allocation16 + $0x17c] sm:$0xf]
    %v2984 = vld [vmem:[#allocation16 + $0x180] sm:$0xf]
    %v2985 = vld [vmem:[#allocation16 + $0x184] sm:$0xf]
    %v2986 = vld [vmem:[#allocation16 + $0x188] sm:$0xf]
    %v2987 = vld [vmem:[#allocation16 + $0x18c] sm:$0xf]
    %v2988 = vld [vmem:[#allocation16 + $0x190] sm:$0xf]
    %v2989 = vld [vmem:[#allocation16 + $0x194] sm:$0xf]
    %v2990 = vld [vmem:[#allocation16 + $0x198] sm:$0xf]
    %v2991 = vld [vmem:[#allocation16 + $0x19c] sm:$0xf]
    %v2992 = vld [vmem:[#allocation16 + $0x1a0] sm:$0x1]
    %v3018 = vunpack.c.l.b16 %v2968
    %v3019 = vunpack.c.l.b16 %v2969
    %v3020 = vunpack.c.l.b16 %v2970
    %v3021 = vunpack.c.l.b16 %v2971
    %v3022 = vunpack.c.l.b16 %v2972
    %v3023 = vunpack.c.l.b16 %v2973
    %v3024 = vunpack.c.l.b16 %v2974
    %v3025 = vunpack.c.l.b16 %v2975
    %v3026 = vunpack.c.l.b16 %v2976
    %v3027 = vunpack.c.l.b16 %v2977
    %v3028 = vunpack.c.l.b16 %v2978
    %v3029 = vunpack.c.l.b16 %v2979
    %v3030 = vunpack.c.l.b16 %v2980
    %v3031 = vunpack.c.l.b16 %v2981
    %v3032 = vunpack.c.l.b16 %v2982
    %v3033 = vunpack.c.l.b16 %v2983
    %v3034 = vunpack.c.l.b16 %v2984
    %v3035 = vunpack.c.l.b16 %v2985
    %v3036 = vunpack.c.l.b16 %v2986
    %v3037 = vunpack.c.l.b16 %v2987
    %v3038 = vunpack.c.l.b16 %v2988
    %v3039 = vunpack.c.l.b16 %v2989
    %v3040 = vunpack.c.l.b16 %v2990
    %v3041 = vunpack.c.l.b16 %v2991
    %v3042 = vunpack.c.l.b16 %v2992
    %v3043 = vpack.c.b16 %v3019, %v3018
    %v3044 = vpack.c.b16 %v3021, %v3020
    %v3045 = vpack.c.b16 %v3023, %v3022
    %v3046 = vpack.c.b16 %v3025, %v3024
    %v3047 = vpack.c.b16 %v3027, %v3026
    %v3048 = vpack.c.b16 %v3029, %v3028
    %v3049 = vpack.c.b16 %v3031, %v3030
    %v3050 = vpack.c.b16 %v3033, %v3032
    %v3051 = vpack.c.b16 %v3035, %v3034
    %v3052 = vpack.c.b16 %v3037, %v3036
    %v3053 = vpack.c.b16 %v3039, %v3038
    %v3054 = vpack.c.b16 %v3041, %v3040
    %v3055 = vpack.c.b16 %v3042, %v3042
    %v3069 = vsel %vm2878, %v2967, 0
    %v3072 = vand.u32 %v3055, %v1997
    %3074 = vmatprep.subr.bf16.mxu0 0
    %3075 = vmatpush1.bf16.msra.mxu0 %v3043
    %3076 = vmatprep.subr.bf16.mxu0 0
    %3077 = vmatpush1.bf16.msra.mxu0 %v3044
    %3078 = vmatprep.subr.bf16.mxu0 0
    %3079 = vmatpush1.bf16.msra.mxu0 %v3045
    %3080 = vmatprep.subr.bf16.mxu0 0
    %3081 = vmatpush1.bf16.msra.mxu0 %v3046
    %3082 = vmatprep.subr.bf16.mxu0 0
    %3083 = vmatpush1.bf16.msra.mxu0 %v3047
    %3084 = vmatprep.subr.bf16.mxu0 0
    %3085 = vmatpush1.bf16.msra.mxu0 %v3048
    %3086 = vmatprep.subr.bf16.mxu0 0
    %3087 = vmatpush1.bf16.msra.mxu0 %v3049
    %3088 = vmatprep.subr.bf16.mxu0 0
    %3089 = vmatpush1.bf16.msra.mxu0 %v3050
    %3090 = vmatprep.subr.bf16.mxu0 0
    %3091 = vmatpush1.bf16.msra.mxu0 %v3051
    %3092 = vmatprep.subr.bf16.mxu0 0
    %3093 = vmatpush1.bf16.msra.mxu0 %v3052
    %3094 = vmatprep.subr.bf16.mxu0 0
    %3095 = vmatpush1.bf16.msra.mxu0 %v3053
    %3096 = vmatprep.subr.bf16.mxu0 0
    %3097 = vmatpush1.bf16.msra.mxu0 %v3054
    %3098 = vmatprep.subr.bf16.mxu0 0
    %3099 = vmatpush1.bf16.msra.mxu0 %v3072
    %3100 = vmatprep.subr.bf16.mxu0 0
    %3101 = vmatpush1.bf16.msra.mxu0 0
    %3102 = vmatprep.subr.bf16.mxu0 0
    %3103 = vmatpush1.bf16.msra.mxu0 0
    %3104 = vmatprep.subr.bf16.mxu0 0
    %3105 = vmatpush1.bf16.msra.mxu0 0
    %3106 = vmatprep.mubr.bf16.mxu0 %v3069
    %3107 = vmatmul.mubr.bf16.gmra.mrb[0].mxu0 %v2966
    %v3108 = vpop.f32.mrb[0].mxu0
    %v3109 = vadd.f32 0.0, %v3108
    %v3110 = vpop.f32.mrb[0].mxu0
    %v3111 = vpop.f32.mrb[0].mxu0
    %v3112 = vpop.f32.mrb[0].mxu0
    %3113 = vdwg.mxu0
    %v3114 = vmax.f32 %v3109, 0.0
    %v3116 = vrot.slane %v3114, 7
    %v3118 = vsel %vm58, 0.0, %v3116
    %v3119 = vsel %vm2952, %v3118, 0.0
    %v3120 = vrot.slane %v3114, 1
    %v3122 = vsel %vm380, %v3120, 0.0
    %v3123 = vsel %vm2959, %v3122, 0.0
    %v3124 = vpack.c.bf16 %v3119, %v3119
    %v3125 = vpack.c.bf16 %v3114, %v3114
    %v3126 = vpack.c.bf16 %v3123, %v3123
    %v3127 = vpack.c.bf16 1.0, 1.0
    %v3128 = vld [vmem:[#allocation16 + $0x1a8] sm:$0xf]
    %v3129 = vld [vmem:[#allocation16 + $0x1ac] sm:$0xf]
    %v3130 = vld [vmem:[#allocation16 + $0x1b0] sm:$0xf]
    %v3131 = vld [vmem:[#allocation16 + $0x1b4] sm:$0xf]
    %v3132 = vld [vmem:[#allocation16 + $0x1b8] sm:$0xf]
    %v3133 = vld [vmem:[#allocation16 + $0x1bc] sm:$0xf]
    %v3134 = vld [vmem:[#allocation16 + $0x1c0] sm:$0xf]
    %v3135 = vld [vmem:[#allocation16 + $0x1c4] sm:$0xf]
    %v3136 = vld [vmem:[#allocation16 + $0x1c8] sm:$0xf]
    %v3137 = vld [vmem:[#allocation16 + $0x1cc] sm:$0xf]
    %v3138 = vld [vmem:[#allocation16 + $0x1d0] sm:$0xf]
    %v3139 = vld [vmem:[#allocation16 + $0x1d4] sm:$0xf]
    %v3140 = vld [vmem:[#allocation16 + $0x1d8] sm:$0xf]
    %v3141 = vld [vmem:[#allocation16 + $0x1dc] sm:$0xf]
    %v3142 = vld [vmem:[#allocation16 + $0x1e0] sm:$0xf]
    %v3143 = vld [vmem:[#allocation16 + $0x1e4] sm:$0xf]
    %v3144 = vld [vmem:[#allocation16 + $0x1e8] sm:$0xf]
    %v3145 = vld [vmem:[#allocation16 + $0x1ec] sm:$0xf]
    %v3146 = vld [vmem:[#allocation16 + $0x1f0] sm:$0xf]
    %v3147 = vld [vmem:[#allocation16 + $0x1f4] sm:$0xf]
    %v3148 = vld [vmem:[#allocation16 + $0x1f8] sm:$0xf]
    %v3149 = vld [vmem:[#allocation16 + $0x1fc] sm:$0xf]
    %v3150 = vld [vmem:[#allocation16 + $0x200] sm:$0xf]
    %v3151 = vld [vmem:[#allocation16 + $0x204] sm:$0xf]
    %v3152 = vld [vmem:[#allocation16 + $0x208] sm:$0xf]
    %v3153 = vld [vmem:[#allocation16 + $0x20c] sm:$0xf]
    %v3154 = vld [vmem:[#allocation16 + $0x210] sm:$0xf]
    %v3155 = vld [vmem:[#allocation16 + $0x214] sm:$0xf]
    %v3156 = vld [vmem:[#allocation16 + $0x218] sm:$0xf]
    %v3157 = vld [vmem:[#allocation16 + $0x21c] sm:$0xf]
    %v3158 = vld [vmem:[#allocation16 + $0x220] sm:$0xf]
    %v3159 = vld [vmem:[#allocation16 + $0x224] sm:$0xf]
    %v3160 = vld [vmem:[#allocation16 + $0x228] sm:$0xf]
    %v3161 = vld [vmem:[#allocation16 + $0x22c] sm:$0xf]
    %v3162 = vld [vmem:[#allocation16 + $0x230] sm:$0xf]
    %v3163 = vld [vmem:[#allocation16 + $0x234] sm:$0xf]
    %v3164 = vld [vmem:[#allocation16 + $0x238] sm:$0xf]
    %v3165 = vld [vmem:[#allocation16 + $0x23c] sm:$0xf]
    %v3166 = vld [vmem:[#allocation16 + $0x240] sm:$0xf]
    %v3167 = vld [vmem:[#allocation16 + $0x244] sm:$0xf]
    %v3168 = vld [vmem:[#allocation16 + $0x248] sm:$0xf]
    %v3169 = vld [vmem:[#allocation16 + $0x24c] sm:$0xf]
    %v3170 = vld [vmem:[#allocation16 + $0x250] sm:$0xf]
    %v3171 = vld [vmem:[#allocation16 + $0x254] sm:$0xf]
    %v3172 = vld [vmem:[#allocation16 + $0x258] sm:$0xf]
    %v3173 = vld [vmem:[#allocation16 + $0x25c] sm:$0xf]
    %v3174 = vld [vmem:[#allocation16 + $0x260] sm:$0xf]
    %v3175 = vld [vmem:[#allocation16 + $0x264] sm:$0xf]
    %v3176 = vld [vmem:[#allocation16 + $0x268] sm:$0x1]
    %v3226 = vunpack.c.l.b16 %v3128
    %v3227 = vunpack.c.l.b16 %v3129
    %v3228 = vunpack.c.l.b16 %v3130
    %v3229 = vunpack.c.l.b16 %v3131
    %v3230 = vunpack.c.l.b16 %v3132
    %v3231 = vunpack.c.l.b16 %v3133
    %v3232 = vunpack.c.l.b16 %v3134
    %v3233 = vunpack.c.l.b16 %v3135
    %v3234 = vunpack.c.l.b16 %v3136
    %v3235 = vunpack.c.l.b16 %v3137
    %v3236 = vunpack.c.l.b16 %v3138
    %v3237 = vunpack.c.l.b16 %v3139
    %v3238 = vunpack.c.l.b16 %v3140
    %v3239 = vunpack.c.l.b16 %v3141
    %v3240 = vunpack.c.l.b16 %v3142
    %v3241 = vunpack.c.l.b16 %v3143
    %v3242 = vunpack.c.l.b16 %v3144
    %v3243 = vunpack.c.l.b16 %v3145
    %v3244 = vunpack.c.l.b16 %v3146
    %v3245 = vunpack.c.l.b16 %v3147
    %v3246 = vunpack.c.l.b16 %v3148
    %v3247 = vunpack.c.l.b16 %v3149
    %v3248 = vunpack.c.l.b16 %v3150
    %v3249 = vunpack.c.l.b16 %v3151
    %v3250 = vunpack.c.l.b16 %v3152
    %v3251 = vunpack.c.l.b16 %v3153
    %v3252 = vunpack.c.l.b16 %v3154
    %v3253 = vunpack.c.l.b16 %v3155
    %v3254 = vunpack.c.l.b16 %v3156
    %v3255 = vunpack.c.l.b16 %v3157
    %v3256 = vunpack.c.l.b16 %v3158
    %v3257 = vunpack.c.l.b16 %v3159
    %v3258 = vunpack.c.l.b16 %v3160
    %v3259 = vunpack.c.l.b16 %v3161
    %v3260 = vunpack.c.l.b16 %v3162
    %v3261 = vunpack.c.l.b16 %v3163
    %v3262 = vunpack.c.l.b16 %v3164
    %v3263 = vunpack.c.l.b16 %v3165
    %v3264 = vunpack.c.l.b16 %v3166
    %v3265 = vunpack.c.l.b16 %v3167
    %v3266 = vunpack.c.l.b16 %v3168
    %v3267 = vunpack.c.l.b16 %v3169
    %v3268 = vunpack.c.l.b16 %v3170
    %v3269 = vunpack.c.l.b16 %v3171
    %v3270 = vunpack.c.l.b16 %v3172
    %v3271 = vunpack.c.l.b16 %v3173
    %v3272 = vunpack.c.l.b16 %v3174
    %v3273 = vunpack.c.l.b16 %v3175
    %v3274 = vunpack.c.l.b16 %v3176
    %v3275 = vpack.c.b16 %v3227, %v3226
    %v3276 = vpack.c.b16 %v3229, %v3228
    %v3277 = vpack.c.b16 %v3231, %v3230
    %v3278 = vpack.c.b16 %v3233, %v3232
    %v3279 = vpack.c.b16 %v3235, %v3234
    %v3280 = vpack.c.b16 %v3237, %v3236
    %v3281 = vpack.c.b16 %v3239, %v3238
    %v3282 = vpack.c.b16 %v3241, %v3240
    %v3283 = vpack.c.b16 %v3243, %v3242
    %v3284 = vpack.c.b16 %v3245, %v3244
    %v3285 = vpack.c.b16 %v3247, %v3246
    %v3286 = vpack.c.b16 %v3249, %v3248
    %v3287 = vpack.c.b16 %v3251, %v3250
    %v3288 = vpack.c.b16 %v3253, %v3252
    %v3289 = vpack.c.b16 %v3255, %v3254
    %v3290 = vpack.c.b16 %v3257, %v3256
    %v3291 = vpack.c.b16 %v3259, %v3258
    %v3292 = vpack.c.b16 %v3261, %v3260
    %v3293 = vpack.c.b16 %v3263, %v3262
    %v3294 = vpack.c.b16 %v3265, %v3264
    %v3295 = vpack.c.b16 %v3267, %v3266
    %v3296 = vpack.c.b16 %v3269, %v3268
    %v3297 = vpack.c.b16 %v3271, %v3270
    %v3298 = vpack.c.b16 %v3273, %v3272
    %v3299 = vpack.c.b16 %v3274, %v3274
    %vm3324 = vcmask 7168
    %v3326 = vsel %vm3324, %v3127, 0
    %v3329 = vand.u32 %v3299, %v1997
    %3331 = vmatprep.subr.bf16.mxu0 0
    %3332 = vmatpush1.bf16.msra.mxu0 %v3275
    %3333 = vmatprep.subr.bf16.mxu0 0
    %3334 = vmatpush1.bf16.msra.mxu0 %v3276
    %3335 = vmatprep.subr.bf16.mxu0 0
    %3336 = vmatpush1.bf16.msra.mxu0 %v3277
    %3337 = vmatprep.subr.bf16.mxu0 0
    %3338 = vmatpush1.bf16.msra.mxu0 %v3278
    %3339 = vmatprep.subr.bf16.mxu0 0
    %3340 = vmatpush1.bf16.msra.mxu0 %v3279
    %3341 = vmatprep.subr.bf16.mxu0 0
    %3342 = vmatpush1.bf16.msra.mxu0 %v3280
    %3343 = vmatprep.subr.bf16.mxu0 0
    %3344 = vmatpush1.bf16.msra.mxu0 %v3281
    %3345 = vmatprep.subr.bf16.mxu0 0
    %3346 = vmatpush1.bf16.msra.mxu0 %v3282
    %3347 = vmatprep.subr.bf16.mxu0 0
    %3348 = vmatpush1.bf16.msra.mxu0 %v3283
    %3349 = vmatprep.subr.bf16.mxu0 0
    %3350 = vmatpush1.bf16.msra.mxu0 %v3284
    %3351 = vmatprep.subr.bf16.mxu0 0
    %3352 = vmatpush1.bf16.msra.mxu0 %v3285
    %3353 = vmatprep.subr.bf16.mxu0 0
    %3354 = vmatpush1.bf16.msra.mxu0 %v3286
    %3355 = vmatprep.subr.bf16.mxu0 0
    %3356 = vmatpush1.bf16.msra.mxu0 %v3287
    %3357 = vmatprep.subr.bf16.mxu0 0
    %3358 = vmatpush1.bf16.msra.mxu0 %v3288
    %3359 = vmatprep.subr.bf16.mxu0 0
    %3360 = vmatpush1.bf16.msra.mxu0 %v3289
    %3361 = vmatprep.subr.bf16.mxu0 0
    %3362 = vmatpush1.bf16.msra.mxu0 %v3290
    %3363 = vmatprep.mubr.bf16.mxu0 %v3125
    %3364 = vmatmul.mubr.bf16.gmra.mrb[0].mxu0 %v3124
    %v3365 = vpop.f32.mrb[0].mxu0
    %v3366 = vadd.f32 0.0, %v3365
    %v3367 = vpop.f32.mrb[0].mxu0
    %v3368 = vpop.f32.mrb[0].mxu0
    %v3369 = vpop.f32.mrb[0].mxu0
    %3370 = vdwg.mxu0
    %3371 = vmatprep.subr.bf16.mxu0 0
    %3372 = vmatpush1.bf16.msra.mxu0 %v3291
    %3373 = vmatprep.subr.bf16.mxu0 0
    %3374 = vmatpush1.bf16.msra.mxu0 %v3292
    %3375 = vmatprep.subr.bf16.mxu0 0
    %3376 = vmatpush1.bf16.msra.mxu0 %v3293
    %3377 = vmatprep.subr.bf16.mxu0 0
    %3378 = vmatpush1.bf16.msra.mxu0 %v3294
    %3379 = vmatprep.subr.bf16.mxu0 0
    %3380 = vmatpush1.bf16.msra.mxu0 %v3295
    %3381 = vmatprep.subr.bf16.mxu0 0
    %3382 = vmatpush1.bf16.msra.mxu0 %v3296
    %3383 = vmatprep.subr.bf16.mxu0 0
    %3384 = vmatpush1.bf16.msra.mxu0 %v3297
    %3385 = vmatprep.subr.bf16.mxu0 0
    %3386 = vmatpush1.bf16.msra.mxu0 %v3298
    %3387 = vmatprep.subr.bf16.mxu0 0
    %3388 = vmatpush1.bf16.msra.mxu0 %v3329
    %3389 = vmatprep.subr.bf16.mxu0 0
    %3390 = vmatpush1.bf16.msra.mxu0 0
    %3391 = vmatprep.subr.bf16.mxu0 0
    %3392 = vmatpush1.bf16.msra.mxu0 0
    %3393 = vmatprep.subr.bf16.mxu0 0
    %3394 = vmatpush1.bf16.msra.mxu0 0
    %3395 = vmatprep.subr.bf16.mxu0 0
    %3396 = vmatpush1.bf16.msra.mxu0 0
    %3397 = vmatprep.subr.bf16.mxu0 0
    %3398 = vmatpush1.bf16.msra.mxu0 0
    %3399 = vmatprep.subr.bf16.mxu0 0
    %3400 = vmatpush1.bf16.msra.mxu0 0
    %3401 = vmatprep.subr.bf16.mxu0 0
    %3402 = vmatpush1.bf16.msra.mxu0 0
    %3403 = vmatprep.mubr.bf16.mxu0 %v3326
    %3404 = vmatmul.mubr.bf16.gmra.mrb[0].mxu0 %v3126
    %v3405 = vpop.f32.mrb[0].mxu0
    %v3406 = vadd.f32 %v3366, %v3405
    %v3407 = vpop.f32.mrb[0].mxu0
    %v3408 = vpop.f32.mrb[0].mxu0
    %v3409 = vpop.f32.mrb[0].mxu0
    %3410 = vdwg.mxu0
    %v3411 = vmax.f32 %v3406, 0.0
    %3412 = vst [vmem:[#allocation12] sm:$0xff] %v3411
    %v3413 = vld [vmem:[#allocation5] sm:$0xff]
    %v3414 = vld [vmem:[#allocation5 + $0x8] sm:$0xff]
    %v3415 = vld [vmem:[#allocation8] sm:$0xff]
    %v3416 = vld [vmem:[#allocation8 + $0x8] sm:$0xff]
    %v3417 = vld [vmem:[#allocation10] sm:$0xff]
    %v3418 = vld [vmem:[#allocation10 + $0x8] sm:$0xff]
    %v3419 = vld [vmem:[#allocation11] sm:$0xff]
    %v3420 = vld [vmem:[#allocation11 + $0x8] sm:$0xff]
    %v3421 = vld [vmem:[#allocation16 + $0x950] sm:$0xf]
    %v3422 = vld [vmem:[#allocation12] sm:$0xf]
    %v3423 = vpack.c.bf16 %v3422, %v3422
    %v3425 = vsel %vm605, %v3421, 0
    %vm3427 = vcmask 1041408
    %v3429 = vsel %vm3427, %v3423, 0
    %3431 = vmatprep.subr.bf16.mxu0 0
    %3432 = vmatpush1.bf16.msra.mxu0 %v3429
    %3433 = vmatprep.subr.bf16.mxu0 0
    %3434 = vmatpush1.bf16.msra.mxu0 0
    %3435 = vmatprep.subr.bf16.mxu0 0
    %3436 = vmatpush1.bf16.msra.mxu0 0
    %3437 = vmatprep.subr.bf16.mxu0 0
    %3438 = vmatpush1.bf16.msra.mxu0 0
    %3439 = vmatprep.subr.bf16.mxu0 0
    %3440 = vmatpush1.bf16.msra.mxu0 0
    %3441 = vmatprep.subr.bf16.mxu0 0
    %3442 = vmatpush1.bf16.msra.mxu0 0
    %3443 = vmatprep.subr.bf16.mxu0 0
    %3444 = vmatpush1.bf16.msra.mxu0 0
    %3445 = vmatprep.subr.bf16.mxu0 0
    %3446 = vmatpush1.bf16.msra.mxu0 0
    %3447 = vmatprep.subr.bf16.mxu0 0
    %3448 = vmatpush1.bf16.msra.mxu0 0
    %3449 = vmatprep.subr.bf16.mxu0 0
    %3450 = vmatpush1.bf16.msra.mxu0 0
    %3451 = vmatprep.subr.bf16.mxu0 0
    %3452 = vmatpush1.bf16.msra.mxu0 0
    %3453 = vmatprep.subr.bf16.mxu0 0
    %3454 = vmatpush1.bf16.msra.mxu0 0
    %3455 = vmatprep.subr.bf16.mxu0 0
    %3456 = vmatpush1.bf16.msra.mxu0 0
    %3457 = vmatprep.subr.bf16.mxu0 0
    %3458 = vmatpush1.bf16.msra.mxu0 0
    %3459 = vmatprep.subr.bf16.mxu0 0
    %3460 = vmatpush1.bf16.msra.mxu0 0
    %3461 = vmatprep.subr.bf16.mxu0 0
    %3462 = vmatpush1.bf16.msra.mxu0 0
    %3463 = vmatprep.mubr.bf16.mxu0 0
    %3464 = vmatmul.mubr.bf16.gmra.mrb[0].mxu0 %v3425
    %v3465 = vpop.f32.mrb[0].mxu0
    %v3466 = vadd.f32 0.0, %v3465
    %v3467 = vpop.f32.mrb[0].mxu0
    %v3468 = vpop.f32.mrb[0].mxu0
    %v3469 = vpop.f32.mrb[0].mxu0
    %3470 = vdwg.mxu0
    %v3471 = vld [vmem:[#allocation12 + $0x4] sm:$0xf]
    %v3472 = vpack.c.bf16 %v3471, %v3471
    %v3474 = vsel %vm3427, %v3472, 0
    %3476 = vmatprep.subr.bf16.mxu0 0
    %3477 = vmatpush1.bf16.msra.mxu0 %v3474
    %3478 = vmatprep.subr.bf16.mxu0 0
    %3479 = vmatpush1.bf16.msra.mxu0 0
    %3480 = vmatprep.subr.bf16.mxu0 0
    %3481 = vmatpush1.bf16.msra.mxu0 0
    %3482 = vmatprep.subr.bf16.mxu0 0
    %3483 = vmatpush1.bf16.msra.mxu0 0
    %3484 = vmatprep.subr.bf16.mxu0 0
    %3485 = vmatpush1.bf16.msra.mxu0 0
    %3486 = vmatprep.subr.bf16.mxu0 0
    %3487 = vmatpush1.bf16.msra.mxu0 0
    %3488 = vmatprep.subr.bf16.mxu0 0
    %3489 = vmatpush1.bf16.msra.mxu0 0
    %3490 = vmatprep.subr.bf16.mxu0 0
    %3491 = vmatpush1.bf16.msra.mxu0 0
    %3492 = vmatprep.subr.bf16.mxu0 0
    %3493 = vmatpush1.bf16.msra.mxu0 0
    %3494 = vmatprep.subr.bf16.mxu0 0
    %3495 = vmatpush1.bf16.msra.mxu0 0
    %3496 = vmatprep.subr.bf16.mxu0 0
    %3497 = vmatpush1.bf16.msra.mxu0 0
    %3498 = vmatprep.subr.bf16.mxu0 0
    %3499 = vmatpush1.bf16.msra.mxu0 0
    %3500 = vmatprep.subr.bf16.mxu0 0
    %3501 = vmatpush1.bf16.msra.mxu0 0
    %3502 = vmatprep.subr.bf16.mxu0 0
    %3503 = vmatpush1.bf16.msra.mxu0 0
    %3504 = vmatprep.subr.bf16.mxu0 0
    %3505 = vmatpush1.bf16.msra.mxu0 0
    %3506 = vmatprep.subr.bf16.mxu0 0
    %3507 = vmatpush1.bf16.msra.mxu0 0
    %3508 = vmatprep.mubr.bf16.mxu0 0
    %3509 = vmatmul.mubr.bf16.gmra.mrb[0].mxu0 %v3425
    %v3510 = vpop.f32.mrb[0].mxu0
    %v3511 = vadd.f32 0.0, %v3510
    %v3512 = vpop.f32.mrb[0].mxu0
    %v3513 = vpop.f32.mrb[0].mxu0
    %v3514 = vpop.f32.mrb[0].mxu0
    %3515 = vdwg.mxu0
    %3518 = vrot.lane.b32.xlu0 %v3415, 8
    %v3519 = vpop.permute.xlu0 %3518
    %3520 = vrot.lane.b32.xlu0 %v3416, 8
    %v3521 = vpop.permute.xlu0 %3520
    %3526 = vrot.lane.b32.xlu0 %v3417, 24
    %v3527 = vpop.permute.xlu0 %3526
    %3528 = vrot.lane.b32.xlu0 %v3418, 24
    %v3529 = vpop.permute.xlu0 %3528
    %3534 = vrot.lane.b32.xlu0 %v3419, 56
    %v3535 = vpop.permute.xlu0 %3534
    %3536 = vrot.lane.b32.xlu0 %v3420, 56
    %v3537 = vpop.permute.xlu0 %3536
    %3542 = vrot.lane.b32.xlu0 %v3466, 120
    %v3543 = vpop.permute.xlu0 %3542
    %3544 = vrot.lane.b32.xlu0 %v3511, 120
    %v3545 = vpop.permute.xlu0 %3544
    %v3548 = vsel %vm622, %v3413, %v3519
    %v3549 = vsel %vm622, %v3414, %v3521
    %v3550 = vsel %vm1104, %v3548, %v3527
    %v3551 = vsel %vm1104, %v3549, %v3529
    %vm3552 = vcmask 457728
    %v3553 = vsel %vm3552, %v3550, %v3535
    %v3554 = vsel %vm3552, %v3551, %v3537
    %vm3555 = vcmask 982016
    %v3556 = vsel %vm3555, %v3553, %v3543
    %v3557 = vsel %vm3555, %v3554, %v3545
    %v3558 = vsel %vm3555, %v3543, 1.0
    %v3559 = vsel %vm3555, %v3545, 1.0
    %v3560 = vpack.c.bf16 %v3557, %v3556
    %v3561 = vpack.c.bf16 %v3559, %v3558
    %v3562 = vld [vmem:[#allocation16 + $0x2f0] sm:$0xf]
    %v3563 = vld [vmem:[#allocation16 + $0x2f4] sm:$0xf]
    %v3564 = vld [vmem:[#allocation16 + $0x2f8] sm:$0xf]
    %v3565 = vld [vmem:[#allocation16 + $0x2fc] sm:$0xf]
    %v3566 = vld [vmem:[#allocation16 + $0x300] sm:$0xf]
    %v3567 = vld [vmem:[#allocation16 + $0x304] sm:$0xf]
    %v3568 = vld [vmem:[#allocation16 + $0x308] sm:$0xf]
    %v3569 = vld [vmem:[#allocation16 + $0x30c] sm:$0xf]
    %v3570 = vld [vmem:[#allocation16 + $0x310] sm:$0xf]
    %v3571 = vld [vmem:[#allocation16 + $0x314] sm:$0xf]
    %v3572 = vld [vmem:[#allocation16 + $0x318] sm:$0xf]
    %v3573 = vld [vmem:[#allocation16 + $0x31c] sm:$0xf]
    %v3574 = vld [vmem:[#allocation16 + $0x320] sm:$0xf]
    %v3575 = vld [vmem:[#allocation16 + $0x324] sm:$0xf]
    %v3576 = vld [vmem:[#allocation16 + $0x328] sm:$0xf]
    %v3577 = vld [vmem:[#allocation16 + $0x32c] sm:$0xf]
    %v3578 = vld [vmem:[#allocation16 + $0x330] sm:$0xf]
    %v3579 = vld [vmem:[#allocation16 + $0x334] sm:$0xf]
    %v3580 = vld [vmem:[#allocation16 + $0x338] sm:$0xf]
    %v3581 = vld [vmem:[#allocation16 + $0x33c] sm:$0xf]
    %v3582 = vld [vmem:[#allocation16 + $0x340] sm:$0xf]
    %v3583 = vld [vmem:[#allocation16 + $0x344] sm:$0xf]
    %v3584 = vld [vmem:[#allocation16 + $0x348] sm:$0xf]
    %v3585 = vld [vmem:[#allocation16 + $0x34c] sm:$0xf]
    %v3586 = vld [vmem:[#allocation16 + $0x350] sm:$0xf]
    %v3587 = vld [vmem:[#allocation16 + $0x354] sm:$0xf]
    %v3588 = vld [vmem:[#allocation16 + $0x358] sm:$0xf]
    %v3589 = vld [vmem:[#allocation16 + $0x35c] sm:$0xf]
    %v3590 = vld [vmem:[#allocation16 + $0x360] sm:$0xf]
    %v3591 = vld [vmem:[#allocation16 + $0x364] sm:$0xf]
    %v3592 = vld [vmem:[#allocation16 + $0x368] sm:$0xf]
    %v3593 = vld [vmem:[#allocation16 + $0x36c] sm:$0x1]
    %v3596 = vrot.slane %v3556, 7
    %v3597 = vrot.slane %v3543, 7
    %v3598 = vrot.slane %v3557, 7
    %v3599 = vsel %vm58, %v3596, %v3598
    %v3600 = vrot.slane %v3545, 7
    %v3601 = vsel %vm58, %v3597, %v3600
    %v3606 = vsel %vm58, 0.0, %v3596
    %v3607 = vsel %vm58, 0.0, %v3597
    %v3608 = vsel %vm2608, %v3606, 0.0
    %v3609 = vsel %vm2608, %v3607, 0.0
    %v3610 = vsel %vm2609, %v3599, 0.0
    %v3611 = vsel %vm2609, %v3601, 0.0
    %v3612 = vpack.c.bf16 %v3610, %v3608
    %v3613 = vpack.c.bf16 %v3611, %v3609
    %v3614 = vld [vmem:[#allocation16 + $0x270] sm:$0xf]
    %v3615 = vld [vmem:[#allocation16 + $0x274] sm:$0xf]
    %v3616 = vld [vmem:[#allocation16 + $0x278] sm:$0xf]
    %v3617 = vld [vmem:[#allocation16 + $0x27c] sm:$0xf]
    %v3618 = vld [vmem:[#allocation16 + $0x280] sm:$0xf]
    %v3619 = vld [vmem:[#allocation16 + $0x284] sm:$0xf]
    %v3620 = vld [vmem:[#allocation16 + $0x288] sm:$0xf]
    %v3621 = vld [vmem:[#allocation16 + $0x28c] sm:$0xf]
    %v3622 = vld [vmem:[#allocation16 + $0x290] sm:$0xf]
    %v3623 = vld [vmem:[#allocation16 + $0x294] sm:$0xf]
    %v3624 = vld [vmem:[#allocation16 + $0x298] sm:$0xf]
    %v3625 = vld [vmem:[#allocation16 + $0x29c] sm:$0xf]
    %v3626 = vld [vmem:[#allocation16 + $0x2a0] sm:$0xf]
    %v3627 = vld [vmem:[#allocation16 + $0x2a4] sm:$0xf]
    %v3628 = vld [vmem:[#allocation16 + $0x2a8] sm:$0xf]
    %v3629 = vld [vmem:[#allocation16 + $0x2ac] sm:$0xf]
    %v3630 = vld [vmem:[#allocation16 + $0x2b0] sm:$0xf]
    %v3631 = vld [vmem:[#allocation16 + $0x2b4] sm:$0xf]
    %v3632 = vld [vmem:[#allocation16 + $0x2b8] sm:$0xf]
    %v3633 = vld [vmem:[#allocation16 + $0x2bc] sm:$0xf]
    %v3634 = vld [vmem:[#allocation16 + $0x2c0] sm:$0xf]
    %v3635 = vld [vmem:[#allocation16 + $0x2c4] sm:$0xf]
    %v3636 = vld [vmem:[#allocation16 + $0x2c8] sm:$0xf]
    %v3637 = vld [vmem:[#allocation16 + $0x2cc] sm:$0xf]
    %v3638 = vld [vmem:[#allocation16 + $0x2d0] sm:$0xf]
    %v3639 = vld [vmem:[#allocation16 + $0x2d4] sm:$0xf]
    %v3640 = vld [vmem:[#allocation16 + $0x2d8] sm:$0xf]
    %v3641 = vld [vmem:[#allocation16 + $0x2dc] sm:$0xf]
    %v3642 = vld [vmem:[#allocation16 + $0x2e0] sm:$0xf]
    %v3643 = vld [vmem:[#allocation16 + $0x2e4] sm:$0xf]
    %v3644 = vld [vmem:[#allocation16 + $0x2e8] sm:$0xf]
    %v3676 = vunpack.c.l.b16 %v3614
    %v3677 = vunpack.c.l.b16 %v3615
    %v3678 = vunpack.c.l.b16 %v3616
    %v3679 = vunpack.c.l.b16 %v3617
    %v3680 = vunpack.c.l.b16 %v3618
    %v3681 = vunpack.c.l.b16 %v3619
    %v3682 = vunpack.c.l.b16 %v3620
    %v3683 = vunpack.c.l.b16 %v3621
    %v3684 = vunpack.c.l.b16 %v3622
    %v3685 = vunpack.c.l.b16 %v3623
    %v3686 = vunpack.c.l.b16 %v3624
    %v3687 = vunpack.c.l.b16 %v3625
    %v3688 = vunpack.c.l.b16 %v3626
    %v3689 = vunpack.c.l.b16 %v3627
    %v3690 = vunpack.c.l.b16 %v3628
    %v3691 = vunpack.c.l.b16 %v3629
    %v3692 = vunpack.c.l.b16 %v3630
    %v3693 = vunpack.c.l.b16 %v3631
    %v3694 = vunpack.c.l.b16 %v3632
    %v3695 = vunpack.c.l.b16 %v3633
    %v3696 = vunpack.c.l.b16 %v3634
    %v3697 = vunpack.c.l.b16 %v3635
    %v3698 = vunpack.c.l.b16 %v3636
    %v3699 = vunpack.c.l.b16 %v3637
    %v3700 = vunpack.c.l.b16 %v3638
    %v3701 = vunpack.c.l.b16 %v3639
    %v3702 = vunpack.c.l.b16 %v3640
    %v3703 = vunpack.c.l.b16 %v3641
    %v3704 = vunpack.c.l.b16 %v3642
    %v3705 = vunpack.c.l.b16 %v3643
    %v3706 = vunpack.c.l.b16 %v3644
    %v3707 = vpack.c.b16 %v3677, %v3676
    %v3708 = vpack.c.b16 %v3679, %v3678
    %v3709 = vpack.c.b16 %v3681, %v3680
    %v3710 = vpack.c.b16 %v3683, %v3682
    %v3711 = vpack.c.b16 %v3685, %v3684
    %v3712 = vpack.c.b16 %v3687, %v3686
    %v3713 = vpack.c.b16 %v3689, %v3688
    %v3714 = vpack.c.b16 %v3691, %v3690
    %v3715 = vpack.c.b16 %v3693, %v3692
    %v3716 = vpack.c.b16 %v3695, %v3694
    %v3717 = vpack.c.b16 %v3697, %v3696
    %v3718 = vpack.c.b16 %v3699, %v3698
    %v3719 = vpack.c.b16 %v3701, %v3700
    %v3720 = vpack.c.b16 %v3703, %v3702
    %v3721 = vpack.c.b16 %v3705, %v3704
    %v3722 = vpack.c.b16 %v3706, %v3706
    %v3739 = vsel %vm3555, %v3613, 0
    %v3742 = vsel %vm1169, %v3722, 0
    %3744 = vmatprep.subr.bf16.mxu0 0
    %3745 = vmatpush1.bf16.msra.mxu0 %v3707
    %3746 = vmatprep.subr.bf16.mxu0 0
    %3747 = vmatpush1.bf16.msra.mxu0 %v3708
    %3748 = vmatprep.subr.bf16.mxu0 0
    %3749 = vmatpush1.bf16.msra.mxu0 %v3709
    %3750 = vmatprep.subr.bf16.mxu0 0
    %3751 = vmatpush1.bf16.msra.mxu0 %v3710
    %3752 = vmatprep.subr.bf16.mxu0 0
    %3753 = vmatpush1.bf16.msra.mxu0 %v3711
    %3754 = vmatprep.subr.bf16.mxu0 0
    %3755 = vmatpush1.bf16.msra.mxu0 %v3712
    %3756 = vmatprep.subr.bf16.mxu0 0
    %3757 = vmatpush1.bf16.msra.mxu0 %v3713
    %3758 = vmatprep.subr.bf16.mxu0 0
    %3759 = vmatpush1.bf16.msra.mxu0 %v3714
    %3760 = vmatprep.subr.bf16.mxu0 0
    %3761 = vmatpush1.bf16.msra.mxu0 %v3715
    %3762 = vmatprep.subr.bf16.mxu0 0
    %3763 = vmatpush1.bf16.msra.mxu0 %v3716
    %3764 = vmatprep.subr.bf16.mxu0 0
    %3765 = vmatpush1.bf16.msra.mxu0 %v3717
    %3766 = vmatprep.subr.bf16.mxu0 0
    %3767 = vmatpush1.bf16.msra.mxu0 %v3718
    %3768 = vmatprep.subr.bf16.mxu0 0
    %3769 = vmatpush1.bf16.msra.mxu0 %v3719
    %3770 = vmatprep.subr.bf16.mxu0 0
    %3771 = vmatpush1.bf16.msra.mxu0 %v3720
    %3772 = vmatprep.subr.bf16.mxu0 0
    %3773 = vmatpush1.bf16.msra.mxu0 %v3721
    %3774 = vmatprep.subr.bf16.mxu0 0
    %3775 = vmatpush1.bf16.msra.mxu0 %v3742
    %3776 = vmatprep.mubr.bf16.mxu0 %v3739
    %3777 = vmatmul.mubr.bf16.gmra.mrb[0].mxu0 %v3612
    %v3778 = vpop.f32.mrb[0].mxu0
    %v3779 = vadd.f32 0.0, %v3778
    %v3780 = vpop.f32.mrb[0].mxu0
    %v3781 = vpop.f32.mrb[0].mxu0
    %v3782 = vadd.f32 0.0, %v3781
    %v3783 = vpop.f32.mrb[0].mxu0
    %3784 = vdwg.mxu0
    %v3817 = vunpack.c.l.b16 %v3562
    %v3818 = vunpack.c.l.b16 %v3563
    %v3819 = vunpack.c.l.b16 %v3564
    %v3820 = vunpack.c.l.b16 %v3565
    %v3821 = vunpack.c.l.b16 %v3566
    %v3822 = vunpack.c.l.b16 %v3567
    %v3823 = vunpack.c.l.b16 %v3568
    %v3824 = vunpack.c.l.b16 %v3569
    %v3825 = vunpack.c.l.b16 %v3570
    %v3826 = vunpack.c.l.b16 %v3571
    %v3827 = vunpack.c.l.b16 %v3572
    %v3828 = vunpack.c.l.b16 %v3573
    %v3829 = vunpack.c.l.b16 %v3574
    %v3830 = vunpack.c.l.b16 %v3575
    %v3831 = vunpack.c.l.b16 %v3576
    %v3832 = vunpack.c.l.b16 %v3577
    %v3833 = vunpack.c.l.b16 %v3578
    %v3834 = vunpack.c.l.b16 %v3579
    %v3835 = vunpack.c.l.b16 %v3580
    %v3836 = vunpack.c.l.b16 %v3581
    %v3837 = vunpack.c.l.b16 %v3582
    %v3838 = vunpack.c.l.b16 %v3583
    %v3839 = vunpack.c.l.b16 %v3584
    %v3840 = vunpack.c.l.b16 %v3585
    %v3841 = vunpack.c.l.b16 %v3586
    %v3842 = vunpack.c.l.b16 %v3587
    %v3843 = vunpack.c.l.b16 %v3588
    %v3844 = vunpack.c.l.b16 %v3589
    %v3845 = vunpack.c.l.b16 %v3590
    %v3846 = vunpack.c.l.b16 %v3591
    %v3847 = vunpack.c.l.b16 %v3592
    %v3848 = vunpack.c.l.b16 %v3593
    %v3849 = vpack.c.b16 %v3818, %v3817
    %v3850 = vpack.c.b16 %v3820, %v3819
    %v3851 = vpack.c.b16 %v3822, %v3821
    %v3852 = vpack.c.b16 %v3824, %v3823
    %v3853 = vpack.c.b16 %v3826, %v3825
    %v3854 = vpack.c.b16 %v3828, %v3827
    %v3855 = vpack.c.b16 %v3830, %v3829
    %v3856 = vpack.c.b16 %v3832, %v3831
    %v3857 = vpack.c.b16 %v3834, %v3833
    %v3858 = vpack.c.b16 %v3836, %v3835
    %v3859 = vpack.c.b16 %v3838, %v3837
    %v3860 = vpack.c.b16 %v3840, %v3839
    %v3861 = vpack.c.b16 %v3842, %v3841
    %v3862 = vpack.c.b16 %v3844, %v3843
    %v3863 = vpack.c.b16 %v3846, %v3845
    %v3864 = vpack.c.b16 %v3848, %v3847
    %vm3880 = vcmask 990208
    %v3882 = vsel %vm3880, %v3561, 0
    %v3885 = vand.u32 %v3864, %v1172
    %3887 = vmatprep.subr.bf16.mxu0 0
    %3888 = vmatpush1.bf16.msra.mxu0 %v3849
    %3889 = vmatprep.subr.bf16.mxu0 0
    %3890 = vmatpush1.bf16.msra.mxu0 %v3850
    %3891 = vmatprep.subr.bf16.mxu0 0
    %3892 = vmatpush1.bf16.msra.mxu0 %v3851
    %3893 = vmatprep.subr.bf16.mxu0 0
    %3894 = vmatpush1.bf16.msra.mxu0 %v3852
    %3895 = vmatprep.subr.bf16.mxu0 0
    %3896 = vmatpush1.bf16.msra.mxu0 %v3853
    %3897 = vmatprep.subr.bf16.mxu0 0
    %3898 = vmatpush1.bf16.msra.mxu0 %v3854
    %3899 = vmatprep.subr.bf16.mxu0 0
    %3900 = vmatpush1.bf16.msra.mxu0 %v3855
    %3901 = vmatprep.subr.bf16.mxu0 0
    %3902 = vmatpush1.bf16.msra.mxu0 %v3856
    %3903 = vmatprep.subr.bf16.mxu0 0
    %3904 = vmatpush1.bf16.msra.mxu0 %v3857
    %3905 = vmatprep.subr.bf16.mxu0 0
    %3906 = vmatpush1.bf16.msra.mxu0 %v3858
    %3907 = vmatprep.subr.bf16.mxu0 0
    %3908 = vmatpush1.bf16.msra.mxu0 %v3859
    %3909 = vmatprep.subr.bf16.mxu0 0
    %3910 = vmatpush1.bf16.msra.mxu0 %v3860
    %3911 = vmatprep.subr.bf16.mxu0 0
    %3912 = vmatpush1.bf16.msra.mxu0 %v3861
    %3913 = vmatprep.subr.bf16.mxu0 0
    %3914 = vmatpush1.bf16.msra.mxu0 %v3862
    %3915 = vmatprep.subr.bf16.mxu0 0
    %3916 = vmatpush1.bf16.msra.mxu0 %v3863
    %3917 = vmatprep.subr.bf16.mxu0 0
    %3918 = vmatpush1.bf16.msra.mxu0 %v3885
    %3919 = vmatprep.mubr.bf16.mxu0 %v3882
    %3920 = vmatmul.mubr.bf16.gmra.mrb[0].mxu0 %v3560
    %v3921 = vpop.f32.mrb[0].mxu0
    %v3922 = vadd.f32 %v3779, %v3921
    %v3923 = vpop.f32.mrb[0].mxu0
    %v3924 = vpop.f32.mrb[0].mxu0
    %v3925 = vadd.f32 %v3782, %v3924
    %v3926 = vpop.f32.mrb[0].mxu0
    %3927 = vdwg.mxu0
    %v3928 = vrot.slane %v3556, 1
    %v3929 = vrot.slane %v3557, 1
    %v3930 = vsel %vm380, %v3928, %v3929
    %v3931 = vrot.slane %v3543, 1
    %v3932 = vrot.slane %v3545, 1
    %v3933 = vsel %vm380, %v3931, %v3932
    %v3938 = vsel %vm380, %v3929, 0.0
    %v3939 = vsel %vm380, %v3932, 0.0
    %v3940 = vsel %vm2622, %v3930, 0.0
    %v3941 = vsel %vm2622, %v3933, 0.0
    %v3942 = vsel %vm2623, %v3938, 0.0
    %v3943 = vsel %vm2623, %v3939, 0.0
    %v3944 = vpack.c.bf16 %v3942, %v3940
    %v3945 = vpack.c.bf16 %v3943, %v3941
    %v3946 = vld [vmem:[#allocation16 + $0x370] sm:$0xf]
    %v3947 = vld [vmem:[#allocation16 + $0x374] sm:$0xf]
    %v3948 = vld [vmem:[#allocation16 + $0x378] sm:$0xf]
    %v3949 = vld [vmem:[#allocation16 + $0x37c] sm:$0xf]
    %v3950 = vld [vmem:[#allocation16 + $0x380] sm:$0xf]
    %v3951 = vld [vmem:[#allocation16 + $0x384] sm:$0xf]
    %v3952 = vld [vmem:[#allocation16 + $0x388] sm:$0xf]
    %v3953 = vld [vmem:[#allocation16 + $0x38c] sm:$0xf]
    %v3954 = vld [vmem:[#allocation16 + $0x390] sm:$0xf]
    %v3955 = vld [vmem:[#allocation16 + $0x394] sm:$0xf]
    %v3956 = vld [vmem:[#allocation16 + $0x398] sm:$0xf]
    %v3957 = vld [vmem:[#allocation16 + $0x39c] sm:$0xf]
    %v3958 = vld [vmem:[#allocation16 + $0x3a0] sm:$0xf]
    %v3959 = vld [vmem:[#allocation16 + $0x3a4] sm:$0xf]
    %v3960 = vld [vmem:[#allocation16 + $0x3a8] sm:$0xf]
    %v3961 = vld [vmem:[#allocation16 + $0x3ac] sm:$0xf]
    %v3962 = vld [vmem:[#allocation16 + $0x3b0] sm:$0xf]
    %v3963 = vld [vmem:[#allocation16 + $0x3b4] sm:$0xf]
    %v3964 = vld [vmem:[#allocation16 + $0x3b8] sm:$0xf]
    %v3965 = vld [vmem:[#allocation16 + $0x3bc] sm:$0xf]
    %v3966 = vld [vmem:[#allocation16 + $0x3c0] sm:$0xf]
    %v3967 = vld [vmem:[#allocation16 + $0x3c4] sm:$0xf]
    %v3968 = vld [vmem:[#allocation16 + $0x3c8] sm:$0xf]
    %v3969 = vld [vmem:[#allocation16 + $0x3cc] sm:$0xf]
    %v3970 = vld [vmem:[#allocation16 + $0x3d0] sm:$0xf]
    %v3971 = vld [vmem:[#allocation16 + $0x3d4] sm:$0xf]
    %v3972 = vld [vmem:[#allocation16 + $0x3d8] sm:$0xf]
    %v3973 = vld [vmem:[#allocation16 + $0x3dc] sm:$0xf]
    %v3974 = vld [vmem:[#allocation16 + $0x3e0] sm:$0xf]
    %v3975 = vld [vmem:[#allocation16 + $0x3e4] sm:$0xf]
    %v3976 = vld [vmem:[#allocation16 + $0x3e8] sm:$0xf]
    %v4008 = vunpack.c.l.b16 %v3946
    %v4009 = vunpack.c.l.b16 %v3947
    %v4010 = vunpack.c.l.b16 %v3948
    %v4011 = vunpack.c.l.b16 %v3949
    %v4012 = vunpack.c.l.b16 %v3950
    %v4013 = vunpack.c.l.b16 %v3951
    %v4014 = vunpack.c.l.b16 %v3952
    %v4015 = vunpack.c.l.b16 %v3953
    %v4016 = vunpack.c.l.b16 %v3954
    %v4017 = vunpack.c.l.b16 %v3955
    %v4018 = vunpack.c.l.b16 %v3956
    %v4019 = vunpack.c.l.b16 %v3957
    %v4020 = vunpack.c.l.b16 %v3958
    %v4021 = vunpack.c.l.b16 %v3959
    %v4022 = vunpack.c.l.b16 %v3960
    %v4023 = vunpack.c.l.b16 %v3961
    %v4024 = vunpack.c.l.b16 %v3962
    %v4025 = vunpack.c.l.b16 %v3963
    %v4026 = vunpack.c.l.b16 %v3964
    %v4027 = vunpack.c.l.b16 %v3965
    %v4028 = vunpack.c.l.b16 %v3966
    %v4029 = vunpack.c.l.b16 %v3967
    %v4030 = vunpack.c.l.b16 %v3968
    %v4031 = vunpack.c.l.b16 %v3969
    %v4032 = vunpack.c.l.b16 %v3970
    %v4033 = vunpack.c.l.b16 %v3971
    %v4034 = vunpack.c.l.b16 %v3972
    %v4035 = vunpack.c.l.b16 %v3973
    %v4036 = vunpack.c.l.b16 %v3974
    %v4037 = vunpack.c.l.b16 %v3975
    %v4038 = vunpack.c.l.b16 %v3976
    %v4039 = vpack.c.b16 %v4009, %v4008
    %v4040 = vpack.c.b16 %v4011, %v4010
    %v4041 = vpack.c.b16 %v4013, %v4012
    %v4042 = vpack.c.b16 %v4015, %v4014
    %v4043 = vpack.c.b16 %v4017, %v4016
    %v4044 = vpack.c.b16 %v4019, %v4018
    %v4045 = vpack.c.b16 %v4021, %v4020
    %v4046 = vpack.c.b16 %v4023, %v4022
    %v4047 = vpack.c.b16 %v4025, %v4024
    %v4048 = vpack.c.b16 %v4027, %v4026
    %v4049 = vpack.c.b16 %v4029, %v4028
    %v4050 = vpack.c.b16 %v4031, %v4030
    %v4051 = vpack.c.b16 %v4033, %v4032
    %v4052 = vpack.c.b16 %v4035, %v4034
    %v4053 = vpack.c.b16 %v4037, %v4036
    %v4054 = vpack.c.b16 %v4038, %v4038
    %v4071 = vsel %vm3555, %v3945, 0
    %v4074 = vsel %vm1169, %v4054, 0
    %4076 = vmatprep.subr.bf16.mxu0 0
    %4077 = vmatpush1.bf16.msra.mxu0 %v4039
    %4078 = vmatprep.subr.bf16.mxu0 0
    %4079 = vmatpush1.bf16.msra.mxu0 %v4040
    %4080 = vmatprep.subr.bf16.mxu0 0
    %4081 = vmatpush1.bf16.msra.mxu0 %v4041
    %4082 = vmatprep.subr.bf16.mxu0 0
    %4083 = vmatpush1.bf16.msra.mxu0 %v4042
    %4084 = vmatprep.subr.bf16.mxu0 0
    %4085 = vmatpush1.bf16.msra.mxu0 %v4043
    %4086 = vmatprep.subr.bf16.mxu0 0
    %4087 = vmatpush1.bf16.msra.mxu0 %v4044
    %4088 = vmatprep.subr.bf16.mxu0 0
    %4089 = vmatpush1.bf16.msra.mxu0 %v4045
    %4090 = vmatprep.subr.bf16.mxu0 0
    %4091 = vmatpush1.bf16.msra.mxu0 %v4046
    %4092 = vmatprep.subr.bf16.mxu0 0
    %4093 = vmatpush1.bf16.msra.mxu0 %v4047
    %4094 = vmatprep.subr.bf16.mxu0 0
    %4095 = vmatpush1.bf16.msra.mxu0 %v4048
    %4096 = vmatprep.subr.bf16.mxu0 0
    %4097 = vmatpush1.bf16.msra.mxu0 %v4049
    %4098 = vmatprep.subr.bf16.mxu0 0
    %4099 = vmatpush1.bf16.msra.mxu0 %v4050
    %4100 = vmatprep.subr.bf16.mxu0 0
    %4101 = vmatpush1.bf16.msra.mxu0 %v4051
    %4102 = vmatprep.subr.bf16.mxu0 0
    %4103 = vmatpush1.bf16.msra.mxu0 %v4052
    %4104 = vmatprep.subr.bf16.mxu0 0
    %4105 = vmatpush1.bf16.msra.mxu0 %v4053
    %4106 = vmatprep.subr.bf16.mxu0 0
    %4107 = vmatpush1.bf16.msra.mxu0 %v4074
    %4108 = vmatprep.mubr.bf16.mxu0 %v4071
    %4109 = vmatmul.mubr.bf16.gmra.mrb[0].mxu0 %v3944
    %v4110 = vpop.f32.mrb[0].mxu0
    %v4111 = vadd.f32 0.0, %v4110
    %v4112 = vpop.f32.mrb[0].mxu0
    %v4113 = vpop.f32.mrb[0].mxu0
    %v4114 = vadd.f32 0.0, %v4113
    %v4115 = vpop.f32.mrb[0].mxu0
    %4116 = vdwg.mxu0
    %v4117 = vadd.f32 %v3922, %v4111
    %v4118 = vadd.f32 %v3925, %v4114
    %v4119 = vmax.f32 %v4117, 0.0
    %v4120 = vmax.f32 %v4118, 0.0
    %v4123 = vrot.slane %v4119, 7
    %v4124 = vrot.slane %v4120, 7
    %v4125 = vsel %vm58, %v4123, %v4124
    %v4128 = vsel %vm58, 0.0, %v4123
    %v4129 = vsel %vm2608, %v4128, 0.0
    %v4130 = vsel %vm2609, %v4125, 0.0
    %v4131 = vrot.slane %v4119, 1
    %v4132 = vrot.slane %v4120, 1
    %v4133 = vsel %vm380, %v4131, %v4132
    %v4136 = vsel %vm380, %v4132, 0.0
    %v4137 = vsel %vm2622, %v4133, 0.0
    %v4138 = vsel %vm2623, %v4136, 0.0
    %4139 = vrot.lane.b32.xlu0 %v4119, 40
    %v4140 = vpop.permute.xlu0 %4139
    %4141 = vrot.lane.b32.xlu0 %v4120, 40
    %v4142 = vpop.permute.xlu0 %4141
    %4147 = vrot.lane.b32.xlu0 %v4137, 80
    %v4148 = vpop.permute.xlu0 %4147
    %4149 = vrot.lane.b32.xlu0 %v4138, 80
    %v4150 = vpop.permute.xlu0 %4149
    %vm4153 = vcmask 326656
    %v4154 = vsel %vm4153, %v4129, %v4140
    %v4155 = vsel %vm4153, %v4130, %v4142
    %vm4156 = vcmask 654336
    %v4157 = vsel %vm4156, %v4154, %v4148
    %v4158 = vsel %vm4156, %v4155, %v4150
    %v4159 = vsel %vm3555, %v4157, 1.0
    %v4160 = vsel %vm3555, %v4158, 1.0
    %v4161 = vpack.c.bf16 %v4160, %v4159
    %v4162 = vld [vmem:[#allocation16 + $0x3f0] sm:$0xf]
    %v4163 = vld [vmem:[#allocation16 + $0x3f4] sm:$0xf]
    %v4164 = vld [vmem:[#allocation16 + $0x3f8] sm:$0xf]
    %v4165 = vld [vmem:[#allocation16 + $0x3fc] sm:$0xf]
    %v4166 = vld [vmem:[#allocation16 + $0x400] sm:$0xf]
    %v4167 = vld [vmem:[#allocation16 + $0x404] sm:$0xf]
    %v4168 = vld [vmem:[#allocation16 + $0x408] sm:$0xf]
    %v4169 = vld [vmem:[#allocation16 + $0x40c] sm:$0xf]
    %v4170 = vld [vmem:[#allocation16 + $0x410] sm:$0xf]
    %v4171 = vld [vmem:[#allocation16 + $0x414] sm:$0xf]
    %v4172 = vld [vmem:[#allocation16 + $0x418] sm:$0xf]
    %v4173 = vld [vmem:[#allocation16 + $0x41c] sm:$0xf]
    %v4174 = vld [vmem:[#allocation16 + $0x420] sm:$0xf]
    %v4175 = vld [vmem:[#allocation16 + $0x424] sm:$0xf]
    %v4176 = vld [vmem:[#allocation16 + $0x428] sm:$0xf]
    %v4177 = vld [vmem:[#allocation16 + $0x42c] sm:$0x1]
    %v4194 = vunpack.c.l.b16 %v4162
    %v4195 = vunpack.c.l.b16 %v4163
    %v4196 = vunpack.c.l.b16 %v4164
    %v4197 = vunpack.c.l.b16 %v4165
    %v4198 = vunpack.c.l.b16 %v4166
    %v4199 = vunpack.c.l.b16 %v4167
    %v4200 = vunpack.c.l.b16 %v4168
    %v4201 = vunpack.c.l.b16 %v4169
    %v4202 = vunpack.c.l.b16 %v4170
    %v4203 = vunpack.c.l.b16 %v4171
    %v4204 = vunpack.c.l.b16 %v4172
    %v4205 = vunpack.c.l.b16 %v4173
    %v4206 = vunpack.c.l.b16 %v4174
    %v4207 = vunpack.c.l.b16 %v4175
    %v4208 = vunpack.c.l.b16 %v4176
    %v4209 = vunpack.c.l.b16 %v4177
    %v4210 = vpack.c.b16 %v4195, %v4194
    %v4211 = vpack.c.b16 %v4197, %v4196
    %v4212 = vpack.c.b16 %v4199, %v4198
    %v4213 = vpack.c.b16 %v4201, %v4200
    %v4214 = vpack.c.b16 %v4203, %v4202
    %v4215 = vpack.c.b16 %v4205, %v4204
    %v4216 = vpack.c.b16 %v4207, %v4206
    %v4217 = vpack.c.b16 %v4209, %v4208
    %v4226 = vsel %vm3880, %v4161, 0
    %v4229 = vand.u32 %v4217, %v1172
    %4231 = vmatprep.subr.bf16.mxu0 0
    %4232 = vmatpush1.bf16.msra.mxu0 %v4210
    %4233 = vmatprep.subr.bf16.mxu0 0
    %4234 = vmatpush1.bf16.msra.mxu0 %v4211
    %4235 = vmatprep.subr.bf16.mxu0 0
    %4236 = vmatpush1.bf16.msra.mxu0 %v4212
    %4237 = vmatprep.subr.bf16.mxu0 0
    %4238 = vmatpush1.bf16.msra.mxu0 %v4213
    %4239 = vmatprep.subr.bf16.mxu0 0
    %4240 = vmatpush1.bf16.msra.mxu0 %v4214
    %4241 = vmatprep.subr.bf16.mxu0 0
    %4242 = vmatpush1.bf16.msra.mxu0 %v4215
    %4243 = vmatprep.subr.bf16.mxu0 0
    %4244 = vmatpush1.bf16.msra.mxu0 %v4216
    %4245 = vmatprep.subr.bf16.mxu0 0
    %4246 = vmatpush1.bf16.msra.mxu0 %v4229
    %4247 = vmatprep.subr.bf16.mxu0 0
    %4248 = vmatpush1.bf16.msra.mxu0 0
    %4249 = vmatprep.subr.bf16.mxu0 0
    %4250 = vmatpush1.bf16.msra.mxu0 0
    %4251 = vmatprep.subr.bf16.mxu0 0
    %4252 = vmatpush1.bf16.msra.mxu0 0
    %4253 = vmatprep.subr.bf16.mxu0 0
    %4254 = vmatpush1.bf16.msra.mxu0 0
    %4255 = vmatprep.subr.bf16.mxu0 0
    %4256 = vmatpush1.bf16.msra.mxu0 0
    %4257 = vmatprep.subr.bf16.mxu0 0
    %4258 = vmatpush1.bf16.msra.mxu0 0
    %4259 = vmatprep.subr.bf16.mxu0 0
    %4260 = vmatpush1.bf16.msra.mxu0 0
    %4261 = vmatprep.subr.bf16.mxu0 0
    %4262 = vmatpush1.bf16.msra.mxu0 0
    %4263 = vmatprep.mubr.bf16.mxu0 0
    %4264 = vmatmul.mubr.bf16.gmra.mrb[0].mxu0 %v4226
    %v4265 = vpop.f32.mrb[0].mxu0
    %v4266 = vadd.f32 0.0, %v4265
    %v4267 = vpop.f32.mrb[0].mxu0
    %v4268 = vpop.f32.mrb[0].mxu0
    %v4269 = vadd.f32 0.0, %v4268
    %v4270 = vpop.f32.mrb[0].mxu0
    %4271 = vdwg.mxu0
    %v4272 = vmax.f32 %v4266, 0.0
    %v4273 = vmax.f32 %v4269, 0.0
    %4274 = vst.msk [vmem:[#allocation13] sm:$0xff] %vm4153, %v4272
    %4275 = vst.msk [vmem:[#allocation13 + $0x8] sm:$0xff] %vm4153, %v4273
    %v4276 = vld [vmem:[#allocation4] sm:$0xff]
    %v4277 = vld [vmem:[#allocation4 + $0x8] sm:$0xff]
    %v4278 = vld [vmem:[#allocation4 + $0x10] sm:$0xff]
    %v4279 = vld [vmem:[#allocation4 + $0x18] sm:$0xff]
    %v4280 = vld [vmem:[#allocation7] sm:$0xff]
    %v4281 = vld [vmem:[#allocation7 + $0x8] sm:$0xff]
    %v4282 = vld [vmem:[#allocation7 + $0x10] sm:$0xff]
    %v4283 = vld [vmem:[#allocation7 + $0x18] sm:$0xff]
    %v4284 = vld [vmem:[#allocation9] sm:$0xff]
    %v4285 = vld [vmem:[#allocation9 + $0x8] sm:$0xff]
    %v4286 = vld [vmem:[#allocation9 + $0x10] sm:$0xff]
    %v4287 = vld [vmem:[#allocation9 + $0x18] sm:$0xff]
    %v4288 = vld [vmem:[#allocation16 + $0x990] sm:$0xf]
    %v4289 = vld [vmem:[#allocation16 + $0x994] sm:$0xf]
    %v4290 = vld [vmem:[#allocation13] sm:$0xff]
    %v4291 = vpack.c.bf16 %v4290, %v4290
    %v4294 = vunpack.c.l.b16 %v4288
    %v4295 = vunpack.c.l.b16 %v4289
    %v4296 = vpack.c.b16 %v4295, %v4294
    %v4298 = vsel %vm622, %v4296, 0
    %v4301 = vsel %vm1169, %v4291, 0
    %4303 = vmatprep.subr.bf16.mxu0 0
    %4304 = vmatpush1.bf16.msra.mxu0 %v4301
    %4305 = vmatprep.subr.bf16.mxu0 0
    %4306 = vmatpush1.bf16.msra.mxu0 0
    %4307 = vmatprep.subr.bf16.mxu0 0
    %4308 = vmatpush1.bf16.msra.mxu0 0
    %4309 = vmatprep.subr.bf16.mxu0 0
    %4310 = vmatpush1.bf16.msra.mxu0 0
    %4311 = vmatprep.subr.bf16.mxu0 0
    %4312 = vmatpush1.bf16.msra.mxu0 0
    %4313 = vmatprep.subr.bf16.mxu0 0
    %4314 = vmatpush1.bf16.msra.mxu0 0
    %4315 = vmatprep.subr.bf16.mxu0 0
    %4316 = vmatpush1.bf16.msra.mxu0 0
    %4317 = vmatprep.subr.bf16.mxu0 0
    %4318 = vmatpush1.bf16.msra.mxu0 0
    %4319 = vmatprep.subr.bf16.mxu0 0
    %4320 = vmatpush1.bf16.msra.mxu0 0
    %4321 = vmatprep.subr.bf16.mxu0 0
    %4322 = vmatpush1.bf16.msra.mxu0 0
    %4323 = vmatprep.subr.bf16.mxu0 0
    %4324 = vmatpush1.bf16.msra.mxu0 0
    %4325 = vmatprep.subr.bf16.mxu0 0
    %4326 = vmatpush1.bf16.msra.mxu0 0
    %4327 = vmatprep.subr.bf16.mxu0 0
    %4328 = vmatpush1.bf16.msra.mxu0 0
    %4329 = vmatprep.subr.bf16.mxu0 0
    %4330 = vmatpush1.bf16.msra.mxu0 0
    %4331 = vmatprep.subr.bf16.mxu0 0
    %4332 = vmatpush1.bf16.msra.mxu0 0
    %4333 = vmatprep.subr.bf16.mxu0 0
    %4334 = vmatpush1.bf16.msra.mxu0 0
    %4335 = vmatprep.mubr.bf16.mxu0 0
    %4336 = vmatmul.mubr.bf16.gmra.mrb[0].mxu0 %v4298
    %v4337 = vpop.f32.mrb[0].mxu0
    %v4338 = vadd.f32 0.0, %v4337
    %v4339 = vpop.f32.mrb[0].mxu0
    %v4340 = vpop.f32.mrb[0].mxu0
    %v4341 = vadd.f32 0.0, %v4340
    %v4342 = vpop.f32.mrb[0].mxu0
    %4343 = vdwg.mxu0
    %v4344 = vld [vmem:[#allocation13 + $0x8] sm:$0xff]
    %v4345 = vpack.c.bf16 %v4344, %v4344
    %v4347 = vsel %vm1169, %v4345, 0
    %4349 = vmatprep.subr.bf16.mxu0 0
    %4350 = vmatpush1.bf16.msra.mxu0 %v4347
    %4351 = vmatprep.subr.bf16.mxu0 0
    %4352 = vmatpush1.bf16.msra.mxu0 0
    %4353 = vmatprep.subr.bf16.mxu0 0
    %4354 = vmatpush1.bf16.msra.mxu0 0
    %4355 = vmatprep.subr.bf16.mxu0 0
    %4356 = vmatpush1.bf16.msra.mxu0 0
    %4357 = vmatprep.subr.bf16.mxu0 0
    %4358 = vmatpush1.bf16.msra.mxu0 0
    %4359 = vmatprep.subr.bf16.mxu0 0
    %4360 = vmatpush1.bf16.msra.mxu0 0
    %4361 = vmatprep.subr.bf16.mxu0 0
    %4362 = vmatpush1.bf16.msra.mxu0 0
    %4363 = vmatprep.subr.bf16.mxu0 0
    %4364 = vmatpush1.bf16.msra.mxu0 0
    %4365 = vmatprep.subr.bf16.mxu0 0
    %4366 = vmatpush1.bf16.msra.mxu0 0
    %4367 = vmatprep.subr.bf16.mxu0 0
    %4368 = vmatpush1.bf16.msra.mxu0 0
    %4369 = vmatprep.subr.bf16.mxu0 0
    %4370 = vmatpush1.bf16.msra.mxu0 0
    %4371 = vmatprep.subr.bf16.mxu0 0
    %4372 = vmatpush1.bf16.msra.mxu0 0
    %4373 = vmatprep.subr.bf16.mxu0 0
    %4374 = vmatpush1.bf16.msra.mxu0 0
    %4375 = vmatprep.subr.bf16.mxu0 0
    %4376 = vmatpush1.bf16.msra.mxu0 0
    %4377 = vmatprep.subr.bf16.mxu0 0
    %4378 = vmatpush1.bf16.msra.mxu0 0
    %4379 = vmatprep.subr.bf16.mxu0 0
    %4380 = vmatpush1.bf16.msra.mxu0 0
    %4381 = vmatprep.mubr.bf16.mxu0 0
    %4382 = vmatmul.mubr.bf16.gmra.mrb[0].mxu0 %v4298
    %v4383 = vpop.f32.mrb[0].mxu0
    %v4384 = vadd.f32 0.0, %v4383
    %v4385 = vpop.f32.mrb[0].mxu0
    %v4386 = vpop.f32.mrb[0].mxu0
    %v4387 = vadd.f32 0.0, %v4386
    %v4388 = vpop.f32.mrb[0].mxu0
    %4389 = vdwg.mxu0
    %v4390 = vld [vmem:[#allocation16 + $0x958] sm:$0xf]
    %v4391 = vld [vmem:[#allocation16 + $0x95c] sm:$0xf]
    %v4392 = vld [vmem:[#allocation12] sm:$0xf]
    %v4393 = vpack.c.bf16 %v4392, %v4392
    %v4396 = vunpack.c.l.b16 %v4390
    %v4397 = vunpack.c.l.b16 %v4391
    %v4398 = vpack.c.b16 %v4397, %v4396
    %v4400 = vsel %vm605, %v4398, 0
    %v4403 = vsel %vm3427, %v4393, 0
    %4405 = vmatprep.subr.bf16.mxu0 0
    %4406 = vmatpush1.bf16.msra.mxu0 %v4403
    %4407 = vmatprep.subr.bf16.mxu0 0
    %4408 = vmatpush1.bf16.msra.mxu0 0
    %4409 = vmatprep.subr.bf16.mxu0 0
    %4410 = vmatpush1.bf16.msra.mxu0 0
    %4411 = vmatprep.subr.bf16.mxu0 0
    %4412 = vmatpush1.bf16.msra.mxu0 0
    %4413 = vmatprep.subr.bf16.mxu0 0
    %4414 = vmatpush1.bf16.msra.mxu0 0
    %4415 = vmatprep.subr.bf16.mxu0 0
    %4416 = vmatpush1.bf16.msra.mxu0 0
    %4417 = vmatprep.subr.bf16.mxu0 0
    %4418 = vmatpush1.bf16.msra.mxu0 0
    %4419 = vmatprep.subr.bf16.mxu0 0
    %4420 = vmatpush1.bf16.msra.mxu0 0
    %4421 = vmatprep.subr.bf16.mxu0 0
    %4422 = vmatpush1.bf16.msra.mxu0 0
    %4423 = vmatprep.subr.bf16.mxu0 0
    %4424 = vmatpush1.bf16.msra.mxu0 0
    %4425 = vmatprep.subr.bf16.mxu0 0
    %4426 = vmatpush1.bf16.msra.mxu0 0
    %4427 = vmatprep.subr.bf16.mxu0 0
    %4428 = vmatpush1.bf16.msra.mxu0 0
    %4429 = vmatprep.subr.bf16.mxu0 0
    %4430 = vmatpush1.bf16.msra.mxu0 0
    %4431 = vmatprep.subr.bf16.mxu0 0
    %4432 = vmatpush1.bf16.msra.mxu0 0
    %4433 = vmatprep.subr.bf16.mxu0 0
    %4434 = vmatpush1.bf16.msra.mxu0 0
    %4435 = vmatprep.subr.bf16.mxu0 0
    %4436 = vmatpush1.bf16.msra.mxu0 0
    %4437 = vmatprep.mubr.bf16.mxu0 0
    %4438 = vmatmul.mubr.bf16.gmra.mrb[0].mxu0 %v4400
    %v4439 = vpop.f32.mrb[0].mxu0
    %v4440 = vadd.f32 0.0, %v4439
    %v4441 = vpop.f32.mrb[0].mxu0
    %v4442 = vpop.f32.mrb[0].mxu0
    %v4443 = vadd.f32 0.0, %v4442
    %v4444 = vpop.f32.mrb[0].mxu0
    %4445 = vdwg.mxu0
    %v4446 = vld [vmem:[#allocation12 + $0x4] sm:$0xf]
    %v4447 = vpack.c.bf16 %v4446, %v4446
    %v4449 = vsel %vm3427, %v4447, 0
    %4451 = vmatprep.subr.bf16.mxu0 0
    %4452 = vmatpush1.bf16.msra.mxu0 %v4449
    %4453 = vmatprep.subr.bf16.mxu0 0
    %4454 = vmatpush1.bf16.msra.mxu0 0
    %4455 = vmatprep.subr.bf16.mxu0 0
    %4456 = vmatpush1.bf16.msra.mxu0 0
    %4457 = vmatprep.subr.bf16.mxu0 0
    %4458 = vmatpush1.bf16.msra.mxu0 0
    %4459 = vmatprep.subr.bf16.mxu0 0
    %4460 = vmatpush1.bf16.msra.mxu0 0
    %4461 = vmatprep.subr.bf16.mxu0 0
    %4462 = vmatpush1.bf16.msra.mxu0 0
    %4463 = vmatprep.subr.bf16.mxu0 0
    %4464 = vmatpush1.bf16.msra.mxu0 0
    %4465 = vmatprep.subr.bf16.mxu0 0
    %4466 = vmatpush1.bf16.msra.mxu0 0
    %4467 = vmatprep.subr.bf16.mxu0 0
    %4468 = vmatpush1.bf16.msra.mxu0 0
    %4469 = vmatprep.subr.bf16.mxu0 0
    %4470 = vmatpush1.bf16.msra.mxu0 0
    %4471 = vmatprep.subr.bf16.mxu0 0
    %4472 = vmatpush1.bf16.msra.mxu0 0
    %4473 = vmatprep.subr.bf16.mxu0 0
    %4474 = vmatpush1.bf16.msra.mxu0 0
    %4475 = vmatprep.subr.bf16.mxu0 0
    %4476 = vmatpush1.bf16.msra.mxu0 0
    %4477 = vmatprep.subr.bf16.mxu0 0
    %4478 = vmatpush1.bf16.msra.mxu0 0
    %4479 = vmatprep.subr.bf16.mxu0 0
    %4480 = vmatpush1.bf16.msra.mxu0 0
    %4481 = vmatprep.subr.bf16.mxu0 0
    %4482 = vmatpush1.bf16.msra.mxu0 0
    %4483 = vmatprep.mubr.bf16.mxu0 0
    %4484 = vmatmul.mubr.bf16.gmra.mrb[0].mxu0 %v4400
    %v4485 = vpop.f32.mrb[0].mxu0
    %v4486 = vadd.f32 0.0, %v4485
    %v4487 = vpop.f32.mrb[0].mxu0
    %v4488 = vpop.f32.mrb[0].mxu0
    %v4489 = vadd.f32 0.0, %v4488
    %v4490 = vpop.f32.mrb[0].mxu0
    %4491 = vdwg.mxu0
    %4496 = vrot.lane.b32.xlu0 %v4280, 8
    %v4497 = vpop.permute.xlu0 %4496
    %4498 = vrot.lane.b32.xlu0 %v4281, 8
    %v4499 = vpop.permute.xlu0 %4498
    %4500 = vrot.lane.b32.xlu0 %v4282, 8
    %v4501 = vpop.permute.xlu0 %4500
    %4502 = vrot.lane.b32.xlu0 %v4283, 8
    %v4503 = vpop.permute.xlu0 %4502
    %4512 = vrot.lane.b32.xlu0 %v4284, 24
    %v4513 = vpop.permute.xlu0 %4512
    %4514 = vrot.lane.b32.xlu0 %v4285, 24
    %v4515 = vpop.permute.xlu0 %4514
    %4516 = vrot.lane.b32.xlu0 %v4286, 24
    %v4517 = vpop.permute.xlu0 %4516
    %4518 = vrot.lane.b32.xlu0 %v4287, 24
    %v4519 = vpop.permute.xlu0 %4518
    %4528 = vrot.lane.b32.xlu0 %v4338, 56
    %v4529 = vpop.permute.xlu0 %4528
    %4530 = vrot.lane.b32.xlu0 %v4341, 56
    %v4531 = vpop.permute.xlu0 %4530
    %4532 = vrot.lane.b32.xlu0 %v4384, 56
    %v4533 = vpop.permute.xlu0 %4532
    %4534 = vrot.lane.b32.xlu0 %v4387, 56
    %v4535 = vpop.permute.xlu0 %4534
    %4544 = vrot.lane.b32.xlu0 %v4440, 96
    %v4545 = vpop.permute.xlu0 %4544
    %4546 = vrot.lane.b32.xlu0 %v4443, 96
    %v4547 = vpop.permute.xlu0 %4546
    %4548 = vrot.lane.b32.xlu0 %v4486, 96
    %v4549 = vpop.permute.xlu0 %4548
    %4550 = vrot.lane.b32.xlu0 %v4489, 96
    %v4551 = vpop.permute.xlu0 %4550
    %v4556 = vsel %vm622, %v4276, %v4497
    %v4557 = vsel %vm622, %v4277, %v4499
    %v4558 = vsel %vm622, %v4278, %v4501
    %v4559 = vsel %vm622, %v4279, %v4503
    %v4560 = vsel %vm1104, %v4556, %v4513
    %v4561 = vsel %vm1104, %v4557, %v4515
    %v4562 = vsel %vm1104, %v4558, %v4517
    %v4563 = vsel %vm1104, %v4559, %v4519
    %v4564 = vsel %vm3552, %v4560, %v4529
    %v4565 = vsel %vm3552, %v4561, %v4531
    %v4566 = vsel %vm3552, %v4562, %v4533
    %v4567 = vsel %vm3552, %v4563, %v4535
    %v4568 = vsel %vm2433, %v4564, %v4545
    %v4569 = vsel %vm2433, %v4565, %v4547
    %v4570 = vsel %vm2433, %v4566, %v4549
    %v4571 = vsel %vm2433, %v4567, %v4551
    %v4572 = vsel %vm2433, %v4545, 1.0
    %v4573 = vsel %vm2433, %v4547, 1.0
    %v4574 = vsel %vm2433, %v4549, 1.0
    %v4575 = vsel %vm2433, %v4551, 1.0
    %v4576 = vpack.c.bf16 %v4569, %v4568
    %v4577 = vpack.c.bf16 %v4573, %v4572
    %v4578 = vpack.c.bf16 %v4571, %v4570
    %v4579 = vpack.c.bf16 %v4575, %v4574
    %v4580 = vld [vmem:[#allocation16 + $0x4a0] sm:$0xf]
    %v4581 = vld [vmem:[#allocation16 + $0x4a4] sm:$0xf]
    %v4582 = vld [vmem:[#allocation16 + $0x4a8] sm:$0xf]
    %v4583 = vld [vmem:[#allocation16 + $0x4ac] sm:$0xf]
    %v4584 = vld [vmem:[#allocation16 + $0x4b0] sm:$0xf]
    %v4585 = vld [vmem:[#allocation16 + $0x4b4] sm:$0xf]
    %v4586 = vld [vmem:[#allocation16 + $0x4b8] sm:$0xf]
    %v4587 = vld [vmem:[#allocation16 + $0x4bc] sm:$0xf]
    %v4588 = vld [vmem:[#allocation16 + $0x4c0] sm:$0xf]
    %v4589 = vld [vmem:[#allocation16 + $0x4c4] sm:$0xf]
    %v4590 = vld [vmem:[#allocation16 + $0x4c8] sm:$0xf]
    %v4591 = vld [vmem:[#allocation16 + $0x4cc] sm:$0xf]
    %v4592 = vld [vmem:[#allocation16 + $0x4d0] sm:$0xf]
    %v4593 = vld [vmem:[#allocation16 + $0x4d4] sm:$0xf]
    %v4594 = vld [vmem:[#allocation16 + $0x4d8] sm:$0xf]
    %v4595 = vld [vmem:[#allocation16 + $0x4dc] sm:$0xf]
    %v4596 = vld [vmem:[#allocation16 + $0x4e0] sm:$0xf]
    %v4597 = vld [vmem:[#allocation16 + $0x4e4] sm:$0xf]
    %v4598 = vld [vmem:[#allocation16 + $0x4e8] sm:$0xf]
    %v4599 = vld [vmem:[#allocation16 + $0x4ec] sm:$0xf]
    %v4600 = vld [vmem:[#allocation16 + $0x4f0] sm:$0xf]
    %v4601 = vld [vmem:[#allocation16 + $0x4f4] sm:$0xf]
    %v4602 = vld [vmem:[#allocation16 + $0x4f8] sm:$0xf]
    %v4603 = vld [vmem:[#allocation16 + $0x4fc] sm:$0xf]
    %v4604 = vld [vmem:[#allocation16 + $0x500] sm:$0xf]
    %v4605 = vld [vmem:[#allocation16 + $0x504] sm:$0xf]
    %v4606 = vld [vmem:[#allocation16 + $0x508] sm:$0xf]
    %v4607 = vld [vmem:[#allocation16 + $0x50c] sm:$0xf]
    %v4608 = vld [vmem:[#allocation16 + $0x510] sm:$0x1]
    %v4613 = vrot.slane %v4568, 7
    %v4614 = vrot.slane %v4545, 7
    %v4615 = vrot.slane %v4569, 7
    %v4616 = vsel %vm58, %v4613, %v4615
    %v4617 = vrot.slane %v4547, 7
    %v4618 = vsel %vm58, %v4614, %v4617
    %v4619 = vrot.slane %v4570, 7
    %v4620 = vsel %vm58, %v4615, %v4619
    %v4621 = vrot.slane %v4549, 7
    %v4622 = vsel %vm58, %v4617, %v4621
    %v4623 = vrot.slane %v4571, 7
    %v4624 = vsel %vm58, %v4619, %v4623
    %v4625 = vrot.slane %v4551, 7
    %v4626 = vsel %vm58, %v4621, %v4625
    %v4635 = vsel %vm58, 0.0, %v4613
    %v4636 = vsel %vm58, 0.0, %v4614
    %v4637 = vsel %vm2192, %v4635, 0.0
    %v4638 = vsel %vm2192, %v4636, 0.0
    %v4639 = vsel %vm2193, %v4616, 0.0
    %v4640 = vsel %vm2193, %v4618, 0.0
    %v4641 = vsel %vm2194, %v4620, 0.0
    %v4642 = vsel %vm2194, %v4622, 0.0
    %v4643 = vsel %vm2195, %v4624, 0.0
    %v4644 = vsel %vm2195, %v4626, 0.0
    %v4645 = vpack.c.bf16 %v4639, %v4637
    %v4646 = vpack.c.bf16 %v4640, %v4638
    %v4647 = vpack.c.bf16 %v4643, %v4641
    %v4648 = vpack.c.bf16 %v4644, %v4642
    %v4649 = vld [vmem:[#allocation16 + $0x430] sm:$0xf]
    %v4650 = vld [vmem:[#allocation16 + $0x434] sm:$0xf]
    %v4651 = vld [vmem:[#allocation16 + $0x438] sm:$0xf]
    %v4652 = vld [vmem:[#allocation16 + $0x43c] sm:$0xf]
    %v4653 = vld [vmem:[#allocation16 + $0x440] sm:$0xf]
    %v4654 = vld [vmem:[#allocation16 + $0x444] sm:$0xf]
    %v4655 = vld [vmem:[#allocation16 + $0x448] sm:$0xf]
    %v4656 = vld [vmem:[#allocation16 + $0x44c] sm:$0xf]
    %v4657 = vld [vmem:[#allocation16 + $0x450] sm:$0xf]
    %v4658 = vld [vmem:[#allocation16 + $0x454] sm:$0xf]
    %v4659 = vld [vmem:[#allocation16 + $0x458] sm:$0xf]
    %v4660 = vld [vmem:[#allocation16 + $0x45c] sm:$0xf]
    %v4661 = vld [vmem:[#allocation16 + $0x460] sm:$0xf]
    %v4662 = vld [vmem:[#allocation16 + $0x464] sm:$0xf]
    %v4663 = vld [vmem:[#allocation16 + $0x468] sm:$0xf]
    %v4664 = vld [vmem:[#allocation16 + $0x46c] sm:$0xf]
    %v4665 = vld [vmem:[#allocation16 + $0x470] sm:$0xf]
    %v4666 = vld [vmem:[#allocation16 + $0x474] sm:$0xf]
    %v4667 = vld [vmem:[#allocation16 + $0x478] sm:$0xf]
    %v4668 = vld [vmem:[#allocation16 + $0x47c] sm:$0xf]
    %v4669 = vld [vmem:[#allocation16 + $0x480] sm:$0xf]
    %v4670 = vld [vmem:[#allocation16 + $0x484] sm:$0xf]
    %v4671 = vld [vmem:[#allocation16 + $0x488] sm:$0xf]
    %v4672 = vld [vmem:[#allocation16 + $0x48c] sm:$0xf]
    %v4673 = vld [vmem:[#allocation16 + $0x490] sm:$0xf]
    %v4674 = vld [vmem:[#allocation16 + $0x494] sm:$0xf]
    %v4675 = vld [vmem:[#allocation16 + $0x498] sm:$0xf]
    %v4676 = vld [vmem:[#allocation16 + $0x49c] sm:$0xf]
    %v4705 = vunpack.c.l.b16 %v4649
    %v4706 = vunpack.c.l.b16 %v4650
    %v4707 = vunpack.c.l.b16 %v4651
    %v4708 = vunpack.c.l.b16 %v4652
    %v4709 = vunpack.c.l.b16 %v4653
    %v4710 = vunpack.c.l.b16 %v4654
    %v4711 = vunpack.c.l.b16 %v4655
    %v4712 = vunpack.c.l.b16 %v4656
    %v4713 = vunpack.c.l.b16 %v4657
    %v4714 = vunpack.c.l.b16 %v4658
    %v4715 = vunpack.c.l.b16 %v4659
    %v4716 = vunpack.c.l.b16 %v4660
    %v4717 = vunpack.c.l.b16 %v4661
    %v4718 = vunpack.c.l.b16 %v4662
    %v4719 = vunpack.c.l.b16 %v4663
    %v4720 = vunpack.c.l.b16 %v4664
    %v4721 = vunpack.c.l.b16 %v4665
    %v4722 = vunpack.c.l.b16 %v4666
    %v4723 = vunpack.c.l.b16 %v4667
    %v4724 = vunpack.c.l.b16 %v4668
    %v4725 = vunpack.c.l.b16 %v4669
    %v4726 = vunpack.c.l.b16 %v4670
    %v4727 = vunpack.c.l.b16 %v4671
    %v4728 = vunpack.c.l.b16 %v4672
    %v4729 = vunpack.c.l.b16 %v4673
    %v4730 = vunpack.c.l.b16 %v4674
    %v4731 = vunpack.c.l.b16 %v4675
    %v4732 = vunpack.c.l.b16 %v4676
    %v4733 = vpack.c.b16 %v4706, %v4705
    %v4734 = vpack.c.b16 %v4708, %v4707
    %v4735 = vpack.c.b16 %v4710, %v4709
    %v4736 = vpack.c.b16 %v4712, %v4711
    %v4737 = vpack.c.b16 %v4714, %v4713
    %v4738 = vpack.c.b16 %v4716, %v4715
    %v4739 = vpack.c.b16 %v4718, %v4717
    %v4740 = vpack.c.b16 %v4720, %v4719
    %v4741 = vpack.c.b16 %v4722, %v4721
    %v4742 = vpack.c.b16 %v4724, %v4723
    %v4743 = vpack.c.b16 %v4726, %v4725
    %v4744 = vpack.c.b16 %v4728, %v4727
    %v4745 = vpack.c.b16 %v4730, %v4729
    %v4746 = vpack.c.b16 %v4732, %v4731
    %v4762 = vsel %vm2433, %v4646, 0
    %v4765 = vsel %vm2433, %v4648, 0
    %4767 = vmatprep.subr.bf16.mxu0 0
    %4768 = vmatpush1.bf16.msra.mxu0 %v4733
    %4769 = vmatprep.subr.bf16.mxu0 0
    %4770 = vmatpush1.bf16.msra.mxu0 %v4734
    %4771 = vmatprep.subr.bf16.mxu0 0
    %4772 = vmatpush1.bf16.msra.mxu0 %v4735
    %4773 = vmatprep.subr.bf16.mxu0 0
    %4774 = vmatpush1.bf16.msra.mxu0 %v4736
    %4775 = vmatprep.subr.bf16.mxu0 0
    %4776 = vmatpush1.bf16.msra.mxu0 %v4737
    %4777 = vmatprep.subr.bf16.mxu0 0
    %4778 = vmatpush1.bf16.msra.mxu0 %v4738
    %4779 = vmatprep.subr.bf16.mxu0 0
    %4780 = vmatpush1.bf16.msra.mxu0 %v4739
    %4781 = vmatprep.subr.bf16.mxu0 0
    %4782 = vmatpush1.bf16.msra.mxu0 %v4740
    %4783 = vmatprep.subr.bf16.mxu0 0
    %4784 = vmatpush1.bf16.msra.mxu0 %v4741
    %4785 = vmatprep.subr.bf16.mxu0 0
    %4786 = vmatpush1.bf16.msra.mxu0 %v4742
    %4787 = vmatprep.subr.bf16.mxu0 0
    %4788 = vmatpush1.bf16.msra.mxu0 %v4743
    %4789 = vmatprep.subr.bf16.mxu0 0
    %4790 = vmatpush1.bf16.msra.mxu0 %v4744
    %4791 = vmatprep.subr.bf16.mxu0 0
    %4792 = vmatpush1.bf16.msra.mxu0 %v4745
    %4793 = vmatprep.subr.bf16.mxu0 0
    %4794 = vmatpush1.bf16.msra.mxu0 %v4746
    %4795 = vmatprep.subr.bf16.mxu0 0
    %4796 = vmatpush1.bf16.msra.mxu0 0
    %4797 = vmatprep.subr.bf16.mxu0 0
    %4798 = vmatpush1.bf16.msra.mxu0 0
    %4799 = vmatprep.mubr.bf16.mxu0 %v4762
    %4800 = vmatmul.mubr.bf16.gmra.mrb[0].mxu0 %v4645
    %v4801 = vpop.f32.mrb[0].mxu0
    %v4802 = vadd.f32 0.0, %v4801
    %v4803 = vpop.f32.mrb[0].mxu0
    %v4804 = vpop.f32.mrb[0].mxu0
    %v4805 = vadd.f32 0.0, %v4804
    %v4806 = vpop.f32.mrb[0].mxu0
    %4807 = vmatprep.mubr.bf16.mxu0 %v4765
    %4808 = vmatmul.mubr.bf16.gmra.mrb[0].mxu0 %v4647
    %v4809 = vpop.f32.mrb[0].mxu0
    %v4810 = vadd.f32 0.0, %v4809
    %v4811 = vpop.f32.mrb[0].mxu0
    %v4812 = vpop.f32.mrb[0].mxu0
    %v4813 = vadd.f32 0.0, %v4812
    %v4814 = vpop.f32.mrb[0].mxu0
    %4815 = vdwg.mxu0
    %v4845 = vunpack.c.l.b16 %v4580
    %v4846 = vunpack.c.l.b16 %v4581
    %v4847 = vunpack.c.l.b16 %v4582
    %v4848 = vunpack.c.l.b16 %v4583
    %v4849 = vunpack.c.l.b16 %v4584
    %v4850 = vunpack.c.l.b16 %v4585
    %v4851 = vunpack.c.l.b16 %v4586
    %v4852 = vunpack.c.l.b16 %v4587
    %v4853 = vunpack.c.l.b16 %v4588
    %v4854 = vunpack.c.l.b16 %v4589
    %v4855 = vunpack.c.l.b16 %v4590
    %v4856 = vunpack.c.l.b16 %v4591
    %v4857 = vunpack.c.l.b16 %v4592
    %v4858 = vunpack.c.l.b16 %v4593
    %v4859 = vunpack.c.l.b16 %v4594
    %v4860 = vunpack.c.l.b16 %v4595
    %v4861 = vunpack.c.l.b16 %v4596
    %v4862 = vunpack.c.l.b16 %v4597
    %v4863 = vunpack.c.l.b16 %v4598
    %v4864 = vunpack.c.l.b16 %v4599
    %v4865 = vunpack.c.l.b16 %v4600
    %v4866 = vunpack.c.l.b16 %v4601
    %v4867 = vunpack.c.l.b16 %v4602
    %v4868 = vunpack.c.l.b16 %v4603
    %v4869 = vunpack.c.l.b16 %v4604
    %v4870 = vunpack.c.l.b16 %v4605
    %v4871 = vunpack.c.l.b16 %v4606
    %v4872 = vunpack.c.l.b16 %v4607
    %v4873 = vunpack.c.l.b16 %v4608
    %v4874 = vpack.c.b16 %v4846, %v4845
    %v4875 = vpack.c.b16 %v4848, %v4847
    %v4876 = vpack.c.b16 %v4850, %v4849
    %v4877 = vpack.c.b16 %v4852, %v4851
    %v4878 = vpack.c.b16 %v4854, %v4853
    %v4879 = vpack.c.b16 %v4856, %v4855
    %v4880 = vpack.c.b16 %v4858, %v4857
    %v4881 = vpack.c.b16 %v4860, %v4859
    %v4882 = vpack.c.b16 %v4862, %v4861
    %v4883 = vpack.c.b16 %v4864, %v4863
    %v4884 = vpack.c.b16 %v4866, %v4865
    %v4885 = vpack.c.b16 %v4868, %v4867
    %v4886 = vpack.c.b16 %v4870, %v4869
    %v4887 = vpack.c.b16 %v4872, %v4871
    %v4888 = vpack.c.b16 %v4873, %v4873
    %v4904 = vsel %vm2492, %v4577, 0
    %v4907 = vsel %vm2492, %v4579, 0
    %v4910 = vand.u32 %v4888, %v1997
    %4912 = vmatprep.subr.bf16.mxu0 0
    %4913 = vmatpush1.bf16.msra.mxu0 %v4874
    %4914 = vmatprep.subr.bf16.mxu0 0
    %4915 = vmatpush1.bf16.msra.mxu0 %v4875
    %4916 = vmatprep.subr.bf16.mxu0 0
    %4917 = vmatpush1.bf16.msra.mxu0 %v4876
    %4918 = vmatprep.subr.bf16.mxu0 0
    %4919 = vmatpush1.bf16.msra.mxu0 %v4877
    %4920 = vmatprep.subr.bf16.mxu0 0
    %4921 = vmatpush1.bf16.msra.mxu0 %v4878
    %4922 = vmatprep.subr.bf16.mxu0 0
    %4923 = vmatpush1.bf16.msra.mxu0 %v4879
    %4924 = vmatprep.subr.bf16.mxu0 0
    %4925 = vmatpush1.bf16.msra.mxu0 %v4880
    %4926 = vmatprep.subr.bf16.mxu0 0
    %4927 = vmatpush1.bf16.msra.mxu0 %v4881
    %4928 = vmatprep.subr.bf16.mxu0 0
    %4929 = vmatpush1.bf16.msra.mxu0 %v4882
    %4930 = vmatprep.subr.bf16.mxu0 0
    %4931 = vmatpush1.bf16.msra.mxu0 %v4883
    %4932 = vmatprep.subr.bf16.mxu0 0
    %4933 = vmatpush1.bf16.msra.mxu0 %v4884
    %4934 = vmatprep.subr.bf16.mxu0 0
    %4935 = vmatpush1.bf16.msra.mxu0 %v4885
    %4936 = vmatprep.subr.bf16.mxu0 0
    %4937 = vmatpush1.bf16.msra.mxu0 %v4886
    %4938 = vmatprep.subr.bf16.mxu0 0
    %4939 = vmatpush1.bf16.msra.mxu0 %v4887
    %4940 = vmatprep.subr.bf16.mxu0 0
    %4941 = vmatpush1.bf16.msra.mxu0 %v4910
    %4942 = vmatprep.subr.bf16.mxu0 0
    %4943 = vmatpush1.bf16.msra.mxu0 0
    %4944 = vmatprep.mubr.bf16.mxu0 %v4904
    %4945 = vmatmul.mubr.bf16.gmra.mrb[0].mxu0 %v4576
    %v4946 = vpop.f32.mrb[0].mxu0
    %v4947 = vadd.f32 %v4802, %v4946
    %v4948 = vpop.f32.mrb[0].mxu0
    %v4949 = vpop.f32.mrb[0].mxu0
    %v4950 = vadd.f32 %v4805, %v4949
    %v4951 = vpop.f32.mrb[0].mxu0
    %4952 = vmatprep.mubr.bf16.mxu0 %v4907
    %4953 = vmatmul.mubr.bf16.gmra.mrb[0].mxu0 %v4578
    %v4954 = vpop.f32.mrb[0].mxu0
    %v4955 = vadd.f32 %v4810, %v4954
    %v4956 = vpop.f32.mrb[0].mxu0
    %v4957 = vpop.f32.mrb[0].mxu0
    %v4958 = vadd.f32 %v4813, %v4957
    %v4959 = vpop.f32.mrb[0].mxu0
    %4960 = vdwg.mxu0
    %v4961 = vrot.slane %v4568, 1
    %v4962 = vrot.slane %v4569, 1
    %v4963 = vsel %vm380, %v4961, %v4962
    %v4964 = vrot.slane %v4545, 1
    %v4965 = vrot.slane %v4547, 1
    %v4966 = vsel %vm380, %v4964, %v4965
    %v4967 = vrot.slane %v4570, 1
    %v4968 = vsel %vm380, %v4962, %v4967
    %v4969 = vrot.slane %v4549, 1
    %v4970 = vsel %vm380, %v4965, %v4969
    %v4971 = vrot.slane %v4571, 1
    %v4972 = vsel %vm380, %v4967, %v4971
    %v4973 = vrot.slane %v4551, 1
    %v4974 = vsel %vm380, %v4969, %v4973
    %v4983 = vsel %vm380, %v4971, 0.0
    %v4984 = vsel %vm380, %v4973, 0.0
    %v4985 = vsel %vm2220, %v4963, 0.0
    %v4986 = vsel %vm2220, %v4966, 0.0
    %v4987 = vsel %vm2221, %v4968, 0.0
    %v4988 = vsel %vm2221, %v4970, 0.0
    %v4989 = vsel %vm2222, %v4972, 0.0
    %v4990 = vsel %vm2222, %v4974, 0.0
    %v4991 = vsel %vm2223, %v4983, 0.0
    %v4992 = vsel %vm2223, %v4984, 0.0
    %v4993 = vpack.c.bf16 %v4987, %v4985
    %v4994 = vpack.c.bf16 %v4988, %v4986
    %v4995 = vpack.c.bf16 %v4991, %v4989
    %v4996 = vpack.c.bf16 %v4992, %v4990
    %v4997 = vld [vmem:[#allocation16 + $0x518] sm:$0xf]
    %v4998 = vld [vmem:[#allocation16 + $0x51c] sm:$0xf]
    %v4999 = vld [vmem:[#allocation16 + $0x520] sm:$0xf]
    %v5000 = vld [vmem:[#allocation16 + $0x524] sm:$0xf]
    %v5001 = vld [vmem:[#allocation16 + $0x528] sm:$0xf]
    %v5002 = vld [vmem:[#allocation16 + $0x52c] sm:$0xf]
    %v5003 = vld [vmem:[#allocation16 + $0x530] sm:$0xf]
    %v5004 = vld [vmem:[#allocation16 + $0x534] sm:$0xf]
    %v5005 = vld [vmem:[#allocation16 + $0x538] sm:$0xf]
    %v5006 = vld [vmem:[#allocation16 + $0x53c] sm:$0xf]
    %v5007 = vld [vmem:[#allocation16 + $0x540] sm:$0xf]
    %v5008 = vld [vmem:[#allocation16 + $0x544] sm:$0xf]
    %v5009 = vld [vmem:[#allocation16 + $0x548] sm:$0xf]
    %v5010 = vld [vmem:[#allocation16 + $0x54c] sm:$0xf]
    %v5011 = vld [vmem:[#allocation16 + $0x550] sm:$0xf]
    %v5012 = vld [vmem:[#allocation16 + $0x554] sm:$0xf]
    %v5013 = vld [vmem:[#allocation16 + $0x558] sm:$0xf]
    %v5014 = vld [vmem:[#allocation16 + $0x55c] sm:$0xf]
    %v5015 = vld [vmem:[#allocation16 + $0x560] sm:$0xf]
    %v5016 = vld [vmem:[#allocation16 + $0x564] sm:$0xf]
    %v5017 = vld [vmem:[#allocation16 + $0x568] sm:$0xf]
    %v5018 = vld [vmem:[#allocation16 + $0x56c] sm:$0xf]
    %v5019 = vld [vmem:[#allocation16 + $0x570] sm:$0xf]
    %v5020 = vld [vmem:[#allocation16 + $0x574] sm:$0xf]
    %v5021 = vld [vmem:[#allocation16 + $0x578] sm:$0xf]
    %v5022 = vld [vmem:[#allocation16 + $0x57c] sm:$0xf]
    %v5023 = vld [vmem:[#allocation16 + $0x580] sm:$0xf]
    %v5024 = vld [vmem:[#allocation16 + $0x584] sm:$0xf]
    %v5053 = vunpack.c.l.b16 %v4997
    %v5054 = vunpack.c.l.b16 %v4998
    %v5055 = vunpack.c.l.b16 %v4999
    %v5056 = vunpack.c.l.b16 %v5000
    %v5057 = vunpack.c.l.b16 %v5001
    %v5058 = vunpack.c.l.b16 %v5002
    %v5059 = vunpack.c.l.b16 %v5003
    %v5060 = vunpack.c.l.b16 %v5004
    %v5061 = vunpack.c.l.b16 %v5005
    %v5062 = vunpack.c.l.b16 %v5006
    %v5063 = vunpack.c.l.b16 %v5007
    %v5064 = vunpack.c.l.b16 %v5008
    %v5065 = vunpack.c.l.b16 %v5009
    %v5066 = vunpack.c.l.b16 %v5010
    %v5067 = vunpack.c.l.b16 %v5011
    %v5068 = vunpack.c.l.b16 %v5012
    %v5069 = vunpack.c.l.b16 %v5013
    %v5070 = vunpack.c.l.b16 %v5014
    %v5071 = vunpack.c.l.b16 %v5015
    %v5072 = vunpack.c.l.b16 %v5016
    %v5073 = vunpack.c.l.b16 %v5017
    %v5074 = vunpack.c.l.b16 %v5018
    %v5075 = vunpack.c.l.b16 %v5019
    %v5076 = vunpack.c.l.b16 %v5020
    %v5077 = vunpack.c.l.b16 %v5021
    %v5078 = vunpack.c.l.b16 %v5022
    %v5079 = vunpack.c.l.b16 %v5023
    %v5080 = vunpack.c.l.b16 %v5024
    %v5081 = vpack.c.b16 %v5054, %v5053
    %v5082 = vpack.c.b16 %v5056, %v5055
    %v5083 = vpack.c.b16 %v5058, %v5057
    %v5084 = vpack.c.b16 %v5060, %v5059
    %v5085 = vpack.c.b16 %v5062, %v5061
    %v5086 = vpack.c.b16 %v5064, %v5063
    %v5087 = vpack.c.b16 %v5066, %v5065
    %v5088 = vpack.c.b16 %v5068, %v5067
    %v5089 = vpack.c.b16 %v5070, %v5069
    %v5090 = vpack.c.b16 %v5072, %v5071
    %v5091 = vpack.c.b16 %v5074, %v5073
    %v5092 = vpack.c.b16 %v5076, %v5075
    %v5093 = vpack.c.b16 %v5078, %v5077
    %v5094 = vpack.c.b16 %v5080, %v5079
    %v5110 = vsel %vm2433, %v4994, 0
    %v5113 = vsel %vm2433, %v4996, 0
    %5115 = vmatprep.subr.bf16.mxu0 0
    %5116 = vmatpush1.bf16.msra.mxu0 %v5081
    %5117 = vmatprep.subr.bf16.mxu0 0
    %5118 = vmatpush1.bf16.msra.mxu0 %v5082
    %5119 = vmatprep.subr.bf16.mxu0 0
    %5120 = vmatpush1.bf16.msra.mxu0 %v5083
    %5121 = vmatprep.subr.bf16.mxu0 0
    %5122 = vmatpush1.bf16.msra.mxu0 %v5084
    %5123 = vmatprep.subr.bf16.mxu0 0
    %5124 = vmatpush1.bf16.msra.mxu0 %v5085
    %5125 = vmatprep.subr.bf16.mxu0 0
    %5126 = vmatpush1.bf16.msra.mxu0 %v5086
    %5127 = vmatprep.subr.bf16.mxu0 0
    %5128 = vmatpush1.bf16.msra.mxu0 %v5087
    %5129 = vmatprep.subr.bf16.mxu0 0
    %5130 = vmatpush1.bf16.msra.mxu0 %v5088
    %5131 = vmatprep.subr.bf16.mxu0 0
    %5132 = vmatpush1.bf16.msra.mxu0 %v5089
    %5133 = vmatprep.subr.bf16.mxu0 0
    %5134 = vmatpush1.bf16.msra.mxu0 %v5090
    %5135 = vmatprep.subr.bf16.mxu0 0
    %5136 = vmatpush1.bf16.msra.mxu0 %v5091
    %5137 = vmatprep.subr.bf16.mxu0 0
    %5138 = vmatpush1.bf16.msra.mxu0 %v5092
    %5139 = vmatprep.subr.bf16.mxu0 0
    %5140 = vmatpush1.bf16.msra.mxu0 %v5093
    %5141 = vmatprep.subr.bf16.mxu0 0
    %5142 = vmatpush1.bf16.msra.mxu0 %v5094
    %5143 = vmatprep.subr.bf16.mxu0 0
    %5144 = vmatpush1.bf16.msra.mxu0 0
    %5145 = vmatprep.subr.bf16.mxu0 0
    %5146 = vmatpush1.bf16.msra.mxu0 0
    %5147 = vmatprep.mubr.bf16.mxu0 %v5110
    %5148 = vmatmul.mubr.bf16.gmra.mrb[0].mxu0 %v4993
    %v5149 = vpop.f32.mrb[0].mxu0
    %v5150 = vadd.f32 0.0, %v5149
    %v5151 = vpop.f32.mrb[0].mxu0
    %v5152 = vpop.f32.mrb[0].mxu0
    %v5153 = vadd.f32 0.0, %v5152
    %v5154 = vpop.f32.mrb[0].mxu0
    %5155 = vmatprep.mubr.bf16.mxu0 %v5113
    %5156 = vmatmul.mubr.bf16.gmra.mrb[0].mxu0 %v4995
    %v5157 = vpop.f32.mrb[0].mxu0
    %v5158 = vadd.f32 0.0, %v5157
    %v5159 = vpop.f32.mrb[0].mxu0
    %v5160 = vpop.f32.mrb[0].mxu0
    %v5161 = vadd.f32 0.0, %v5160
    %v5162 = vpop.f32.mrb[0].mxu0
    %5163 = vdwg.mxu0
    %v5164 = vadd.f32 %v4947, %v5150
    %v5165 = vadd.f32 %v4950, %v5153
    %v5166 = vadd.f32 %v4955, %v5158
    %v5167 = vadd.f32 %v4958, %v5161
    %v5168 = vmax.f32 %v5164, 0.0
    %v5169 = vmax.f32 %v5165, 0.0
    %v5170 = vmax.f32 %v5166, 0.0
    %v5171 = vmax.f32 %v5167, 0.0
    %v5176 = vrot.slane %v5168, 7
    %v5177 = vrot.slane %v5169, 7
    %v5178 = vsel %vm58, %v5176, %v5177
    %v5179 = vrot.slane %v5170, 7
    %v5180 = vsel %vm58, %v5177, %v5179
    %v5181 = vrot.slane %v5171, 7
    %v5182 = vsel %vm58, %v5179, %v5181
    %v5187 = vsel %vm58, 0.0, %v5176
    %v5188 = vsel %vm2192, %v5187, 0.0
    %v5189 = vsel %vm2193, %v5178, 0.0
    %v5190 = vsel %vm2194, %v5180, 0.0
    %v5191 = vsel %vm2195, %v5182, 0.0
    %v5192 = vrot.slane %v5168, 1
    %v5193 = vrot.slane %v5169, 1
    %v5194 = vsel %vm380, %v5192, %v5193
    %v5195 = vrot.slane %v5170, 1
    %v5196 = vsel %vm380, %v5193, %v5195
    %v5197 = vrot.slane %v5171, 1
    %v5198 = vsel %vm380, %v5195, %v5197
    %v5203 = vsel %vm380, %v5197, 0.0
    %v5204 = vsel %vm2220, %v5194, 0.0
    %v5205 = vsel %vm2221, %v5196, 0.0
    %v5206 = vsel %vm2222, %v5198, 0.0
    %v5207 = vsel %vm2223, %v5203, 0.0
    %5208 = vrot.lane.b32.xlu0 %v5168, 40
    %v5209 = vpop.permute.xlu0 %5208
    %5210 = vrot.lane.b32.xlu0 %v5169, 40
    %v5211 = vpop.permute.xlu0 %5210
    %5212 = vrot.lane.b32.xlu0 %v5170, 40
    %v5213 = vpop.permute.xlu0 %5212
    %5214 = vrot.lane.b32.xlu0 %v5171, 40
    %v5215 = vpop.permute.xlu0 %5214
    %5224 = vrot.lane.b32.xlu0 %v5204, 80
    %v5225 = vpop.permute.xlu0 %5224
    %5226 = vrot.lane.b32.xlu0 %v5205, 80
    %v5227 = vpop.permute.xlu0 %5226
    %5228 = vrot.lane.b32.xlu0 %v5206, 80
    %v5229 = vpop.permute.xlu0 %5228
    %5230 = vrot.lane.b32.xlu0 %v5207, 80
    %v5231 = vpop.permute.xlu0 %5230
    %v5236 = vsel %vm4153, %v5188, %v5209
    %v5237 = vsel %vm4153, %v5189, %v5211
    %v5238 = vsel %vm4153, %v5190, %v5213
    %v5239 = vsel %vm4153, %v5191, %v5215
    %v5240 = vsel %vm4156, %v5236, %v5225
    %v5241 = vsel %vm4156, %v5237, %v5227
    %v5242 = vsel %vm4156, %v5238, %v5229
    %v5243 = vsel %vm4156, %v5239, %v5231
    %v5244 = vsel %vm3555, %v5240, 1.0
    %v5245 = vsel %vm3555, %v5241, 1.0
    %v5246 = vsel %vm3555, %v5242, 1.0
    %v5247 = vsel %vm3555, %v5243, 1.0
    %v5248 = vpack.c.bf16 %v5245, %v5244
    %v5249 = vpack.c.bf16 %v5247, %v5246
    %v5250 = vld [vmem:[#allocation16 + $0x588] sm:$0xf]
    %v5251 = vld [vmem:[#allocation16 + $0x58c] sm:$0xf]
    %v5252 = vld [vmem:[#allocation16 + $0x590] sm:$0xf]
    %v5253 = vld [vmem:[#allocation16 + $0x594] sm:$0xf]
    %v5254 = vld [vmem:[#allocation16 + $0x598] sm:$0xf]
    %v5255 = vld [vmem:[#allocation16 + $0x59c] sm:$0xf]
    %v5256 = vld [vmem:[#allocation16 + $0x5a0] sm:$0xf]
    %v5257 = vld [vmem:[#allocation16 + $0x5a4] sm:$0xf]
    %v5258 = vld [vmem:[#allocation16 + $0x5a8] sm:$0xf]
    %v5259 = vld [vmem:[#allocation16 + $0x5ac] sm:$0xf]
    %v5260 = vld [vmem:[#allocation16 + $0x5b0] sm:$0xf]
    %v5261 = vld [vmem:[#allocation16 + $0x5b4] sm:$0xf]
    %v5262 = vld [vmem:[#allocation16 + $0x5b8] sm:$0xf]
    %v5263 = vld [vmem:[#allocation16 + $0x5bc] sm:$0xf]
    %v5264 = vld [vmem:[#allocation16 + $0x5c0] sm:$0xf]
    %v5265 = vld [vmem:[#allocation16 + $0x5c4] sm:$0x1]
    %v5282 = vunpack.c.l.b16 %v5250
    %v5283 = vunpack.c.l.b16 %v5251
    %v5284 = vunpack.c.l.b16 %v5252
    %v5285 = vunpack.c.l.b16 %v5253
    %v5286 = vunpack.c.l.b16 %v5254
    %v5287 = vunpack.c.l.b16 %v5255
    %v5288 = vunpack.c.l.b16 %v5256
    %v5289 = vunpack.c.l.b16 %v5257
    %v5290 = vunpack.c.l.b16 %v5258
    %v5291 = vunpack.c.l.b16 %v5259
    %v5292 = vunpack.c.l.b16 %v5260
    %v5293 = vunpack.c.l.b16 %v5261
    %v5294 = vunpack.c.l.b16 %v5262
    %v5295 = vunpack.c.l.b16 %v5263
    %v5296 = vunpack.c.l.b16 %v5264
    %v5297 = vunpack.c.l.b16 %v5265
    %v5298 = vpack.c.b16 %v5283, %v5282
    %v5299 = vpack.c.b16 %v5285, %v5284
    %v5300 = vpack.c.b16 %v5287, %v5286
    %v5301 = vpack.c.b16 %v5289, %v5288
    %v5302 = vpack.c.b16 %v5291, %v5290
    %v5303 = vpack.c.b16 %v5293, %v5292
    %v5304 = vpack.c.b16 %v5295, %v5294
    %v5305 = vpack.c.b16 %v5297, %v5296
    %v5314 = vsel %vm3880, %v5248, 0
    %v5317 = vsel %vm3880, %v5249, 0
    %v5320 = vand.u32 %v5305, %v1172
    %5322 = vmatprep.subr.bf16.mxu0 0
    %5323 = vmatpush1.bf16.msra.mxu0 %v5298
    %5324 = vmatprep.subr.bf16.mxu0 0
    %5325 = vmatpush1.bf16.msra.mxu0 %v5299
    %5326 = vmatprep.subr.bf16.mxu0 0
    %5327 = vmatpush1.bf16.msra.mxu0 %v5300
    %5328 = vmatprep.subr.bf16.mxu0 0
    %5329 = vmatpush1.bf16.msra.mxu0 %v5301
    %5330 = vmatprep.subr.bf16.mxu0 0
    %5331 = vmatpush1.bf16.msra.mxu0 %v5302
    %5332 = vmatprep.subr.bf16.mxu0 0
    %5333 = vmatpush1.bf16.msra.mxu0 %v5303
    %5334 = vmatprep.subr.bf16.mxu0 0
    %5335 = vmatpush1.bf16.msra.mxu0 %v5304
    %5336 = vmatprep.subr.bf16.mxu0 0
    %5337 = vmatpush1.bf16.msra.mxu0 %v5320
    %5338 = vmatprep.subr.bf16.mxu0 0
    %5339 = vmatpush1.bf16.msra.mxu0 0
    %5340 = vmatprep.subr.bf16.mxu0 0
    %5341 = vmatpush1.bf16.msra.mxu0 0
    %5342 = vmatprep.subr.bf16.mxu0 0
    %5343 = vmatpush1.bf16.msra.mxu0 0
    %5344 = vmatprep.subr.bf16.mxu0 0
    %5345 = vmatpush1.bf16.msra.mxu0 0
    %5346 = vmatprep.subr.bf16.mxu0 0
    %5347 = vmatpush1.bf16.msra.mxu0 0
    %5348 = vmatprep.subr.bf16.mxu0 0
    %5349 = vmatpush1.bf16.msra.mxu0 0
    %5350 = vmatprep.subr.bf16.mxu0 0
    %5351 = vmatpush1.bf16.msra.mxu0 0
    %5352 = vmatprep.subr.bf16.mxu0 0
    %5353 = vmatpush1.bf16.msra.mxu0 0
    %5354 = vmatprep.mubr.bf16.mxu0 0
    %5355 = vmatmul.mubr.bf16.gmra.mrb[0].mxu0 %v5314
    %v5356 = vpop.f32.mrb[0].mxu0
    %v5357 = vadd.f32 0.0, %v5356
    %v5358 = vpop.f32.mrb[0].mxu0
    %v5359 = vpop.f32.mrb[0].mxu0
    %v5360 = vadd.f32 0.0, %v5359
    %v5361 = vpop.f32.mrb[0].mxu0
    %5362 = vmatprep.mubr.bf16.mxu0 0
    %5363 = vmatmul.mubr.bf16.gmra.mrb[0].mxu0 %v5317
    %v5364 = vpop.f32.mrb[0].mxu0
    %v5365 = vadd.f32 0.0, %v5364
    %v5366 = vpop.f32.mrb[0].mxu0
    %v5367 = vpop.f32.mrb[0].mxu0
    %v5368 = vadd.f32 0.0, %v5367
    %v5369 = vpop.f32.mrb[0].mxu0
    %5370 = vdwg.mxu0
    %v5371 = vmax.f32 %v5357, 0.0
    %v5372 = vmax.f32 %v5360, 0.0
    %v5373 = vmax.f32 %v5365, 0.0
    %v5374 = vmax.f32 %v5368, 0.0
    %5375 = vst.msk [vmem:[#allocation14] sm:$0xff] %vm4153, %v5371
    %5376 = vst.msk [vmem:[#allocation14 + $0x8] sm:$0xff] %vm4153, %v5372
    %5377 = vst.msk [vmem:[#allocation14 + $0x10] sm:$0xff] %vm4153, %v5373
    %5378 = vst.msk [vmem:[#allocation14 + $0x18] sm:$0xff] %vm4153, %v5374
    %v5379 = vld [vmem:[#allocation3] sm:$0xff]
    %v5380 = vld [vmem:[#allocation3 + $0x8] sm:$0xff]
    %v5381 = vld [vmem:[#allocation3 + $0x10] sm:$0xff]
    %v5382 = vld [vmem:[#allocation3 + $0x18] sm:$0xff]
    %v5383 = vld [vmem:[#allocation3 + $0x20] sm:$0xff]
    %v5384 = vld [vmem:[#allocation3 + $0x28] sm:$0xff]
    %v5385 = vld [vmem:[#allocation3 + $0x30] sm:$0xff]
    %v5386 = vld [vmem:[#allocation3 + $0x38] sm:$0xff]
    %v5387 = vld [vmem:[#allocation6] sm:$0xff]
    %v5388 = vld [vmem:[#allocation6 + $0x8] sm:$0xff]
    %v5389 = vld [vmem:[#allocation6 + $0x10] sm:$0xff]
    %v5390 = vld [vmem:[#allocation6 + $0x18] sm:$0xff]
    %v5391 = vld [vmem:[#allocation6 + $0x20] sm:$0xff]
    %v5392 = vld [vmem:[#allocation6 + $0x28] sm:$0xff]
    %v5393 = vld [vmem:[#allocation6 + $0x30] sm:$0xff]
    %v5394 = vld [vmem:[#allocation6 + $0x38] sm:$0xff]
    %v5395 = vld [vmem:[#allocation16 + $0x9c8] sm:$0xf]
    %v5396 = vld [vmem:[#allocation16 + $0x9cc] sm:$0xf]
    %v5397 = vld [vmem:[#allocation16 + $0x9d0] sm:$0xf]
    %v5398 = vld [vmem:[#allocation16 + $0x9d4] sm:$0xf]
    %v5399 = vld [vmem:[#allocation14] sm:$0xff]
    %v5400 = vld [vmem:[#allocation14 + $0x8] sm:$0xff]
    %v5401 = vpack.c.bf16 %v5400, %v5399
    %v5406 = vunpack.c.l.b16 %v5395
    %v5407 = vunpack.c.l.b16 %v5396
    %v5408 = vunpack.c.l.b16 %v5397
    %v5409 = vunpack.c.l.b16 %v5398
    %v5410 = vpack.c.b16 %v5407, %v5406
    %v5411 = vpack.c.b16 %v5409, %v5408
    %v5413 = vsel %vm1087, %v5410, 0
    %v5416 = vsel %vm1087, %v5411, 0
    %5418 = vmatprep.subr.bf16.mxu0 0
    %5419 = vmatpush1.bf16.msra.mxu0 %v5401
    %5420 = vmatprep.subr.bf16.mxu0 0
    %5421 = vmatpush1.bf16.msra.mxu0 0
    %5422 = vmatprep.subr.bf16.mxu0 0
    %5423 = vmatpush1.bf16.msra.mxu0 0
    %5424 = vmatprep.subr.bf16.mxu0 0
    %5425 = vmatpush1.bf16.msra.mxu0 0
    %5426 = vmatprep.subr.bf16.mxu0 0
    %5427 = vmatpush1.bf16.msra.mxu0 0
    %5428 = vmatprep.subr.bf16.mxu0 0
    %5429 = vmatpush1.bf16.msra.mxu0 0
    %5430 = vmatprep.subr.bf16.mxu0 0
    %5431 = vmatpush1.bf16.msra.mxu0 0
    %5432 = vmatprep.subr.bf16.mxu0 0
    %5433 = vmatpush1.bf16.msra.mxu0 0
    %5434 = vmatprep.subr.bf16.mxu0 0
    %5435 = vmatpush1.bf16.msra.mxu0 0
    %5436 = vmatprep.subr.bf16.mxu0 0
    %5437 = vmatpush1.bf16.msra.mxu0 0
    %5438 = vmatprep.subr.bf16.mxu0 0
    %5439 = vmatpush1.bf16.msra.mxu0 0
    %5440 = vmatprep.subr.bf16.mxu0 0
    %5441 = vmatpush1.bf16.msra.mxu0 0
    %5442 = vmatprep.subr.bf16.mxu0 0
    %5443 = vmatpush1.bf16.msra.mxu0 0
    %5444 = vmatprep.subr.bf16.mxu0 0
    %5445 = vmatpush1.bf16.msra.mxu0 0
    %5446 = vmatprep.subr.bf16.mxu0 0
    %5447 = vmatpush1.bf16.msra.mxu0 0
    %5448 = vmatprep.subr.bf16.mxu0 0
    %5449 = vmatpush1.bf16.msra.mxu0 0
    %5450 = vmatprep.mubr.bf16.mxu0 0
    %5451 = vmatmul.mubr.bf16.gmra.mrb[0].mxu0 %v5413
    %v5452 = vpop.f32.mrb[0].mxu0
    %v5453 = vadd.f32 0.0, %v5452
    %v5454 = vpop.f32.mrb[0].mxu0
    %v5455 = vpop.f32.mrb[0].mxu0
    %v5456 = vadd.f32 0.0, %v5455
    %v5457 = vpop.f32.mrb[0].mxu0
    %5458 = vmatprep.mubr.bf16.mxu0 0
    %5459 = vmatmul.mubr.bf16.gmra.mrb[0].mxu0 %v5416
    %v5460 = vpop.f32.mrb[0].mxu0
    %v5461 = vadd.f32 0.0, %v5460
    %v5462 = vpop.f32.mrb[0].mxu0
    %v5463 = vpop.f32.mrb[0].mxu0
    %v5464 = vadd.f32 0.0, %v5463
    %v5465 = vpop.f32.mrb[0].mxu0
    %5466 = vdwg.mxu0
    %v5467 = vld [vmem:[#allocation14 + $0x10] sm:$0xff]
    %v5468 = vld [vmem:[#allocation14 + $0x18] sm:$0xff]
    %v5469 = vpack.c.bf16 %v5468, %v5467
    %5470 = vmatprep.subr.bf16.mxu0 0
    %5471 = vmatpush1.bf16.msra.mxu0 %v5469
    %5472 = vmatprep.subr.bf16.mxu0 0
    %5473 = vmatpush1.bf16.msra.mxu0 0
    %5474 = vmatprep.subr.bf16.mxu0 0
    %5475 = vmatpush1.bf16.msra.mxu0 0
    %5476 = vmatprep.subr.bf16.mxu0 0
    %5477 = vmatpush1.bf16.msra.mxu0 0
    %5478 = vmatprep.subr.bf16.mxu0 0
    %5479 = vmatpush1.bf16.msra.mxu0 0
    %5480 = vmatprep.subr.bf16.mxu0 0
    %5481 = vmatpush1.bf16.msra.mxu0 0
    %5482 = vmatprep.subr.bf16.mxu0 0
    %5483 = vmatpush1.bf16.msra.mxu0 0
    %5484 = vmatprep.subr.bf16.mxu0 0
    %5485 = vmatpush1.bf16.msra.mxu0 0
    %5486 = vmatprep.subr.bf16.mxu0 0
    %5487 = vmatpush1.bf16.msra.mxu0 0
    %5488 = vmatprep.subr.bf16.mxu0 0
    %5489 = vmatpush1.bf16.msra.mxu0 0
    %5490 = vmatprep.subr.bf16.mxu0 0
    %5491 = vmatpush1.bf16.msra.mxu0 0
    %5492 = vmatprep.subr.bf16.mxu0 0
    %5493 = vmatpush1.bf16.msra.mxu0 0
    %5494 = vmatprep.subr.bf16.mxu0 0
    %5495 = vmatpush1.bf16.msra.mxu0 0
    %5496 = vmatprep.subr.bf16.mxu0 0
    %5497 = vmatpush1.bf16.msra.mxu0 0
    %5498 = vmatprep.subr.bf16.mxu0 0
    %5499 = vmatpush1.bf16.msra.mxu0 0
    %5500 = vmatprep.subr.bf16.mxu0 0
    %5501 = vmatpush1.bf16.msra.mxu0 0
    %5502 = vmatprep.mubr.bf16.mxu0 0
    %5503 = vmatmul.mubr.bf16.gmra.mrb[0].mxu0 %v5413
    %v5504 = vpop.f32.mrb[0].mxu0
    %v5505 = vadd.f32 0.0, %v5504
    %v5506 = vpop.f32.mrb[0].mxu0
    %v5507 = vpop.f32.mrb[0].mxu0
    %v5508 = vadd.f32 0.0, %v5507
    %v5509 = vpop.f32.mrb[0].mxu0
    %5510 = vmatprep.mubr.bf16.mxu0 0
    %5511 = vmatmul.mubr.bf16.gmra.mrb[0].mxu0 %v5416
    %v5512 = vpop.f32.mrb[0].mxu0
    %v5513 = vadd.f32 0.0, %v5512
    %v5514 = vpop.f32.mrb[0].mxu0
    %v5515 = vpop.f32.mrb[0].mxu0
    %v5516 = vadd.f32 0.0, %v5515
    %v5517 = vpop.f32.mrb[0].mxu0
    %5518 = vdwg.mxu0
    %v5519 = vld [vmem:[#allocation16 + $0x998] sm:$0xf]
    %v5520 = vld [vmem:[#allocation16 + $0x99c] sm:$0xf]
    %v5521 = vld [vmem:[#allocation16 + $0x9a0] sm:$0xf]
    %v5522 = vld [vmem:[#allocation16 + $0x9a4] sm:$0xf]
    %v5523 = vld [vmem:[#allocation13] sm:$0xff]
    %v5524 = vpack.c.bf16 %v5523, %v5523
    %v5529 = vunpack.c.l.b16 %v5519
    %v5530 = vunpack.c.l.b16 %v5520
    %v5531 = vunpack.c.l.b16 %v5521
    %v5532 = vunpack.c.l.b16 %v5522
    %v5533 = vpack.c.b16 %v5530, %v5529
    %v5534 = vpack.c.b16 %v5532, %v5531
    %v5536 = vsel %vm622, %v5533, 0
    %v5539 = vsel %vm622, %v5534, 0
    %v5542 = vsel %vm1169, %v5524, 0
    %5544 = vmatprep.subr.bf16.mxu0 0
    %5545 = vmatpush1.bf16.msra.mxu0 %v5542
    %5546 = vmatprep.subr.bf16.mxu0 0
    %5547 = vmatpush1.bf16.msra.mxu0 0
    %5548 = vmatprep.subr.bf16.mxu0 0
    %5549 = vmatpush1.bf16.msra.mxu0 0
    %5550 = vmatprep.subr.bf16.mxu0 0
    %5551 = vmatpush1.bf16.msra.mxu0 0
    %5552 = vmatprep.subr.bf16.mxu0 0
    %5553 = vmatpush1.bf16.msra.mxu0 0
    %5554 = vmatprep.subr.bf16.mxu0 0
    %5555 = vmatpush1.bf16.msra.mxu0 0
    %5556 = vmatprep.subr.bf16.mxu0 0
    %5557 = vmatpush1.bf16.msra.mxu0 0
    %5558 = vmatprep.subr.bf16.mxu0 0
    %5559 = vmatpush1.bf16.msra.mxu0 0
    %5560 = vmatprep.subr.bf16.mxu0 0
    %5561 = vmatpush1.bf16.msra.mxu0 0
    %5562 = vmatprep.subr.bf16.mxu0 0
    %5563 = vmatpush1.bf16.msra.mxu0 0
    %5564 = vmatprep.subr.bf16.mxu0 0
    %5565 = vmatpush1.bf16.msra.mxu0 0
    %5566 = vmatprep.subr.bf16.mxu0 0
    %5567 = vmatpush1.bf16.msra.mxu0 0
    %5568 = vmatprep.subr.bf16.mxu0 0
    %5569 = vmatpush1.bf16.msra.mxu0 0
    %5570 = vmatprep.subr.bf16.mxu0 0
    %5571 = vmatpush1.bf16.msra.mxu0 0
    %5572 = vmatprep.subr.bf16.mxu0 0
    %5573 = vmatpush1.bf16.msra.mxu0 0
    %5574 = vmatprep.subr.bf16.mxu0 0
    %5575 = vmatpush1.bf16.msra.mxu0 0
    %5576 = vmatprep.mubr.bf16.mxu0 0
    %5577 = vmatmul.mubr.bf16.gmra.mrb[0].mxu0 %v5536
    %v5578 = vpop.f32.mrb[0].mxu0
    %v5579 = vadd.f32 0.0, %v5578
    %v5580 = vpop.f32.mrb[0].mxu0
    %v5581 = vpop.f32.mrb[0].mxu0
    %v5582 = vadd.f32 0.0, %v5581
    %v5583 = vpop.f32.mrb[0].mxu0
    %5584 = vmatprep.mubr.bf16.mxu0 0
    %5585 = vmatmul.mubr.bf16.gmra.mrb[0].mxu0 %v5539
    %v5586 = vpop.f32.mrb[0].mxu0
    %v5587 = vadd.f32 0.0, %v5586
    %v5588 = vpop.f32.mrb[0].mxu0
    %v5589 = vpop.f32.mrb[0].mxu0
    %v5590 = vadd.f32 0.0, %v5589
    %v5591 = vpop.f32.mrb[0].mxu0
    %5592 = vdwg.mxu0
    %v5593 = vld [vmem:[#allocation13 + $0x8] sm:$0xff]
    %v5594 = vpack.c.bf16 %v5593, %v5593
    %v5596 = vsel %vm1169, %v5594, 0
    %5598 = vmatprep.subr.bf16.mxu0 0
    %5599 = vmatpush1.bf16.msra.mxu0 %v5596
    %5600 = vmatprep.subr.bf16.mxu0 0
    %5601 = vmatpush1.bf16.msra.mxu0 0
    %5602 = vmatprep.subr.bf16.mxu0 0
    %5603 = vmatpush1.bf16.msra.mxu0 0
    %5604 = vmatprep.subr.bf16.mxu0 0
    %5605 = vmatpush1.bf16.msra.mxu0 0
    %5606 = vmatprep.subr.bf16.mxu0 0
    %5607 = vmatpush1.bf16.msra.mxu0 0
    %5608 = vmatprep.subr.bf16.mxu0 0
    %5609 = vmatpush1.bf16.msra.mxu0 0
    %5610 = vmatprep.subr.bf16.mxu0 0
    %5611 = vmatpush1.bf16.msra.mxu0 0
    %5612 = vmatprep.subr.bf16.mxu0 0
    %5613 = vmatpush1.bf16.msra.mxu0 0
    %5614 = vmatprep.subr.bf16.mxu0 0
    %5615 = vmatpush1.bf16.msra.mxu0 0
    %5616 = vmatprep.subr.bf16.mxu0 0
    %5617 = vmatpush1.bf16.msra.mxu0 0
    %5618 = vmatprep.subr.bf16.mxu0 0
    %5619 = vmatpush1.bf16.msra.mxu0 0
    %5620 = vmatprep.subr.bf16.mxu0 0
    %5621 = vmatpush1.bf16.msra.mxu0 0
    %5622 = vmatprep.subr.bf16.mxu0 0
    %5623 = vmatpush1.bf16.msra.mxu0 0
    %5624 = vmatprep.subr.bf16.mxu0 0
    %5625 = vmatpush1.bf16.msra.mxu0 0
    %5626 = vmatprep.subr.bf16.mxu0 0
    %5627 = vmatpush1.bf16.msra.mxu0 0
    %5628 = vmatprep.subr.bf16.mxu0 0
    %5629 = vmatpush1.bf16.msra.mxu0 0
    %5630 = vmatprep.mubr.bf16.mxu0 0
    %5631 = vmatmul.mubr.bf16.gmra.mrb[0].mxu0 %v5536
    %v5632 = vpop.f32.mrb[0].mxu0
    %v5633 = vadd.f32 0.0, %v5632
    %v5634 = vpop.f32.mrb[0].mxu0
    %v5635 = vpop.f32.mrb[0].mxu0
    %v5636 = vadd.f32 0.0, %v5635
    %v5637 = vpop.f32.mrb[0].mxu0
    %5638 = vmatprep.mubr.bf16.mxu0 0
    %5639 = vmatmul.mubr.bf16.gmra.mrb[0].mxu0 %v5539
    %v5640 = vpop.f32.mrb[0].mxu0
    %v5641 = vadd.f32 0.0, %v5640
    %v5642 = vpop.f32.mrb[0].mxu0
    %v5643 = vpop.f32.mrb[0].mxu0
    %v5644 = vadd.f32 0.0, %v5643
    %v5645 = vpop.f32.mrb[0].mxu0
    %5646 = vdwg.mxu0
    %v5647 = vld [vmem:[#allocation16 + $0x960] sm:$0xf]
    %v5648 = vld [vmem:[#allocation16 + $0x964] sm:$0xf]
    %v5649 = vld [vmem:[#allocation16 + $0x968] sm:$0xf]
    %v5650 = vld [vmem:[#allocation16 + $0x96c] sm:$0xf]
    %v5651 = vld [vmem:[#allocation12] sm:$0xf]
    %v5652 = vpack.c.bf16 %v5651, %v5651
    %v5657 = vunpack.c.l.b16 %v5647
    %v5658 = vunpack.c.l.b16 %v5648
    %v5659 = vunpack.c.l.b16 %v5649
    %v5660 = vunpack.c.l.b16 %v5650
    %v5661 = vpack.c.b16 %v5658, %v5657
    %v5662 = vpack.c.b16 %v5660, %v5659
    %v5664 = vsel %vm605, %v5661, 0
    %v5667 = vsel %vm605, %v5662, 0
    %v5670 = vsel %vm3427, %v5652, 0
    %5672 = vmatprep.subr.bf16.mxu0 0
    %5673 = vmatpush1.bf16.msra.mxu0 %v5670
    %5674 = vmatprep.subr.bf16.mxu0 0
    %5675 = vmatpush1.bf16.msra.mxu0 0
    %5676 = vmatprep.subr.bf16.mxu0 0
    %5677 = vmatpush1.bf16.msra.mxu0 0
    %5678 = vmatprep.subr.bf16.mxu0 0
    %5679 = vmatpush1.bf16.msra.mxu0 0
    %5680 = vmatprep.subr.bf16.mxu0 0
    %5681 = vmatpush1.bf16.msra.mxu0 0
    %5682 = vmatprep.subr.bf16.mxu0 0
    %5683 = vmatpush1.bf16.msra.mxu0 0
    %5684 = vmatprep.subr.bf16.mxu0 0
    %5685 = vmatpush1.bf16.msra.mxu0 0
    %5686 = vmatprep.subr.bf16.mxu0 0
    %5687 = vmatpush1.bf16.msra.mxu0 0
    %5688 = vmatprep.subr.bf16.mxu0 0
    %5689 = vmatpush1.bf16.msra.mxu0 0
    %5690 = vmatprep.subr.bf16.mxu0 0
    %5691 = vmatpush1.bf16.msra.mxu0 0
    %5692 = vmatprep.subr.bf16.mxu0 0
    %5693 = vmatpush1.bf16.msra.mxu0 0
    %5694 = vmatprep.subr.bf16.mxu0 0
    %5695 = vmatpush1.bf16.msra.mxu0 0
    %5696 = vmatprep.subr.bf16.mxu0 0
    %5697 = vmatpush1.bf16.msra.mxu0 0
    %5698 = vmatprep.subr.bf16.mxu0 0
    %5699 = vmatpush1.bf16.msra.mxu0 0
    %5700 = vmatprep.subr.bf16.mxu0 0
    %5701 = vmatpush1.bf16.msra.mxu0 0
    %5702 = vmatprep.subr.bf16.mxu0 0
    %5703 = vmatpush1.bf16.msra.mxu0 0
    %5704 = vmatprep.mubr.bf16.mxu0 0
    %5705 = vmatmul.mubr.bf16.gmra.mrb[0].mxu0 %v5664
    %v5706 = vpop.f32.mrb[0].mxu0
    %v5707 = vadd.f32 0.0, %v5706
    %v5708 = vpop.f32.mrb[0].mxu0
    %v5709 = vpop.f32.mrb[0].mxu0
    %v5710 = vadd.f32 0.0, %v5709
    %v5711 = vpop.f32.mrb[0].mxu0
    %5712 = vmatprep.mubr.bf16.mxu0 0
    %5713 = vmatmul.mubr.bf16.gmra.mrb[0].mxu0 %v5667
    %v5714 = vpop.f32.mrb[0].mxu0
    %v5715 = vadd.f32 0.0, %v5714
    %v5716 = vpop.f32.mrb[0].mxu0
    %v5717 = vpop.f32.mrb[0].mxu0
    %v5718 = vadd.f32 0.0, %v5717
    %v5719 = vpop.f32.mrb[0].mxu0
    %5720 = vdwg.mxu0
    %v5721 = vld [vmem:[#allocation12 + $0x4] sm:$0xf]
    %v5722 = vpack.c.bf16 %v5721, %v5721
    %v5724 = vsel %vm3427, %v5722, 0
    %5726 = vmatprep.subr.bf16.mxu0 0
    %5727 = vmatpush1.bf16.msra.mxu0 %v5724
    %5728 = vmatprep.subr.bf16.mxu0 0
    %5729 = vmatpush1.bf16.msra.mxu0 0
    %5730 = vmatprep.subr.bf16.mxu0 0
    %5731 = vmatpush1.bf16.msra.mxu0 0
    %5732 = vmatprep.subr.bf16.mxu0 0
    %5733 = vmatpush1.bf16.msra.mxu0 0
    %5734 = vmatprep.subr.bf16.mxu0 0
    %5735 = vmatpush1.bf16.msra.mxu0 0
    %5736 = vmatprep.subr.bf16.mxu0 0
    %5737 = vmatpush1.bf16.msra.mxu0 0
    %5738 = vmatprep.subr.bf16.mxu0 0
    %5739 = vmatpush1.bf16.msra.mxu0 0
    %5740 = vmatprep.subr.bf16.mxu0 0
    %5741 = vmatpush1.bf16.msra.mxu0 0
    %5742 = vmatprep.subr.bf16.mxu0 0
    %5743 = vmatpush1.bf16.msra.mxu0 0
    %5744 = vmatprep.subr.bf16.mxu0 0
    %5745 = vmatpush1.bf16.msra.mxu0 0
    %5746 = vmatprep.subr.bf16.mxu0 0
    %5747 = vmatpush1.bf16.msra.mxu0 0
    %5748 = vmatprep.subr.bf16.mxu0 0
    %5749 = vmatpush1.bf16.msra.mxu0 0
    %5750 = vmatprep.subr.bf16.mxu0 0
    %5751 = vmatpush1.bf16.msra.mxu0 0
    %5752 = vmatprep.subr.bf16.mxu0 0
    %5753 = vmatpush1.bf16.msra.mxu0 0
    %5754 = vmatprep.subr.bf16.mxu0 0
    %5755 = vmatpush1.bf16.msra.mxu0 0
    %5756 = vmatprep.subr.bf16.mxu0 0
    %5757 = vmatpush1.bf16.msra.mxu0 0
    %5758 = vmatprep.mubr.bf16.mxu0 0
    %5759 = vmatmul.mubr.bf16.gmra.mrb[0].mxu0 %v5664
    %v5760 = vpop.f32.mrb[0].mxu0
    %v5761 = vadd.f32 0.0, %v5760
    %v5762 = vpop.f32.mrb[0].mxu0
    %v5763 = vpop.f32.mrb[0].mxu0
    %v5764 = vadd.f32 0.0, %v5763
    %v5765 = vpop.f32.mrb[0].mxu0
    %5766 = vmatprep.mubr.bf16.mxu0 0
    %5767 = vmatmul.mubr.bf16.gmra.mrb[0].mxu0 %v5667
    %v5768 = vpop.f32.mrb[0].mxu0
    %v5769 = vadd.f32 0.0, %v5768
    %v5770 = vpop.f32.mrb[0].mxu0
    %v5771 = vpop.f32.mrb[0].mxu0
    %v5772 = vadd.f32 0.0, %v5771
    %v5773 = vpop.f32.mrb[0].mxu0
    %5774 = vdwg.mxu0
    %5783 = vrot.lane.b32.xlu0 %v5387, 8
    %v5784 = vpop.permute.xlu0 %5783
    %5785 = vrot.lane.b32.xlu0 %v5388, 8
    %v5786 = vpop.permute.xlu0 %5785
    %5787 = vrot.lane.b32.xlu0 %v5389, 8
    %v5788 = vpop.permute.xlu0 %5787
    %5789 = vrot.lane.b32.xlu0 %v5390, 8
    %v5790 = vpop.permute.xlu0 %5789
    %5791 = vrot.lane.b32.xlu0 %v5391, 8
    %v5792 = vpop.permute.xlu0 %5791
    %5793 = vrot.lane.b32.xlu0 %v5392, 8
    %v5794 = vpop.permute.xlu0 %5793
    %5795 = vrot.lane.b32.xlu0 %v5393, 8
    %v5796 = vpop.permute.xlu0 %5795
    %5797 = vrot.lane.b32.xlu0 %v5394, 8
    %v5798 = vpop.permute.xlu0 %5797
    %5815 = vrot.lane.b32.xlu0 %v5453, 24
    %v5816 = vpop.permute.xlu0 %5815
    %5817 = vrot.lane.b32.xlu0 %v5456, 24
    %v5818 = vpop.permute.xlu0 %5817
    %5819 = vrot.lane.b32.xlu0 %v5461, 24
    %v5820 = vpop.permute.xlu0 %5819
    %5821 = vrot.lane.b32.xlu0 %v5464, 24
    %v5822 = vpop.permute.xlu0 %5821
    %5823 = vrot.lane.b32.xlu0 %v5505, 24
    %v5824 = vpop.permute.xlu0 %5823
    %5825 = vrot.lane.b32.xlu0 %v5508, 24
    %v5826 = vpop.permute.xlu0 %5825
    %5827 = vrot.lane.b32.xlu0 %v5513, 24
    %v5828 = vpop.permute.xlu0 %5827
    %5829 = vrot.lane.b32.xlu0 %v5516, 24
    %v5830 = vpop.permute.xlu0 %5829
    %5847 = vrot.lane.b32.xlu0 %v5579, 64
    %v5848 = vpop.permute.xlu0 %5847
    %5849 = vrot.lane.b32.xlu0 %v5582, 64
    %v5850 = vpop.permute.xlu0 %5849
    %5851 = vrot.lane.b32.xlu0 %v5587, 64
    %v5852 = vpop.permute.xlu0 %5851
    %5853 = vrot.lane.b32.xlu0 %v5590, 64
    %v5854 = vpop.permute.xlu0 %5853
    %5855 = vrot.lane.b32.xlu0 %v5633, 64
    %v5856 = vpop.permute.xlu0 %5855
    %5857 = vrot.lane.b32.xlu0 %v5636, 64
    %v5858 = vpop.permute.xlu0 %5857
    %5859 = vrot.lane.b32.xlu0 %v5641, 64
    %v5860 = vpop.permute.xlu0 %5859
    %5861 = vrot.lane.b32.xlu0 %v5644, 64
    %v5862 = vpop.permute.xlu0 %5861
    %5879 = vrot.lane.b32.xlu0 %v5707, 104
    %v5880 = vpop.permute.xlu0 %5879
    %5881 = vrot.lane.b32.xlu0 %v5710, 104
    %v5882 = vpop.permute.xlu0 %5881
    %5883 = vrot.lane.b32.xlu0 %v5715, 104
    %v5884 = vpop.permute.xlu0 %5883
    %5885 = vrot.lane.b32.xlu0 %v5718, 104
    %v5886 = vpop.permute.xlu0 %5885
    %5887 = vrot.lane.b32.xlu0 %v5761, 104
    %v5888 = vpop.permute.xlu0 %5887
    %5889 = vrot.lane.b32.xlu0 %v5764, 104
    %v5890 = vpop.permute.xlu0 %5889
    %5891 = vrot.lane.b32.xlu0 %v5769, 104
    %v5892 = vpop.permute.xlu0 %5891
    %5893 = vrot.lane.b32.xlu0 %v5772, 104
    %v5894 = vpop.permute.xlu0 %5893
    %v5903 = vsel %vm622, %v5379, %v5784
    %v5904 = vsel %vm622, %v5380, %v5786
    %v5905 = vsel %vm622, %v5381, %v5788
    %v5906 = vsel %vm622, %v5382, %v5790
    %v5907 = vsel %vm622, %v5383, %v5792
    %v5908 = vsel %vm622, %v5384, %v5794
    %v5909 = vsel %vm622, %v5385, %v5796
    %v5910 = vsel %vm622, %v5386, %v5798
    %v5911 = vsel %vm1104, %v5903, %v5816
    %v5912 = vsel %vm1104, %v5904, %v5818
    %v5913 = vsel %vm1104, %v5905, %v5820
    %v5914 = vsel %vm1104, %v5906, %v5822
    %v5915 = vsel %vm1104, %v5907, %v5824
    %v5916 = vsel %vm1104, %v5908, %v5826
    %v5917 = vsel %vm1104, %v5909, %v5828
    %v5918 = vsel %vm1104, %v5910, %v5830
    %v5919 = vsel %vm2428, %v5911, %v5848
    %v5920 = vsel %vm2428, %v5912, %v5850
    %v5921 = vsel %vm2428, %v5913, %v5852
    %v5922 = vsel %vm2428, %v5914, %v5854
    %v5923 = vsel %vm2428, %v5915, %v5856
    %v5924 = vsel %vm2428, %v5916, %v5858
    %v5925 = vsel %vm2428, %v5917, %v5860
    %v5926 = vsel %vm2428, %v5918, %v5862
    %vm5927 = vcmask 850944
    %v5928 = vsel %vm5927, %v5919, %v5880
    %v5929 = vsel %vm5927, %v5920, %v5882
    %v5930 = vsel %vm5927, %v5921, %v5884
    %v5931 = vsel %vm5927, %v5922, %v5886
    %v5932 = vsel %vm5927, %v5923, %v5888
    %v5933 = vsel %vm5927, %v5924, %v5890
    %v5934 = vsel %vm5927, %v5925, %v5892
    %v5935 = vsel %vm5927, %v5926, %v5894
    %v5936 = vsel %vm5927, %v5880, 1.0
    %v5937 = vsel %vm5927, %v5882, 1.0
    %v5938 = vsel %vm5927, %v5884, 1.0
    %v5939 = vsel %vm5927, %v5886, 1.0
    %v5940 = vsel %vm5927, %v5888, 1.0
    %v5941 = vsel %vm5927, %v5890, 1.0
    %v5942 = vsel %vm5927, %v5892, 1.0
    %v5943 = vsel %vm5927, %v5894, 1.0
    %v5944 = vpack.c.bf16 %v5929, %v5928
    %v5945 = vpack.c.bf16 %v5937, %v5936
    %v5946 = vpack.c.bf16 %v5931, %v5930
    %v5947 = vpack.c.bf16 %v5939, %v5938
    %v5948 = vpack.c.bf16 %v5933, %v5932
    %v5949 = vpack.c.bf16 %v5941, %v5940
    %v5950 = vpack.c.bf16 %v5935, %v5934
    %v5951 = vpack.c.bf16 %v5943, %v5942
    %v5952 = vld [vmem:[#allocation16 + $0x640] sm:$0xf]
    %v5953 = vld [vmem:[#allocation16 + $0x644] sm:$0xf]
    %v5954 = vld [vmem:[#allocation16 + $0x648] sm:$0xf]
    %v5955 = vld [vmem:[#allocation16 + $0x64c] sm:$0xf]
    %v5956 = vld [vmem:[#allocation16 + $0x650] sm:$0xf]
    %v5957 = vld [vmem:[#allocation16 + $0x654] sm:$0xf]
    %v5958 = vld [vmem:[#allocation16 + $0x658] sm:$0xf]
    %v5959 = vld [vmem:[#allocation16 + $0x65c] sm:$0xf]
    %v5960 = vld [vmem:[#allocation16 + $0x660] sm:$0xf]
    %v5961 = vld [vmem:[#allocation16 + $0x664] sm:$0xf]
    %v5962 = vld [vmem:[#allocation16 + $0x668] sm:$0xf]
    %v5963 = vld [vmem:[#allocation16 + $0x66c] sm:$0xf]
    %v5964 = vld [vmem:[#allocation16 + $0x670] sm:$0xf]
    %v5965 = vld [vmem:[#allocation16 + $0x674] sm:$0xf]
    %v5966 = vld [vmem:[#allocation16 + $0x678] sm:$0xf]
    %v5967 = vld [vmem:[#allocation16 + $0x67c] sm:$0xf]
    %v5968 = vld [vmem:[#allocation16 + $0x680] sm:$0xf]
    %v5969 = vld [vmem:[#allocation16 + $0x684] sm:$0xf]
    %v5970 = vld [vmem:[#allocation16 + $0x688] sm:$0xf]
    %v5971 = vld [vmem:[#allocation16 + $0x68c] sm:$0xf]
    %v5972 = vld [vmem:[#allocation16 + $0x690] sm:$0xf]
    %v5973 = vld [vmem:[#allocation16 + $0x694] sm:$0xf]
    %v5974 = vld [vmem:[#allocation16 + $0x698] sm:$0xf]
    %v5975 = vld [vmem:[#allocation16 + $0x69c] sm:$0xf]
    %v5976 = vld [vmem:[#allocation16 + $0x6a0] sm:$0xf]
    %v5977 = vld [vmem:[#allocation16 + $0x6a4] sm:$0xf]
    %v5978 = vld [vmem:[#allocation16 + $0x6a8] sm:$0xf]
    %v5979 = vld [vmem:[#allocation16 + $0x6ac] sm:$0xf]
    %v5980 = vld [vmem:[#allocation16 + $0x6b0] sm:$0xf]
    %v5981 = vld [vmem:[#allocation16 + $0x6b4] sm:$0x1]
    %v5990 = vrot.slane %v5928, 7
    %v5991 = vrot.slane %v5880, 7
    %v5992 = vrot.slane %v5929, 7
    %v5993 = vsel %vm58, %v5990, %v5992
    %v5994 = vrot.slane %v5882, 7
    %v5995 = vsel %vm58, %v5991, %v5994
    %v5996 = vrot.slane %v5930, 7
    %v5997 = vsel %vm58, %v5992, %v5996
    %v5998 = vrot.slane %v5884, 7
    %v5999 = vsel %vm58, %v5994, %v5998
    %v6000 = vrot.slane %v5931, 7
    %v6001 = vsel %vm58, %v5996, %v6000
    %v6002 = vrot.slane %v5886, 7
    %v6003 = vsel %vm58, %v5998, %v6002
    %v6004 = vrot.slane %v5932, 7
    %v6005 = vsel %vm58, %v6000, %v6004
    %v6006 = vrot.slane %v5888, 7
    %v6007 = vsel %vm58, %v6002, %v6006
    %v6008 = vrot.slane %v5933, 7
    %v6009 = vsel %vm58, %v6004, %v6008
    %v6010 = vrot.slane %v5890, 7
    %v6011 = vsel %vm58, %v6006, %v6010
    %v6012 = vrot.slane %v5934, 7
    %v6013 = vsel %vm58, %v6008, %v6012
    %v6014 = vrot.slane %v5892, 7
    %v6015 = vsel %vm58, %v6010, %v6014
    %v6016 = vrot.slane %v5935, 7
    %v6017 = vsel %vm58, %v6012, %v6016
    %v6018 = vrot.slane %v5894, 7
    %v6019 = vsel %vm58, %v6014, %v6018
    %v6036 = vsel %vm58, 0.0, %v5990
    %v6037 = vsel %vm58, 0.0, %v5991
    %v6038 = vsel %vm1538, %v6036, 0.0
    %v6039 = vsel %vm1538, %v6037, 0.0
    %v6040 = vsel %vm1539, %v5993, 0.0
    %v6041 = vsel %vm1539, %v5995, 0.0
    %v6042 = vsel %vm1540, %v5997, 0.0
    %v6043 = vsel %vm1540, %v5999, 0.0
    %v6044 = vsel %vm1541, %v6001, 0.0
    %v6045 = vsel %vm1541, %v6003, 0.0
    %v6046 = vsel %vm1542, %v6005, 0.0
    %v6047 = vsel %vm1542, %v6007, 0.0
    %v6048 = vsel %vm1543, %v6009, 0.0
    %v6049 = vsel %vm1543, %v6011, 0.0
    %v6050 = vsel %vm1544, %v6013, 0.0
    %v6051 = vsel %vm1544, %v6015, 0.0
    %v6052 = vsel %vm1545, %v6017, 0.0
    %v6053 = vsel %vm1545, %v6019, 0.0
    %v6054 = vpack.c.bf16 %v6040, %v6038
    %v6055 = vpack.c.bf16 %v6041, %v6039
    %v6056 = vpack.c.bf16 %v6044, %v6042
    %v6057 = vpack.c.bf16 %v6045, %v6043
    %v6058 = vpack.c.bf16 %v6048, %v6046
    %v6059 = vpack.c.bf16 %v6049, %v6047
    %v6060 = vpack.c.bf16 %v6052, %v6050
    %v6061 = vpack.c.bf16 %v6053, %v6051
    %v6062 = vld [vmem:[#allocation16 + $0x5c8] sm:$0xf]
    %v6063 = vld [vmem:[#allocation16 + $0x5cc] sm:$0xf]
    %v6064 = vld [vmem:[#allocation16 + $0x5d0] sm:$0xf]
    %v6065 = vld [vmem:[#allocation16 + $0x5d4] sm:$0xf]
    %v6066 = vld [vmem:[#allocation16 + $0x5d8] sm:$0xf]
    %v6067 = vld [vmem:[#allocation16 + $0x5dc] sm:$0xf]
    %v6068 = vld [vmem:[#allocation16 + $0x5e0] sm:$0xf]
    %v6069 = vld [vmem:[#allocation16 + $0x5e4] sm:$0xf]
    %v6070 = vld [vmem:[#allocation16 + $0x5e8] sm:$0xf]
    %v6071 = vld [vmem:[#allocation16 + $0x5ec] sm:$0xf]
    %v6072 = vld [vmem:[#allocation16 + $0x5f0] sm:$0xf]
    %v6073 = vld [vmem:[#allocation16 + $0x5f4] sm:$0xf]
    %v6074 = vld [vmem:[#allocation16 + $0x5f8] sm:$0xf]
    %v6075 = vld [vmem:[#allocation16 + $0x5fc] sm:$0xf]
    %v6076 = vld [vmem:[#allocation16 + $0x600] sm:$0xf]
    %v6077 = vld [vmem:[#allocation16 + $0x604] sm:$0xf]
    %v6078 = vld [vmem:[#allocation16 + $0x608] sm:$0xf]
    %v6079 = vld [vmem:[#allocation16 + $0x60c] sm:$0xf]
    %v6080 = vld [vmem:[#allocation16 + $0x610] sm:$0xf]
    %v6081 = vld [vmem:[#allocation16 + $0x614] sm:$0xf]
    %v6082 = vld [vmem:[#allocation16 + $0x618] sm:$0xf]
    %v6083 = vld [vmem:[#allocation16 + $0x61c] sm:$0xf]
    %v6084 = vld [vmem:[#allocation16 + $0x620] sm:$0xf]
    %v6085 = vld [vmem:[#allocation16 + $0x624] sm:$0xf]
    %v6086 = vld [vmem:[#allocation16 + $0x628] sm:$0xf]
    %v6087 = vld [vmem:[#allocation16 + $0x62c] sm:$0xf]
    %v6088 = vld [vmem:[#allocation16 + $0x630] sm:$0xf]
    %v6089 = vld [vmem:[#allocation16 + $0x634] sm:$0xf]
    %v6090 = vld [vmem:[#allocation16 + $0x638] sm:$0xf]
    %v6120 = vunpack.c.l.b16 %v6062
    %v6121 = vunpack.c.l.b16 %v6063
    %v6122 = vunpack.c.l.b16 %v6064
    %v6123 = vunpack.c.l.b16 %v6065
    %v6124 = vunpack.c.l.b16 %v6066
    %v6125 = vunpack.c.l.b16 %v6067
    %v6126 = vunpack.c.l.b16 %v6068
    %v6127 = vunpack.c.l.b16 %v6069
    %v6128 = vunpack.c.l.b16 %v6070
    %v6129 = vunpack.c.l.b16 %v6071
    %v6130 = vunpack.c.l.b16 %v6072
    %v6131 = vunpack.c.l.b16 %v6073
    %v6132 = vunpack.c.l.b16 %v6074
    %v6133 = vunpack.c.l.b16 %v6075
    %v6134 = vunpack.c.l.b16 %v6076
    %v6135 = vunpack.c.l.b16 %v6077
    %v6136 = vunpack.c.l.b16 %v6078
    %v6137 = vunpack.c.l.b16 %v6079
    %v6138 = vunpack.c.l.b16 %v6080
    %v6139 = vunpack.c.l.b16 %v6081
    %v6140 = vunpack.c.l.b16 %v6082
    %v6141 = vunpack.c.l.b16 %v6083
    %v6142 = vunpack.c.l.b16 %v6084
    %v6143 = vunpack.c.l.b16 %v6085
    %v6144 = vunpack.c.l.b16 %v6086
    %v6145 = vunpack.c.l.b16 %v6087
    %v6146 = vunpack.c.l.b16 %v6088
    %v6147 = vunpack.c.l.b16 %v6089
    %v6148 = vunpack.c.l.b16 %v6090
    %v6149 = vpack.c.b16 %v6121, %v6120
    %v6150 = vpack.c.b16 %v6123, %v6122
    %v6151 = vpack.c.b16 %v6125, %v6124
    %v6152 = vpack.c.b16 %v6127, %v6126
    %v6153 = vpack.c.b16 %v6129, %v6128
    %v6154 = vpack.c.b16 %v6131, %v6130
    %v6155 = vpack.c.b16 %v6133, %v6132
    %v6156 = vpack.c.b16 %v6135, %v6134
    %v6157 = vpack.c.b16 %v6137, %v6136
    %v6158 = vpack.c.b16 %v6139, %v6138
    %v6159 = vpack.c.b16 %v6141, %v6140
    %v6160 = vpack.c.b16 %v6143, %v6142
    %v6161 = vpack.c.b16 %v6145, %v6144
    %v6162 = vpack.c.b16 %v6147, %v6146
    %v6163 = vpack.c.b16 %v6148, %v6148
    %v6179 = vsel %vm5927, %v6055, 0
    %v6182 = vsel %vm5927, %v6057, 0
    %v6185 = vsel %vm5927, %v6059, 0
    %v6188 = vsel %vm5927, %v6061, 0
    %v6191 = vsel %vm1169, %v6163, 0
    %6193 = vmatprep.subr.bf16.mxu0 0
    %6194 = vmatpush1.bf16.msra.mxu0 %v6149
    %6195 = vmatprep.subr.bf16.mxu0 0
    %6196 = vmatpush1.bf16.msra.mxu0 %v6150
    %6197 = vmatprep.subr.bf16.mxu0 0
    %6198 = vmatpush1.bf16.msra.mxu0 %v6151
    %6199 = vmatprep.subr.bf16.mxu0 0
    %6200 = vmatpush1.bf16.msra.mxu0 %v6152
    %6201 = vmatprep.subr.bf16.mxu0 0
    %6202 = vmatpush1.bf16.msra.mxu0 %v6153
    %6203 = vmatprep.subr.bf16.mxu0 0
    %6204 = vmatpush1.bf16.msra.mxu0 %v6154
    %6205 = vmatprep.subr.bf16.mxu0 0
    %6206 = vmatpush1.bf16.msra.mxu0 %v6155
    %6207 = vmatprep.subr.bf16.mxu0 0
    %6208 = vmatpush1.bf16.msra.mxu0 %v6156
    %6209 = vmatprep.subr.bf16.mxu0 0
    %6210 = vmatpush1.bf16.msra.mxu0 %v6157
    %6211 = vmatprep.subr.bf16.mxu0 0
    %6212 = vmatpush1.bf16.msra.mxu0 %v6158
    %6213 = vmatprep.subr.bf16.mxu0 0
    %6214 = vmatpush1.bf16.msra.mxu0 %v6159
    %6215 = vmatprep.subr.bf16.mxu0 0
    %6216 = vmatpush1.bf16.msra.mxu0 %v6160
    %6217 = vmatprep.subr.bf16.mxu0 0
    %6218 = vmatpush1.bf16.msra.mxu0 %v6161
    %6219 = vmatprep.subr.bf16.mxu0 0
    %6220 = vmatpush1.bf16.msra.mxu0 %v6162
    %6221 = vmatprep.subr.bf16.mxu0 0
    %6222 = vmatpush1.bf16.msra.mxu0 %v6191
    %6223 = vmatprep.subr.bf16.mxu0 0
    %6224 = vmatpush1.bf16.msra.mxu0 0
    %6225 = vmatprep.mubr.bf16.mxu0 %v6179
    %6226 = vmatmul.mubr.bf16.gmra.mrb[0].mxu0 %v6054
    %v6227 = vpop.f32.mrb[0].mxu0
    %v6228 = vadd.f32 0.0, %v6227
    %v6229 = vpop.f32.mrb[0].mxu0
    %v6230 = vpop.f32.mrb[0].mxu0
    %v6231 = vadd.f32 0.0, %v6230
    %v6232 = vpop.f32.mrb[0].mxu0
    %6233 = vmatprep.mubr.bf16.mxu0 %v6182
    %6234 = vmatmul.mubr.bf16.gmra.mrb[0].mxu0 %v6056
    %v6235 = vpop.f32.mrb[0].mxu0
    %v6236 = vadd.f32 0.0, %v6235
    %v6237 = vpop.f32.mrb[0].mxu0
    %v6238 = vpop.f32.mrb[0].mxu0
    %v6239 = vadd.f32 0.0, %v6238
    %v6240 = vpop.f32.mrb[0].mxu0
    %6241 = vmatprep.mubr.bf16.mxu0 %v6185
    %6242 = vmatmul.mubr.bf16.gmra.mrb[0].mxu0 %v6058
    %v6243 = vpop.f32.mrb[0].mxu0
    %v6244 = vadd.f32 0.0, %v6243
    %v6245 = vpop.f32.mrb[0].mxu0
    %v6246 = vpop.f32.mrb[0].mxu0
    %v6247 = vadd.f32 0.0, %v6246
    %v6248 = vpop.f32.mrb[0].mxu0
    %6249 = vmatprep.mubr.bf16.mxu0 %v6188
    %6250 = vmatmul.mubr.bf16.gmra.mrb[0].mxu0 %v6060
    %v6251 = vpop.f32.mrb[0].mxu0
    %v6252 = vadd.f32 0.0, %v6251
    %v6253 = vpop.f32.mrb[0].mxu0
    %v6254 = vpop.f32.mrb[0].mxu0
    %v6255 = vadd.f32 0.0, %v6254
    %v6256 = vpop.f32.mrb[0].mxu0
    %6257 = vdwg.mxu0
    %v6288 = vunpack.c.l.b16 %v5952
    %v6289 = vunpack.c.l.b16 %v5953
    %v6290 = vunpack.c.l.b16 %v5954
    %v6291 = vunpack.c.l.b16 %v5955
    %v6292 = vunpack.c.l.b16 %v5956
    %v6293 = vunpack.c.l.b16 %v5957
    %v6294 = vunpack.c.l.b16 %v5958
    %v6295 = vunpack.c.l.b16 %v5959
    %v6296 = vunpack.c.l.b16 %v5960
    %v6297 = vunpack.c.l.b16 %v5961
    %v6298 = vunpack.c.l.b16 %v5962
    %v6299 = vunpack.c.l.b16 %v5963
    %v6300 = vunpack.c.l.b16 %v5964
    %v6301 = vunpack.c.l.b16 %v5965
    %v6302 = vunpack.c.l.b16 %v5966
    %v6303 = vunpack.c.l.b16 %v5967
    %v6304 = vunpack.c.l.b16 %v5968
    %v6305 = vunpack.c.l.b16 %v5969
    %v6306 = vunpack.c.l.b16 %v5970
    %v6307 = vunpack.c.l.b16 %v5971
    %v6308 = vunpack.c.l.b16 %v5972
    %v6309 = vunpack.c.l.b16 %v5973
    %v6310 = vunpack.c.l.b16 %v5974
    %v6311 = vunpack.c.l.b16 %v5975
    %v6312 = vunpack.c.l.b16 %v5976
    %v6313 = vunpack.c.l.b16 %v5977
    %v6314 = vunpack.c.l.b16 %v5978
    %v6315 = vunpack.c.l.b16 %v5979
    %v6316 = vunpack.c.l.b16 %v5980
    %v6317 = vunpack.c.l.b16 %v5981
    %v6318 = vpack.c.b16 %v6289, %v6288
    %v6319 = vpack.c.b16 %v6291, %v6290
    %v6320 = vpack.c.b16 %v6293, %v6292
    %v6321 = vpack.c.b16 %v6295, %v6294
    %v6322 = vpack.c.b16 %v6297, %v6296
    %v6323 = vpack.c.b16 %v6299, %v6298
    %v6324 = vpack.c.b16 %v6301, %v6300
    %v6325 = vpack.c.b16 %v6303, %v6302
    %v6326 = vpack.c.b16 %v6305, %v6304
    %v6327 = vpack.c.b16 %v6307, %v6306
    %v6328 = vpack.c.b16 %v6309, %v6308
    %v6329 = vpack.c.b16 %v6311, %v6310
    %v6330 = vpack.c.b16 %v6313, %v6312
    %v6331 = vpack.c.b16 %v6315, %v6314
    %v6332 = vpack.c.b16 %v6317, %v6316
    %vm6347 = vcmask 859136
    %v6349 = vsel %vm6347, %v5945, 0
    %v6352 = vsel %vm6347, %v5947, 0
    %v6355 = vsel %vm6347, %v5949, 0
    %v6358 = vsel %vm6347, %v5951, 0
    %v6361 = vand.u32 %v6332, %v1172
    %6363 = vmatprep.subr.bf16.mxu0 0
    %6364 = vmatpush1.bf16.msra.mxu0 %v6318
    %6365 = vmatprep.subr.bf16.mxu0 0
    %6366 = vmatpush1.bf16.msra.mxu0 %v6319
    %6367 = vmatprep.subr.bf16.mxu0 0
    %6368 = vmatpush1.bf16.msra.mxu0 %v6320
    %6369 = vmatprep.subr.bf16.mxu0 0
    %6370 = vmatpush1.bf16.msra.mxu0 %v6321
    %6371 = vmatprep.subr.bf16.mxu0 0
    %6372 = vmatpush1.bf16.msra.mxu0 %v6322
    %6373 = vmatprep.subr.bf16.mxu0 0
    %6374 = vmatpush1.bf16.msra.mxu0 %v6323
    %6375 = vmatprep.subr.bf16.mxu0 0
    %6376 = vmatpush1.bf16.msra.mxu0 %v6324
    %6377 = vmatprep.subr.bf16.mxu0 0
    %6378 = vmatpush1.bf16.msra.mxu0 %v6325
    %6379 = vmatprep.subr.bf16.mxu0 0
    %6380 = vmatpush1.bf16.msra.mxu0 %v6326
    %6381 = vmatprep.subr.bf16.mxu0 0
    %6382 = vmatpush1.bf16.msra.mxu0 %v6327
    %6383 = vmatprep.subr.bf16.mxu0 0
    %6384 = vmatpush1.bf16.msra.mxu0 %v6328
    %6385 = vmatprep.subr.bf16.mxu0 0
    %6386 = vmatpush1.bf16.msra.mxu0 %v6329
    %6387 = vmatprep.subr.bf16.mxu0 0
    %6388 = vmatpush1.bf16.msra.mxu0 %v6330
    %6389 = vmatprep.subr.bf16.mxu0 0
    %6390 = vmatpush1.bf16.msra.mxu0 %v6331
    %6391 = vmatprep.subr.bf16.mxu0 0
    %6392 = vmatpush1.bf16.msra.mxu0 %v6361
    %6393 = vmatprep.subr.bf16.mxu0 0
    %6394 = vmatpush1.bf16.msra.mxu0 0
    %6395 = vmatprep.mubr.bf16.mxu0 %v6349
    %6396 = vmatmul.mubr.bf16.gmra.mrb[0].mxu0 %v5944
    %v6397 = vpop.f32.mrb[0].mxu0
    %v6398 = vadd.f32 %v6228, %v6397
    %v6399 = vpop.f32.mrb[0].mxu0
    %v6400 = vpop.f32.mrb[0].mxu0
    %v6401 = vadd.f32 %v6231, %v6400
    %v6402 = vpop.f32.mrb[0].mxu0
    %6403 = vmatprep.mubr.bf16.mxu0 %v6352
    %6404 = vmatmul.mubr.bf16.gmra.mrb[0].mxu0 %v5946
    %v6405 = vpop.f32.mrb[0].mxu0
    %v6406 = vadd.f32 %v6236, %v6405
    %v6407 = vpop.f32.mrb[0].mxu0
    %v6408 = vpop.f32.mrb[0].mxu0
    %v6409 = vadd.f32 %v6239, %v6408
    %v6410 = vpop.f32.mrb[0].mxu0
    %6411 = vmatprep.mubr.bf16.mxu0 %v6355
    %6412 = vmatmul.mubr.bf16.gmra.mrb[0].mxu0 %v5948
    %v6413 = vpop.f32.mrb[0].mxu0
    %v6414 = vadd.f32 %v6244, %v6413
    %v6415 = vpop.f32.mrb[0].mxu0
    %v6416 = vpop.f32.mrb[0].mxu0
    %v6417 = vadd.f32 %v6247, %v6416
    %v6418 = vpop.f32.mrb[0].mxu0
    %6419 = vmatprep.mubr.bf16.mxu0 %v6358
    %6420 = vmatmul.mubr.bf16.gmra.mrb[0].mxu0 %v5950
    %v6421 = vpop.f32.mrb[0].mxu0
    %v6422 = vadd.f32 %v6252, %v6421
    %v6423 = vpop.f32.mrb[0].mxu0
    %v6424 = vpop.f32.mrb[0].mxu0
    %v6425 = vadd.f32 %v6255, %v6424
    %v6426 = vpop.f32.mrb[0].mxu0
    %6427 = vdwg.mxu0
    %v6428 = vrot.slane %v5928, 1
    %v6429 = vrot.slane %v5929, 1
    %v6430 = vsel %vm380, %v6428, %v6429
    %v6431 = vrot.slane %v5880, 1
    %v6432 = vrot.slane %v5882, 1
    %v6433 = vsel %vm380, %v6431, %v6432
    %v6434 = vrot.slane %v5930, 1
    %v6435 = vsel %vm380, %v6429, %v6434
    %v6436 = vrot.slane %v5884, 1
    %v6437 = vsel %vm380, %v6432, %v6436
    %v6438 = vrot.slane %v5931, 1
    %v6439 = vsel %vm380, %v6434, %v6438
    %v6440 = vrot.slane %v5886, 1
    %v6441 = vsel %vm380, %v6436, %v6440
    %v6442 = vrot.slane %v5932, 1
    %v6443 = vsel %vm380, %v6438, %v6442
    %v6444 = vrot.slane %v5888, 1
    %v6445 = vsel %vm380, %v6440, %v6444
    %v6446 = vrot.slane %v5933, 1
    %v6447 = vsel %vm380, %v6442, %v6446
    %v6448 = vrot.slane %v5890, 1
    %v6449 = vsel %vm380, %v6444, %v6448
    %v6450 = vrot.slane %v5934, 1
    %v6451 = vsel %vm380, %v6446, %v6450
    %v6452 = vrot.slane %v5892, 1
    %v6453 = vsel %vm380, %v6448, %v6452
    %v6454 = vrot.slane %v5935, 1
    %v6455 = vsel %vm380, %v6450, %v6454
    %v6456 = vrot.slane %v5894, 1
    %v6457 = vsel %vm380, %v6452, %v6456
    %v6474 = vsel %vm380, %v6454, 0.0
    %v6475 = vsel %vm380, %v6456, 0.0
    %v6476 = vsel %vm1594, %v6430, 0.0
    %v6477 = vsel %vm1594, %v6433, 0.0
    %v6478 = vsel %vm1595, %v6435, 0.0
    %v6479 = vsel %vm1595, %v6437, 0.0
    %v6480 = vsel %vm1596, %v6439, 0.0
    %v6481 = vsel %vm1596, %v6441, 0.0
    %v6482 = vsel %vm1597, %v6443, 0.0
    %v6483 = vsel %vm1597, %v6445, 0.0
    %v6484 = vsel %vm1598, %v6447, 0.0
    %v6485 = vsel %vm1598, %v6449, 0.0
    %v6486 = vsel %vm1599, %v6451, 0.0
    %v6487 = vsel %vm1599, %v6453, 0.0
    %v6488 = vsel %vm1600, %v6455, 0.0
    %v6489 = vsel %vm1600, %v6457, 0.0
    %v6490 = vsel %vm1601, %v6474, 0.0
    %v6491 = vsel %vm1601, %v6475, 0.0
    %v6492 = vpack.c.bf16 %v6478, %v6476
    %v6493 = vpack.c.bf16 %v6479, %v6477
    %v6494 = vpack.c.bf16 %v6482, %v6480
    %v6495 = vpack.c.bf16 %v6483, %v6481
    %v6496 = vpack.c.bf16 %v6486, %v6484
    %v6497 = vpack.c.bf16 %v6487, %v6485
    %v6498 = vpack.c.bf16 %v6490, %v6488
    %v6499 = vpack.c.bf16 %v6491, %v6489
    %v6500 = vld [vmem:[#allocation16 + $0x6b8] sm:$0xf]
    %v6501 = vld [vmem:[#allocation16 + $0x6bc] sm:$0xf]
    %v6502 = vld [vmem:[#allocation16 + $0x6c0] sm:$0xf]
    %v6503 = vld [vmem:[#allocation16 + $0x6c4] sm:$0xf]
    %v6504 = vld [vmem:[#allocation16 + $0x6c8] sm:$0xf]
    %v6505 = vld [vmem:[#allocation16 + $0x6cc] sm:$0xf]
    %v6506 = vld [vmem:[#allocation16 + $0x6d0] sm:$0xf]
    %v6507 = vld [vmem:[#allocation16 + $0x6d4] sm:$0xf]
    %v6508 = vld [vmem:[#allocation16 + $0x6d8] sm:$0xf]
    %v6509 = vld [vmem:[#allocation16 + $0x6dc] sm:$0xf]
    %v6510 = vld [vmem:[#allocation16 + $0x6e0] sm:$0xf]
    %v6511 = vld [vmem:[#allocation16 + $0x6e4] sm:$0xf]
    %v6512 = vld [vmem:[#allocation16 + $0x6e8] sm:$0xf]
    %v6513 = vld [vmem:[#allocation16 + $0x6ec] sm:$0xf]
    %v6514 = vld [vmem:[#allocation16 + $0x6f0] sm:$0xf]
    %v6515 = vld [vmem:[#allocation16 + $0x6f4] sm:$0xf]
    %v6516 = vld [vmem:[#allocation16 + $0x6f8] sm:$0xf]
    %v6517 = vld [vmem:[#allocation16 + $0x6fc] sm:$0xf]
    %v6518 = vld [vmem:[#allocation16 + $0x700] sm:$0xf]
    %v6519 = vld [vmem:[#allocation16 + $0x704] sm:$0xf]
    %v6520 = vld [vmem:[#allocation16 + $0x708] sm:$0xf]
    %v6521 = vld [vmem:[#allocation16 + $0x70c] sm:$0xf]
    %v6522 = vld [vmem:[#allocation16 + $0x710] sm:$0xf]
    %v6523 = vld [vmem:[#allocation16 + $0x714] sm:$0xf]
    %v6524 = vld [vmem:[#allocation16 + $0x718] sm:$0xf]
    %v6525 = vld [vmem:[#allocation16 + $0x71c] sm:$0xf]
    %v6526 = vld [vmem:[#allocation16 + $0x720] sm:$0xf]
    %v6527 = vld [vmem:[#allocation16 + $0x724] sm:$0xf]
    %v6528 = vld [vmem:[#allocation16 + $0x728] sm:$0xf]
    %v6558 = vunpack.c.l.b16 %v6500
    %v6559 = vunpack.c.l.b16 %v6501
    %v6560 = vunpack.c.l.b16 %v6502
    %v6561 = vunpack.c.l.b16 %v6503
    %v6562 = vunpack.c.l.b16 %v6504
    %v6563 = vunpack.c.l.b16 %v6505
    %v6564 = vunpack.c.l.b16 %v6506
    %v6565 = vunpack.c.l.b16 %v6507
    %v6566 = vunpack.c.l.b16 %v6508
    %v6567 = vunpack.c.l.b16 %v6509
    %v6568 = vunpack.c.l.b16 %v6510
    %v6569 = vunpack.c.l.b16 %v6511
    %v6570 = vunpack.c.l.b16 %v6512
    %v6571 = vunpack.c.l.b16 %v6513
    %v6572 = vunpack.c.l.b16 %v6514
    %v6573 = vunpack.c.l.b16 %v6515
    %v6574 = vunpack.c.l.b16 %v6516
    %v6575 = vunpack.c.l.b16 %v6517
    %v6576 = vunpack.c.l.b16 %v6518
    %v6577 = vunpack.c.l.b16 %v6519
    %v6578 = vunpack.c.l.b16 %v6520
    %v6579 = vunpack.c.l.b16 %v6521
    %v6580 = vunpack.c.l.b16 %v6522
    %v6581 = vunpack.c.l.b16 %v6523
    %v6582 = vunpack.c.l.b16 %v6524
    %v6583 = vunpack.c.l.b16 %v6525
    %v6584 = vunpack.c.l.b16 %v6526
    %v6585 = vunpack.c.l.b16 %v6527
    %v6586 = vunpack.c.l.b16 %v6528
    %v6587 = vpack.c.b16 %v6559, %v6558
    %v6588 = vpack.c.b16 %v6561, %v6560
    %v6589 = vpack.c.b16 %v6563, %v6562
    %v6590 = vpack.c.b16 %v6565, %v6564
    %v6591 = vpack.c.b16 %v6567, %v6566
    %v6592 = vpack.c.b16 %v6569, %v6568
    %v6593 = vpack.c.b16 %v6571, %v6570
    %v6594 = vpack.c.b16 %v6573, %v6572
    %v6595 = vpack.c.b16 %v6575, %v6574
    %v6596 = vpack.c.b16 %v6577, %v6576
    %v6597 = vpack.c.b16 %v6579, %v6578
    %v6598 = vpack.c.b16 %v6581, %v6580
    %v6599 = vpack.c.b16 %v6583, %v6582
    %v6600 = vpack.c.b16 %v6585, %v6584
    %v6601 = vpack.c.b16 %v6586, %v6586
    %v6617 = vsel %vm5927, %v6493, 0
    %v6620 = vsel %vm5927, %v6495, 0
    %v6623 = vsel %vm5927, %v6497, 0
    %v6626 = vsel %vm5927, %v6499, 0
    %v6629 = vsel %vm1169, %v6601, 0
    %6631 = vmatprep.subr.bf16.mxu0 0
    %6632 = vmatpush1.bf16.msra.mxu0 %v6587
    %6633 = vmatprep.subr.bf16.mxu0 0
    %6634 = vmatpush1.bf16.msra.mxu0 %v6588
    %6635 = vmatprep.subr.bf16.mxu0 0
    %6636 = vmatpush1.bf16.msra.mxu0 %v6589
    %6637 = vmatprep.subr.bf16.mxu0 0
    %6638 = vmatpush1.bf16.msra.mxu0 %v6590
    %6639 = vmatprep.subr.bf16.mxu0 0
    %6640 = vmatpush1.bf16.msra.mxu0 %v6591
    %6641 = vmatprep.subr.bf16.mxu0 0
    %6642 = vmatpush1.bf16.msra.mxu0 %v6592
    %6643 = vmatprep.subr.bf16.mxu0 0
    %6644 = vmatpush1.bf16.msra.mxu0 %v6593
    %6645 = vmatprep.subr.bf16.mxu0 0
    %6646 = vmatpush1.bf16.msra.mxu0 %v6594
    %6647 = vmatprep.subr.bf16.mxu0 0
    %6648 = vmatpush1.bf16.msra.mxu0 %v6595
    %6649 = vmatprep.subr.bf16.mxu0 0
    %6650 = vmatpush1.bf16.msra.mxu0 %v6596
    %6651 = vmatprep.subr.bf16.mxu0 0
    %6652 = vmatpush1.bf16.msra.mxu0 %v6597
    %6653 = vmatprep.subr.bf16.mxu0 0
    %6654 = vmatpush1.bf16.msra.mxu0 %v6598
    %6655 = vmatprep.subr.bf16.mxu0 0
    %6656 = vmatpush1.bf16.msra.mxu0 %v6599
    %6657 = vmatprep.subr.bf16.mxu0 0
    %6658 = vmatpush1.bf16.msra.mxu0 %v6600
    %6659 = vmatprep.subr.bf16.mxu0 0
    %6660 = vmatpush1.bf16.msra.mxu0 %v6629
    %6661 = vmatprep.subr.bf16.mxu0 0
    %6662 = vmatpush1.bf16.msra.mxu0 0
    %6663 = vmatprep.mubr.bf16.mxu0 %v6617
    %6664 = vmatmul.mubr.bf16.gmra.mrb[0].mxu0 %v6492
    %v6665 = vpop.f32.mrb[0].mxu0
    %v6666 = vadd.f32 0.0, %v6665
    %v6667 = vpop.f32.mrb[0].mxu0
    %v6668 = vpop.f32.mrb[0].mxu0
    %v6669 = vadd.f32 0.0, %v6668
    %v6670 = vpop.f32.mrb[0].mxu0
    %6671 = vmatprep.mubr.bf16.mxu0 %v6620
    %6672 = vmatmul.mubr.bf16.gmra.mrb[0].mxu0 %v6494
    %v6673 = vpop.f32.mrb[0].mxu0
    %v6674 = vadd.f32 0.0, %v6673
    %v6675 = vpop.f32.mrb[0].mxu0
    %v6676 = vpop.f32.mrb[0].mxu0
    %v6677 = vadd.f32 0.0, %v6676
    %v6678 = vpop.f32.mrb[0].mxu0
    %6679 = vmatprep.mubr.bf16.mxu0 %v6623
    %6680 = vmatmul.mubr.bf16.gmra.mrb[0].mxu0 %v6496
    %v6681 = vpop.f32.mrb[0].mxu0
    %v6682 = vadd.f32 0.0, %v6681
    %v6683 = vpop.f32.mrb[0].mxu0
    %v6684 = vpop.f32.mrb[0].mxu0
    %v6685 = vadd.f32 0.0, %v6684
    %v6686 = vpop.f32.mrb[0].mxu0
    %6687 = vmatprep.mubr.bf16.mxu0 %v6626
    %6688 = vmatmul.mubr.bf16.gmra.mrb[0].mxu0 %v6498
    %v6689 = vpop.f32.mrb[0].mxu0
    %v6690 = vadd.f32 0.0, %v6689
    %v6691 = vpop.f32.mrb[0].mxu0
    %v6692 = vpop.f32.mrb[0].mxu0
    %v6693 = vadd.f32 0.0, %v6692
    %v6694 = vpop.f32.mrb[0].mxu0
    %6695 = vdwg.mxu0
    %v6696 = vadd.f32 %v6398, %v6666
    %v6697 = vadd.f32 %v6401, %v6669
    %v6698 = vadd.f32 %v6406, %v6674
    %v6699 = vadd.f32 %v6409, %v6677
    %v6700 = vadd.f32 %v6414, %v6682
    %v6701 = vadd.f32 %v6417, %v6685
    %v6702 = vadd.f32 %v6422, %v6690
    %v6703 = vadd.f32 %v6425, %v6693
    %v6704 = vmax.f32 %v6696, 0.0
    %v6705 = vmax.f32 %v6697, 0.0
    %v6706 = vmax.f32 %v6698, 0.0
    %v6707 = vmax.f32 %v6699, 0.0
    %v6708 = vmax.f32 %v6700, 0.0
    %v6709 = vmax.f32 %v6701, 0.0
    %v6710 = vmax.f32 %v6702, 0.0
    %v6711 = vmax.f32 %v6703, 0.0
    %v6720 = vrot.slane %v6704, 7
    %v6721 = vrot.slane %v6705, 7
    %v6722 = vsel %vm58, %v6720, %v6721
    %v6723 = vrot.slane %v6706, 7
    %v6724 = vsel %vm58, %v6721, %v6723
    %v6725 = vrot.slane %v6707, 7
    %v6726 = vsel %vm58, %v6723, %v6725
    %v6727 = vrot.slane %v6708, 7
    %v6728 = vsel %vm58, %v6725, %v6727
    %v6729 = vrot.slane %v6709, 7
    %v6730 = vsel %vm58, %v6727, %v6729
    %v6731 = vrot.slane %v6710, 7
    %v6732 = vsel %vm58, %v6729, %v6731
    %v6733 = vrot.slane %v6711, 7
    %v6734 = vsel %vm58, %v6731, %v6733
    %v6743 = vsel %vm58, 0.0, %v6720
    %v6744 = vsel %vm1538, %v6743, 0.0
    %v6745 = vsel %vm1539, %v6722, 0.0
    %v6746 = vsel %vm1540, %v6724, 0.0
    %v6747 = vsel %vm1541, %v6726, 0.0
    %v6748 = vsel %vm1542, %v6728, 0.0
    %v6749 = vsel %vm1543, %v6730, 0.0
    %v6750 = vsel %vm1544, %v6732, 0.0
    %v6751 = vsel %vm1545, %v6734, 0.0
    %v6752 = vrot.slane %v6704, 1
    %v6753 = vrot.slane %v6705, 1
    %v6754 = vsel %vm380, %v6752, %v6753
    %v6755 = vrot.slane %v6706, 1
    %v6756 = vsel %vm380, %v6753, %v6755
    %v6757 = vrot.slane %v6707, 1
    %v6758 = vsel %vm380, %v6755, %v6757
    %v6759 = vrot.slane %v6708, 1
    %v6760 = vsel %vm380, %v6757, %v6759
    %v6761 = vrot.slane %v6709, 1
    %v6762 = vsel %vm380, %v6759, %v6761
    %v6763 = vrot.slane %v6710, 1
    %v6764 = vsel %vm380, %v6761, %v6763
    %v6765 = vrot.slane %v6711, 1
    %v6766 = vsel %vm380, %v6763, %v6765
    %v6775 = vsel %vm380, %v6765, 0.0
    %v6776 = vsel %vm1594, %v6754, 0.0
    %v6777 = vsel %vm1595, %v6756, 0.0
    %v6778 = vsel %vm1596, %v6758, 0.0
    %v6779 = vsel %vm1597, %v6760, 0.0
    %v6780 = vsel %vm1598, %v6762, 0.0
    %v6781 = vsel %vm1599, %v6764, 0.0
    %v6782 = vsel %vm1600, %v6766, 0.0
    %v6783 = vsel %vm1601, %v6775, 0.0
    %6784 = vrot.lane.b32.xlu0 %v6704, 40
    %v6785 = vpop.permute.xlu0 %6784
    %6786 = vrot.lane.b32.xlu0 %v6705, 40
    %v6787 = vpop.permute.xlu0 %6786
    %6788 = vrot.lane.b32.xlu0 %v6706, 40
    %v6789 = vpop.permute.xlu0 %6788
    %6790 = vrot.lane.b32.xlu0 %v6707, 40
    %v6791 = vpop.permute.xlu0 %6790
    %6792 = vrot.lane.b32.xlu0 %v6708, 40
    %v6793 = vpop.permute.xlu0 %6792
    %6794 = vrot.lane.b32.xlu0 %v6709, 40
    %v6795 = vpop.permute.xlu0 %6794
    %6796 = vrot.lane.b32.xlu0 %v6710, 40
    %v6797 = vpop.permute.xlu0 %6796
    %6798 = vrot.lane.b32.xlu0 %v6711, 40
    %v6799 = vpop.permute.xlu0 %6798
    %6816 = vrot.lane.b32.xlu0 %v6776, 80
    %v6817 = vpop.permute.xlu0 %6816
    %6818 = vrot.lane.b32.xlu0 %v6777, 80
    %v6819 = vpop.permute.xlu0 %6818
    %6820 = vrot.lane.b32.xlu0 %v6778, 80
    %v6821 = vpop.permute.xlu0 %6820
    %6822 = vrot.lane.b32.xlu0 %v6779, 80
    %v6823 = vpop.permute.xlu0 %6822
    %6824 = vrot.lane.b32.xlu0 %v6780, 80
    %v6825 = vpop.permute.xlu0 %6824
    %6826 = vrot.lane.b32.xlu0 %v6781, 80
    %v6827 = vpop.permute.xlu0 %6826
    %6828 = vrot.lane.b32.xlu0 %v6782, 80
    %v6829 = vpop.permute.xlu0 %6828
    %6830 = vrot.lane.b32.xlu0 %v6783, 80
    %v6831 = vpop.permute.xlu0 %6830
    %v6840 = vsel %vm4153, %v6744, %v6785
    %v6841 = vsel %vm4153, %v6745, %v6787
    %v6842 = vsel %vm4153, %v6746, %v6789
    %v6843 = vsel %vm4153, %v6747, %v6791
    %v6844 = vsel %vm4153, %v6748, %v6793
    %v6845 = vsel %vm4153, %v6749, %v6795
    %v6846 = vsel %vm4153, %v6750, %v6797
    %v6847 = vsel %vm4153, %v6751, %v6799
    %v6848 = vsel %vm4156, %v6840, %v6817
    %v6849 = vsel %vm4156, %v6841, %v6819
    %v6850 = vsel %vm4156, %v6842, %v6821
    %v6851 = vsel %vm4156, %v6843, %v6823
    %v6852 = vsel %vm4156, %v6844, %v6825
    %v6853 = vsel %vm4156, %v6845, %v6827
    %v6854 = vsel %vm4156, %v6846, %v6829
    %v6855 = vsel %vm4156, %v6847, %v6831
    %v6856 = vsel %vm3555, %v6848, 1.0
    %v6857 = vsel %vm3555, %v6849, 1.0
    %v6858 = vsel %vm3555, %v6850, 1.0
    %v6859 = vsel %vm3555, %v6851, 1.0
    %v6860 = vsel %vm3555, %v6852, 1.0
    %v6861 = vsel %vm3555, %v6853, 1.0
    %v6862 = vsel %vm3555, %v6854, 1.0
    %v6863 = vsel %vm3555, %v6855, 1.0
    %v6864 = vpack.c.bf16 %v6857, %v6856
    %v6865 = vpack.c.bf16 %v6859, %v6858
    %v6866 = vpack.c.bf16 %v6861, %v6860
    %v6867 = vpack.c.bf16 %v6863, %v6862
    %v6868 = vld [vmem:[#allocation16 + $0x730] sm:$0xf]
    %v6869 = vld [vmem:[#allocation16 + $0x734] sm:$0xf]
    %v6870 = vld [vmem:[#allocation16 + $0x738] sm:$0xf]
    %v6871 = vld [vmem:[#allocation16 + $0x73c] sm:$0xf]
    %v6872 = vld [vmem:[#allocation16 + $0x740] sm:$0xf]
    %v6873 = vld [vmem:[#allocation16 + $0x744] sm:$0xf]
    %v6874 = vld [vmem:[#allocation16 + $0x748] sm:$0xf]
    %v6875 = vld [vmem:[#allocation16 + $0x74c] sm:$0xf]
    %v6876 = vld [vmem:[#allocation16 + $0x750] sm:$0xf]
    %v6877 = vld [vmem:[#allocation16 + $0x754] sm:$0xf]
    %v6878 = vld [vmem:[#allocation16 + $0x758] sm:$0xf]
    %v6879 = vld [vmem:[#allocation16 + $0x75c] sm:$0xf]
    %v6880 = vld [vmem:[#allocation16 + $0x760] sm:$0xf]
    %v6881 = vld [vmem:[#allocation16 + $0x764] sm:$0xf]
    %v6882 = vld [vmem:[#allocation16 + $0x768] sm:$0xf]
    %v6883 = vld [vmem:[#allocation16 + $0x76c] sm:$0x1]
    %v6900 = vunpack.c.l.b16 %v6868
    %v6901 = vunpack.c.l.b16 %v6869
    %v6902 = vunpack.c.l.b16 %v6870
    %v6903 = vunpack.c.l.b16 %v6871
    %v6904 = vunpack.c.l.b16 %v6872
    %v6905 = vunpack.c.l.b16 %v6873
    %v6906 = vunpack.c.l.b16 %v6874
    %v6907 = vunpack.c.l.b16 %v6875
    %v6908 = vunpack.c.l.b16 %v6876
    %v6909 = vunpack.c.l.b16 %v6877
    %v6910 = vunpack.c.l.b16 %v6878
    %v6911 = vunpack.c.l.b16 %v6879
    %v6912 = vunpack.c.l.b16 %v6880
    %v6913 = vunpack.c.l.b16 %v6881
    %v6914 = vunpack.c.l.b16 %v6882
    %v6915 = vunpack.c.l.b16 %v6883
    %v6916 = vpack.c.b16 %v6901, %v6900
    %v6917 = vpack.c.b16 %v6903, %v6902
    %v6918 = vpack.c.b16 %v6905, %v6904
    %v6919 = vpack.c.b16 %v6907, %v6906
    %v6920 = vpack.c.b16 %v6909, %v6908
    %v6921 = vpack.c.b16 %v6911, %v6910
    %v6922 = vpack.c.b16 %v6913, %v6912
    %v6923 = vpack.c.b16 %v6915, %v6914
    %v6932 = vsel %vm3880, %v6864, 0
    %v6935 = vsel %vm3880, %v6865, 0
    %v6938 = vsel %vm3880, %v6866, 0
    %v6941 = vsel %vm3880, %v6867, 0
    %v6944 = vand.u32 %v6923, %v1172
    %6946 = vmatprep.subr.bf16.mxu0 0
    %6947 = vmatpush1.bf16.msra.mxu0 %v6916
    %6948 = vmatprep.subr.bf16.mxu0 0
    %6949 = vmatpush1.bf16.msra.mxu0 %v6917
    %6950 = vmatprep.subr.bf16.mxu0 0
    %6951 = vmatpush1.bf16.msra.mxu0 %v6918
    %6952 = vmatprep.subr.bf16.mxu0 0
    %6953 = vmatpush1.bf16.msra.mxu0 %v6919
    %6954 = vmatprep.subr.bf16.mxu0 0
    %6955 = vmatpush1.bf16.msra.mxu0 %v6920
    %6956 = vmatprep.subr.bf16.mxu0 0
    %6957 = vmatpush1.bf16.msra.mxu0 %v6921
    %6958 = vmatprep.subr.bf16.mxu0 0
    %6959 = vmatpush1.bf16.msra.mxu0 %v6922
    %6960 = vmatprep.subr.bf16.mxu0 0
    %6961 = vmatpush1.bf16.msra.mxu0 %v6944
    %6962 = vmatprep.subr.bf16.mxu0 0
    %6963 = vmatpush1.bf16.msra.mxu0 0
    %6964 = vmatprep.subr.bf16.mxu0 0
    %6965 = vmatpush1.bf16.msra.mxu0 0
    %6966 = vmatprep.subr.bf16.mxu0 0
    %6967 = vmatpush1.bf16.msra.mxu0 0
    %6968 = vmatprep.subr.bf16.mxu0 0
    %6969 = vmatpush1.bf16.msra.mxu0 0
    %6970 = vmatprep.subr.bf16.mxu0 0
    %6971 = vmatpush1.bf16.msra.mxu0 0
    %6972 = vmatprep.subr.bf16.mxu0 0
    %6973 = vmatpush1.bf16.msra.mxu0 0
    %6974 = vmatprep.subr.bf16.mxu0 0
    %6975 = vmatpush1.bf16.msra.mxu0 0
    %6976 = vmatprep.subr.bf16.mxu0 0
    %6977 = vmatpush1.bf16.msra.mxu0 0
    %6978 = vmatprep.mubr.bf16.mxu0 0
    %6979 = vmatmul.mubr.bf16.gmra.mrb[0].mxu0 %v6932
    %v6980 = vpop.f32.mrb[0].mxu0
    %v6981 = vadd.f32 0.0, %v6980
    %v6982 = vpop.f32.mrb[0].mxu0
    %v6983 = vpop.f32.mrb[0].mxu0
    %v6984 = vadd.f32 0.0, %v6983
    %v6985 = vpop.f32.mrb[0].mxu0
    %6986 = vmatprep.mubr.bf16.mxu0 0
    %6987 = vmatmul.mubr.bf16.gmra.mrb[0].mxu0 %v6935
    %v6988 = vpop.f32.mrb[0].mxu0
    %v6989 = vadd.f32 0.0, %v6988
    %v6990 = vpop.f32.mrb[0].mxu0
    %v6991 = vpop.f32.mrb[0].mxu0
    %v6992 = vadd.f32 0.0, %v6991
    %v6993 = vpop.f32.mrb[0].mxu0
    %6994 = vmatprep.mubr.bf16.mxu0 0
    %6995 = vmatmul.mubr.bf16.gmra.mrb[0].mxu0 %v6938
    %v6996 = vpop.f32.mrb[0].mxu0
    %v6997 = vadd.f32 0.0, %v6996
    %v6998 = vpop.f32.mrb[0].mxu0
    %v6999 = vpop.f32.mrb[0].mxu0
    %v7000 = vadd.f32 0.0, %v6999
    %v7001 = vpop.f32.mrb[0].mxu0
    %7002 = vmatprep.mubr.bf16.mxu0 0
    %7003 = vmatmul.mubr.bf16.gmra.mrb[0].mxu0 %v6941
    %v7004 = vpop.f32.mrb[0].mxu0
    %v7005 = vadd.f32 0.0, %v7004
    %v7006 = vpop.f32.mrb[0].mxu0
    %v7007 = vpop.f32.mrb[0].mxu0
    %v7008 = vadd.f32 0.0, %v7007
    %v7009 = vpop.f32.mrb[0].mxu0
    %7010 = vdwg.mxu0
    %v7011 = vmax.f32 %v6981, 0.0
    %v7012 = vmax.f32 %v6984, 0.0
    %v7013 = vmax.f32 %v6989, 0.0
    %v7014 = vmax.f32 %v6992, 0.0
    %v7015 = vmax.f32 %v6997, 0.0
    %v7016 = vmax.f32 %v7000, 0.0
    %v7017 = vmax.f32 %v7005, 0.0
    %v7018 = vmax.f32 %v7008, 0.0
    %7019 = vst.msk [vmem:[#allocation15] sm:$0xff] %vm4153, %v7011
    %7020 = vst.msk [vmem:[#allocation15 + $0x8] sm:$0xff] %vm4153, %v7012
    %7021 = vst.msk [vmem:[#allocation15 + $0x10] sm:$0xff] %vm4153, %v7013
    %7022 = vst.msk [vmem:[#allocation15 + $0x18] sm:$0xff] %vm4153, %v7014
    %7023 = vst.msk [vmem:[#allocation15 + $0x20] sm:$0xff] %vm4153, %v7015
    %7024 = vst.msk [vmem:[#allocation15 + $0x28] sm:$0xff] %vm4153, %v7016
    %7025 = vst.msk [vmem:[#allocation15 + $0x30] sm:$0xff] %vm4153, %v7017
    %7026 = vst.msk [vmem:[#allocation15 + $0x38] sm:$0xff] %vm4153, %v7018
    %v7027 = vld [vmem:[#allocation2] sm:$0xff]
    %v7028 = vld [vmem:[#allocation2 + $0x8] sm:$0xff]
    %v7029 = vld [vmem:[#allocation2 + $0x10] sm:$0xff]
    %v7030 = vld [vmem:[#allocation2 + $0x18] sm:$0xff]
    %v7031 = vld [vmem:[#allocation2 + $0x20] sm:$0xff]
    %v7032 = vld [vmem:[#allocation2 + $0x28] sm:$0xff]
    %v7033 = vld [vmem:[#allocation2 + $0x30] sm:$0xff]
    %v7034 = vld [vmem:[#allocation2 + $0x38] sm:$0xff]
    %v7035 = vld [vmem:[#allocation2 + $0x40] sm:$0xff]
    %v7036 = vld [vmem:[#allocation2 + $0x48] sm:$0xff]
    %v7037 = vld [vmem:[#allocation2 + $0x50] sm:$0xff]
    %v7038 = vld [vmem:[#allocation2 + $0x58] sm:$0xff]
    %v7039 = vld [vmem:[#allocation2 + $0x60] sm:$0xff]
    %v7040 = vld [vmem:[#allocation2 + $0x68] sm:$0xff]
    %v7041 = vld [vmem:[#allocation2 + $0x70] sm:$0xff]
    %v7042 = vld [vmem:[#allocation2 + $0x78] sm:$0xff]
    %v7043 = vld [vmem:[#allocation16 + $0x9f8] sm:$0xf]
    %v7044 = vld [vmem:[#allocation16 + $0x9fc] sm:$0xf]
    %v7045 = vld [vmem:[#allocation16 + $0xa00] sm:$0xf]
    %v7046 = vld [vmem:[#allocation16 + $0xa04] sm:$0xf]
    %v7047 = vld [vmem:[#allocation16 + $0xa08] sm:$0xf]
    %v7048 = vld [vmem:[#allocation16 + $0xa0c] sm:$0xf]
    %v7049 = vld [vmem:[#allocation16 + $0xa10] sm:$0xf]
    %v7050 = vld [vmem:[#allocation16 + $0xa14] sm:$0xf]
    %v7051 = vld [vmem:[#allocation15] sm:$0xff]
    %v7052 = vld [vmem:[#allocation15 + $0x8] sm:$0xff]
    %v7053 = vld [vmem:[#allocation15 + $0x10] sm:$0xff]
    %v7054 = vld [vmem:[#allocation15 + $0x18] sm:$0xff]
    %v7055 = vpack.c.bf16 %v7052, %v7051
    %v7056 = vpack.c.bf16 %v7054, %v7053
    %v7065 = vunpack.c.l.b16 %v7043
    %v7066 = vunpack.c.l.b16 %v7044
    %v7067 = vunpack.c.l.b16 %v7045
    %v7068 = vunpack.c.l.b16 %v7046
    %v7069 = vunpack.c.l.b16 %v7047
    %v7070 = vunpack.c.l.b16 %v7048
    %v7071 = vunpack.c.l.b16 %v7049
    %v7072 = vunpack.c.l.b16 %v7050
    %v7073 = vpack.c.b16 %v7066, %v7065
    %v7074 = vpack.c.b16 %v7068, %v7067
    %v7075 = vpack.c.b16 %v7070, %v7069
    %v7076 = vpack.c.b16 %v7072, %v7071
    %v7078 = vsel %vm1933, %v7073, 0
    %v7081 = vsel %vm1933, %v7074, 0
    %v7084 = vsel %vm1933, %v7075, 0
    %v7087 = vsel %vm1933, %v7076, 0
    %7089 = vmatprep.subr.bf16.mxu0 0
    %7090 = vmatpush1.bf16.msra.mxu0 %v7055
    %7091 = vmatprep.subr.bf16.mxu0 0
    %7092 = vmatpush1.bf16.msra.mxu0 %v7056
    %7093 = vmatprep.subr.bf16.mxu0 0
    %7094 = vmatpush1.bf16.msra.mxu0 0
    %7095 = vmatprep.subr.bf16.mxu0 0
    %7096 = vmatpush1.bf16.msra.mxu0 0
    %7097 = vmatprep.subr.bf16.mxu0 0
    %7098 = vmatpush1.bf16.msra.mxu0 0
    %7099 = vmatprep.subr.bf16.mxu0 0
    %7100 = vmatpush1.bf16.msra.mxu0 0
    %7101 = vmatprep.subr.bf16.mxu0 0
    %7102 = vmatpush1.bf16.msra.mxu0 0
    %7103 = vmatprep.subr.bf16.mxu0 0
    %7104 = vmatpush1.bf16.msra.mxu0 0
    %7105 = vmatprep.subr.bf16.mxu0 0
    %7106 = vmatpush1.bf16.msra.mxu0 0
    %7107 = vmatprep.subr.bf16.mxu0 0
    %7108 = vmatpush1.bf16.msra.mxu0 0
    %7109 = vmatprep.subr.bf16.mxu0 0
    %7110 = vmatpush1.bf16.msra.mxu0 0
    %7111 = vmatprep.subr.bf16.mxu0 0
    %7112 = vmatpush1.bf16.msra.mxu0 0
    %7113 = vmatprep.subr.bf16.mxu0 0
    %7114 = vmatpush1.bf16.msra.mxu0 0
    %7115 = vmatprep.subr.bf16.mxu0 0
    %7116 = vmatpush1.bf16.msra.mxu0 0
    %7117 = vmatprep.subr.bf16.mxu0 0
    %7118 = vmatpush1.bf16.msra.mxu0 0
    %7119 = vmatprep.subr.bf16.mxu0 0
    %7120 = vmatpush1.bf16.msra.mxu0 0
    %7121 = vmatprep.mubr.bf16.mxu0 0
    %7122 = vmatmul.mubr.bf16.gmra.mrb[0].mxu0 %v7078
    %v7123 = vpop.f32.mrb[0].mxu0
    %v7124 = vadd.f32 0.0, %v7123
    %v7125 = vpop.f32.mrb[0].mxu0
    %v7126 = vpop.f32.mrb[0].mxu0
    %v7127 = vadd.f32 0.0, %v7126
    %v7128 = vpop.f32.mrb[0].mxu0
    %7129 = vmatprep.mubr.bf16.mxu0 0
    %7130 = vmatmul.mubr.bf16.gmra.mrb[0].mxu0 %v7081
    %v7131 = vpop.f32.mrb[0].mxu0
    %v7132 = vadd.f32 0.0, %v7131
    %v7133 = vpop.f32.mrb[0].mxu0
    %v7134 = vpop.f32.mrb[0].mxu0
    %v7135 = vadd.f32 0.0, %v7134
    %v7136 = vpop.f32.mrb[0].mxu0
    %7137 = vmatprep.mubr.bf16.mxu0 0
    %7138 = vmatmul.mubr.bf16.gmra.mrb[0].mxu0 %v7084
    %v7139 = vpop.f32.mrb[0].mxu0
    %v7140 = vadd.f32 0.0, %v7139
    %v7141 = vpop.f32.mrb[0].mxu0
    %v7142 = vpop.f32.mrb[0].mxu0
    %v7143 = vadd.f32 0.0, %v7142
    %v7144 = vpop.f32.mrb[0].mxu0
    %7145 = vmatprep.mubr.bf16.mxu0 0
    %7146 = vmatmul.mubr.bf16.gmra.mrb[0].mxu0 %v7087
    %v7147 = vpop.f32.mrb[0].mxu0
    %v7148 = vadd.f32 0.0, %v7147
    %v7149 = vpop.f32.mrb[0].mxu0
    %v7150 = vpop.f32.mrb[0].mxu0
    %v7151 = vadd.f32 0.0, %v7150
    %v7152 = vpop.f32.mrb[0].mxu0
    %7153 = vdwg.mxu0
    %v7154 = vld [vmem:[#allocation15 + $0x20] sm:$0xff]
    %v7155 = vld [vmem:[#allocation15 + $0x28] sm:$0xff]
    %v7156 = vld [vmem:[#allocation15 + $0x30] sm:$0xff]
    %v7157 = vld [vmem:[#allocation15 + $0x38] sm:$0xff]
    %v7158 = vpack.c.bf16 %v7155, %v7154
    %v7159 = vpack.c.bf16 %v7157, %v7156
    %7160 = vmatprep.subr.bf16.mxu0 0
    %7161 = vmatpush1.bf16.msra.mxu0 %v7158
    %7162 = vmatprep.subr.bf16.mxu0 0
    %7163 = vmatpush1.bf16.msra.mxu0 %v7159
    %7164 = vmatprep.subr.bf16.mxu0 0
    %7165 = vmatpush1.bf16.msra.mxu0 0
    %7166 = vmatprep.subr.bf16.mxu0 0
    %7167 = vmatpush1.bf16.msra.mxu0 0
    %7168 = vmatprep.subr.bf16.mxu0 0
    %7169 = vmatpush1.bf16.msra.mxu0 0
    %7170 = vmatprep.subr.bf16.mxu0 0
    %7171 = vmatpush1.bf16.msra.mxu0 0
    %7172 = vmatprep.subr.bf16.mxu0 0
    %7173 = vmatpush1.bf16.msra.mxu0 0
    %7174 = vmatprep.subr.bf16.mxu0 0
    %7175 = vmatpush1.bf16.msra.mxu0 0
    %7176 = vmatprep.subr.bf16.mxu0 0
    %7177 = vmatpush1.bf16.msra.mxu0 0
    %7178 = vmatprep.subr.bf16.mxu0 0
    %7179 = vmatpush1.bf16.msra.mxu0 0
    %7180 = vmatprep.subr.bf16.mxu0 0
    %7181 = vmatpush1.bf16.msra.mxu0 0
    %7182 = vmatprep.subr.bf16.mxu0 0
    %7183 = vmatpush1.bf16.msra.mxu0 0
    %7184 = vmatprep.subr.bf16.mxu0 0
    %7185 = vmatpush1.bf16.msra.mxu0 0
    %7186 = vmatprep.subr.bf16.mxu0 0
    %7187 = vmatpush1.bf16.msra.mxu0 0
    %7188 = vmatprep.subr.bf16.mxu0 0
    %7189 = vmatpush1.bf16.msra.mxu0 0
    %7190 = vmatprep.subr.bf16.mxu0 0
    %7191 = vmatpush1.bf16.msra.mxu0 0
    %7192 = vmatprep.mubr.bf16.mxu0 0
    %7193 = vmatmul.mubr.bf16.gmra.mrb[0].mxu0 %v7078
    %v7194 = vpop.f32.mrb[0].mxu0
    %v7195 = vadd.f32 0.0, %v7194
    %v7196 = vpop.f32.mrb[0].mxu0
    %v7197 = vpop.f32.mrb[0].mxu0
    %v7198 = vadd.f32 0.0, %v7197
    %v7199 = vpop.f32.mrb[0].mxu0
    %7200 = vmatprep.mubr.bf16.mxu0 0
    %7201 = vmatmul.mubr.bf16.gmra.mrb[0].mxu0 %v7081
    %v7202 = vpop.f32.mrb[0].mxu0
    %v7203 = vadd.f32 0.0, %v7202
    %v7204 = vpop.f32.mrb[0].mxu0
    %v7205 = vpop.f32.mrb[0].mxu0
    %v7206 = vadd.f32 0.0, %v7205
    %v7207 = vpop.f32.mrb[0].mxu0
    %7208 = vmatprep.mubr.bf16.mxu0 0
    %7209 = vmatmul.mubr.bf16.gmra.mrb[0].mxu0 %v7084
    %v7210 = vpop.f32.mrb[0].mxu0
    %v7211 = vadd.f32 0.0, %v7210
    %v7212 = vpop.f32.mrb[0].mxu0
    %v7213 = vpop.f32.mrb[0].mxu0
    %v7214 = vadd.f32 0.0, %v7213
    %v7215 = vpop.f32.mrb[0].mxu0
    %7216 = vmatprep.mubr.bf16.mxu0 0
    %7217 = vmatmul.mubr.bf16.gmra.mrb[0].mxu0 %v7087
    %v7218 = vpop.f32.mrb[0].mxu0
    %v7219 = vadd.f32 0.0, %v7218
    %v7220 = vpop.f32.mrb[0].mxu0
    %v7221 = vpop.f32.mrb[0].mxu0
    %v7222 = vadd.f32 0.0, %v7221
    %v7223 = vpop.f32.mrb[0].mxu0
    %7224 = vdwg.mxu0
    %v7225 = vld [vmem:[#allocation16 + $0x9d8] sm:$0xf]
    %v7226 = vld [vmem:[#allocation16 + $0x9dc] sm:$0xf]
    %v7227 = vld [vmem:[#allocation16 + $0x9e0] sm:$0xf]
    %v7228 = vld [vmem:[#allocation16 + $0x9e4] sm:$0xf]
    %v7229 = vld [vmem:[#allocation16 + $0x9e8] sm:$0xf]
    %v7230 = vld [vmem:[#allocation16 + $0x9ec] sm:$0xf]
    %v7231 = vld [vmem:[#allocation16 + $0x9f0] sm:$0xf]
    %v7232 = vld [vmem:[#allocation16 + $0x9f4] sm:$0xf]
    %v7233 = vld [vmem:[#allocation14] sm:$0xff]
    %v7234 = vld [vmem:[#allocation14 + $0x8] sm:$0xff]
    %v7235 = vpack.c.bf16 %v7234, %v7233
    %v7244 = vunpack.c.l.b16 %v7225
    %v7245 = vunpack.c.l.b16 %v7226
    %v7246 = vunpack.c.l.b16 %v7227
    %v7247 = vunpack.c.l.b16 %v7228
    %v7248 = vunpack.c.l.b16 %v7229
    %v7249 = vunpack.c.l.b16 %v7230
    %v7250 = vunpack.c.l.b16 %v7231
    %v7251 = vunpack.c.l.b16 %v7232
    %v7252 = vpack.c.b16 %v7245, %v7244
    %v7253 = vpack.c.b16 %v7247, %v7246
    %v7254 = vpack.c.b16 %v7249, %v7248
    %v7255 = vpack.c.b16 %v7251, %v7250
    %v7257 = vsel %vm1087, %v7252, 0
    %v7260 = vsel %vm1087, %v7253, 0
    %v7263 = vsel %vm1087, %v7254, 0
    %v7266 = vsel %vm1087, %v7255, 0
    %7268 = vmatprep.subr.bf16.mxu0 0
    %7269 = vmatpush1.bf16.msra.mxu0 %v7235
    %7270 = vmatprep.subr.bf16.mxu0 0
    %7271 = vmatpush1.bf16.msra.mxu0 0
    %7272 = vmatprep.subr.bf16.mxu0 0
    %7273 = vmatpush1.bf16.msra.mxu0 0
    %7274 = vmatprep.subr.bf16.mxu0 0
    %7275 = vmatpush1.bf16.msra.mxu0 0
    %7276 = vmatprep.subr.bf16.mxu0 0
    %7277 = vmatpush1.bf16.msra.mxu0 0
    %7278 = vmatprep.subr.bf16.mxu0 0
    %7279 = vmatpush1.bf16.msra.mxu0 0
    %7280 = vmatprep.subr.bf16.mxu0 0
    %7281 = vmatpush1.bf16.msra.mxu0 0
    %7282 = vmatprep.subr.bf16.mxu0 0
    %7283 = vmatpush1.bf16.msra.mxu0 0
    %7284 = vmatprep.subr.bf16.mxu0 0
    %7285 = vmatpush1.bf16.msra.mxu0 0
    %7286 = vmatprep.subr.bf16.mxu0 0
    %7287 = vmatpush1.bf16.msra.mxu0 0
    %7288 = vmatprep.subr.bf16.mxu0 0
    %7289 = vmatpush1.bf16.msra.mxu0 0
    %7290 = vmatprep.subr.bf16.mxu0 0
    %7291 = vmatpush1.bf16.msra.mxu0 0
    %7292 = vmatprep.subr.bf16.mxu0 0
    %7293 = vmatpush1.bf16.msra.mxu0 0
    %7294 = vmatprep.subr.bf16.mxu0 0
    %7295 = vmatpush1.bf16.msra.mxu0 0
    %7296 = vmatprep.subr.bf16.mxu0 0
    %7297 = vmatpush1.bf16.msra.mxu0 0
    %7298 = vmatprep.subr.bf16.mxu0 0
    %7299 = vmatpush1.bf16.msra.mxu0 0
    %7300 = vmatprep.mubr.bf16.mxu0 0
    %7301 = vmatmul.mubr.bf16.gmra.mrb[0].mxu0 %v7257
    %v7302 = vpop.f32.mrb[0].mxu0
    %v7303 = vadd.f32 0.0, %v7302
    %v7304 = vpop.f32.mrb[0].mxu0
    %v7305 = vpop.f32.mrb[0].mxu0
    %v7306 = vadd.f32 0.0, %v7305
    %v7307 = vpop.f32.mrb[0].mxu0
    %7308 = vmatprep.mubr.bf16.mxu0 0
    %7309 = vmatmul.mubr.bf16.gmra.mrb[0].mxu0 %v7260
    %v7310 = vpop.f32.mrb[0].mxu0
    %v7311 = vadd.f32 0.0, %v7310
    %v7312 = vpop.f32.mrb[0].mxu0
    %v7313 = vpop.f32.mrb[0].mxu0
    %v7314 = vadd.f32 0.0, %v7313
    %v7315 = vpop.f32.mrb[0].mxu0
    %7316 = vmatprep.mubr.bf16.mxu0 0
    %7317 = vmatmul.mubr.bf16.gmra.mrb[0].mxu0 %v7263
    %v7318 = vpop.f32.mrb[0].mxu0
    %v7319 = vadd.f32 0.0, %v7318
    %v7320 = vpop.f32.mrb[0].mxu0
    %v7321 = vpop.f32.mrb[0].mxu0
    %v7322 = vadd.f32 0.0, %v7321
    %v7323 = vpop.f32.mrb[0].mxu0
    %7324 = vmatprep.mubr.bf16.mxu0 0
    %7325 = vmatmul.mubr.bf16.gmra.mrb[0].mxu0 %v7266
    %v7326 = vpop.f32.mrb[0].mxu0
    %v7327 = vadd.f32 0.0, %v7326
    %v7328 = vpop.f32.mrb[0].mxu0
    %v7329 = vpop.f32.mrb[0].mxu0
    %v7330 = vadd.f32 0.0, %v7329
    %v7331 = vpop.f32.mrb[0].mxu0
    %7332 = vdwg.mxu0
    %v7333 = vld [vmem:[#allocation14 + $0x10] sm:$0xff]
    %v7334 = vld [vmem:[#allocation14 + $0x18] sm:$0xff]
    %v7335 = vpack.c.bf16 %v7334, %v7333
    %7336 = vmatprep.subr.bf16.mxu0 0
    %7337 = vmatpush1.bf16.msra.mxu0 %v7335
    %7338 = vmatprep.subr.bf16.mxu0 0
    %7339 = vmatpush1.bf16.msra.mxu0 0
    %7340 = vmatprep.subr.bf16.mxu0 0
    %7341 = vmatpush1.bf16.msra.mxu0 0
    %7342 = vmatprep.subr.bf16.mxu0 0
    %7343 = vmatpush1.bf16.msra.mxu0 0
    %7344 = vmatprep.subr.bf16.mxu0 0
    %7345 = vmatpush1.bf16.msra.mxu0 0
    %7346 = vmatprep.subr.bf16.mxu0 0
    %7347 = vmatpush1.bf16.msra.mxu0 0
    %7348 = vmatprep.subr.bf16.mxu0 0
    %7349 = vmatpush1.bf16.msra.mxu0 0
    %7350 = vmatprep.subr.bf16.mxu0 0
    %7351 = vmatpush1.bf16.msra.mxu0 0
    %7352 = vmatprep.subr.bf16.mxu0 0
    %7353 = vmatpush1.bf16.msra.mxu0 0
    %7354 = vmatprep.subr.bf16.mxu0 0
    %7355 = vmatpush1.bf16.msra.mxu0 0
    %7356 = vmatprep.subr.bf16.mxu0 0
    %7357 = vmatpush1.bf16.msra.mxu0 0
    %7358 = vmatprep.subr.bf16.mxu0 0
    %7359 = vmatpush1.bf16.msra.mxu0 0
    %7360 = vmatprep.subr.bf16.mxu0 0
    %7361 = vmatpush1.bf16.msra.mxu0 0
    %7362 = vmatprep.subr.bf16.mxu0 0
    %7363 = vmatpush1.bf16.msra.mxu0 0
    %7364 = vmatprep.subr.bf16.mxu0 0
    %7365 = vmatpush1.bf16.msra.mxu0 0
    %7366 = vmatprep.subr.bf16.mxu0 0
    %7367 = vmatpush1.bf16.msra.mxu0 0
    %7368 = vmatprep.mubr.bf16.mxu0 0
    %7369 = vmatmul.mubr.bf16.gmra.mrb[0].mxu0 %v7257
    %v7370 = vpop.f32.mrb[0].mxu0
    %v7371 = vadd.f32 0.0, %v7370
    %v7372 = vpop.f32.mrb[0].mxu0
    %v7373 = vpop.f32.mrb[0].mxu0
    %v7374 = vadd.f32 0.0, %v7373
    %v7375 = vpop.f32.mrb[0].mxu0
    %7376 = vmatprep.mubr.bf16.mxu0 0
    %7377 = vmatmul.mubr.bf16.gmra.mrb[0].mxu0 %v7260
    %v7378 = vpop.f32.mrb[0].mxu0
    %v7379 = vadd.f32 0.0, %v7378
    %v7380 = vpop.f32.mrb[0].mxu0
    %v7381 = vpop.f32.mrb[0].mxu0
    %v7382 = vadd.f32 0.0, %v7381
    %v7383 = vpop.f32.mrb[0].mxu0
    %7384 = vmatprep.mubr.bf16.mxu0 0
    %7385 = vmatmul.mubr.bf16.gmra.mrb[0].mxu0 %v7263
    %v7386 = vpop.f32.mrb[0].mxu0
    %v7387 = vadd.f32 0.0, %v7386
    %v7388 = vpop.f32.mrb[0].mxu0
    %v7389 = vpop.f32.mrb[0].mxu0
    %v7390 = vadd.f32 0.0, %v7389
    %v7391 = vpop.f32.mrb[0].mxu0
    %7392 = vmatprep.mubr.bf16.mxu0 0
    %7393 = vmatmul.mubr.bf16.gmra.mrb[0].mxu0 %v7266
    %v7394 = vpop.f32.mrb[0].mxu0
    %v7395 = vadd.f32 0.0, %v7394
    %v7396 = vpop.f32.mrb[0].mxu0
    %v7397 = vpop.f32.mrb[0].mxu0
    %v7398 = vadd.f32 0.0, %v7397
    %v7399 = vpop.f32.mrb[0].mxu0
    %7400 = vdwg.mxu0
    %v7401 = vld [vmem:[#allocation16 + $0x9a8] sm:$0xf]
    %v7402 = vld [vmem:[#allocation16 + $0x9ac] sm:$0xf]
    %v7403 = vld [vmem:[#allocation16 + $0x9b0] sm:$0xf]
    %v7404 = vld [vmem:[#allocation16 + $0x9b4] sm:$0xf]
    %v7405 = vld [vmem:[#allocation16 + $0x9b8] sm:$0xf]
    %v7406 = vld [vmem:[#allocation16 + $0x9bc] sm:$0xf]
    %v7407 = vld [vmem:[#allocation16 + $0x9c0] sm:$0xf]
    %v7408 = vld [vmem:[#allocation16 + $0x9c4] sm:$0xf]
    %v7409 = vld [vmem:[#allocation13] sm:$0xff]
    %v7410 = vpack.c.bf16 %v7409, %v7409
    %v7419 = vunpack.c.l.b16 %v7401
    %v7420 = vunpack.c.l.b16 %v7402
    %v7421 = vunpack.c.l.b16 %v7403
    %v7422 = vunpack.c.l.b16 %v7404
    %v7423 = vunpack.c.l.b16 %v7405
    %v7424 = vunpack.c.l.b16 %v7406
    %v7425 = vunpack.c.l.b16 %v7407
    %v7426 = vunpack.c.l.b16 %v7408
    %v7427 = vpack.c.b16 %v7420, %v7419
    %v7428 = vpack.c.b16 %v7422, %v7421
    %v7429 = vpack.c.b16 %v7424, %v7423
    %v7430 = vpack.c.b16 %v7426, %v7425
    %v7432 = vsel %vm622, %v7427, 0
    %v7435 = vsel %vm622, %v7428, 0
    %v7438 = vsel %vm622, %v7429, 0
    %v7441 = vsel %vm622, %v7430, 0
    %v7444 = vsel %vm1169, %v7410, 0
    %7446 = vmatprep.subr.bf16.mxu0 0
    %7447 = vmatpush1.bf16.msra.mxu0 %v7444
    %7448 = vmatprep.subr.bf16.mxu0 0
    %7449 = vmatpush1.bf16.msra.mxu0 0
    %7450 = vmatprep.subr.bf16.mxu0 0
    %7451 = vmatpush1.bf16.msra.mxu0 0
    %7452 = vmatprep.subr.bf16.mxu0 0
    %7453 = vmatpush1.bf16.msra.mxu0 0
    %7454 = vmatprep.subr.bf16.mxu0 0
    %7455 = vmatpush1.bf16.msra.mxu0 0
    %7456 = vmatprep.subr.bf16.mxu0 0
    %7457 = vmatpush1.bf16.msra.mxu0 0
    %7458 = vmatprep.subr.bf16.mxu0 0
    %7459 = vmatpush1.bf16.msra.mxu0 0
    %7460 = vmatprep.subr.bf16.mxu0 0
    %7461 = vmatpush1.bf16.msra.mxu0 0
    %7462 = vmatprep.subr.bf16.mxu0 0
    %7463 = vmatpush1.bf16.msra.mxu0 0
    %7464 = vmatprep.subr.bf16.mxu0 0
    %7465 = vmatpush1.bf16.msra.mxu0 0
    %7466 = vmatprep.subr.bf16.mxu0 0
    %7467 = vmatpush1.bf16.msra.mxu0 0
    %7468 = vmatprep.subr.bf16.mxu0 0
    %7469 = vmatpush1.bf16.msra.mxu0 0
    %7470 = vmatprep.subr.bf16.mxu0 0
    %7471 = vmatpush1.bf16.msra.mxu0 0
    %7472 = vmatprep.subr.bf16.mxu0 0
    %7473 = vmatpush1.bf16.msra.mxu0 0
    %7474 = vmatprep.subr.bf16.mxu0 0
    %7475 = vmatpush1.bf16.msra.mxu0 0
    %7476 = vmatprep.subr.bf16.mxu0 0
    %7477 = vmatpush1.bf16.msra.mxu0 0
    %7478 = vmatprep.mubr.bf16.mxu0 0
    %7479 = vmatmul.mubr.bf16.gmra.mrb[0].mxu0 %v7432
    %v7480 = vpop.f32.mrb[0].mxu0
    %v7481 = vadd.f32 0.0, %v7480
    %v7482 = vpop.f32.mrb[0].mxu0
    %v7483 = vpop.f32.mrb[0].mxu0
    %v7484 = vadd.f32 0.0, %v7483
    %v7485 = vpop.f32.mrb[0].mxu0
    %7486 = vmatprep.mubr.bf16.mxu0 0
    %7487 = vmatmul.mubr.bf16.gmra.mrb[0].mxu0 %v7435
    %v7488 = vpop.f32.mrb[0].mxu0
    %v7489 = vadd.f32 0.0, %v7488
    %v7490 = vpop.f32.mrb[0].mxu0
    %v7491 = vpop.f32.mrb[0].mxu0
    %v7492 = vadd.f32 0.0, %v7491
    %v7493 = vpop.f32.mrb[0].mxu0
    %7494 = vmatprep.mubr.bf16.mxu0 0
    %7495 = vmatmul.mubr.bf16.gmra.mrb[0].mxu0 %v7438
    %v7496 = vpop.f32.mrb[0].mxu0
    %v7497 = vadd.f32 0.0, %v7496
    %v7498 = vpop.f32.mrb[0].mxu0
    %v7499 = vpop.f32.mrb[0].mxu0
    %v7500 = vadd.f32 0.0, %v7499
    %v7501 = vpop.f32.mrb[0].mxu0
    %7502 = vmatprep.mubr.bf16.mxu0 0
    %7503 = vmatmul.mubr.bf16.gmra.mrb[0].mxu0 %v7441
    %v7504 = vpop.f32.mrb[0].mxu0
    %v7505 = vadd.f32 0.0, %v7504
    %v7506 = vpop.f32.mrb[0].mxu0
    %v7507 = vpop.f32.mrb[0].mxu0
    %v7508 = vadd.f32 0.0, %v7507
    %v7509 = vpop.f32.mrb[0].mxu0
    %7510 = vdwg.mxu0
    %v7511 = vld [vmem:[#allocation13 + $0x8] sm:$0xff]
    %v7512 = vpack.c.bf16 %v7511, %v7511
    %v7514 = vsel %vm1169, %v7512, 0
    %7516 = vmatprep.subr.bf16.mxu0 0
    %7517 = vmatpush1.bf16.msra.mxu0 %v7514
    %7518 = vmatprep.subr.bf16.mxu0 0
    %7519 = vmatpush1.bf16.msra.mxu0 0
    %7520 = vmatprep.subr.bf16.mxu0 0
    %7521 = vmatpush1.bf16.msra.mxu0 0
    %7522 = vmatprep.subr.bf16.mxu0 0
    %7523 = vmatpush1.bf16.msra.mxu0 0
    %7524 = vmatprep.subr.bf16.mxu0 0
    %7525 = vmatpush1.bf16.msra.mxu0 0
    %7526 = vmatprep.subr.bf16.mxu0 0
    %7527 = vmatpush1.bf16.msra.mxu0 0
    %7528 = vmatprep.subr.bf16.mxu0 0
    %7529 = vmatpush1.bf16.msra.mxu0 0
    %7530 = vmatprep.subr.bf16.mxu0 0
    %7531 = vmatpush1.bf16.msra.mxu0 0
    %7532 = vmatprep.subr.bf16.mxu0 0
    %7533 = vmatpush1.bf16.msra.mxu0 0
    %7534 = vmatprep.subr.bf16.mxu0 0
    %7535 = vmatpush1.bf16.msra.mxu0 0
    %7536 = vmatprep.subr.bf16.mxu0 0
    %7537 = vmatpush1.bf16.msra.mxu0 0
    %7538 = vmatprep.subr.bf16.mxu0 0
    %7539 = vmatpush1.bf16.msra.mxu0 0
    %7540 = vmatprep.subr.bf16.mxu0 0
    %7541 = vmatpush1.bf16.msra.mxu0 0
    %7542 = vmatprep.subr.bf16.mxu0 0
    %7543 = vmatpush1.bf16.msra.mxu0 0
    %7544 = vmatprep.subr.bf16.mxu0 0
    %7545 = vmatpush1.bf16.msra.mxu0 0
    %7546 = vmatprep.subr.bf16.mxu0 0
    %7547 = vmatpush1.bf16.msra.mxu0 0
    %7548 = vmatprep.mubr.bf16.mxu0 0
    %7549 = vmatmul.mubr.bf16.gmra.mrb[0].mxu0 %v7432
    %v7550 = vpop.f32.mrb[0].mxu0
    %v7551 = vadd.f32 0.0, %v7550
    %v7552 = vpop.f32.mrb[0].mxu0
    %v7553 = vpop.f32.mrb[0].mxu0
    %v7554 = vadd.f32 0.0, %v7553
    %v7555 = vpop.f32.mrb[0].mxu0
    %7556 = vmatprep.mubr.bf16.mxu0 0
    %7557 = vmatmul.mubr.bf16.gmra.mrb[0].mxu0 %v7435
    %v7558 = vpop.f32.mrb[0].mxu0
    %v7559 = vadd.f32 0.0, %v7558
    %v7560 = vpop.f32.mrb[0].mxu0
    %v7561 = vpop.f32.mrb[0].mxu0
    %v7562 = vadd.f32 0.0, %v7561
    %v7563 = vpop.f32.mrb[0].mxu0
    %7564 = vmatprep.mubr.bf16.mxu0 0
    %7565 = vmatmul.mubr.bf16.gmra.mrb[0].mxu0 %v7438
    %v7566 = vpop.f32.mrb[0].mxu0
    %v7567 = vadd.f32 0.0, %v7566
    %v7568 = vpop.f32.mrb[0].mxu0
    %v7569 = vpop.f32.mrb[0].mxu0
    %v7570 = vadd.f32 0.0, %v7569
    %v7571 = vpop.f32.mrb[0].mxu0
    %7572 = vmatprep.mubr.bf16.mxu0 0
    %7573 = vmatmul.mubr.bf16.gmra.mrb[0].mxu0 %v7441
    %v7574 = vpop.f32.mrb[0].mxu0
    %v7575 = vadd.f32 0.0, %v7574
    %v7576 = vpop.f32.mrb[0].mxu0
    %v7577 = vpop.f32.mrb[0].mxu0
    %v7578 = vadd.f32 0.0, %v7577
    %v7579 = vpop.f32.mrb[0].mxu0
    %7580 = vdwg.mxu0
    %v7581 = vld [vmem:[#allocation16 + $0x970] sm:$0xf]
    %v7582 = vld [vmem:[#allocation16 + $0x974] sm:$0xf]
    %v7583 = vld [vmem:[#allocation16 + $0x978] sm:$0xf]
    %v7584 = vld [vmem:[#allocation16 + $0x97c] sm:$0xf]
    %v7585 = vld [vmem:[#allocation16 + $0x980] sm:$0xf]
    %v7586 = vld [vmem:[#allocation16 + $0x984] sm:$0xf]
    %v7587 = vld [vmem:[#allocation16 + $0x988] sm:$0xf]
    %v7588 = vld [vmem:[#allocation16 + $0x98c] sm:$0xf]
    %v7589 = vld [vmem:[#allocation12] sm:$0xf]
    %v7590 = vpack.c.bf16 %v7589, %v7589
    %v7599 = vunpack.c.l.b16 %v7581
    %v7600 = vunpack.c.l.b16 %v7582
    %v7601 = vunpack.c.l.b16 %v7583
    %v7602 = vunpack.c.l.b16 %v7584
    %v7603 = vunpack.c.l.b16 %v7585
    %v7604 = vunpack.c.l.b16 %v7586
    %v7605 = vunpack.c.l.b16 %v7587
    %v7606 = vunpack.c.l.b16 %v7588
    %v7607 = vpack.c.b16 %v7600, %v7599
    %v7608 = vpack.c.b16 %v7602, %v7601
    %v7609 = vpack.c.b16 %v7604, %v7603
    %v7610 = vpack.c.b16 %v7606, %v7605
    %v7612 = vsel %vm605, %v7607, 0
    %v7615 = vsel %vm605, %v7608, 0
    %v7618 = vsel %vm605, %v7609, 0
    %v7621 = vsel %vm605, %v7610, 0
    %v7624 = vsel %vm3427, %v7590, 0
    %7626 = vmatprep.subr.bf16.mxu0 0
    %7627 = vmatpush1.bf16.msra.mxu0 %v7624
    %7628 = vmatprep.subr.bf16.mxu0 0
    %7629 = vmatpush1.bf16.msra.mxu0 0
    %7630 = vmatprep.subr.bf16.mxu0 0
    %7631 = vmatpush1.bf16.msra.mxu0 0
    %7632 = vmatprep.subr.bf16.mxu0 0
    %7633 = vmatpush1.bf16.msra.mxu0 0
    %7634 = vmatprep.subr.bf16.mxu0 0
    %7635 = vmatpush1.bf16.msra.mxu0 0
    %7636 = vmatprep.subr.bf16.mxu0 0
    %7637 = vmatpush1.bf16.msra.mxu0 0
    %7638 = vmatprep.subr.bf16.mxu0 0
    %7639 = vmatpush1.bf16.msra.mxu0 0
    %7640 = vmatprep.subr.bf16.mxu0 0
    %7641 = vmatpush1.bf16.msra.mxu0 0
    %7642 = vmatprep.subr.bf16.mxu0 0
    %7643 = vmatpush1.bf16.msra.mxu0 0
    %7644 = vmatprep.subr.bf16.mxu0 0
    %7645 = vmatpush1.bf16.msra.mxu0 0
    %7646 = vmatprep.subr.bf16.mxu0 0
    %7647 = vmatpush1.bf16.msra.mxu0 0
    %7648 = vmatprep.subr.bf16.mxu0 0
    %7649 = vmatpush1.bf16.msra.mxu0 0
    %7650 = vmatprep.subr.bf16.mxu0 0
    %7651 = vmatpush1.bf16.msra.mxu0 0
    %7652 = vmatprep.subr.bf16.mxu0 0
    %7653 = vmatpush1.bf16.msra.mxu0 0
    %7654 = vmatprep.subr.bf16.mxu0 0
    %7655 = vmatpush1.bf16.msra.mxu0 0
    %7656 = vmatprep.subr.bf16.mxu0 0
    %7657 = vmatpush1.bf16.msra.mxu0 0
    %7658 = vmatprep.mubr.bf16.mxu0 0
    %7659 = vmatmul.mubr.bf16.gmra.mrb[0].mxu0 %v7612
    %v7660 = vpop.f32.mrb[0].mxu0
    %v7661 = vadd.f32 0.0, %v7660
    %v7662 = vpop.f32.mrb[0].mxu0
    %v7663 = vpop.f32.mrb[0].mxu0
    %v7664 = vadd.f32 0.0, %v7663
    %v7665 = vpop.f32.mrb[0].mxu0
    %7666 = vmatprep.mubr.bf16.mxu0 0
    %7667 = vmatmul.mubr.bf16.gmra.mrb[0].mxu0 %v7615
    %v7668 = vpop.f32.mrb[0].mxu0
    %v7669 = vadd.f32 0.0, %v7668
    %v7670 = vpop.f32.mrb[0].mxu0
    %v7671 = vpop.f32.mrb[0].mxu0
    %v7672 = vadd.f32 0.0, %v7671
    %v7673 = vpop.f32.mrb[0].mxu0
    %7674 = vmatprep.mubr.bf16.mxu0 0
    %7675 = vmatmul.mubr.bf16.gmra.mrb[0].mxu0 %v7618
    %v7676 = vpop.f32.mrb[0].mxu0
    %v7677 = vadd.f32 0.0, %v7676
    %v7678 = vpop.f32.mrb[0].mxu0
    %v7679 = vpop.f32.mrb[0].mxu0
    %v7680 = vadd.f32 0.0, %v7679
    %v7681 = vpop.f32.mrb[0].mxu0
    %7682 = vmatprep.mubr.bf16.mxu0 0
    %7683 = vmatmul.mubr.bf16.gmra.mrb[0].mxu0 %v7621
    %v7684 = vpop.f32.mrb[0].mxu0
    %v7685 = vadd.f32 0.0, %v7684
    %v7686 = vpop.f32.mrb[0].mxu0
    %v7687 = vpop.f32.mrb[0].mxu0
    %v7688 = vadd.f32 0.0, %v7687
    %v7689 = vpop.f32.mrb[0].mxu0
    %7690 = vdwg.mxu0
    %v7691 = vld [vmem:[#allocation12 + $0x4] sm:$0xf]
    %v7692 = vpack.c.bf16 %v7691, %v7691
    %v7694 = vsel %vm3427, %v7692, 0
    %7696 = vmatprep.subr.bf16.mxu0 0
    %7697 = vmatpush1.bf16.msra.mxu0 %v7694
    %7698 = vmatprep.subr.bf16.mxu0 0
    %7699 = vmatpush1.bf16.msra.mxu0 0
    %7700 = vmatprep.subr.bf16.mxu0 0
    %7701 = vmatpush1.bf16.msra.mxu0 0
    %7702 = vmatprep.subr.bf16.mxu0 0
    %7703 = vmatpush1.bf16.msra.mxu0 0
    %7704 = vmatprep.subr.bf16.mxu0 0
    %7705 = vmatpush1.bf16.msra.mxu0 0
    %7706 = vmatprep.subr.bf16.mxu0 0
    %7707 = vmatpush1.bf16.msra.mxu0 0
    %7708 = vmatprep.subr.bf16.mxu0 0
    %7709 = vmatpush1.bf16.msra.mxu0 0
    %7710 = vmatprep.subr.bf16.mxu0 0
    %7711 = vmatpush1.bf16.msra.mxu0 0
    %7712 = vmatprep.subr.bf16.mxu0 0
    %7713 = vmatpush1.bf16.msra.mxu0 0
    %7714 = vmatprep.subr.bf16.mxu0 0
    %7715 = vmatpush1.bf16.msra.mxu0 0
    %7716 = vmatprep.subr.bf16.mxu0 0
    %7717 = vmatpush1.bf16.msra.mxu0 0
    %7718 = vmatprep.subr.bf16.mxu0 0
    %7719 = vmatpush1.bf16.msra.mxu0 0
    %7720 = vmatprep.subr.bf16.mxu0 0
    %7721 = vmatpush1.bf16.msra.mxu0 0
    %7722 = vmatprep.subr.bf16.mxu0 0
    %7723 = vmatpush1.bf16.msra.mxu0 0
    %7724 = vmatprep.subr.bf16.mxu0 0
    %7725 = vmatpush1.bf16.msra.mxu0 0
    %7726 = vmatprep.subr.bf16.mxu0 0
    %7727 = vmatpush1.bf16.msra.mxu0 0
    %7728 = vmatprep.mubr.bf16.mxu0 0
    %7729 = vmatmul.mubr.bf16.gmra.mrb[0].mxu0 %v7612
    %v7730 = vpop.f32.mrb[0].mxu0
    %v7731 = vadd.f32 0.0, %v7730
    %v7732 = vpop.f32.mrb[0].mxu0
    %v7733 = vpop.f32.mrb[0].mxu0
    %v7734 = vadd.f32 0.0, %v7733
    %v7735 = vpop.f32.mrb[0].mxu0
    %7736 = vmatprep.mubr.bf16.mxu0 0
    %7737 = vmatmul.mubr.bf16.gmra.mrb[0].mxu0 %v7615
    %v7738 = vpop.f32.mrb[0].mxu0
    %v7739 = vadd.f32 0.0, %v7738
    %v7740 = vpop.f32.mrb[0].mxu0
    %v7741 = vpop.f32.mrb[0].mxu0
    %v7742 = vadd.f32 0.0, %v7741
    %v7743 = vpop.f32.mrb[0].mxu0
    %7744 = vmatprep.mubr.bf16.mxu0 0
    %7745 = vmatmul.mubr.bf16.gmra.mrb[0].mxu0 %v7618
    %v7746 = vpop.f32.mrb[0].mxu0
    %v7747 = vadd.f32 0.0, %v7746
    %v7748 = vpop.f32.mrb[0].mxu0
    %v7749 = vpop.f32.mrb[0].mxu0
    %v7750 = vadd.f32 0.0, %v7749
    %v7751 = vpop.f32.mrb[0].mxu0
    %7752 = vmatprep.mubr.bf16.mxu0 0
    %7753 = vmatmul.mubr.bf16.gmra.mrb[0].mxu0 %v7621
    %v7754 = vpop.f32.mrb[0].mxu0
    %v7755 = vadd.f32 0.0, %v7754
    %v7756 = vpop.f32.mrb[0].mxu0
    %v7757 = vpop.f32.mrb[0].mxu0
    %v7758 = vadd.f32 0.0, %v7757
    %v7759 = vpop.f32.mrb[0].mxu0
    %7760 = vdwg.mxu0
    %7777 = vrot.lane.b32.xlu0 %v7124, 8
    %v7778 = vpop.permute.xlu0 %7777
    %7779 = vrot.lane.b32.xlu0 %v7127, 8
    %v7780 = vpop.permute.xlu0 %7779
    %7781 = vrot.lane.b32.xlu0 %v7132, 8
    %v7782 = vpop.permute.xlu0 %7781
    %7783 = vrot.lane.b32.xlu0 %v7135, 8
    %v7784 = vpop.permute.xlu0 %7783
    %7785 = vrot.lane.b32.xlu0 %v7140, 8
    %v7786 = vpop.permute.xlu0 %7785
    %7787 = vrot.lane.b32.xlu0 %v7143, 8
    %v7788 = vpop.permute.xlu0 %7787
    %7789 = vrot.lane.b32.xlu0 %v7148, 8
    %v7790 = vpop.permute.xlu0 %7789
    %7791 = vrot.lane.b32.xlu0 %v7151, 8
    %v7792 = vpop.permute.xlu0 %7791
    %7793 = vrot.lane.b32.xlu0 %v7195, 8
    %v7794 = vpop.permute.xlu0 %7793
    %7795 = vrot.lane.b32.xlu0 %v7198, 8
    %v7796 = vpop.permute.xlu0 %7795
    %7797 = vrot.lane.b32.xlu0 %v7203, 8
    %v7798 = vpop.permute.xlu0 %7797
    %7799 = vrot.lane.b32.xlu0 %v7206, 8
    %v7800 = vpop.permute.xlu0 %7799
    %7801 = vrot.lane.b32.xlu0 %v7211, 8
    %v7802 = vpop.permute.xlu0 %7801
    %7803 = vrot.lane.b32.xlu0 %v7214, 8
    %v7804 = vpop.permute.xlu0 %7803
    %7805 = vrot.lane.b32.xlu0 %v7219, 8
    %v7806 = vpop.permute.xlu0 %7805
    %7807 = vrot.lane.b32.xlu0 %v7222, 8
    %v7808 = vpop.permute.xlu0 %7807
    %7841 = vrot.lane.b32.xlu0 %v7303, 48
    %v7842 = vpop.permute.xlu0 %7841
    %7843 = vrot.lane.b32.xlu0 %v7306, 48
    %v7844 = vpop.permute.xlu0 %7843
    %7845 = vrot.lane.b32.xlu0 %v7311, 48
    %v7846 = vpop.permute.xlu0 %7845
    %7847 = vrot.lane.b32.xlu0 %v7314, 48
    %v7848 = vpop.permute.xlu0 %7847
    %7849 = vrot.lane.b32.xlu0 %v7319, 48
    %v7850 = vpop.permute.xlu0 %7849
    %7851 = vrot.lane.b32.xlu0 %v7322, 48
    %v7852 = vpop.permute.xlu0 %7851
    %7853 = vrot.lane.b32.xlu0 %v7327, 48
    %v7854 = vpop.permute.xlu0 %7853
    %7855 = vrot.lane.b32.xlu0 %v7330, 48
    %v7856 = vpop.permute.xlu0 %7855
    %7857 = vrot.lane.b32.xlu0 %v7371, 48
    %v7858 = vpop.permute.xlu0 %7857
    %7859 = vrot.lane.b32.xlu0 %v7374, 48
    %v7860 = vpop.permute.xlu0 %7859
    %7861 = vrot.lane.b32.xlu0 %v7379, 48
    %v7862 = vpop.permute.xlu0 %7861
    %7863 = vrot.lane.b32.xlu0 %v7382, 48
    %v7864 = vpop.permute.xlu0 %7863
    %7865 = vrot.lane.b32.xlu0 %v7387, 48
    %v7866 = vpop.permute.xlu0 %7865
    %7867 = vrot.lane.b32.xlu0 %v7390, 48
    %v7868 = vpop.permute.xlu0 %7867
    %7869 = vrot.lane.b32.xlu0 %v7395, 48
    %v7870 = vpop.permute.xlu0 %7869
    %7871 = vrot.lane.b32.xlu0 %v7398, 48
    %v7872 = vpop.permute.xlu0 %7871
    %7905 = vrot.lane.b32.xlu0 %v7481, 88
    %v7906 = vpop.permute.xlu0 %7905
    %7907 = vrot.lane.b32.xlu0 %v7484, 88
    %v7908 = vpop.permute.xlu0 %7907
    %7909 = vrot.lane.b32.xlu0 %v7489, 88
    %v7910 = vpop.permute.xlu0 %7909
    %7911 = vrot.lane.b32.xlu0 %v7492, 88
    %v7912 = vpop.permute.xlu0 %7911
    %7913 = vrot.lane.b32.xlu0 %v7497, 88
    %v7914 = vpop.permute.xlu0 %7913
    %7915 = vrot.lane.b32.xlu0 %v7500, 88
    %v7916 = vpop.permute.xlu0 %7915
    %7917 = vrot.lane.b32.xlu0 %v7505, 88
    %v7918 = vpop.permute.xlu0 %7917
    %7919 = vrot.lane.b32.xlu0 %v7508, 88
    %v7920 = vpop.permute.xlu0 %7919
    %7921 = vrot.lane.b32.xlu0 %v7551, 88
    %v7922 = vpop.permute.xlu0 %7921
    %7923 = vrot.lane.b32.xlu0 %v7554, 88
    %v7924 = vpop.permute.xlu0 %7923
    %7925 = vrot.lane.b32.xlu0 %v7559, 88
    %v7926 = vpop.permute.xlu0 %7925
    %7927 = vrot.lane.b32.xlu0 %v7562, 88
    %v7928 = vpop.permute.xlu0 %7927
    %7929 = vrot.lane.b32.xlu0 %v7567, 88
    %v7930 = vpop.permute.xlu0 %7929
    %7931 = vrot.lane.b32.xlu0 %v7570, 88
    %v7932 = vpop.permute.xlu0 %7931
    %7933 = vrot.lane.b32.xlu0 %v7575, 88
    %v7934 = vpop.permute.xlu0 %7933
    %7935 = vrot.lane.b32.xlu0 %v7578, 88
    %v7936 = vpop.permute.xlu0 %7935
    %v7953 = vsel %vm622, %v7027, %v7778
    %v7954 = vsel %vm622, %v7028, %v7780
    %v7955 = vsel %vm622, %v7029, %v7782
    %v7956 = vsel %vm622, %v7030, %v7784
    %v7957 = vsel %vm622, %v7031, %v7786
    %v7958 = vsel %vm622, %v7032, %v7788
    %v7959 = vsel %vm622, %v7033, %v7790
    %v7960 = vsel %vm622, %v7034, %v7792
    %v7961 = vsel %vm622, %v7035, %v7794
    %v7962 = vsel %vm622, %v7036, %v7796
    %v7963 = vsel %vm622, %v7037, %v7798
    %v7964 = vsel %vm622, %v7038, %v7800
    %v7965 = vsel %vm622, %v7039, %v7802
    %v7966 = vsel %vm622, %v7040, %v7804
    %v7967 = vsel %vm622, %v7041, %v7806
    %v7968 = vsel %vm622, %v7042, %v7808
    %v7969 = vsel %vm1942, %v7953, %v7842
    %v7970 = vsel %vm1942, %v7954, %v7844
    %v7971 = vsel %vm1942, %v7955, %v7846
    %v7972 = vsel %vm1942, %v7956, %v7848
    %v7973 = vsel %vm1942, %v7957, %v7850
    %v7974 = vsel %vm1942, %v7958, %v7852
    %v7975 = vsel %vm1942, %v7959, %v7854
    %v7976 = vsel %vm1942, %v7960, %v7856
    %v7977 = vsel %vm1942, %v7961, %v7858
    %v7978 = vsel %vm1942, %v7962, %v7860
    %v7979 = vsel %vm1942, %v7963, %v7862
    %v7980 = vsel %vm1942, %v7964, %v7864
    %v7981 = vsel %vm1942, %v7965, %v7866
    %v7982 = vsel %vm1942, %v7966, %v7868
    %v7983 = vsel %vm1942, %v7967, %v7870
    %v7984 = vsel %vm1942, %v7968, %v7872
    %vm7985 = vcmask 719872
    %v7986 = vsel %vm7985, %v7969, %v7906
    %v7987 = vsel %vm7985, %v7970, %v7908
    %v7988 = vsel %vm7985, %v7971, %v7910
    %v7989 = vsel %vm7985, %v7972, %v7912
    %v7990 = vsel %vm7985, %v7973, %v7914
    %v7991 = vsel %vm7985, %v7974, %v7916
    %v7992 = vsel %vm7985, %v7975, %v7918
    %v7993 = vsel %vm7985, %v7976, %v7920
    %v7994 = vsel %vm7985, %v7977, %v7922
    %v7995 = vsel %vm7985, %v7978, %v7924
    %v7996 = vsel %vm7985, %v7979, %v7926
    %v7997 = vsel %vm7985, %v7980, %v7928
    %v7998 = vsel %vm7985, %v7981, %v7930
    %v7999 = vsel %vm7985, %v7982, %v7932
    %v8000 = vsel %vm7985, %v7983, %v7934
    %v8001 = vsel %vm7985, %v7984, %v7936
    %v8002 = vpack.c.bf16 %v7987, %v7986
    %v8003 = vpack.c.bf16 %v7664, %v7661
    %v8004 = vpack.c.bf16 %v7989, %v7988
    %v8005 = vpack.c.bf16 %v7672, %v7669
    %v8006 = vpack.c.bf16 %v7991, %v7990
    %v8007 = vpack.c.bf16 %v7680, %v7677
    %v8008 = vpack.c.bf16 %v7993, %v7992
    %v8009 = vpack.c.bf16 %v7688, %v7685
    %v8010 = vpack.c.bf16 %v7995, %v7994
    %v8011 = vpack.c.bf16 %v7734, %v7731
    %v8012 = vpack.c.bf16 %v7997, %v7996
    %v8013 = vpack.c.bf16 %v7742, %v7739
    %v8014 = vpack.c.bf16 %v7999, %v7998
    %v8015 = vpack.c.bf16 %v7750, %v7747
    %v8016 = vpack.c.bf16 %v8001, %v8000
    %v8017 = vpack.c.bf16 %v7758, %v7755
    %v8018 = vld [vmem:[#allocation16 + $0x7f0] sm:$0xf]
    %v8019 = vld [vmem:[#allocation16 + $0x7f4] sm:$0xf]
    %v8020 = vld [vmem:[#allocation16 + $0x7f8] sm:$0xf]
    %v8021 = vld [vmem:[#allocation16 + $0x7fc] sm:$0xf]
    %v8022 = vld [vmem:[#allocation16 + $0x800] sm:$0xf]
    %v8023 = vld [vmem:[#allocation16 + $0x804] sm:$0xf]
    %v8024 = vld [vmem:[#allocation16 + $0x808] sm:$0xf]
    %v8025 = vld [vmem:[#allocation16 + $0x80c] sm:$0xf]
    %v8026 = vld [vmem:[#allocation16 + $0x810] sm:$0xf]
    %v8027 = vld [vmem:[#allocation16 + $0x814] sm:$0xf]
    %v8028 = vld [vmem:[#allocation16 + $0x818] sm:$0xf]
    %v8029 = vld [vmem:[#allocation16 + $0x81c] sm:$0xf]
    %v8030 = vld [vmem:[#allocation16 + $0x820] sm:$0xf]
    %v8031 = vld [vmem:[#allocation16 + $0x824] sm:$0xf]
    %v8032 = vld [vmem:[#allocation16 + $0x828] sm:$0xf]
    %v8033 = vld [vmem:[#allocation16 + $0x82c] sm:$0xf]
    %v8034 = vld [vmem:[#allocation16 + $0x830] sm:$0xf]
    %v8035 = vld [vmem:[#allocation16 + $0x834] sm:$0xf]
    %v8036 = vld [vmem:[#allocation16 + $0x838] sm:$0xf]
    %v8037 = vld [vmem:[#allocation16 + $0x83c] sm:$0xf]
    %v8038 = vld [vmem:[#allocation16 + $0x840] sm:$0xf]
    %v8039 = vld [vmem:[#allocation16 + $0x844] sm:$0xf]
    %v8040 = vld [vmem:[#allocation16 + $0x848] sm:$0xf]
    %v8041 = vld [vmem:[#allocation16 + $0x84c] sm:$0xf]
    %v8042 = vld [vmem:[#allocation16 + $0x850] sm:$0xf]
    %v8043 = vld [vmem:[#allocation16 + $0x854] sm:$0xf]
    %v8044 = vld [vmem:[#allocation16 + $0x858] sm:$0xf]
    %v8045 = vld [vmem:[#allocation16 + $0x85c] sm:$0xf]
    %v8046 = vld [vmem:[#allocation16 + $0x860] sm:$0xf]
    %v8047 = vld [vmem:[#allocation16 + $0x864] sm:$0xf]
    %v8048 = vld [vmem:[#allocation16 + $0x868] sm:$0xf]
    %v8049 = vld [vmem:[#allocation16 + $0x86c] sm:$0xf]
    %v8050 = vld [vmem:[#allocation16 + $0x870] sm:$0x1]
    %v8083 = vrot.slane %v7986, 7
    %v8084 = vrot.slane %v7661, 7
    %v8085 = vrot.slane %v7987, 7
    %v8086 = vsel %vm58, %v8083, %v8085
    %v8087 = vrot.slane %v7664, 7
    %v8088 = vsel %vm58, %v8084, %v8087
    %v8089 = vrot.slane %v7988, 7
    %v8090 = vsel %vm58, %v8085, %v8089
    %v8091 = vrot.slane %v7669, 7
    %v8092 = vsel %vm58, %v8087, %v8091
    %v8093 = vrot.slane %v7989, 7
    %v8094 = vsel %vm58, %v8089, %v8093
    %v8095 = vrot.slane %v7672, 7
    %v8096 = vsel %vm58, %v8091, %v8095
    %v8097 = vrot.slane %v7990, 7
    %v8098 = vsel %vm58, %v8093, %v8097
    %v8099 = vrot.slane %v7677, 7
    %v8100 = vsel %vm58, %v8095, %v8099
    %v8101 = vrot.slane %v7991, 7
    %v8102 = vsel %vm58, %v8097, %v8101
    %v8103 = vrot.slane %v7680, 7
    %v8104 = vsel %vm58, %v8099, %v8103
    %v8105 = vrot.slane %v7992, 7
    %v8106 = vsel %vm58, %v8101, %v8105
    %v8107 = vrot.slane %v7685, 7
    %v8108 = vsel %vm58, %v8103, %v8107
    %v8109 = vrot.slane %v7993, 7
    %v8110 = vsel %vm58, %v8105, %v8109
    %v8111 = vrot.slane %v7688, 7
    %v8112 = vsel %vm58, %v8107, %v8111
    %v8113 = vrot.slane %v7994, 7
    %v8114 = vsel %vm58, %v8109, %v8113
    %v8115 = vrot.slane %v7731, 7
    %v8116 = vsel %vm58, %v8111, %v8115
    %v8117 = vrot.slane %v7995, 7
    %v8118 = vsel %vm58, %v8113, %v8117
    %v8119 = vrot.slane %v7734, 7
    %v8120 = vsel %vm58, %v8115, %v8119
    %v8121 = vrot.slane %v7996, 7
    %v8122 = vsel %vm58, %v8117, %v8121
    %v8123 = vrot.slane %v7739, 7
    %v8124 = vsel %vm58, %v8119, %v8123
    %v8125 = vrot.slane %v7997, 7
    %v8126 = vsel %vm58, %v8121, %v8125
    %v8127 = vrot.slane %v7742, 7
    %v8128 = vsel %vm58, %v8123, %v8127
    %v8129 = vrot.slane %v7998, 7
    %v8130 = vsel %vm58, %v8125, %v8129
    %v8131 = vrot.slane %v7747, 7
    %v8132 = vsel %vm58, %v8127, %v8131
    %v8133 = vrot.slane %v7999, 7
    %v8134 = vsel %vm58, %v8129, %v8133
    %v8135 = vrot.slane %v7750, 7
    %v8136 = vsel %vm58, %v8131, %v8135
    %v8137 = vrot.slane %v8000, 7
    %v8138 = vsel %vm58, %v8133, %v8137
    %v8139 = vrot.slane %v7755, 7
    %v8140 = vsel %vm58, %v8135, %v8139
    %v8141 = vrot.slane %v8001, 7
    %v8142 = vsel %vm58, %v8137, %v8141
    %v8143 = vrot.slane %v7758, 7
    %v8144 = vsel %vm58, %v8139, %v8143
    %v8177 = vsel %vm58, 0.0, %v8083
    %v8178 = vsel %vm58, 0.0, %v8084
    %v8179 = vsel %vm348, %v8177, 0.0
    %v8180 = vsel %vm348, %v8178, 0.0
    %v8181 = vsel %vm349, %v8086, 0.0
    %v8182 = vsel %vm349, %v8088, 0.0
    %v8183 = vsel %vm350, %v8090, 0.0
    %v8184 = vsel %vm350, %v8092, 0.0
    %v8185 = vsel %vm351, %v8094, 0.0
    %v8186 = vsel %vm351, %v8096, 0.0
    %v8187 = vsel %vm352, %v8098, 0.0
    %v8188 = vsel %vm352, %v8100, 0.0
    %v8189 = vsel %vm353, %v8102, 0.0
    %v8190 = vsel %vm353, %v8104, 0.0
    %v8191 = vsel %vm354, %v8106, 0.0
    %v8192 = vsel %vm354, %v8108, 0.0
    %v8193 = vsel %vm355, %v8110, 0.0
    %v8194 = vsel %vm355, %v8112, 0.0
    %v8195 = vsel %vm356, %v8114, 0.0
    %v8196 = vsel %vm356, %v8116, 0.0
    %v8197 = vsel %vm357, %v8118, 0.0
    %v8198 = vsel %vm357, %v8120, 0.0
    %v8199 = vsel %vm358, %v8122, 0.0
    %v8200 = vsel %vm358, %v8124, 0.0
    %v8201 = vsel %vm359, %v8126, 0.0
    %v8202 = vsel %vm359, %v8128, 0.0
    %v8203 = vsel %vm360, %v8130, 0.0
    %v8204 = vsel %vm360, %v8132, 0.0
    %v8205 = vsel %vm361, %v8134, 0.0
    %v8206 = vsel %vm361, %v8136, 0.0
    %v8207 = vsel %vm362, %v8138, 0.0
    %v8208 = vsel %vm362, %v8140, 0.0
    %v8209 = vsel %vm363, %v8142, 0.0
    %v8210 = vsel %vm363, %v8144, 0.0
    %v8211 = vpack.c.bf16 %v8181, %v8179
    %v8212 = vpack.c.bf16 %v8182, %v8180
    %v8213 = vpack.c.bf16 %v8185, %v8183
    %v8214 = vpack.c.bf16 %v8186, %v8184
    %v8215 = vpack.c.bf16 %v8189, %v8187
    %v8216 = vpack.c.bf16 %v8190, %v8188
    %v8217 = vpack.c.bf16 %v8193, %v8191
    %v8218 = vpack.c.bf16 %v8194, %v8192
    %v8219 = vpack.c.bf16 %v8197, %v8195
    %v8220 = vpack.c.bf16 %v8198, %v8196
    %v8221 = vpack.c.bf16 %v8201, %v8199
    %v8222 = vpack.c.bf16 %v8202, %v8200
    %v8223 = vpack.c.bf16 %v8205, %v8203
    %v8224 = vpack.c.bf16 %v8206, %v8204
    %v8225 = vpack.c.bf16 %v8209, %v8207
    %v8226 = vpack.c.bf16 %v8210, %v8208
    %v8227 = vld [vmem:[#allocation16 + $0x770] sm:$0xf]
    %v8228 = vld [vmem:[#allocation16 + $0x774] sm:$0xf]
    %v8229 = vld [vmem:[#allocation16 + $0x778] sm:$0xf]
    %v8230 = vld [vmem:[#allocation16 + $0x77c] sm:$0xf]
    %v8231 = vld [vmem:[#allocation16 + $0x780] sm:$0xf]
    %v8232 = vld [vmem:[#allocation16 + $0x784] sm:$0xf]
    %v8233 = vld [vmem:[#allocation16 + $0x788] sm:$0xf]
    %v8234 = vld [vmem:[#allocation16 + $0x78c] sm:$0xf]
    %v8235 = vld [vmem:[#allocation16 + $0x790] sm:$0xf]
    %v8236 = vld [vmem:[#allocation16 + $0x794] sm:$0xf]
    %v8237 = vld [vmem:[#allocation16 + $0x798] sm:$0xf]
    %v8238 = vld [vmem:[#allocation16 + $0x79c] sm:$0xf]
    %v8239 = vld [vmem:[#allocation16 + $0x7a0] sm:$0xf]
    %v8240 = vld [vmem:[#allocation16 + $0x7a4] sm:$0xf]
    %v8241 = vld [vmem:[#allocation16 + $0x7a8] sm:$0xf]
    %v8242 = vld [vmem:[#allocation16 + $0x7ac] sm:$0xf]
    %v8243 = vld [vmem:[#allocation16 + $0x7b0] sm:$0xf]
    %v8244 = vld [vmem:[#allocation16 + $0x7b4] sm:$0xf]
    %v8245 = vld [vmem:[#allocation16 + $0x7b8] sm:$0xf]
    %v8246 = vld [vmem:[#allocation16 + $0x7bc] sm:$0xf]
    %v8247 = vld [vmem:[#allocation16 + $0x7c0] sm:$0xf]
    %v8248 = vld [vmem:[#allocation16 + $0x7c4] sm:$0xf]
    %v8249 = vld [vmem:[#allocation16 + $0x7c8] sm:$0xf]
    %v8250 = vld [vmem:[#allocation16 + $0x7cc] sm:$0xf]
    %v8251 = vld [vmem:[#allocation16 + $0x7d0] sm:$0xf]
    %v8252 = vld [vmem:[#allocation16 + $0x7d4] sm:$0xf]
    %v8253 = vld [vmem:[#allocation16 + $0x7d8] sm:$0xf]
    %v8254 = vld [vmem:[#allocation16 + $0x7dc] sm:$0xf]
    %v8255 = vld [vmem:[#allocation16 + $0x7e0] sm:$0xf]
    %v8256 = vld [vmem:[#allocation16 + $0x7e4] sm:$0xf]
    %v8257 = vld [vmem:[#allocation16 + $0x7e8] sm:$0xf]
    %v8258 = vld [vmem:[#allocation16 + $0x7ec] sm:$0xf]
    %v8291 = vunpack.c.l.b16 %v8227
    %v8292 = vunpack.c.l.b16 %v8228
    %v8293 = vunpack.c.l.b16 %v8229
    %v8294 = vunpack.c.l.b16 %v8230
    %v8295 = vunpack.c.l.b16 %v8231
    %v8296 = vunpack.c.l.b16 %v8232
    %v8297 = vunpack.c.l.b16 %v8233
    %v8298 = vunpack.c.l.b16 %v8234
    %v8299 = vunpack.c.l.b16 %v8235
    %v8300 = vunpack.c.l.b16 %v8236
    %v8301 = vunpack.c.l.b16 %v8237
    %v8302 = vunpack.c.l.b16 %v8238
    %v8303 = vunpack.c.l.b16 %v8239
    %v8304 = vunpack.c.l.b16 %v8240
    %v8305 = vunpack.c.l.b16 %v8241
    %v8306 = vunpack.c.l.b16 %v8242
    %v8307 = vunpack.c.l.b16 %v8243
    %v8308 = vunpack.c.l.b16 %v8244
    %v8309 = vunpack.c.l.b16 %v8245
    %v8310 = vunpack.c.l.b16 %v8246
    %v8311 = vunpack.c.l.b16 %v8247
    %v8312 = vunpack.c.l.b16 %v8248
    %v8313 = vunpack.c.l.b16 %v8249
    %v8314 = vunpack.c.l.b16 %v8250
    %v8315 = vunpack.c.l.b16 %v8251
    %v8316 = vunpack.c.l.b16 %v8252
    %v8317 = vunpack.c.l.b16 %v8253
    %v8318 = vunpack.c.l.b16 %v8254
    %v8319 = vunpack.c.l.b16 %v8255
    %v8320 = vunpack.c.l.b16 %v8256
    %v8321 = vunpack.c.l.b16 %v8257
    %v8322 = vunpack.c.l.b16 %v8258
    %v8323 = vpack.c.b16 %v8292, %v8291
    %v8324 = vpack.c.b16 %v8294, %v8293
    %v8325 = vpack.c.b16 %v8296, %v8295
    %v8326 = vpack.c.b16 %v8298, %v8297
    %v8327 = vpack.c.b16 %v8300, %v8299
    %v8328 = vpack.c.b16 %v8302, %v8301
    %v8329 = vpack.c.b16 %v8304, %v8303
    %v8330 = vpack.c.b16 %v8306, %v8305
    %v8331 = vpack.c.b16 %v8308, %v8307
    %v8332 = vpack.c.b16 %v8310, %v8309
    %v8333 = vpack.c.b16 %v8312, %v8311
    %v8334 = vpack.c.b16 %v8314, %v8313
    %v8335 = vpack.c.b16 %v8316, %v8315
    %v8336 = vpack.c.b16 %v8318, %v8317
    %v8337 = vpack.c.b16 %v8320, %v8319
    %v8338 = vpack.c.b16 %v8322, %v8321
    %8355 = vmatprep.subr.bf16.mxu0 0
    %8356 = vmatpush1.bf16.msra.mxu0 %v8323
    %8357 = vmatprep.subr.bf16.mxu0 0
    %8358 = vmatpush1.bf16.msra.mxu0 %v8324
    %8359 = vmatprep.subr.bf16.mxu0 0
    %8360 = vmatpush1.bf16.msra.mxu0 %v8325
    %8361 = vmatprep.subr.bf16.mxu0 0
    %8362 = vmatpush1.bf16.msra.mxu0 %v8326
    %8363 = vmatprep.subr.bf16.mxu0 0
    %8364 = vmatpush1.bf16.msra.mxu0 %v8327
    %8365 = vmatprep.subr.bf16.mxu0 0
    %8366 = vmatpush1.bf16.msra.mxu0 %v8328
    %8367 = vmatprep.subr.bf16.mxu0 0
    %8368 = vmatpush1.bf16.msra.mxu0 %v8329
    %8369 = vmatprep.subr.bf16.mxu0 0
    %8370 = vmatpush1.bf16.msra.mxu0 %v8330
    %8371 = vmatprep.subr.bf16.mxu0 0
    %8372 = vmatpush1.bf16.msra.mxu0 %v8331
    %8373 = vmatprep.subr.bf16.mxu0 0
    %8374 = vmatpush1.bf16.msra.mxu0 %v8332
    %8375 = vmatprep.subr.bf16.mxu0 0
    %8376 = vmatpush1.bf16.msra.mxu0 %v8333
    %8377 = vmatprep.subr.bf16.mxu0 0
    %8378 = vmatpush1.bf16.msra.mxu0 %v8334
    %8379 = vmatprep.subr.bf16.mxu0 0
    %8380 = vmatpush1.bf16.msra.mxu0 %v8335
    %8381 = vmatprep.subr.bf16.mxu0 0
    %8382 = vmatpush1.bf16.msra.mxu0 %v8336
    %8383 = vmatprep.subr.bf16.mxu0 0
    %8384 = vmatpush1.bf16.msra.mxu0 %v8337
    %8385 = vmatprep.subr.bf16.mxu0 0
    %8386 = vmatpush1.bf16.msra.mxu0 %v8338
    %8387 = vmatprep.mubr.bf16.mxu0 %v8212
    %8388 = vmatmul.mubr.bf16.gmra.mrb[0].mxu0 %v8211
    %v8389 = vpop.f32.mrb[0].mxu0
    %v8390 = vadd.f32 0.0, %v8389
    %v8391 = vpop.f32.mrb[0].mxu0
    %v8392 = vpop.f32.mrb[0].mxu0
    %v8393 = vadd.f32 0.0, %v8392
    %v8394 = vpop.f32.mrb[0].mxu0
    %8395 = vmatprep.mubr.bf16.mxu0 %v8214
    %8396 = vmatmul.mubr.bf16.gmra.mrb[0].mxu0 %v8213
    %v8397 = vpop.f32.mrb[0].mxu0
    %v8398 = vadd.f32 0.0, %v8397
    %v8399 = vpop.f32.mrb[0].mxu0
    %v8400 = vpop.f32.mrb[0].mxu0
    %v8401 = vadd.f32 0.0, %v8400
    %v8402 = vpop.f32.mrb[0].mxu0
    %8403 = vmatprep.mubr.bf16.mxu0 %v8216
    %8404 = vmatmul.mubr.bf16.gmra.mrb[0].mxu0 %v8215
    %v8405 = vpop.f32.mrb[0].mxu0
    %v8406 = vadd.f32 0.0, %v8405
    %v8407 = vpop.f32.mrb[0].mxu0
    %v8408 = vpop.f32.mrb[0].mxu0
    %v8409 = vadd.f32 0.0, %v8408
    %v8410 = vpop.f32.mrb[0].mxu0
    %8411 = vmatprep.mubr.bf16.mxu0 %v8218
    %8412 = vmatmul.mubr.bf16.gmra.mrb[0].mxu0 %v8217
    %v8413 = vpop.f32.mrb[0].mxu0
    %v8414 = vadd.f32 0.0, %v8413
    %v8415 = vpop.f32.mrb[0].mxu0
    %v8416 = vpop.f32.mrb[0].mxu0
    %v8417 = vadd.f32 0.0, %v8416
    %v8418 = vpop.f32.mrb[0].mxu0
    %8419 = vmatprep.mubr.bf16.mxu0 %v8220
    %8420 = vmatmul.mubr.bf16.gmra.mrb[0].mxu0 %v8219
    %v8421 = vpop.f32.mrb[0].mxu0
    %v8422 = vadd.f32 0.0, %v8421
    %v8423 = vpop.f32.mrb[0].mxu0
    %v8424 = vpop.f32.mrb[0].mxu0
    %v8425 = vadd.f32 0.0, %v8424
    %v8426 = vpop.f32.mrb[0].mxu0
    %8427 = vmatprep.mubr.bf16.mxu0 %v8222
    %8428 = vmatmul.mubr.bf16.gmra.mrb[0].mxu0 %v8221
    %v8429 = vpop.f32.mrb[0].mxu0
    %v8430 = vadd.f32 0.0, %v8429
    %v8431 = vpop.f32.mrb[0].mxu0
    %v8432 = vpop.f32.mrb[0].mxu0
    %v8433 = vadd.f32 0.0, %v8432
    %v8434 = vpop.f32.mrb[0].mxu0
    %8435 = vmatprep.mubr.bf16.mxu0 %v8224
    %8436 = vmatmul.mubr.bf16.gmra.mrb[0].mxu0 %v8223
    %v8437 = vpop.f32.mrb[0].mxu0
    %v8438 = vadd.f32 0.0, %v8437
    %v8439 = vpop.f32.mrb[0].mxu0
    %v8440 = vpop.f32.mrb[0].mxu0
    %v8441 = vadd.f32 0.0, %v8440
    %v8442 = vpop.f32.mrb[0].mxu0
    %8443 = vmatprep.mubr.bf16.mxu0 %v8226
    %8444 = vmatmul.mubr.bf16.gmra.mrb[0].mxu0 %v8225
    %v8445 = vpop.f32.mrb[0].mxu0
    %v8446 = vadd.f32 0.0, %v8445
    %v8447 = vpop.f32.mrb[0].mxu0
    %v8448 = vpop.f32.mrb[0].mxu0
    %v8449 = vadd.f32 0.0, %v8448
    %v8450 = vpop.f32.mrb[0].mxu0
    %8451 = vdwg.mxu0
    %v8485 = vunpack.c.l.b16 %v8018
    %v8486 = vunpack.c.l.b16 %v8019
    %v8487 = vunpack.c.l.b16 %v8020
    %v8488 = vunpack.c.l.b16 %v8021
    %v8489 = vunpack.c.l.b16 %v8022
    %v8490 = vunpack.c.l.b16 %v8023
    %v8491 = vunpack.c.l.b16 %v8024
    %v8492 = vunpack.c.l.b16 %v8025
    %v8493 = vunpack.c.l.b16 %v8026
    %v8494 = vunpack.c.l.b16 %v8027
    %v8495 = vunpack.c.l.b16 %v8028
    %v8496 = vunpack.c.l.b16 %v8029
    %v8497 = vunpack.c.l.b16 %v8030
    %v8498 = vunpack.c.l.b16 %v8031
    %v8499 = vunpack.c.l.b16 %v8032
    %v8500 = vunpack.c.l.b16 %v8033
    %v8501 = vunpack.c.l.b16 %v8034
    %v8502 = vunpack.c.l.b16 %v8035
    %v8503 = vunpack.c.l.b16 %v8036
    %v8504 = vunpack.c.l.b16 %v8037
    %v8505 = vunpack.c.l.b16 %v8038
    %v8506 = vunpack.c.l.b16 %v8039
    %v8507 = vunpack.c.l.b16 %v8040
    %v8508 = vunpack.c.l.b16 %v8041
    %v8509 = vunpack.c.l.b16 %v8042
    %v8510 = vunpack.c.l.b16 %v8043
    %v8511 = vunpack.c.l.b16 %v8044
    %v8512 = vunpack.c.l.b16 %v8045
    %v8513 = vunpack.c.l.b16 %v8046
    %v8514 = vunpack.c.l.b16 %v8047
    %v8515 = vunpack.c.l.b16 %v8048
    %v8516 = vunpack.c.l.b16 %v8049
    %v8517 = vunpack.c.l.b16 %v8050
    %v8518 = vpack.c.b16 %v8486, %v8485
    %v8519 = vpack.c.b16 %v8488, %v8487
    %v8520 = vpack.c.b16 %v8490, %v8489
    %v8521 = vpack.c.b16 %v8492, %v8491
    %v8522 = vpack.c.b16 %v8494, %v8493
    %v8523 = vpack.c.b16 %v8496, %v8495
    %v8524 = vpack.c.b16 %v8498, %v8497
    %v8525 = vpack.c.b16 %v8500, %v8499
    %v8526 = vpack.c.b16 %v8502, %v8501
    %v8527 = vpack.c.b16 %v8504, %v8503
    %v8528 = vpack.c.b16 %v8506, %v8505
    %v8529 = vpack.c.b16 %v8508, %v8507
    %v8530 = vpack.c.b16 %v8510, %v8509
    %v8531 = vpack.c.b16 %v8512, %v8511
    %v8532 = vpack.c.b16 %v8514, %v8513
    %v8533 = vpack.c.b16 %v8516, %v8515
    %v8534 = vpack.c.b16 %v8517, %v8517
    %v8552 = vand.u32 %v8534, %v1997
    %8554 = vmatprep.subr.bf16.mxu0 0
    %8555 = vmatpush1.bf16.msra.mxu0 %v8518
    %8556 = vmatprep.subr.bf16.mxu0 0
    %8557 = vmatpush1.bf16.msra.mxu0 %v8519
    %8558 = vmatprep.subr.bf16.mxu0 0
    %8559 = vmatpush1.bf16.msra.mxu0 %v8520
    %8560 = vmatprep.subr.bf16.mxu0 0
    %8561 = vmatpush1.bf16.msra.mxu0 %v8521
    %8562 = vmatprep.subr.bf16.mxu0 0
    %8563 = vmatpush1.bf16.msra.mxu0 %v8522
    %8564 = vmatprep.subr.bf16.mxu0 0
    %8565 = vmatpush1.bf16.msra.mxu0 %v8523
    %8566 = vmatprep.subr.bf16.mxu0 0
    %8567 = vmatpush1.bf16.msra.mxu0 %v8524
    %8568 = vmatprep.subr.bf16.mxu0 0
    %8569 = vmatpush1.bf16.msra.mxu0 %v8525
    %8570 = vmatprep.subr.bf16.mxu0 0
    %8571 = vmatpush1.bf16.msra.mxu0 %v8526
    %8572 = vmatprep.subr.bf16.mxu0 0
    %8573 = vmatpush1.bf16.msra.mxu0 %v8527
    %8574 = vmatprep.subr.bf16.mxu0 0
    %8575 = vmatpush1.bf16.msra.mxu0 %v8528
    %8576 = vmatprep.subr.bf16.mxu0 0
    %8577 = vmatpush1.bf16.msra.mxu0 %v8529
    %8578 = vmatprep.subr.bf16.mxu0 0
    %8579 = vmatpush1.bf16.msra.mxu0 %v8530
    %8580 = vmatprep.subr.bf16.mxu0 0
    %8581 = vmatpush1.bf16.msra.mxu0 %v8531
    %8582 = vmatprep.subr.bf16.mxu0 0
    %8583 = vmatpush1.bf16.msra.mxu0 %v8532
    %8584 = vmatprep.subr.bf16.mxu0 0
    %8585 = vmatpush1.bf16.msra.mxu0 %v8533
    %8586 = vmatprep.mubr.bf16.mxu0 %v8003
    %8587 = vmatmul.mubr.bf16.gmra.mrb[0].mxu0 %v8002
    %v8588 = vpop.f32.mrb[0].mxu0
    %v8589 = vadd.f32 %v8390, %v8588
    %v8590 = vpop.f32.mrb[0].mxu0
    %v8591 = vpop.f32.mrb[0].mxu0
    %v8592 = vadd.f32 %v8393, %v8591
    %v8593 = vpop.f32.mrb[0].mxu0
    %8594 = vmatprep.mubr.bf16.mxu0 %v8005
    %8595 = vmatmul.mubr.bf16.gmra.mrb[0].mxu0 %v8004
    %v8596 = vpop.f32.mrb[0].mxu0
    %v8597 = vadd.f32 %v8398, %v8596
    %v8598 = vpop.f32.mrb[0].mxu0
    %v8599 = vpop.f32.mrb[0].mxu0
    %v8600 = vadd.f32 %v8401, %v8599
    %v8601 = vpop.f32.mrb[0].mxu0
    %8602 = vmatprep.mubr.bf16.mxu0 %v8007
    %8603 = vmatmul.mubr.bf16.gmra.mrb[0].mxu0 %v8006
    %v8604 = vpop.f32.mrb[0].mxu0
    %v8605 = vadd.f32 %v8406, %v8604
    %v8606 = vpop.f32.mrb[0].mxu0
    %v8607 = vpop.f32.mrb[0].mxu0
    %v8608 = vadd.f32 %v8409, %v8607
    %v8609 = vpop.f32.mrb[0].mxu0
    %8610 = vmatprep.mubr.bf16.mxu0 %v8009
    %8611 = vmatmul.mubr.bf16.gmra.mrb[0].mxu0 %v8008
    %v8612 = vpop.f32.mrb[0].mxu0
    %v8613 = vadd.f32 %v8414, %v8612
    %v8614 = vpop.f32.mrb[0].mxu0
    %v8615 = vpop.f32.mrb[0].mxu0
    %v8616 = vadd.f32 %v8417, %v8615
    %v8617 = vpop.f32.mrb[0].mxu0
    %8618 = vmatprep.mubr.bf16.mxu0 %v8011
    %8619 = vmatmul.mubr.bf16.gmra.mrb[0].mxu0 %v8010
    %v8620 = vpop.f32.mrb[0].mxu0
    %v8621 = vadd.f32 %v8422, %v8620
    %v8622 = vpop.f32.mrb[0].mxu0
    %v8623 = vpop.f32.mrb[0].mxu0
    %v8624 = vadd.f32 %v8425, %v8623
    %v8625 = vpop.f32.mrb[0].mxu0
    %8626 = vmatprep.mubr.bf16.mxu0 %v8013
    %8627 = vmatmul.mubr.bf16.gmra.mrb[0].mxu0 %v8012
    %v8628 = vpop.f32.mrb[0].mxu0
    %v8629 = vadd.f32 %v8430, %v8628
    %v8630 = vpop.f32.mrb[0].mxu0
    %v8631 = vpop.f32.mrb[0].mxu0
    %v8632 = vadd.f32 %v8433, %v8631
    %v8633 = vpop.f32.mrb[0].mxu0
    %8634 = vmatprep.mubr.bf16.mxu0 %v8015
    %8635 = vmatmul.mubr.bf16.gmra.mrb[0].mxu0 %v8014
    %v8636 = vpop.f32.mrb[0].mxu0
    %v8637 = vadd.f32 %v8438, %v8636
    %v8638 = vpop.f32.mrb[0].mxu0
    %v8639 = vpop.f32.mrb[0].mxu0
    %v8640 = vadd.f32 %v8441, %v8639
    %v8641 = vpop.f32.mrb[0].mxu0
    %8642 = vmatprep.mubr.bf16.mxu0 %v8017
    %8643 = vmatmul.mubr.bf16.gmra.mrb[0].mxu0 %v8016
    %v8644 = vpop.f32.mrb[0].mxu0
    %v8645 = vadd.f32 %v8446, %v8644
    %v8646 = vpop.f32.mrb[0].mxu0
    %v8647 = vpop.f32.mrb[0].mxu0
    %v8648 = vadd.f32 %v8449, %v8647
    %v8649 = vpop.f32.mrb[0].mxu0
    %8650 = vdwg.mxu0
    %8651 = vmatprep.subr.bf16.mxu0 0
    %8652 = vmatpush1.bf16.msra.mxu0 %v8552
    %8653 = vmatprep.subr.bf16.mxu0 0
    %8654 = vmatpush1.bf16.msra.mxu0 0
    %8655 = vmatprep.subr.bf16.mxu0 0
    %8656 = vmatpush1.bf16.msra.mxu0 0
    %8657 = vmatprep.subr.bf16.mxu0 0
    %8658 = vmatpush1.bf16.msra.mxu0 0
    %8659 = vmatprep.subr.bf16.mxu0 0
    %8660 = vmatpush1.bf16.msra.mxu0 0
    %8661 = vmatprep.subr.bf16.mxu0 0
    %8662 = vmatpush1.bf16.msra.mxu0 0
    %8663 = vmatprep.subr.bf16.mxu0 0
    %8664 = vmatpush1.bf16.msra.mxu0 0
    %8665 = vmatprep.subr.bf16.mxu0 0
    %8666 = vmatpush1.bf16.msra.mxu0 0
    %8667 = vmatprep.subr.bf16.mxu0 0
    %8668 = vmatpush1.bf16.msra.mxu0 0
    %8669 = vmatprep.subr.bf16.mxu0 0
    %8670 = vmatpush1.bf16.msra.mxu0 0
    %8671 = vmatprep.subr.bf16.mxu0 0
    %8672 = vmatpush1.bf16.msra.mxu0 0
    %8673 = vmatprep.subr.bf16.mxu0 0
    %8674 = vmatpush1.bf16.msra.mxu0 0
    %8675 = vmatprep.subr.bf16.mxu0 0
    %8676 = vmatpush1.bf16.msra.mxu0 0
    %8677 = vmatprep.subr.bf16.mxu0 0
    %8678 = vmatpush1.bf16.msra.mxu0 0
    %8679 = vmatprep.subr.bf16.mxu0 0
    %8680 = vmatpush1.bf16.msra.mxu0 0
    %8681 = vmatprep.subr.bf16.mxu0 0
    %8682 = vmatpush1.bf16.msra.mxu0 0
    %8683 = vmatprep.mubr.bf16.mxu0 0
    %8684 = vmatmul.mubr.bf16.gmra.mrb[0].mxu0 %v3326
    %v8685 = vpop.f32.mrb[0].mxu0
    %v8686 = vadd.f32 %v8589, %v8685
    %v8687 = vpop.f32.mrb[0].mxu0
    %v8688 = vpop.f32.mrb[0].mxu0
    %v8689 = vadd.f32 %v8592, %v8688
    %v8690 = vpop.f32.mrb[0].mxu0
    %8691 = vmatprep.mubr.bf16.mxu0 0
    %8692 = vmatmul.mubr.bf16.gmra.mrb[0].mxu0 %v3326
    %v8693 = vpop.f32.mrb[0].mxu0
    %v8694 = vadd.f32 %v8597, %v8693
    %v8695 = vpop.f32.mrb[0].mxu0
    %v8696 = vpop.f32.mrb[0].mxu0
    %v8697 = vadd.f32 %v8600, %v8696
    %v8698 = vpop.f32.mrb[0].mxu0
    %8699 = vmatprep.mubr.bf16.mxu0 0
    %8700 = vmatmul.mubr.bf16.gmra.mrb[0].mxu0 %v3326
    %v8701 = vpop.f32.mrb[0].mxu0
    %v8702 = vadd.f32 %v8605, %v8701
    %v8703 = vpop.f32.mrb[0].mxu0
    %v8704 = vpop.f32.mrb[0].mxu0
    %v8705 = vadd.f32 %v8608, %v8704
    %v8706 = vpop.f32.mrb[0].mxu0
    %8707 = vmatprep.mubr.bf16.mxu0 0
    %8708 = vmatmul.mubr.bf16.gmra.mrb[0].mxu0 %v3326
    %v8709 = vpop.f32.mrb[0].mxu0
    %v8710 = vadd.f32 %v8613, %v8709
    %v8711 = vpop.f32.mrb[0].mxu0
    %v8712 = vpop.f32.mrb[0].mxu0
    %v8713 = vadd.f32 %v8616, %v8712
    %v8714 = vpop.f32.mrb[0].mxu0
    %8715 = vmatprep.mubr.bf16.mxu0 0
    %8716 = vmatmul.mubr.bf16.gmra.mrb[0].mxu0 %v3326
    %v8717 = vpop.f32.mrb[0].mxu0
    %v8718 = vadd.f32 %v8621, %v8717
    %v8719 = vpop.f32.mrb[0].mxu0
    %v8720 = vpop.f32.mrb[0].mxu0
    %v8721 = vadd.f32 %v8624, %v8720
    %v8722 = vpop.f32.mrb[0].mxu0
    %8723 = vmatprep.mubr.bf16.mxu0 0
    %8724 = vmatmul.mubr.bf16.gmra.mrb[0].mxu0 %v3326
    %v8725 = vpop.f32.mrb[0].mxu0
    %v8726 = vadd.f32 %v8629, %v8725
    %v8727 = vpop.f32.mrb[0].mxu0
    %v8728 = vpop.f32.mrb[0].mxu0
    %v8729 = vadd.f32 %v8632, %v8728
    %v8730 = vpop.f32.mrb[0].mxu0
    %8731 = vmatprep.mubr.bf16.mxu0 0
    %8732 = vmatmul.mubr.bf16.gmra.mrb[0].mxu0 %v3326
    %v8733 = vpop.f32.mrb[0].mxu0
    %v8734 = vadd.f32 %v8637, %v8733
    %v8735 = vpop.f32.mrb[0].mxu0
    %v8736 = vpop.f32.mrb[0].mxu0
    %v8737 = vadd.f32 %v8640, %v8736
    %v8738 = vpop.f32.mrb[0].mxu0
    %8739 = vmatprep.mubr.bf16.mxu0 0
    %8740 = vmatmul.mubr.bf16.gmra.mrb[0].mxu0 %v3326
    %v8741 = vpop.f32.mrb[0].mxu0
    %v8742 = vadd.f32 %v8645, %v8741
    %v8743 = vpop.f32.mrb[0].mxu0
    %v8744 = vpop.f32.mrb[0].mxu0
    %v8745 = vadd.f32 %v8648, %v8744
    %v8746 = vpop.f32.mrb[0].mxu0
    %8747 = vdwg.mxu0
    %v8748 = vrot.slane %v7986, 1
    %v8749 = vrot.slane %v7987, 1
    %v8750 = vsel %vm380, %v8748, %v8749
    %v8751 = vrot.slane %v7661, 1
    %v8752 = vrot.slane %v7664, 1
    %v8753 = vsel %vm380, %v8751, %v8752
    %v8754 = vrot.slane %v7988, 1
    %v8755 = vsel %vm380, %v8749, %v8754
    %v8756 = vrot.slane %v7669, 1
    %v8757 = vsel %vm380, %v8752, %v8756
    %v8758 = vrot.slane %v7989, 1
    %v8759 = vsel %vm380, %v8754, %v8758
    %v8760 = vrot.slane %v7672, 1
    %v8761 = vsel %vm380, %v8756, %v8760
    %v8762 = vrot.slane %v7990, 1
    %v8763 = vsel %vm380, %v8758, %v8762
    %v8764 = vrot.slane %v7677, 1
    %v8765 = vsel %vm380, %v8760, %v8764
    %v8766 = vrot.slane %v7991, 1
    %v8767 = vsel %vm380, %v8762, %v8766
    %v8768 = vrot.slane %v7680, 1
    %v8769 = vsel %vm380, %v8764, %v8768
    %v8770 = vrot.slane %v7992, 1
    %v8771 = vsel %vm380, %v8766, %v8770
    %v8772 = vrot.slane %v7685, 1
    %v8773 = vsel %vm380, %v8768, %v8772
    %v8774 = vrot.slane %v7993, 1
    %v8775 = vsel %vm380, %v8770, %v8774
    %v8776 = vrot.slane %v7688, 1
    %v8777 = vsel %vm380, %v8772, %v8776
    %v8778 = vrot.slane %v7994, 1
    %v8779 = vsel %vm380, %v8774, %v8778
    %v8780 = vrot.slane %v7731, 1
    %v8781 = vsel %vm380, %v8776, %v8780
    %v8782 = vrot.slane %v7995, 1
    %v8783 = vsel %vm380, %v8778, %v8782
    %v8784 = vrot.slane %v7734, 1
    %v8785 = vsel %vm380, %v8780, %v8784
    %v8786 = vrot.slane %v7996, 1
    %v8787 = vsel %vm380, %v8782, %v8786
    %v8788 = vrot.slane %v7739, 1
    %v8789 = vsel %vm380, %v8784, %v8788
    %v8790 = vrot.slane %v7997, 1
    %v8791 = vsel %vm380, %v8786, %v8790
    %v8792 = vrot.slane %v7742, 1
    %v8793 = vsel %vm380, %v8788, %v8792
    %v8794 = vrot.slane %v7998, 1
    %v8795 = vsel %vm380, %v8790, %v8794
    %v8796 = vrot.slane %v7747, 1
    %v8797 = vsel %vm380, %v8792, %v8796
    %v8798 = vrot.slane %v7999, 1
    %v8799 = vsel %vm380, %v8794, %v8798
    %v8800 = vrot.slane %v7750, 1
    %v8801 = vsel %vm380, %v8796, %v8800
    %v8802 = vrot.slane %v8000, 1
    %v8803 = vsel %vm380, %v8798, %v8802
    %v8804 = vrot.slane %v7755, 1
    %v8805 = vsel %vm380, %v8800, %v8804
    %v8806 = vrot.slane %v8001, 1
    %v8807 = vsel %vm380, %v8802, %v8806
    %v8808 = vrot.slane %v7758, 1
    %v8809 = vsel %vm380, %v8804, %v8808
    %v8842 = vsel %vm380, %v8806, 0.0
    %v8843 = vsel %vm380, %v8808, 0.0
    %v8844 = vsel %vm461, %v8750, 0.0
    %v8845 = vsel %vm461, %v8753, 0.0
    %v8846 = vsel %vm462, %v8755, 0.0
    %v8847 = vsel %vm462, %v8757, 0.0
    %v8848 = vsel %vm463, %v8759, 0.0
    %v8849 = vsel %vm463, %v8761, 0.0
    %v8850 = vsel %vm464, %v8763, 0.0
    %v8851 = vsel %vm464, %v8765, 0.0
    %v8852 = vsel %vm465, %v8767, 0.0
    %v8853 = vsel %vm465, %v8769, 0.0
    %v8854 = vsel %vm466, %v8771, 0.0
    %v8855 = vsel %vm466, %v8773, 0.0
    %v8856 = vsel %vm467, %v8775, 0.0
    %v8857 = vsel %vm467, %v8777, 0.0
    %v8858 = vsel %vm468, %v8779, 0.0
    %v8859 = vsel %vm468, %v8781, 0.0
    %v8860 = vsel %vm469, %v8783, 0.0
    %v8861 = vsel %vm469, %v8785, 0.0
    %v8862 = vsel %vm470, %v8787, 0.0
    %v8863 = vsel %vm470, %v8789, 0.0
    %v8864 = vsel %vm471, %v8791, 0.0
    %v8865 = vsel %vm471, %v8793, 0.0
    %v8866 = vsel %vm472, %v8795, 0.0
    %v8867 = vsel %vm472, %v8797, 0.0
    %v8868 = vsel %vm473, %v8799, 0.0
    %v8869 = vsel %vm473, %v8801, 0.0
    %v8870 = vsel %vm474, %v8803, 0.0
    %v8871 = vsel %vm474, %v8805, 0.0
    %v8872 = vsel %vm475, %v8807, 0.0
    %v8873 = vsel %vm475, %v8809, 0.0
    %v8874 = vsel %vm476, %v8842, 0.0
    %v8875 = vsel %vm476, %v8843, 0.0
    %v8876 = vpack.c.bf16 %v8846, %v8844
    %v8877 = vpack.c.bf16 %v8847, %v8845
    %v8878 = vpack.c.bf16 %v8850, %v8848
    %v8879 = vpack.c.bf16 %v8851, %v8849
    %v8880 = vpack.c.bf16 %v8854, %v8852
    %v8881 = vpack.c.bf16 %v8855, %v8853
    %v8882 = vpack.c.bf16 %v8858, %v8856
    %v8883 = vpack.c.bf16 %v8859, %v8857
    %v8884 = vpack.c.bf16 %v8862, %v8860
    %v8885 = vpack.c.bf16 %v8863, %v8861
    %v8886 = vpack.c.bf16 %v8866, %v8864
    %v8887 = vpack.c.bf16 %v8867, %v8865
    %v8888 = vpack.c.bf16 %v8870, %v8868
    %v8889 = vpack.c.bf16 %v8871, %v8869
    %v8890 = vpack.c.bf16 %v8874, %v8872
    %v8891 = vpack.c.bf16 %v8875, %v8873
    %v8892 = vld [vmem:[#allocation16 + $0x878] sm:$0xf]
    %v8893 = vld [vmem:[#allocation16 + $0x87c] sm:$0xf]
    %v8894 = vld [vmem:[#allocation16 + $0x880] sm:$0xf]
    %v8895 = vld [vmem:[#allocation16 + $0x884] sm:$0xf]
    %v8896 = vld [vmem:[#allocation16 + $0x888] sm:$0xf]
    %v8897 = vld [vmem:[#allocation16 + $0x88c] sm:$0xf]
    %v8898 = vld [vmem:[#allocation16 + $0x890] sm:$0xf]
    %v8899 = vld [vmem:[#allocation16 + $0x894] sm:$0xf]
    %v8900 = vld [vmem:[#allocation16 + $0x898] sm:$0xf]
    %v8901 = vld [vmem:[#allocation16 + $0x89c] sm:$0xf]
    %v8902 = vld [vmem:[#allocation16 + $0x8a0] sm:$0xf]
    %v8903 = vld [vmem:[#allocation16 + $0x8a4] sm:$0xf]
    %v8904 = vld [vmem:[#allocation16 + $0x8a8] sm:$0xf]
    %v8905 = vld [vmem:[#allocation16 + $0x8ac] sm:$0xf]
    %v8906 = vld [vmem:[#allocation16 + $0x8b0] sm:$0xf]
    %v8907 = vld [vmem:[#allocation16 + $0x8b4] sm:$0xf]
    %v8908 = vld [vmem:[#allocation16 + $0x8b8] sm:$0xf]
    %v8909 = vld [vmem:[#allocation16 + $0x8bc] sm:$0xf]
    %v8910 = vld [vmem:[#allocation16 + $0x8c0] sm:$0xf]
    %v8911 = vld [vmem:[#allocation16 + $0x8c4] sm:$0xf]
    %v8912 = vld [vmem:[#allocation16 + $0x8c8] sm:$0xf]
    %v8913 = vld [vmem:[#allocation16 + $0x8cc] sm:$0xf]
    %v8914 = vld [vmem:[#allocation16 + $0x8d0] sm:$0xf]
    %v8915 = vld [vmem:[#allocation16 + $0x8d4] sm:$0xf]
    %v8916 = vld [vmem:[#allocation16 + $0x8d8] sm:$0xf]
    %v8917 = vld [vmem:[#allocation16 + $0x8dc] sm:$0xf]
    %v8918 = vld [vmem:[#allocation16 + $0x8e0] sm:$0xf]
    %v8919 = vld [vmem:[#allocation16 + $0x8e4] sm:$0xf]
    %v8920 = vld [vmem:[#allocation16 + $0x8e8] sm:$0xf]
    %v8921 = vld [vmem:[#allocation16 + $0x8ec] sm:$0xf]
    %v8922 = vld [vmem:[#allocation16 + $0x8f0] sm:$0xf]
    %v8923 = vld [vmem:[#allocation16 + $0x8f4] sm:$0xf]
    %v8956 = vunpack.c.l.b16 %v8892
    %v8957 = vunpack.c.l.b16 %v8893
    %v8958 = vunpack.c.l.b16 %v8894
    %v8959 = vunpack.c.l.b16 %v8895
    %v8960 = vunpack.c.l.b16 %v8896
    %v8961 = vunpack.c.l.b16 %v8897
    %v8962 = vunpack.c.l.b16 %v8898
    %v8963 = vunpack.c.l.b16 %v8899
    %v8964 = vunpack.c.l.b16 %v8900
    %v8965 = vunpack.c.l.b16 %v8901
    %v8966 = vunpack.c.l.b16 %v8902
    %v8967 = vunpack.c.l.b16 %v8903
    %v8968 = vunpack.c.l.b16 %v8904
    %v8969 = vunpack.c.l.b16 %v8905
    %v8970 = vunpack.c.l.b16 %v8906
    %v8971 = vunpack.c.l.b16 %v8907
    %v8972 = vunpack.c.l.b16 %v8908
    %v8973 = vunpack.c.l.b16 %v8909
    %v8974 = vunpack.c.l.b16 %v8910
    %v8975 = vunpack.c.l.b16 %v8911
    %v8976 = vunpack.c.l.b16 %v8912
    %v8977 = vunpack.c.l.b16 %v8913
    %v8978 = vunpack.c.l.b16 %v8914
    %v8979 = vunpack.c.l.b16 %v8915
    %v8980 = vunpack.c.l.b16 %v8916
    %v8981 = vunpack.c.l.b16 %v8917
    %v8982 = vunpack.c.l.b16 %v8918
    %v8983 = vunpack.c.l.b16 %v8919
    %v8984 = vunpack.c.l.b16 %v8920
    %v8985 = vunpack.c.l.b16 %v8921
    %v8986 = vunpack.c.l.b16 %v8922
    %v8987 = vunpack.c.l.b16 %v8923
    %v8988 = vpack.c.b16 %v8957, %v8956
    %v8989 = vpack.c.b16 %v8959, %v8958
    %v8990 = vpack.c.b16 %v8961, %v8960
    %v8991 = vpack.c.b16 %v8963, %v8962
    %v8992 = vpack.c.b16 %v8965, %v8964
    %v8993 = vpack.c.b16 %v8967, %v8966
    %v8994 = vpack.c.b16 %v8969, %v8968
    %v8995 = vpack.c.b16 %v8971, %v8970
    %v8996 = vpack.c.b16 %v8973, %v8972
    %v8997 = vpack.c.b16 %v8975, %v8974
    %v8998 = vpack.c.b16 %v8977, %v8976
    %v8999 = vpack.c.b16 %v8979, %v8978
    %v9000 = vpack.c.b16 %v8981, %v8980
    %v9001 = vpack.c.b16 %v8983, %v8982
    %v9002 = vpack.c.b16 %v8985, %v8984
    %v9003 = vpack.c.b16 %v8987, %v8986
    %9020 = vmatprep.subr.bf16.mxu0 0
    %9021 = vmatpush1.bf16.msra.mxu0 %v8988
    %9022 = vmatprep.subr.bf16.mxu0 0
    %9023 = vmatpush1.bf16.msra.mxu0 %v8989
    %9024 = vmatprep.subr.bf16.mxu0 0
    %9025 = vmatpush1.bf16.msra.mxu0 %v8990
    %9026 = vmatprep.subr.bf16.mxu0 0
    %9027 = vmatpush1.bf16.msra.mxu0 %v8991
    %9028 = vmatprep.subr.bf16.mxu0 0
    %9029 = vmatpush1.bf16.msra.mxu0 %v8992
    %9030 = vmatprep.subr.bf16.mxu0 0
    %9031 = vmatpush1.bf16.msra.mxu0 %v8993
    %9032 = vmatprep.subr.bf16.mxu0 0
    %9033 = vmatpush1.bf16.msra.mxu0 %v8994
    %9034 = vmatprep.subr.bf16.mxu0 0
    %9035 = vmatpush1.bf16.msra.mxu0 %v8995
    %9036 = vmatprep.subr.bf16.mxu0 0
    %9037 = vmatpush1.bf16.msra.mxu0 %v8996
    %9038 = vmatprep.subr.bf16.mxu0 0
    %9039 = vmatpush1.bf16.msra.mxu0 %v8997
    %9040 = vmatprep.subr.bf16.mxu0 0
    %9041 = vmatpush1.bf16.msra.mxu0 %v8998
    %9042 = vmatprep.subr.bf16.mxu0 0
    %9043 = vmatpush1.bf16.msra.mxu0 %v8999
    %9044 = vmatprep.subr.bf16.mxu0 0
    %9045 = vmatpush1.bf16.msra.mxu0 %v9000
    %9046 = vmatprep.subr.bf16.mxu0 0
    %9047 = vmatpush1.bf16.msra.mxu0 %v9001
    %9048 = vmatprep.subr.bf16.mxu0 0
    %9049 = vmatpush1.bf16.msra.mxu0 %v9002
    %9050 = vmatprep.subr.bf16.mxu0 0
    %9051 = vmatpush1.bf16.msra.mxu0 %v9003
    %9052 = vmatprep.mubr.bf16.mxu0 %v8877
    %9053 = vmatmul.mubr.bf16.gmra.mrb[0].mxu0 %v8876
    %v9054 = vpop.f32.mrb[0].mxu0
    %v9055 = vadd.f32 0.0, %v9054
    %v9056 = vpop.f32.mrb[0].mxu0
    %v9057 = vpop.f32.mrb[0].mxu0
    %v9058 = vadd.f32 0.0, %v9057
    %v9059 = vpop.f32.mrb[0].mxu0
    %9060 = vmatprep.mubr.bf16.mxu0 %v8879
    %9061 = vmatmul.mubr.bf16.gmra.mrb[0].mxu0 %v8878
    %v9062 = vpop.f32.mrb[0].mxu0
    %v9063 = vadd.f32 0.0, %v9062
    %v9064 = vpop.f32.mrb[0].mxu0
    %v9065 = vpop.f32.mrb[0].mxu0
    %v9066 = vadd.f32 0.0, %v9065
    %v9067 = vpop.f32.mrb[0].mxu0
    %9068 = vmatprep.mubr.bf16.mxu0 %v8881
    %9069 = vmatmul.mubr.bf16.gmra.mrb[0].mxu0 %v8880
    %v9070 = vpop.f32.mrb[0].mxu0
    %v9071 = vadd.f32 0.0, %v9070
    %v9072 = vpop.f32.mrb[0].mxu0
    %v9073 = vpop.f32.mrb[0].mxu0
    %v9074 = vadd.f32 0.0, %v9073
    %v9075 = vpop.f32.mrb[0].mxu0
    %9076 = vmatprep.mubr.bf16.mxu0 %v8883
    %9077 = vmatmul.mubr.bf16.gmra.mrb[0].mxu0 %v8882
    %v9078 = vpop.f32.mrb[0].mxu0
    %v9079 = vadd.f32 0.0, %v9078
    %v9080 = vpop.f32.mrb[0].mxu0
    %v9081 = vpop.f32.mrb[0].mxu0
    %v9082 = vadd.f32 0.0, %v9081
    %v9083 = vpop.f32.mrb[0].mxu0
    %9084 = vmatprep.mubr.bf16.mxu0 %v8885
    %9085 = vmatmul.mubr.bf16.gmra.mrb[0].mxu0 %v8884
    %v9086 = vpop.f32.mrb[0].mxu0
    %v9087 = vadd.f32 0.0, %v9086
    %v9088 = vpop.f32.mrb[0].mxu0
    %v9089 = vpop.f32.mrb[0].mxu0
    %v9090 = vadd.f32 0.0, %v9089
    %v9091 = vpop.f32.mrb[0].mxu0
    %9092 = vmatprep.mubr.bf16.mxu0 %v8887
    %9093 = vmatmul.mubr.bf16.gmra.mrb[0].mxu0 %v8886
    %v9094 = vpop.f32.mrb[0].mxu0
    %v9095 = vadd.f32 0.0, %v9094
    %v9096 = vpop.f32.mrb[0].mxu0
    %v9097 = vpop.f32.mrb[0].mxu0
    %v9098 = vadd.f32 0.0, %v9097
    %v9099 = vpop.f32.mrb[0].mxu0
    %9100 = vmatprep.mubr.bf16.mxu0 %v8889
    %9101 = vmatmul.mubr.bf16.gmra.mrb[0].mxu0 %v8888
    %v9102 = vpop.f32.mrb[0].mxu0
    %v9103 = vadd.f32 0.0, %v9102
    %v9104 = vpop.f32.mrb[0].mxu0
    %v9105 = vpop.f32.mrb[0].mxu0
    %v9106 = vadd.f32 0.0, %v9105
    %v9107 = vpop.f32.mrb[0].mxu0
    %9108 = vmatprep.mubr.bf16.mxu0 %v8891
    %9109 = vmatmul.mubr.bf16.gmra.mrb[0].mxu0 %v8890
    %v9110 = vpop.f32.mrb[0].mxu0
    %v9111 = vadd.f32 0.0, %v9110
    %v9112 = vpop.f32.mrb[0].mxu0
    %v9113 = vpop.f32.mrb[0].mxu0
    %v9114 = vadd.f32 0.0, %v9113
    %v9115 = vpop.f32.mrb[0].mxu0
    %9116 = vdwg.mxu0
    %v9117 = vadd.f32 %v8686, %v9055
    %v9118 = vadd.f32 %v8689, %v9058
    %v9119 = vadd.f32 %v8694, %v9063
    %v9120 = vadd.f32 %v8697, %v9066
    %v9121 = vadd.f32 %v8702, %v9071
    %v9122 = vadd.f32 %v8705, %v9074
    %v9123 = vadd.f32 %v8710, %v9079
    %v9124 = vadd.f32 %v8713, %v9082
    %v9125 = vadd.f32 %v8718, %v9087
    %v9126 = vadd.f32 %v8721, %v9090
    %v9127 = vadd.f32 %v8726, %v9095
    %v9128 = vadd.f32 %v8729, %v9098
    %v9129 = vadd.f32 %v8734, %v9103
    %v9130 = vadd.f32 %v8737, %v9106
    %v9131 = vadd.f32 %v8742, %v9111
    %v9132 = vadd.f32 %v8745, %v9114
    %v9133 = vmax.f32 %v9117, 0.0
    %v9134 = vmax.f32 %v9118, 0.0
    %v9135 = vmax.f32 %v9119, 0.0
    %v9136 = vmax.f32 %v9120, 0.0
    %v9137 = vmax.f32 %v9121, 0.0
    %v9138 = vmax.f32 %v9122, 0.0
    %v9139 = vmax.f32 %v9123, 0.0
    %v9140 = vmax.f32 %v9124, 0.0
    %v9141 = vmax.f32 %v9125, 0.0
    %v9142 = vmax.f32 %v9126, 0.0
    %v9143 = vmax.f32 %v9127, 0.0
    %v9144 = vmax.f32 %v9128, 0.0
    %v9145 = vmax.f32 %v9129, 0.0
    %v9146 = vmax.f32 %v9130, 0.0
    %v9147 = vmax.f32 %v9131, 0.0
    %v9148 = vmax.f32 %v9132, 0.0
    %v9165 = vrot.slane %v9133, 7
    %v9166 = vrot.slane %v9134, 7
    %v9167 = vsel %vm58, %v9165, %v9166
    %v9168 = vrot.slane %v9135, 7
    %v9169 = vsel %vm58, %v9166, %v9168
    %v9170 = vrot.slane %v9136, 7
    %v9171 = vsel %vm58, %v9168, %v9170
    %v9172 = vrot.slane %v9137, 7
    %v9173 = vsel %vm58, %v9170, %v9172
    %v9174 = vrot.slane %v9138, 7
    %v9175 = vsel %vm58, %v9172, %v9174
    %v9176 = vrot.slane %v9139, 7
    %v9177 = vsel %vm58, %v9174, %v9176
    %v9178 = vrot.slane %v9140, 7
    %v9179 = vsel %vm58, %v9176, %v9178
    %v9180 = vrot.slane %v9141, 7
    %v9181 = vsel %vm58, %v9178, %v9180
    %v9182 = vrot.slane %v9142, 7
    %v9183 = vsel %vm58, %v9180, %v9182
    %v9184 = vrot.slane %v9143, 7
    %v9185 = vsel %vm58, %v9182, %v9184
    %v9186 = vrot.slane %v9144, 7
    %v9187 = vsel %vm58, %v9184, %v9186
    %v9188 = vrot.slane %v9145, 7
    %v9189 = vsel %vm58, %v9186, %v9188
    %v9190 = vrot.slane %v9146, 7
    %v9191 = vsel %vm58, %v9188, %v9190
    %v9192 = vrot.slane %v9147, 7
    %v9193 = vsel %vm58, %v9190, %v9192
    %v9194 = vrot.slane %v9148, 7
    %v9195 = vsel %vm58, %v9192, %v9194
    %v9212 = vsel %vm58, 0.0, %v9165
    %v9213 = vsel %vm348, %v9212, 0.0
    %v9214 = vsel %vm349, %v9167, 0.0
    %v9215 = vsel %vm350, %v9169, 0.0
    %v9216 = vsel %vm351, %v9171, 0.0
    %v9217 = vsel %vm352, %v9173, 0.0
    %v9218 = vsel %vm353, %v9175, 0.0
    %v9219 = vsel %vm354, %v9177, 0.0
    %v9220 = vsel %vm355, %v9179, 0.0
    %v9221 = vsel %vm356, %v9181, 0.0
    %v9222 = vsel %vm357, %v9183, 0.0
    %v9223 = vsel %vm358, %v9185, 0.0
    %v9224 = vsel %vm359, %v9187, 0.0
    %v9225 = vsel %vm360, %v9189, 0.0
    %v9226 = vsel %vm361, %v9191, 0.0
    %v9227 = vsel %vm362, %v9193, 0.0
    %v9228 = vsel %vm363, %v9195, 0.0
    %v9229 = vrot.slane %v9133, 1
    %v9230 = vrot.slane %v9134, 1
    %v9231 = vsel %vm380, %v9229, %v9230
    %v9232 = vrot.slane %v9135, 1
    %v9233 = vsel %vm380, %v9230, %v9232
    %v9234 = vrot.slane %v9136, 1
    %v9235 = vsel %vm380, %v9232, %v9234
    %v9236 = vrot.slane %v9137, 1
    %v9237 = vsel %vm380, %v9234, %v9236
    %v9238 = vrot.slane %v9138, 1
    %v9239 = vsel %vm380, %v9236, %v9238
    %v9240 = vrot.slane %v9139, 1
    %v9241 = vsel %vm380, %v9238, %v9240
    %v9242 = vrot.slane %v9140, 1
    %v9243 = vsel %vm380, %v9240, %v9242
    %v9244 = vrot.slane %v9141, 1
    %v9245 = vsel %vm380, %v9242, %v9244
    %v9246 = vrot.slane %v9142, 1
    %v9247 = vsel %vm380, %v9244, %v9246
    %v9248 = vrot.slane %v9143, 1
    %v9249 = vsel %vm380, %v9246, %v9248
    %v9250 = vrot.slane %v9144, 1
    %v9251 = vsel %vm380, %v9248, %v9250
    %v9252 = vrot.slane %v9145, 1
    %v9253 = vsel %vm380, %v9250, %v9252
    %v9254 = vrot.slane %v9146, 1
    %v9255 = vsel %vm380, %v9252, %v9254
    %v9256 = vrot.slane %v9147, 1
    %v9257 = vsel %vm380, %v9254, %v9256
    %v9258 = vrot.slane %v9148, 1
    %v9259 = vsel %vm380, %v9256, %v9258
    %v9276 = vsel %vm380, %v9258, 0.0
    %v9277 = vsel %vm461, %v9231, 0.0
    %v9278 = vsel %vm462, %v9233, 0.0
    %v9279 = vsel %vm463, %v9235, 0.0
    %v9280 = vsel %vm464, %v9237, 0.0
    %v9281 = vsel %vm465, %v9239, 0.0
    %v9282 = vsel %vm466, %v9241, 0.0
    %v9283 = vsel %vm467, %v9243, 0.0
    %v9284 = vsel %vm468, %v9245, 0.0
    %v9285 = vsel %vm469, %v9247, 0.0
    %v9286 = vsel %vm470, %v9249, 0.0
    %v9287 = vsel %vm471, %v9251, 0.0
    %v9288 = vsel %vm472, %v9253, 0.0
    %v9289 = vsel %vm473, %v9255, 0.0
    %v9290 = vsel %vm474, %v9257, 0.0
    %v9291 = vsel %vm475, %v9259, 0.0
    %v9292 = vsel %vm476, %v9276, 0.0
    %9293 = vrot.lane.b32.xlu0 %v9133, 40
    %v9294 = vpop.permute.xlu0 %9293
    %9295 = vrot.lane.b32.xlu0 %v9134, 40
    %v9296 = vpop.permute.xlu0 %9295
    %9297 = vrot.lane.b32.xlu0 %v9135, 40
    %v9298 = vpop.permute.xlu0 %9297
    %9299 = vrot.lane.b32.xlu0 %v9136, 40
    %v9300 = vpop.permute.xlu0 %9299
    %9301 = vrot.lane.b32.xlu0 %v9137, 40
    %v9302 = vpop.permute.xlu0 %9301
    %9303 = vrot.lane.b32.xlu0 %v9138, 40
    %v9304 = vpop.permute.xlu0 %9303
    %9305 = vrot.lane.b32.xlu0 %v9139, 40
    %v9306 = vpop.permute.xlu0 %9305
    %9307 = vrot.lane.b32.xlu0 %v9140, 40
    %v9308 = vpop.permute.xlu0 %9307
    %9309 = vrot.lane.b32.xlu0 %v9141, 40
    %v9310 = vpop.permute.xlu0 %9309
    %9311 = vrot.lane.b32.xlu0 %v9142, 40
    %v9312 = vpop.permute.xlu0 %9311
    %9313 = vrot.lane.b32.xlu0 %v9143, 40
    %v9314 = vpop.permute.xlu0 %9313
    %9315 = vrot.lane.b32.xlu0 %v9144, 40
    %v9316 = vpop.permute.xlu0 %9315
    %9317 = vrot.lane.b32.xlu0 %v9145, 40
    %v9318 = vpop.permute.xlu0 %9317
    %9319 = vrot.lane.b32.xlu0 %v9146, 40
    %v9320 = vpop.permute.xlu0 %9319
    %9321 = vrot.lane.b32.xlu0 %v9147, 40
    %v9322 = vpop.permute.xlu0 %9321
    %9323 = vrot.lane.b32.xlu0 %v9148, 40
    %v9324 = vpop.permute.xlu0 %9323
    %9357 = vrot.lane.b32.xlu0 %v9277, 80
    %v9358 = vpop.permute.xlu0 %9357
    %9359 = vrot.lane.b32.xlu0 %v9278, 80
    %v9360 = vpop.permute.xlu0 %9359
    %9361 = vrot.lane.b32.xlu0 %v9279, 80
    %v9362 = vpop.permute.xlu0 %9361
    %9363 = vrot.lane.b32.xlu0 %v9280, 80
    %v9364 = vpop.permute.xlu0 %9363
    %9365 = vrot.lane.b32.xlu0 %v9281, 80
    %v9366 = vpop.permute.xlu0 %9365
    %9367 = vrot.lane.b32.xlu0 %v9282, 80
    %v9368 = vpop.permute.xlu0 %9367
    %9369 = vrot.lane.b32.xlu0 %v9283, 80
    %v9370 = vpop.permute.xlu0 %9369
    %9371 = vrot.lane.b32.xlu0 %v9284, 80
    %v9372 = vpop.permute.xlu0 %9371
    %9373 = vrot.lane.b32.xlu0 %v9285, 80
    %v9374 = vpop.permute.xlu0 %9373
    %9375 = vrot.lane.b32.xlu0 %v9286, 80
    %v9376 = vpop.permute.xlu0 %9375
    %9377 = vrot.lane.b32.xlu0 %v9287, 80
    %v9378 = vpop.permute.xlu0 %9377
    %9379 = vrot.lane.b32.xlu0 %v9288, 80
    %v9380 = vpop.permute.xlu0 %9379
    %9381 = vrot.lane.b32.xlu0 %v9289, 80
    %v9382 = vpop.permute.xlu0 %9381
    %9383 = vrot.lane.b32.xlu0 %v9290, 80
    %v9384 = vpop.permute.xlu0 %9383
    %9385 = vrot.lane.b32.xlu0 %v9291, 80
    %v9386 = vpop.permute.xlu0 %9385
    %9387 = vrot.lane.b32.xlu0 %v9292, 80
    %v9388 = vpop.permute.xlu0 %9387
    %v9405 = vsel %vm4153, %v9213, %v9294
    %v9406 = vsel %vm4153, %v9214, %v9296
    %v9407 = vsel %vm4153, %v9215, %v9298
    %v9408 = vsel %vm4153, %v9216, %v9300
    %v9409 = vsel %vm4153, %v9217, %v9302
    %v9410 = vsel %vm4153, %v9218, %v9304
    %v9411 = vsel %vm4153, %v9219, %v9306
    %v9412 = vsel %vm4153, %v9220, %v9308
    %v9413 = vsel %vm4153, %v9221, %v9310
    %v9414 = vsel %vm4153, %v9222, %v9312
    %v9415 = vsel %vm4153, %v9223, %v9314
    %v9416 = vsel %vm4153, %v9224, %v9316
    %v9417 = vsel %vm4153, %v9225, %v9318
    %v9418 = vsel %vm4153, %v9226, %v9320
    %v9419 = vsel %vm4153, %v9227, %v9322
    %v9420 = vsel %vm4153, %v9228, %v9324
    %v9421 = vsel %vm4156, %v9405, %v9358
    %v9422 = vsel %vm4156, %v9406, %v9360
    %v9423 = vsel %vm4156, %v9407, %v9362
    %v9424 = vsel %vm4156, %v9408, %v9364
    %v9425 = vsel %vm4156, %v9409, %v9366
    %v9426 = vsel %vm4156, %v9410, %v9368
    %v9427 = vsel %vm4156, %v9411, %v9370
    %v9428 = vsel %vm4156, %v9412, %v9372
    %v9429 = vsel %vm4156, %v9413, %v9374
    %v9430 = vsel %vm4156, %v9414, %v9376
    %v9431 = vsel %vm4156, %v9415, %v9378
    %v9432 = vsel %vm4156, %v9416, %v9380
    %v9433 = vsel %vm4156, %v9417, %v9382
    %v9434 = vsel %vm4156, %v9418, %v9384
    %v9435 = vsel %vm4156, %v9419, %v9386
    %v9436 = vsel %vm4156, %v9420, %v9388
    %v9437 = vsel %vm3555, %v9421, 1.0
    %v9438 = vsel %vm3555, %v9422, 1.0
    %v9439 = vsel %vm3555, %v9423, 1.0
    %v9440 = vsel %vm3555, %v9424, 1.0
    %v9441 = vsel %vm3555, %v9425, 1.0
    %v9442 = vsel %vm3555, %v9426, 1.0
    %v9443 = vsel %vm3555, %v9427, 1.0
    %v9444 = vsel %vm3555, %v9428, 1.0
    %v9445 = vsel %vm3555, %v9429, 1.0
    %v9446 = vsel %vm3555, %v9430, 1.0
    %v9447 = vsel %vm3555, %v9431, 1.0
    %v9448 = vsel %vm3555, %v9432, 1.0
    %v9449 = vsel %vm3555, %v9433, 1.0
    %v9450 = vsel %vm3555, %v9434, 1.0
    %v9451 = vsel %vm3555, %v9435, 1.0
    %v9452 = vsel %vm3555, %v9436, 1.0
    %v9453 = vpack.c.bf16 %v9438, %v9437
    %v9454 = vpack.c.bf16 %v9440, %v9439
    %v9455 = vpack.c.bf16 %v9442, %v9441
    %v9456 = vpack.c.bf16 %v9444, %v9443
    %v9457 = vpack.c.bf16 %v9446, %v9445
    %v9458 = vpack.c.bf16 %v9448, %v9447
    %v9459 = vpack.c.bf16 %v9450, %v9449
    %v9460 = vpack.c.bf16 %v9452, %v9451
    %v9461 = vld [vmem:[#allocation16 + $0x8f8] sm:$0xf]
    %v9462 = vld [vmem:[#allocation16 + $0x8fc] sm:$0xf]
    %v9463 = vld [vmem:[#allocation16 + $0x900] sm:$0xf]
    %v9464 = vld [vmem:[#allocation16 + $0x904] sm:$0xf]
    %v9465 = vld [vmem:[#allocation16 + $0x908] sm:$0xf]
    %v9466 = vld [vmem:[#allocation16 + $0x90c] sm:$0xf]
    %v9467 = vld [vmem:[#allocation16 + $0x910] sm:$0xf]
    %v9468 = vld [vmem:[#allocation16 + $0x914] sm:$0xf]
    %v9469 = vld [vmem:[#allocation16 + $0x918] sm:$0xf]
    %v9470 = vld [vmem:[#allocation16 + $0x91c] sm:$0xf]
    %v9471 = vld [vmem:[#allocation16 + $0x920] sm:$0xf]
    %v9472 = vld [vmem:[#allocation16 + $0x924] sm:$0xf]
    %v9473 = vld [vmem:[#allocation16 + $0x928] sm:$0xf]
    %v9474 = vld [vmem:[#allocation16 + $0x92c] sm:$0xf]
    %v9475 = vld [vmem:[#allocation16 + $0x930] sm:$0xf]
    %v9476 = vld [vmem:[#allocation16 + $0x934] sm:$0x1]
    %v9493 = vunpack.c.l.b16 %v9461
    %v9494 = vunpack.c.l.b16 %v9462
    %v9495 = vunpack.c.l.b16 %v9463
    %v9496 = vunpack.c.l.b16 %v9464
    %v9497 = vunpack.c.l.b16 %v9465
    %v9498 = vunpack.c.l.b16 %v9466
    %v9499 = vunpack.c.l.b16 %v9467
    %v9500 = vunpack.c.l.b16 %v9468
    %v9501 = vunpack.c.l.b16 %v9469
    %v9502 = vunpack.c.l.b16 %v9470
    %v9503 = vunpack.c.l.b16 %v9471
    %v9504 = vunpack.c.l.b16 %v9472
    %v9505 = vunpack.c.l.b16 %v9473
    %v9506 = vunpack.c.l.b16 %v9474
    %v9507 = vunpack.c.l.b16 %v9475
    %v9508 = vunpack.c.l.b16 %v9476
    %v9509 = vpack.c.b16 %v9494, %v9493
    %v9510 = vpack.c.b16 %v9496, %v9495
    %v9511 = vpack.c.b16 %v9498, %v9497
    %v9512 = vpack.c.b16 %v9500, %v9499
    %v9513 = vpack.c.b16 %v9502, %v9501
    %v9514 = vpack.c.b16 %v9504, %v9503
    %v9515 = vpack.c.b16 %v9506, %v9505
    %v9516 = vpack.c.b16 %v9508, %v9507
    %v9525 = vsel %vm3880, %v9453, 0
    %v9528 = vsel %vm3880, %v9454, 0
    %v9531 = vsel %vm3880, %v9455, 0
    %v9534 = vsel %vm3880, %v9456, 0
    %v9537 = vsel %vm3880, %v9457, 0
    %v9540 = vsel %vm3880, %v9458, 0
    %v9543 = vsel %vm3880, %v9459, 0
    %v9546 = vsel %vm3880, %v9460, 0
    %v9549 = vand.u32 %v9516, %v1172
    %9551 = vmatprep.subr.bf16.mxu0 0
    %9552 = vmatpush1.bf16.msra.mxu0 %v9509
    %9553 = vmatprep.subr.bf16.mxu0 0
    %9554 = vmatpush1.bf16.msra.mxu0 %v9510
    %9555 = vmatprep.subr.bf16.mxu0 0
    %9556 = vmatpush1.bf16.msra.mxu0 %v9511
    %9557 = vmatprep.subr.bf16.mxu0 0
    %9558 = vmatpush1.bf16.msra.mxu0 %v9512
    %9559 = vmatprep.subr.bf16.mxu0 0
    %9560 = vmatpush1.bf16.msra.mxu0 %v9513
    %9561 = vmatprep.subr.bf16.mxu0 0
    %9562 = vmatpush1.bf16.msra.mxu0 %v9514
    %9563 = vmatprep.subr.bf16.mxu0 0
    %9564 = vmatpush1.bf16.msra.mxu0 %v9515
    %9565 = vmatprep.subr.bf16.mxu0 0
    %9566 = vmatpush1.bf16.msra.mxu0 %v9549
    %9567 = vmatprep.subr.bf16.mxu0 0
    %9568 = vmatpush1.bf16.msra.mxu0 0
    %9569 = vmatprep.subr.bf16.mxu0 0
    %9570 = vmatpush1.bf16.msra.mxu0 0
    %9571 = vmatprep.subr.bf16.mxu0 0
    %9572 = vmatpush1.bf16.msra.mxu0 0
    %9573 = vmatprep.subr.bf16.mxu0 0
    %9574 = vmatpush1.bf16.msra.mxu0 0
    %9575 = vmatprep.subr.bf16.mxu0 0
    %9576 = vmatpush1.bf16.msra.mxu0 0
    %9577 = vmatprep.subr.bf16.mxu0 0
    %9578 = vmatpush1.bf16.msra.mxu0 0
    %9579 = vmatprep.subr.bf16.mxu0 0
    %9580 = vmatpush1.bf16.msra.mxu0 0
    %9581 = vmatprep.subr.bf16.mxu0 0
    %9582 = vmatpush1.bf16.msra.mxu0 0
    %9583 = vmatprep.mubr.bf16.mxu0 0
    %9584 = vmatmul.mubr.bf16.gmra.mrb[0].mxu0 %v9525
    %v9585 = vpop.f32.mrb[0].mxu0
    %v9586 = vadd.f32 0.0, %v9585
    %v9587 = vpop.f32.mrb[0].mxu0
    %v9588 = vpop.f32.mrb[0].mxu0
    %v9589 = vadd.f32 0.0, %v9588
    %v9590 = vpop.f32.mrb[0].mxu0
    %9591 = vmatprep.mubr.bf16.mxu0 0
    %9592 = vmatmul.mubr.bf16.gmra.mrb[0].mxu0 %v9528
    %v9593 = vpop.f32.mrb[0].mxu0
    %v9594 = vadd.f32 0.0, %v9593
    %v9595 = vpop.f32.mrb[0].mxu0
    %v9596 = vpop.f32.mrb[0].mxu0
    %v9597 = vadd.f32 0.0, %v9596
    %v9598 = vpop.f32.mrb[0].mxu0
    %9599 = vmatprep.mubr.bf16.mxu0 0
    %9600 = vmatmul.mubr.bf16.gmra.mrb[0].mxu0 %v9531
    %v9601 = vpop.f32.mrb[0].mxu0
    %v9602 = vadd.f32 0.0, %v9601
    %v9603 = vpop.f32.mrb[0].mxu0
    %v9604 = vpop.f32.mrb[0].mxu0
    %v9605 = vadd.f32 0.0, %v9604
    %v9606 = vpop.f32.mrb[0].mxu0
    %9607 = vmatprep.mubr.bf16.mxu0 0
    %9608 = vmatmul.mubr.bf16.gmra.mrb[0].mxu0 %v9534
    %v9609 = vpop.f32.mrb[0].mxu0
    %v9610 = vadd.f32 0.0, %v9609
    %v9611 = vpop.f32.mrb[0].mxu0
    %v9612 = vpop.f32.mrb[0].mxu0
    %v9613 = vadd.f32 0.0, %v9612
    %v9614 = vpop.f32.mrb[0].mxu0
    %9615 = vmatprep.mubr.bf16.mxu0 0
    %9616 = vmatmul.mubr.bf16.gmra.mrb[0].mxu0 %v9537
    %v9617 = vpop.f32.mrb[0].mxu0
    %v9618 = vadd.f32 0.0, %v9617
    %v9619 = vpop.f32.mrb[0].mxu0
    %v9620 = vpop.f32.mrb[0].mxu0
    %v9621 = vadd.f32 0.0, %v9620
    %v9622 = vpop.f32.mrb[0].mxu0
    %9623 = vmatprep.mubr.bf16.mxu0 0
    %9624 = vmatmul.mubr.bf16.gmra.mrb[0].mxu0 %v9540
    %v9625 = vpop.f32.mrb[0].mxu0
    %v9626 = vadd.f32 0.0, %v9625
    %v9627 = vpop.f32.mrb[0].mxu0
    %v9628 = vpop.f32.mrb[0].mxu0
    %v9629 = vadd.f32 0.0, %v9628
    %v9630 = vpop.f32.mrb[0].mxu0
    %9631 = vmatprep.mubr.bf16.mxu0 0
    %9632 = vmatmul.mubr.bf16.gmra.mrb[0].mxu0 %v9543
    %v9633 = vpop.f32.mrb[0].mxu0
    %v9634 = vadd.f32 0.0, %v9633
    %v9635 = vpop.f32.mrb[0].mxu0
    %v9636 = vpop.f32.mrb[0].mxu0
    %v9637 = vadd.f32 0.0, %v9636
    %v9638 = vpop.f32.mrb[0].mxu0
    %9639 = vmatprep.mubr.bf16.mxu0 0
    %9640 = vmatmul.mubr.bf16.gmra.mrb[0].mxu0 %v9546
    %v9641 = vpop.f32.mrb[0].mxu0
    %v9642 = vadd.f32 0.0, %v9641
    %v9643 = vpop.f32.mrb[0].mxu0
    %v9644 = vpop.f32.mrb[0].mxu0
    %v9645 = vadd.f32 0.0, %v9644
    %v9646 = vpop.f32.mrb[0].mxu0
    %9647 = vdwg.mxu0
    %v9648 = vmax.f32 %v9586, 0.0
    %v9649 = vmax.f32 %v9589, 0.0
    %v9650 = vmax.f32 %v9594, 0.0
    %v9651 = vmax.f32 %v9597, 0.0
    %v9652 = vmax.f32 %v9602, 0.0
    %v9653 = vmax.f32 %v9605, 0.0
    %v9654 = vmax.f32 %v9610, 0.0
    %v9655 = vmax.f32 %v9613, 0.0
    %v9656 = vmax.f32 %v9618, 0.0
    %v9657 = vmax.f32 %v9621, 0.0
    %v9658 = vmax.f32 %v9626, 0.0
    %v9659 = vmax.f32 %v9629, 0.0
    %v9660 = vmax.f32 %v9634, 0.0
    %v9661 = vmax.f32 %v9637, 0.0
    %v9662 = vmax.f32 %v9642, 0.0
    %v9663 = vmax.f32 %v9645, 0.0
    %v9664 = vsel %vm4153, %v9648, 1.0
    %v9665 = vsel %vm4153, %v9649, 1.0
    %v9666 = vsel %vm4153, %v9650, 1.0
    %v9667 = vsel %vm4153, %v9651, 1.0
    %v9668 = vsel %vm4153, %v9652, 1.0
    %v9669 = vsel %vm4153, %v9653, 1.0
    %v9670 = vsel %vm4153, %v9654, 1.0
    %v9671 = vsel %vm4153, %v9655, 1.0
    %v9672 = vsel %vm4153, %v9656, 1.0
    %v9673 = vsel %vm4153, %v9657, 1.0
    %v9674 = vsel %vm4153, %v9658, 1.0
    %v9675 = vsel %vm4153, %v9659, 1.0
    %v9676 = vsel %vm4153, %v9660, 1.0
    %v9677 = vsel %vm4153, %v9661, 1.0
    %v9678 = vsel %vm4153, %v9662, 1.0
    %v9679 = vsel %vm4153, %v9663, 1.0
    %v9680 = vpack.c.bf16 %v9665, %v9664
    %v9681 = vpack.c.bf16 %v9667, %v9666
    %v9682 = vpack.c.bf16 %v9669, %v9668
    %v9683 = vpack.c.bf16 %v9671, %v9670
    %v9684 = vpack.c.bf16 %v9673, %v9672
    %v9685 = vpack.c.bf16 %v9675, %v9674
    %v9686 = vpack.c.bf16 %v9677, %v9676
    %v9687 = vpack.c.bf16 %v9679, %v9678
    %v9688 = vld [vmem:[#allocation16 + $0x938] sm:$0xf]
    %v9689 = vld [vmem:[#allocation16 + $0x93c] sm:$0xf]
    %v9690 = vld [vmem:[#allocation16 + $0x940] sm:$0xf]
    %v9691 = vld [vmem:[#allocation16 + $0x944] sm:$0xf]
    %v9692 = vld [vmem:[#allocation16 + $0x948] sm:$0xf]
    %v9693 = vld [vmem:[#allocation16 + $0x94c] sm:$0x1]
    %v9700 = vunpack.c.l.b16 %v9688
    %v9701 = vunpack.c.l.b16 %v9689
    %v9702 = vunpack.c.l.b16 %v9690
    %v9703 = vunpack.c.l.b16 %v9691
    %v9704 = vunpack.c.l.b16 %v9692
    %v9705 = vunpack.c.l.b16 %v9693
    %v9706 = vpack.c.b16 %v9701, %v9700
    %v9707 = vpack.c.b16 %v9703, %v9702
    %v9708 = vpack.c.b16 %v9705, %v9704
    %vm9711 = vcmask 334848
    %v9713 = vsel %vm9711, %v9680, 0
    %v9716 = vsel %vm9711, %v9681, 0
    %v9719 = vsel %vm9711, %v9682, 0
    %v9722 = vsel %vm9711, %v9683, 0
    %v9725 = vsel %vm9711, %v9684, 0
    %v9728 = vsel %vm9711, %v9685, 0
    %v9731 = vsel %vm9711, %v9686, 0
    %v9734 = vsel %vm9711, %v9687, 0
    %v9737 = vand.u32 %v9708, %v1172
    %9739 = vmatprep.subr.bf16.mxu0 0
    %9740 = vmatpush1.bf16.msra.mxu0 %v9706
    %9741 = vmatprep.subr.bf16.mxu0 0
    %9742 = vmatpush1.bf16.msra.mxu0 %v9707
    %9743 = vmatprep.subr.bf16.mxu0 0
    %9744 = vmatpush1.bf16.msra.mxu0 %v9737
    %9745 = vmatprep.subr.bf16.mxu0 0
    %9746 = vmatpush1.bf16.msra.mxu0 0
    %9747 = vmatprep.subr.bf16.mxu0 0
    %9748 = vmatpush1.bf16.msra.mxu0 0
    %9749 = vmatprep.subr.bf16.mxu0 0
    %9750 = vmatpush1.bf16.msra.mxu0 0
    %9751 = vmatprep.subr.bf16.mxu0 0
    %9752 = vmatpush1.bf16.msra.mxu0 0
    %9753 = vmatprep.subr.bf16.mxu0 0
    %9754 = vmatpush1.bf16.msra.mxu0 0
    %9755 = vmatprep.subr.bf16.mxu0 0
    %9756 = vmatpush1.bf16.msra.mxu0 0
    %9757 = vmatprep.subr.bf16.mxu0 0
    %9758 = vmatpush1.bf16.msra.mxu0 0
    %9759 = vmatprep.subr.bf16.mxu0 0
    %9760 = vmatpush1.bf16.msra.mxu0 0
    %9761 = vmatprep.subr.bf16.mxu0 0
    %9762 = vmatpush1.bf16.msra.mxu0 0
    %9763 = vmatprep.subr.bf16.mxu0 0
    %9764 = vmatpush1.bf16.msra.mxu0 0
    %9765 = vmatprep.subr.bf16.mxu0 0
    %9766 = vmatpush1.bf16.msra.mxu0 0
    %9767 = vmatprep.subr.bf16.mxu0 0
    %9768 = vmatpush1.bf16.msra.mxu0 0
    %9769 = vmatprep.subr.bf16.mxu0 0
    %9770 = vmatpush1.bf16.msra.mxu0 0
    %9771 = vmatprep.mubr.bf16.mxu0 0
    %9772 = vmatmul.mubr.bf16.gmra.mrb[0].mxu0 %v9713
    %v9773 = vpop.f32.mrb[0].mxu0
    %v9774 = vadd.f32 0.0, %v9773
    %v9775 = vpop.f32.mrb[0].mxu0
    %v9776 = vpop.f32.mrb[0].mxu0
    %v9777 = vadd.f32 0.0, %v9776
    %v9778 = vpop.f32.mrb[0].mxu0
    %9779 = vmatprep.mubr.bf16.mxu0 0
    %9780 = vmatmul.mubr.bf16.gmra.mrb[0].mxu0 %v9716
    %v9781 = vpop.f32.mrb[0].mxu0
    %v9782 = vadd.f32 0.0, %v9781
    %v9783 = vpop.f32.mrb[0].mxu0
    %v9784 = vpop.f32.mrb[0].mxu0
    %v9785 = vadd.f32 0.0, %v9784
    %v9786 = vpop.f32.mrb[0].mxu0
    %9787 = vmatprep.mubr.bf16.mxu0 0
    %9788 = vmatmul.mubr.bf16.gmra.mrb[0].mxu0 %v9719
    %v9789 = vpop.f32.mrb[0].mxu0
    %v9790 = vadd.f32 0.0, %v9789
    %v9791 = vpop.f32.mrb[0].mxu0
    %v9792 = vpop.f32.mrb[0].mxu0
    %v9793 = vadd.f32 0.0, %v9792
    %v9794 = vpop.f32.mrb[0].mxu0
    %9795 = vmatprep.mubr.bf16.mxu0 0
    %9796 = vmatmul.mubr.bf16.gmra.mrb[0].mxu0 %v9722
    %v9797 = vpop.f32.mrb[0].mxu0
    %v9798 = vadd.f32 0.0, %v9797
    %v9799 = vpop.f32.mrb[0].mxu0
    %v9800 = vpop.f32.mrb[0].mxu0
    %v9801 = vadd.f32 0.0, %v9800
    %v9802 = vpop.f32.mrb[0].mxu0
    %9803 = vmatprep.mubr.bf16.mxu0 0
    %9804 = vmatmul.mubr.bf16.gmra.mrb[0].mxu0 %v9725
    %v9805 = vpop.f32.mrb[0].mxu0
    %v9806 = vadd.f32 0.0, %v9805
    %v9807 = vpop.f32.mrb[0].mxu0
    %v9808 = vpop.f32.mrb[0].mxu0
    %v9809 = vadd.f32 0.0, %v9808
    %v9810 = vpop.f32.mrb[0].mxu0
    %9811 = vmatprep.mubr.bf16.mxu0 0
    %9812 = vmatmul.mubr.bf16.gmra.mrb[0].mxu0 %v9728
    %v9813 = vpop.f32.mrb[0].mxu0
    %v9814 = vadd.f32 0.0, %v9813
    %v9815 = vpop.f32.mrb[0].mxu0
    %v9816 = vpop.f32.mrb[0].mxu0
    %v9817 = vadd.f32 0.0, %v9816
    %v9818 = vpop.f32.mrb[0].mxu0
    %9819 = vmatprep.mubr.bf16.mxu0 0
    %9820 = vmatmul.mubr.bf16.gmra.mrb[0].mxu0 %v9731
    %v9821 = vpop.f32.mrb[0].mxu0
    %v9822 = vadd.f32 0.0, %v9821
    %v9823 = vpop.f32.mrb[0].mxu0
    %v9824 = vpop.f32.mrb[0].mxu0
    %v9825 = vadd.f32 0.0, %v9824
    %v9826 = vpop.f32.mrb[0].mxu0
    %9827 = vmatprep.mubr.bf16.mxu0 0
    %9828 = vmatmul.mubr.bf16.gmra.mrb[0].mxu0 %v9734
    %v9829 = vpop.f32.mrb[0].mxu0
    %v9830 = vadd.f32 0.0, %v9829
    %v9831 = vpop.f32.mrb[0].mxu0
    %v9832 = vpop.f32.mrb[0].mxu0
    %v9833 = vadd.f32 0.0, %v9832
    %v9834 = vpop.f32.mrb[0].mxu0
    %9835 = vdwg.mxu0
    %9852 = vrot.lane.b32.xlu0 %v9774, 127
    %v9853 = vpop.permute.xlu0 %9852
    %9854 = vrot.lane.b32.xlu0 %v9777, 127
    %v9855 = vpop.permute.xlu0 %9854
    %9856 = vrot.lane.b32.xlu0 %v9782, 127
    %v9857 = vpop.permute.xlu0 %9856
    %9858 = vrot.lane.b32.xlu0 %v9785, 127
    %v9859 = vpop.permute.xlu0 %9858
    %9860 = vrot.lane.b32.xlu0 %v9790, 127
    %v9861 = vpop.permute.xlu0 %9860
    %9862 = vrot.lane.b32.xlu0 %v9793, 127
    %v9863 = vpop.permute.xlu0 %9862
    %9864 = vrot.lane.b32.xlu0 %v9798, 127
    %v9865 = vpop.permute.xlu0 %9864
    %9866 = vrot.lane.b32.xlu0 %v9801, 127
    %v9867 = vpop.permute.xlu0 %9866
    %9868 = vrot.lane.b32.xlu0 %v9806, 127
    %v9869 = vpop.permute.xlu0 %9868
    %9870 = vrot.lane.b32.xlu0 %v9809, 127
    %v9871 = vpop.permute.xlu0 %9870
    %9872 = vrot.lane.b32.xlu0 %v9814, 127
    %v9873 = vpop.permute.xlu0 %9872
    %9874 = vrot.lane.b32.xlu0 %v9817, 127
    %v9875 = vpop.permute.xlu0 %9874
    %9876 = vrot.lane.b32.xlu0 %v9822, 127
    %v9877 = vpop.permute.xlu0 %9876
    %9878 = vrot.lane.b32.xlu0 %v9825, 127
    %v9879 = vpop.permute.xlu0 %9878
    %9880 = vrot.lane.b32.xlu0 %v9830, 127
    %v9881 = vpop.permute.xlu0 %9880
    %9882 = vrot.lane.b32.xlu0 %v9833, 127
    %v9883 = vpop.permute.xlu0 %9882
    %v9900 = vmax.f32 %v9774, %v9853
    %v9901 = vmax.f32 %v9777, %v9855
    %v9902 = vmax.f32 %v9782, %v9857
    %v9903 = vmax.f32 %v9785, %v9859
    %v9904 = vmax.f32 %v9790, %v9861
    %v9905 = vmax.f32 %v9793, %v9863
    %v9906 = vmax.f32 %v9798, %v9865
    %v9907 = vmax.f32 %v9801, %v9867
    %v9908 = vmax.f32 %v9806, %v9869
    %v9909 = vmax.f32 %v9809, %v9871
    %v9910 = vmax.f32 %v9814, %v9873
    %v9911 = vmax.f32 %v9817, %v9875
    %v9912 = vmax.f32 %v9822, %v9877
    %v9913 = vmax.f32 %v9825, %v9879
    %v9914 = vmax.f32 %v9830, %v9881
    %v9915 = vmax.f32 %v9833, %v9883
    %9916 = vrot.lane.b32.xlu0 %v9774, 126
    %v9917 = vpop.permute.xlu0 %9916
    %9918 = vrot.lane.b32.xlu0 %v9777, 126
    %v9919 = vpop.permute.xlu0 %9918
    %9920 = vrot.lane.b32.xlu0 %v9782, 126
    %v9921 = vpop.permute.xlu0 %9920
    %9922 = vrot.lane.b32.xlu0 %v9785, 126
    %v9923 = vpop.permute.xlu0 %9922
    %9924 = vrot.lane.b32.xlu0 %v9790, 126
    %v9925 = vpop.permute.xlu0 %9924
    %9926 = vrot.lane.b32.xlu0 %v9793, 126
    %v9927 = vpop.permute.xlu0 %9926
    %9928 = vrot.lane.b32.xlu0 %v9798, 126
    %v9929 = vpop.permute.xlu0 %9928
    %9930 = vrot.lane.b32.xlu0 %v9801, 126
    %v9931 = vpop.permute.xlu0 %9930
    %9932 = vrot.lane.b32.xlu0 %v9806, 126
    %v9933 = vpop.permute.xlu0 %9932
    %9934 = vrot.lane.b32.xlu0 %v9809, 126
    %v9935 = vpop.permute.xlu0 %9934
    %9936 = vrot.lane.b32.xlu0 %v9814, 126
    %v9937 = vpop.permute.xlu0 %9936
    %9938 = vrot.lane.b32.xlu0 %v9817, 126
    %v9939 = vpop.permute.xlu0 %9938
    %9940 = vrot.lane.b32.xlu0 %v9822, 126
    %v9941 = vpop.permute.xlu0 %9940
    %9942 = vrot.lane.b32.xlu0 %v9825, 126
    %v9943 = vpop.permute.xlu0 %9942
    %9944 = vrot.lane.b32.xlu0 %v9830, 126
    %v9945 = vpop.permute.xlu0 %9944
    %9946 = vrot.lane.b32.xlu0 %v9833, 126
    %v9947 = vpop.permute.xlu0 %9946
    %v9964 = vmax.f32 %v9900, %v9917
    %v9965 = vmax.f32 %v9901, %v9919
    %v9966 = vmax.f32 %v9902, %v9921
    %v9967 = vmax.f32 %v9903, %v9923
    %v9968 = vmax.f32 %v9904, %v9925
    %v9969 = vmax.f32 %v9905, %v9927
    %v9970 = vmax.f32 %v9906, %v9929
    %v9971 = vmax.f32 %v9907, %v9931
    %v9972 = vmax.f32 %v9908, %v9933
    %v9973 = vmax.f32 %v9909, %v9935
    %v9974 = vmax.f32 %v9910, %v9937
    %v9975 = vmax.f32 %v9911, %v9939
    %v9976 = vmax.f32 %v9912, %v9941
    %v9977 = vmax.f32 %v9913, %v9943
    %v9978 = vmax.f32 %v9914, %v9945
    %v9979 = vmax.f32 %v9915, %v9947
    %v9980 = vsub.f32 %v9774, %v9964
    %v9981 = vsub.f32 %v9777, %v9965
    %v9982 = vsub.f32 %v9782, %v9966
    %v9983 = vsub.f32 %v9785, %v9967
    %v9984 = vsub.f32 %v9790, %v9968
    %v9985 = vsub.f32 %v9793, %v9969
    %v9986 = vsub.f32 %v9798, %v9970
    %v9987 = vsub.f32 %v9801, %v9971
    %v9988 = vsub.f32 %v9806, %v9972
    %v9989 = vsub.f32 %v9809, %v9973
    %v9990 = vsub.f32 %v9814, %v9974
    %v9991 = vsub.f32 %v9817, %v9975
    %v9992 = vsub.f32 %v9822, %v9976
    %v9993 = vsub.f32 %v9825, %v9977
    %v9994 = vsub.f32 %v9830, %v9978
    %v9995 = vsub.f32 %v9833, %v9979
    %v9996 = vmul.f32 %v9980, 1.442695
    %v9997 = vpow.pop %v9996
    %v9998 = vmul.f32 %v9981, 1.442695
    %v9999 = vpow.pop %v9998
    %v10000 = vmul.f32 %v9982, 1.442695
    %v10001 = vpow.pop %v10000
    %v10002 = vmul.f32 %v9983, 1.442695
    %v10003 = vpow.pop %v10002
    %v10004 = vmul.f32 %v9984, 1.442695
    %v10005 = vpow.pop %v10004
    %v10006 = vmul.f32 %v9985, 1.442695
    %v10007 = vpow.pop %v10006
    %v10008 = vmul.f32 %v9986, 1.442695
    %v10009 = vpow.pop %v10008
    %v10010 = vmul.f32 %v9987, 1.442695
    %v10011 = vpow.pop %v10010
    %v10012 = vmul.f32 %v9988, 1.442695
    %v10013 = vpow.pop %v10012
    %v10014 = vmul.f32 %v9989, 1.442695
    %v10015 = vpow.pop %v10014
    %v10016 = vmul.f32 %v9990, 1.442695
    %v10017 = vpow.pop %v10016
    %v10018 = vmul.f32 %v9991, 1.442695
    %v10019 = vpow.pop %v10018
    %v10020 = vmul.f32 %v9992, 1.442695
    %v10021 = vpow.pop %v10020
    %v10022 = vmul.f32 %v9993, 1.442695
    %v10023 = vpow.pop %v10022
    %v10024 = vmul.f32 %v9994, 1.442695
    %v10025 = vpow.pop %v10024
    %v10026 = vmul.f32 %v9995, 1.442695
    %v10027 = vpow.pop %v10026
    %10044 = vrot.lane.b32.xlu0 %v9964, 1
    %v10045 = vpop.permute.xlu0 %10044
    %10046 = vrot.lane.b32.xlu0 %v9965, 1
    %v10047 = vpop.permute.xlu0 %10046
    %10048 = vrot.lane.b32.xlu0 %v9966, 1
    %v10049 = vpop.permute.xlu0 %10048
    %10050 = vrot.lane.b32.xlu0 %v9967, 1
    %v10051 = vpop.permute.xlu0 %10050
    %10052 = vrot.lane.b32.xlu0 %v9968, 1
    %v10053 = vpop.permute.xlu0 %10052
    %10054 = vrot.lane.b32.xlu0 %v9969, 1
    %v10055 = vpop.permute.xlu0 %10054
    %10056 = vrot.lane.b32.xlu0 %v9970, 1
    %v10057 = vpop.permute.xlu0 %10056
    %10058 = vrot.lane.b32.xlu0 %v9971, 1
    %v10059 = vpop.permute.xlu0 %10058
    %10060 = vrot.lane.b32.xlu0 %v9972, 1
    %v10061 = vpop.permute.xlu0 %10060
    %10062 = vrot.lane.b32.xlu0 %v9973, 1
    %v10063 = vpop.permute.xlu0 %10062
    %10064 = vrot.lane.b32.xlu0 %v9974, 1
    %v10065 = vpop.permute.xlu0 %10064
    %10066 = vrot.lane.b32.xlu0 %v9975, 1
    %v10067 = vpop.permute.xlu0 %10066
    %10068 = vrot.lane.b32.xlu0 %v9976, 1
    %v10069 = vpop.permute.xlu0 %10068
    %10070 = vrot.lane.b32.xlu0 %v9977, 1
    %v10071 = vpop.permute.xlu0 %10070
    %10072 = vrot.lane.b32.xlu0 %v9978, 1
    %v10073 = vpop.permute.xlu0 %10072
    %10074 = vrot.lane.b32.xlu0 %v9979, 1
    %v10075 = vpop.permute.xlu0 %10074
    %v10092 = vsub.f32 %v9774, %v10045
    %v10093 = vsub.f32 %v9777, %v10047
    %v10094 = vsub.f32 %v9782, %v10049
    %v10095 = vsub.f32 %v9785, %v10051
    %v10096 = vsub.f32 %v9790, %v10053
    %v10097 = vsub.f32 %v9793, %v10055
    %v10098 = vsub.f32 %v9798, %v10057
    %v10099 = vsub.f32 %v9801, %v10059
    %v10100 = vsub.f32 %v9806, %v10061
    %v10101 = vsub.f32 %v9809, %v10063
    %v10102 = vsub.f32 %v9814, %v10065
    %v10103 = vsub.f32 %v9817, %v10067
    %v10104 = vsub.f32 %v9822, %v10069
    %v10105 = vsub.f32 %v9825, %v10071
    %v10106 = vsub.f32 %v9830, %v10073
    %v10107 = vsub.f32 %v9833, %v10075
    %v10108 = vmul.f32 %v10092, 1.442695
    %v10109 = vpow.pop %v10108
    %v10110 = vmul.f32 %v10093, 1.442695
    %v10111 = vpow.pop %v10110
    %v10112 = vmul.f32 %v10094, 1.442695
    %v10113 = vpow.pop %v10112
    %v10114 = vmul.f32 %v10095, 1.442695
    %v10115 = vpow.pop %v10114
    %v10116 = vmul.f32 %v10096, 1.442695
    %v10117 = vpow.pop %v10116
    %v10118 = vmul.f32 %v10097, 1.442695
    %v10119 = vpow.pop %v10118
    %v10120 = vmul.f32 %v10098, 1.442695
    %v10121 = vpow.pop %v10120
    %v10122 = vmul.f32 %v10099, 1.442695
    %v10123 = vpow.pop %v10122
    %v10124 = vmul.f32 %v10100, 1.442695
    %v10125 = vpow.pop %v10124
    %v10126 = vmul.f32 %v10101, 1.442695
    %v10127 = vpow.pop %v10126
    %v10128 = vmul.f32 %v10102, 1.442695
    %v10129 = vpow.pop %v10128
    %v10130 = vmul.f32 %v10103, 1.442695
    %v10131 = vpow.pop %v10130
    %v10132 = vmul.f32 %v10104, 1.442695
    %v10133 = vpow.pop %v10132
    %v10134 = vmul.f32 %v10105, 1.442695
    %v10135 = vpow.pop %v10134
    %v10136 = vmul.f32 %v10106, 1.442695
    %v10137 = vpow.pop %v10136
    %v10138 = vmul.f32 %v10107, 1.442695
    %v10139 = vpow.pop %v10138
    %10140 = vrot.lane.b32.xlu0 %v9964, 2
    %v10141 = vpop.permute.xlu0 %10140
    %10142 = vrot.lane.b32.xlu0 %v9965, 2
    %v10143 = vpop.permute.xlu0 %10142
    %10144 = vrot.lane.b32.xlu0 %v9966, 2
    %v10145 = vpop.permute.xlu0 %10144
    %10146 = vrot.lane.b32.xlu0 %v9967, 2
    %v10147 = vpop.permute.xlu0 %10146
    %10148 = vrot.lane.b32.xlu0 %v9968, 2
    %v10149 = vpop.permute.xlu0 %10148
    %10150 = vrot.lane.b32.xlu0 %v9969, 2
    %v10151 = vpop.permute.xlu0 %10150
    %10152 = vrot.lane.b32.xlu0 %v9970, 2
    %v10153 = vpop.permute.xlu0 %10152
    %10154 = vrot.lane.b32.xlu0 %v9971, 2
    %v10155 = vpop.permute.xlu0 %10154
    %10156 = vrot.lane.b32.xlu0 %v9972, 2
    %v10157 = vpop.permute.xlu0 %10156
    %10158 = vrot.lane.b32.xlu0 %v9973, 2
    %v10159 = vpop.permute.xlu0 %10158
    %10160 = vrot.lane.b32.xlu0 %v9974, 2
    %v10161 = vpop.permute.xlu0 %10160
    %10162 = vrot.lane.b32.xlu0 %v9975, 2
    %v10163 = vpop.permute.xlu0 %10162
    %10164 = vrot.lane.b32.xlu0 %v9976, 2
    %v10165 = vpop.permute.xlu0 %10164
    %10166 = vrot.lane.b32.xlu0 %v9977, 2
    %v10167 = vpop.permute.xlu0 %10166
    %10168 = vrot.lane.b32.xlu0 %v9978, 2
    %v10169 = vpop.permute.xlu0 %10168
    %10170 = vrot.lane.b32.xlu0 %v9979, 2
    %v10171 = vpop.permute.xlu0 %10170
    %v10188 = vsub.f32 %v9774, %v10141
    %v10189 = vsub.f32 %v9777, %v10143
    %v10190 = vsub.f32 %v9782, %v10145
    %v10191 = vsub.f32 %v9785, %v10147
    %v10192 = vsub.f32 %v9790, %v10149
    %v10193 = vsub.f32 %v9793, %v10151
    %v10194 = vsub.f32 %v9798, %v10153
    %v10195 = vsub.f32 %v9801, %v10155
    %v10196 = vsub.f32 %v9806, %v10157
    %v10197 = vsub.f32 %v9809, %v10159
    %v10198 = vsub.f32 %v9814, %v10161
    %v10199 = vsub.f32 %v9817, %v10163
    %v10200 = vsub.f32 %v9822, %v10165
    %v10201 = vsub.f32 %v9825, %v10167
    %v10202 = vsub.f32 %v9830, %v10169
    %v10203 = vsub.f32 %v9833, %v10171
    %v10204 = vmul.f32 %v10188, 1.442695
    %v10205 = vpow.pop %v10204
    %v10206 = vmul.f32 %v10189, 1.442695
    %v10207 = vpow.pop %v10206
    %v10208 = vmul.f32 %v10190, 1.442695
    %v10209 = vpow.pop %v10208
    %v10210 = vmul.f32 %v10191, 1.442695
    %v10211 = vpow.pop %v10210
    %v10212 = vmul.f32 %v10192, 1.442695
    %v10213 = vpow.pop %v10212
    %v10214 = vmul.f32 %v10193, 1.442695
    %v10215 = vpow.pop %v10214
    %v10216 = vmul.f32 %v10194, 1.442695
    %v10217 = vpow.pop %v10216
    %v10218 = vmul.f32 %v10195, 1.442695
    %v10219 = vpow.pop %v10218
    %v10220 = vmul.f32 %v10196, 1.442695
    %v10221 = vpow.pop %v10220
    %v10222 = vmul.f32 %v10197, 1.442695
    %v10223 = vpow.pop %v10222
    %v10224 = vmul.f32 %v10198, 1.442695
    %v10225 = vpow.pop %v10224
    %v10226 = vmul.f32 %v10199, 1.442695
    %v10227 = vpow.pop %v10226
    %v10228 = vmul.f32 %v10200, 1.442695
    %v10229 = vpow.pop %v10228
    %v10230 = vmul.f32 %v10201, 1.442695
    %v10231 = vpow.pop %v10230
    %v10232 = vmul.f32 %v10202, 1.442695
    %v10233 = vpow.pop %v10232
    %v10234 = vmul.f32 %v10203, 1.442695
    %v10235 = vpow.pop %v10234
    %10252 = vrot.lane.b32.xlu0 %v10109, 127
    %v10253 = vpop.permute.xlu0 %10252
    %10254 = vrot.lane.b32.xlu0 %v10111, 127
    %v10255 = vpop.permute.xlu0 %10254
    %10256 = vrot.lane.b32.xlu0 %v10113, 127
    %v10257 = vpop.permute.xlu0 %10256
    %10258 = vrot.lane.b32.xlu0 %v10115, 127
    %v10259 = vpop.permute.xlu0 %10258
    %10260 = vrot.lane.b32.xlu0 %v10117, 127
    %v10261 = vpop.permute.xlu0 %10260
    %10262 = vrot.lane.b32.xlu0 %v10119, 127
    %v10263 = vpop.permute.xlu0 %10262
    %10264 = vrot.lane.b32.xlu0 %v10121, 127
    %v10265 = vpop.permute.xlu0 %10264
    %10266 = vrot.lane.b32.xlu0 %v10123, 127
    %v10267 = vpop.permute.xlu0 %10266
    %10268 = vrot.lane.b32.xlu0 %v10125, 127
    %v10269 = vpop.permute.xlu0 %10268
    %10270 = vrot.lane.b32.xlu0 %v10127, 127
    %v10271 = vpop.permute.xlu0 %10270
    %10272 = vrot.lane.b32.xlu0 %v10129, 127
    %v10273 = vpop.permute.xlu0 %10272
    %10274 = vrot.lane.b32.xlu0 %v10131, 127
    %v10275 = vpop.permute.xlu0 %10274
    %10276 = vrot.lane.b32.xlu0 %v10133, 127
    %v10277 = vpop.permute.xlu0 %10276
    %10278 = vrot.lane.b32.xlu0 %v10135, 127
    %v10279 = vpop.permute.xlu0 %10278
    %10280 = vrot.lane.b32.xlu0 %v10137, 127
    %v10281 = vpop.permute.xlu0 %10280
    %10282 = vrot.lane.b32.xlu0 %v10139, 127
    %v10283 = vpop.permute.xlu0 %10282
    %v10300 = vadd.f32 %v9997, %v10253
    %v10301 = vadd.f32 %v9999, %v10255
    %v10302 = vadd.f32 %v10001, %v10257
    %v10303 = vadd.f32 %v10003, %v10259
    %v10304 = vadd.f32 %v10005, %v10261
    %v10305 = vadd.f32 %v10007, %v10263
    %v10306 = vadd.f32 %v10009, %v10265
    %v10307 = vadd.f32 %v10011, %v10267
    %v10308 = vadd.f32 %v10013, %v10269
    %v10309 = vadd.f32 %v10015, %v10271
    %v10310 = vadd.f32 %v10017, %v10273
    %v10311 = vadd.f32 %v10019, %v10275
    %v10312 = vadd.f32 %v10021, %v10277
    %v10313 = vadd.f32 %v10023, %v10279
    %v10314 = vadd.f32 %v10025, %v10281
    %v10315 = vadd.f32 %v10027, %v10283
    %10332 = vrot.lane.b32.xlu0 %v10205, 126
    %v10333 = vpop.permute.xlu0 %10332
    %10334 = vrot.lane.b32.xlu0 %v10207, 126
    %v10335 = vpop.permute.xlu0 %10334
    %10336 = vrot.lane.b32.xlu0 %v10209, 126
    %v10337 = vpop.permute.xlu0 %10336
    %10338 = vrot.lane.b32.xlu0 %v10211, 126
    %v10339 = vpop.permute.xlu0 %10338
    %10340 = vrot.lane.b32.xlu0 %v10213, 126
    %v10341 = vpop.permute.xlu0 %10340
    %10342 = vrot.lane.b32.xlu0 %v10215, 126
    %v10343 = vpop.permute.xlu0 %10342
    %10344 = vrot.lane.b32.xlu0 %v10217, 126
    %v10345 = vpop.permute.xlu0 %10344
    %10346 = vrot.lane.b32.xlu0 %v10219, 126
    %v10347 = vpop.permute.xlu0 %10346
    %10348 = vrot.lane.b32.xlu0 %v10221, 126
    %v10349 = vpop.permute.xlu0 %10348
    %10350 = vrot.lane.b32.xlu0 %v10223, 126
    %v10351 = vpop.permute.xlu0 %10350
    %10352 = vrot.lane.b32.xlu0 %v10225, 126
    %v10353 = vpop.permute.xlu0 %10352
    %10354 = vrot.lane.b32.xlu0 %v10227, 126
    %v10355 = vpop.permute.xlu0 %10354
    %10356 = vrot.lane.b32.xlu0 %v10229, 126
    %v10357 = vpop.permute.xlu0 %10356
    %10358 = vrot.lane.b32.xlu0 %v10231, 126
    %v10359 = vpop.permute.xlu0 %10358
    %10360 = vrot.lane.b32.xlu0 %v10233, 126
    %v10361 = vpop.permute.xlu0 %10360
    %10362 = vrot.lane.b32.xlu0 %v10235, 126
    %v10363 = vpop.permute.xlu0 %10362
    %v10380 = vadd.f32 %v10300, %v10333
    %v10381 = vadd.f32 %v10301, %v10335
    %v10382 = vadd.f32 %v10302, %v10337
    %v10383 = vadd.f32 %v10303, %v10339
    %v10384 = vadd.f32 %v10304, %v10341
    %v10385 = vadd.f32 %v10305, %v10343
    %v10386 = vadd.f32 %v10306, %v10345
    %v10387 = vadd.f32 %v10307, %v10347
    %v10388 = vadd.f32 %v10308, %v10349
    %v10389 = vadd.f32 %v10309, %v10351
    %v10390 = vadd.f32 %v10310, %v10353
    %v10391 = vadd.f32 %v10311, %v10355
    %v10392 = vadd.f32 %v10312, %v10357
    %v10393 = vadd.f32 %v10313, %v10359
    %v10394 = vadd.f32 %v10314, %v10361
    %v10395 = vadd.f32 %v10315, %v10363
    %v10396 = vrcp.pop %v10380
    %v10397 = vmul.f32 1.0, %v10396
    %v10398 = vrcp.pop %v10381
    %v10399 = vmul.f32 1.0, %v10398
    %v10400 = vrcp.pop %v10382
    %v10401 = vmul.f32 1.0, %v10400
    %v10402 = vrcp.pop %v10383
    %v10403 = vmul.f32 1.0, %v10402
    %v10404 = vrcp.pop %v10384
    %v10405 = vmul.f32 1.0, %v10404
    %v10406 = vrcp.pop %v10385
    %v10407 = vmul.f32 1.0, %v10406
    %v10408 = vrcp.pop %v10386
    %v10409 = vmul.f32 1.0, %v10408
    %v10410 = vrcp.pop %v10387
    %v10411 = vmul.f32 1.0, %v10410
    %v10412 = vrcp.pop %v10388
    %v10413 = vmul.f32 1.0, %v10412
    %v10414 = vrcp.pop %v10389
    %v10415 = vmul.f32 1.0, %v10414
    %v10416 = vrcp.pop %v10390
    %v10417 = vmul.f32 1.0, %v10416
    %v10418 = vrcp.pop %v10391
    %v10419 = vmul.f32 1.0, %v10418
    %v10420 = vrcp.pop %v10392
    %v10421 = vmul.f32 1.0, %v10420
    %v10422 = vrcp.pop %v10393
    %v10423 = vmul.f32 1.0, %v10422
    %v10424 = vrcp.pop %v10394
    %v10425 = vmul.f32 1.0, %v10424
    %v10426 = vrcp.pop %v10395
    %v10427 = vmul.f32 1.0, %v10426
    %v10428 = vmul.f32 %v9997, %v10397
    %v10429 = vmul.f32 %v9999, %v10399
    %v10430 = vmul.f32 %v10001, %v10401
    %v10431 = vmul.f32 %v10003, %v10403
    %v10432 = vmul.f32 %v10005, %v10405
    %v10433 = vmul.f32 %v10007, %v10407
    %v10434 = vmul.f32 %v10009, %v10409
    %v10435 = vmul.f32 %v10011, %v10411
    %v10436 = vmul.f32 %v10013, %v10413
    %v10437 = vmul.f32 %v10015, %v10415
    %v10438 = vmul.f32 %v10017, %v10417
    %v10439 = vmul.f32 %v10019, %v10419
    %v10440 = vmul.f32 %v10021, %v10421
    %v10441 = vmul.f32 %v10023, %v10423
    %v10442 = vmul.f32 %v10025, %v10425
    %v10443 = vmul.f32 %v10027, %v10427
    %10460 = vrot.lane.b32.xlu0 %v10397, 1
    %v10461 = vpop.permute.xlu0 %10460
    %10462 = vrot.lane.b32.xlu0 %v10399, 1
    %v10463 = vpop.permute.xlu0 %10462
    %10464 = vrot.lane.b32.xlu0 %v10401, 1
    %v10465 = vpop.permute.xlu0 %10464
    %10466 = vrot.lane.b32.xlu0 %v10403, 1
    %v10467 = vpop.permute.xlu0 %10466
    %10468 = vrot.lane.b32.xlu0 %v10405, 1
    %v10469 = vpop.permute.xlu0 %10468
    %10470 = vrot.lane.b32.xlu0 %v10407, 1
    %v10471 = vpop.permute.xlu0 %10470
    %10472 = vrot.lane.b32.xlu0 %v10409, 1
    %v10473 = vpop.permute.xlu0 %10472
    %10474 = vrot.lane.b32.xlu0 %v10411, 1
    %v10475 = vpop.permute.xlu0 %10474
    %10476 = vrot.lane.b32.xlu0 %v10413, 1
    %v10477 = vpop.permute.xlu0 %10476
    %10478 = vrot.lane.b32.xlu0 %v10415, 1
    %v10479 = vpop.permute.xlu0 %10478
    %10480 = vrot.lane.b32.xlu0 %v10417, 1
    %v10481 = vpop.permute.xlu0 %10480
    %10482 = vrot.lane.b32.xlu0 %v10419, 1
    %v10483 = vpop.permute.xlu0 %10482
    %10484 = vrot.lane.b32.xlu0 %v10421, 1
    %v10485 = vpop.permute.xlu0 %10484
    %10486 = vrot.lane.b32.xlu0 %v10423, 1
    %v10487 = vpop.permute.xlu0 %10486
    %10488 = vrot.lane.b32.xlu0 %v10425, 1
    %v10489 = vpop.permute.xlu0 %10488
    %10490 = vrot.lane.b32.xlu0 %v10427, 1
    %v10491 = vpop.permute.xlu0 %10490
    %v10508 = vmul.f32 %v10109, %v10461
    %v10509 = vmul.f32 %v10111, %v10463
    %v10510 = vmul.f32 %v10113, %v10465
    %v10511 = vmul.f32 %v10115, %v10467
    %v10512 = vmul.f32 %v10117, %v10469
    %v10513 = vmul.f32 %v10119, %v10471
    %v10514 = vmul.f32 %v10121, %v10473
    %v10515 = vmul.f32 %v10123, %v10475
    %v10516 = vmul.f32 %v10125, %v10477
    %v10517 = vmul.f32 %v10127, %v10479
    %v10518 = vmul.f32 %v10129, %v10481
    %v10519 = vmul.f32 %v10131, %v10483
    %v10520 = vmul.f32 %v10133, %v10485
    %v10521 = vmul.f32 %v10135, %v10487
    %v10522 = vmul.f32 %v10137, %v10489
    %v10523 = vmul.f32 %v10139, %v10491
    %10524 = vrot.lane.b32.xlu0 %v10397, 2
    %v10525 = vpop.permute.xlu0 %10524
    %10526 = vrot.lane.b32.xlu0 %v10399, 2
    %v10527 = vpop.permute.xlu0 %10526
    %10528 = vrot.lane.b32.xlu0 %v10401, 2
    %v10529 = vpop.permute.xlu0 %10528
    %10530 = vrot.lane.b32.xlu0 %v10403, 2
    %v10531 = vpop.permute.xlu0 %10530
    %10532 = vrot.lane.b32.xlu0 %v10405, 2
    %v10533 = vpop.permute.xlu0 %10532
    %10534 = vrot.lane.b32.xlu0 %v10407, 2
    %v10535 = vpop.permute.xlu0 %10534
    %10536 = vrot.lane.b32.xlu0 %v10409, 2
    %v10537 = vpop.permute.xlu0 %10536
    %10538 = vrot.lane.b32.xlu0 %v10411, 2
    %v10539 = vpop.permute.xlu0 %10538
    %10540 = vrot.lane.b32.xlu0 %v10413, 2
    %v10541 = vpop.permute.xlu0 %10540
    %10542 = vrot.lane.b32.xlu0 %v10415, 2
    %v10543 = vpop.permute.xlu0 %10542
    %10544 = vrot.lane.b32.xlu0 %v10417, 2
    %v10545 = vpop.permute.xlu0 %10544
    %10546 = vrot.lane.b32.xlu0 %v10419, 2
    %v10547 = vpop.permute.xlu0 %10546
    %10548 = vrot.lane.b32.xlu0 %v10421, 2
    %v10549 = vpop.permute.xlu0 %10548
    %10550 = vrot.lane.b32.xlu0 %v10423, 2
    %v10551 = vpop.permute.xlu0 %10550
    %10552 = vrot.lane.b32.xlu0 %v10425, 2
    %v10553 = vpop.permute.xlu0 %10552
    %10554 = vrot.lane.b32.xlu0 %v10427, 2
    %v10555 = vpop.permute.xlu0 %10554
    %v10572 = vmul.f32 %v10205, %v10525
    %v10573 = vmul.f32 %v10207, %v10527
    %v10574 = vmul.f32 %v10209, %v10529
    %v10575 = vmul.f32 %v10211, %v10531
    %v10576 = vmul.f32 %v10213, %v10533
    %v10577 = vmul.f32 %v10215, %v10535
    %v10578 = vmul.f32 %v10217, %v10537
    %v10579 = vmul.f32 %v10219, %v10539
    %v10580 = vmul.f32 %v10221, %v10541
    %v10581 = vmul.f32 %v10223, %v10543
    %v10582 = vmul.f32 %v10225, %v10545
    %v10583 = vmul.f32 %v10227, %v10547
    %v10584 = vmul.f32 %v10229, %v10549
    %v10585 = vmul.f32 %v10231, %v10551
    %v10586 = vmul.f32 %v10233, %v10553
    %v10587 = vmul.f32 %v10235, %v10555
    %v10588 = vsel %vm3324, %v10428, %v10508
    %v10589 = vsel %vm3324, %v10429, %v10509
    %v10590 = vsel %vm3324, %v10430, %v10510
    %v10591 = vsel %vm3324, %v10431, %v10511
    %v10592 = vsel %vm3324, %v10432, %v10512
    %v10593 = vsel %vm3324, %v10433, %v10513
    %v10594 = vsel %vm3324, %v10434, %v10514
    %v10595 = vsel %vm3324, %v10435, %v10515
    %v10596 = vsel %vm3324, %v10436, %v10516
    %v10597 = vsel %vm3324, %v10437, %v10517
    %v10598 = vsel %vm3324, %v10438, %v10518
    %v10599 = vsel %vm3324, %v10439, %v10519
    %v10600 = vsel %vm3324, %v10440, %v10520
    %v10601 = vsel %vm3324, %v10441, %v10521
    %v10602 = vsel %vm3324, %v10442, %v10522
    %v10603 = vsel %vm3324, %v10443, %v10523
    %vm10604 = vcmask 15360
    %v10605 = vsel %vm10604, %v10588, %v10572
    %v10606 = vsel %vm10604, %v10589, %v10573
    %v10607 = vsel %vm10604, %v10590, %v10574
    %v10608 = vsel %vm10604, %v10591, %v10575
    %v10609 = vsel %vm10604, %v10592, %v10576
    %v10610 = vsel %vm10604, %v10593, %v10577
    %v10611 = vsel %vm10604, %v10594, %v10578
    %v10612 = vsel %vm10604, %v10595, %v10579
    %v10613 = vsel %vm10604, %v10596, %v10580
    %v10614 = vsel %vm10604, %v10597, %v10581
    %v10615 = vsel %vm10604, %v10598, %v10582
    %v10616 = vsel %vm10604, %v10599, %v10583
    %v10617 = vsel %vm10604, %v10600, %v10584
    %v10618 = vsel %vm10604, %v10601, %v10585
    %v10619 = vsel %vm10604, %v10602, %v10586
    %v10620 = vsel %vm10604, %v10603, %v10587
    %vm10621 = vcmask 23552
    %v10622 = vsel %vm10621, %v10605, 0.0
    %v10623 = vsel %vm10621, %v10606, 0.0
    %v10624 = vsel %vm10621, %v10607, 0.0
    %v10625 = vsel %vm10621, %v10608, 0.0
    %v10626 = vsel %vm10621, %v10609, 0.0
    %v10627 = vsel %vm10621, %v10610, 0.0
    %v10628 = vsel %vm10621, %v10611, 0.0
    %v10629 = vsel %vm10621, %v10612, 0.0
    %v10630 = vsel %vm10621, %v10613, 0.0
    %v10631 = vsel %vm10621, %v10614, 0.0
    %v10632 = vsel %vm10621, %v10615, 0.0
    %v10633 = vsel %vm10621, %v10616, 0.0
    %v10634 = vsel %vm10621, %v10617, 0.0
    %v10635 = vsel %vm10621, %v10618, 0.0
    %v10636 = vsel %vm10621, %v10619, 0.0
    %v10637 = vsel %vm10621, %v10620, 0.0
    %10638 = vst.msk [vmem:[%s2] sm:$0xff] %vm622, %v10622
    %10639 = vst.msk [vmem:[%s2 + $0x8] sm:$0xff] %vm622, %v10623
    %10640 = vst.msk [vmem:[%s2 + $0x10] sm:$0xff] %vm622, %v10624
    %10641 = vst.msk [vmem:[%s2 + $0x18] sm:$0xff] %vm622, %v10625
    %10642 = vst.msk [vmem:[%s2 + $0x20] sm:$0xff] %vm622, %v10626
    %10643 = vst.msk [vmem:[%s2 + $0x28] sm:$0xff] %vm622, %v10627
    %10644 = vst.msk [vmem:[%s2 + $0x30] sm:$0xff] %vm622, %v10628
    %10645 = vst.msk [vmem:[%s2 + $0x38] sm:$0xff] %vm622, %v10629
    %10646 = vst.msk [vmem:[%s2 + $0x40] sm:$0xff] %vm622, %v10630
    %10647 = vst.msk [vmem:[%s2 + $0x48] sm:$0xff] %vm622, %v10631
    %10648 = vst.msk [vmem:[%s2 + $0x50] sm:$0xff] %vm622, %v10632
    %10649 = vst.msk [vmem:[%s2 + $0x58] sm:$0xff] %vm622, %v10633
    %10650 = vst.msk [vmem:[%s2 + $0x60] sm:$0xff] %vm622, %v10634
    %10651 = vst.msk [vmem:[%s2 + $0x68] sm:$0xff] %vm622, %v10635
    %10652 = vst.msk [vmem:[%s2 + $0x70] sm:$0xff] %vm622, %v10636
    %10653 = vst.msk [vmem:[%s2 + $0x78] sm:$0xff] %vm622, %v10637
    // Predicated region
    $region14: #{forward.1} parent=1 // pred_check
      _
    $region15: #{forward.1} parent=1 // pred_check_branch
      %10655 = sbr.rel (0) target = $region17
    $region16: #{forward.1} parent=1 // pred_region
      _
    $region17: #{forward.1} parent=1 // pred_fallthru
      _
    // Predicated region
    $region18: #{forward.1} parent=1 // pred_check
      _
    $region19: #{forward.1} parent=1 // pred_check_branch
      %10657 = sbr.rel (0) target = $region21
    $region20: #{forward.1} parent=1 // pred_region
      _
    $region21: #{forward.1} parent=1 // pred_fallthru
      _
    %10658 = vsyncpa [#allocation17], 1

</llo_original>
